<compile_context>
chip_gen: v6e
topology: v6e:2x2x1
jax: 0.10.0
libtpu: 0.0.40
codegen_flags: <defaults>
</compile_context>

<pallas_src>
import functools

import jax
import jax.numpy as jnp
from jax.experimental import pallas as pl
from jax.experimental.pallas import tpu as pltpu

_LANE = 128
_BN_EPS = 1e-5  # nn.BatchNorm2d default


def _silu(y):
    return y * jax.nn.sigmoid(y)


def _round_up(v, m):
    return ((v + m - 1) // m) * m


# ----------------------------- fused C2f kernel -----------------------------

def _make_c2f_kernel(H, W, c1, cp, c2p, n, shortcut):
    """Builds the fused kernel (static shapes / static bottleneck count)."""
    HW = H * W

    def kernel(*refs):
        it = iter(refs)
        x_ref = next(it)                                   # (1, H, W, c1)
        cv1w = next(it)                                    # (c1, 2*cp)
        cv1s = next(it)                                    # (1, 2*cp)
        cv1b = next(it)                                    # (1, 2*cp)
        m = [tuple(next(it) for _ in range(6)) for _ in range(n)]
        cv2w = next(it)                                    # ((2+n)*cp, c2p)
        cv2s = next(it)                                    # (1, c2p)
        cv2b = next(it)                                    # (1, c2p)
        o_ref = next(it)                                   # (1, H, W, c2p)
        ycat = next(it)                                    # VMEM (HW, (2+n)*cp)
        patch = next(it)                                   # VMEM (H, W, 9*cp)

        # Zero the im2col slab once per grid step.  Each tap lives in its own
        # 128-lane column block and only its in-bounds window is overwritten
        # below, so the remaining zeros act as the 3x3 "same" padding halo for
        # every conv in the chain.
        patch[...] = jnp.zeros((H, W, 9 * cp), jnp.float32)

        # ---- cv1: 1x1 conv + folded BN + SiLU, chunks written in place -----
        x2d = x_ref[...].reshape(HW, c1)
        y = jnp.dot(x2d, cv1w[...], preferred_element_type=jnp.float32)
        y = _silu(y * cv1s[...] + cv1b[...])               # (HW, 2*cp)
        ycat[:, 0:2 * cp] = y                              # chunk 0 | chunk 1

        # ---- 3x3 conv + folded BN + SiLU as ONE matmul (K = 9*cp) ----------
        def conv3(src2d, w_ref, s_ref, b_ref):
            src3 = src2d.reshape(H, W, cp)
            for dy in range(3):
                for dx in range(3):
                    j = dy * 3 + dx
                    r0, r1 = max(0, 1 - dy), min(H, H + 1 - dy)
                    k0, k1 = max(0, 1 - dx), min(W, W + 1 - dx)
                    patch[r0:r1, k0:k1, j * cp:(j + 1) * cp] = (
                        src3[r0 + dy - 1:r1 + dy - 1,
                             k0 + dx - 1:k1 + dx - 1, :])
            h = jnp.dot(patch[...].reshape(HW, 9 * cp), w_ref[...],
                        preferred_element_type=jnp.float32)
            return _silu(h * s_ref[...] + b_ref[...])

        # ---- n bottlenecks: t / h stay in registers, one write per chunk ---
        t = y[:, cp:2 * cp]                                # (HW, cp)
        for i in range(n):
            w1, s1, b1, w2, s2, b2 = m[i]
            h = conv3(t, w1, s1, b1)
            h = conv3(h, w2, s2, b2)
            if shortcut:                                   # fused residual add
                h = h + t
            ycat[:, (2 + i) * cp:(3 + i) * cp] = h
            t = h

        # ---- cv2: single matmul over the whole concat slab, K=(2+n)*cp -----
        out = jnp.dot(ycat[...], cv2w[...], preferred_element_type=jnp.float32)
        out = _silu(out * cv2s[...] + cv2b[...])
        o_ref[...] = out.reshape(1, H, W, c2p).astype(o_ref.dtype)

    return kernel


def c2f_forward(x, kparams, *, c2, n, shortcut=False):
    """Fused C2f forward.  x is NHWC (N, H, W, c1); returns NHWC (N, H, W, c2)."""
    N, H, W, c1 = x.shape
    cp = kparams["cv1_w"].shape[-1] // 2       # padded hidden width (static)
    c2p = kparams["cv2_w"].shape[-1]           # padded output width (static)
    HW = H * W

    kernel = _make_c2f_kernel(H, W, c1, cp, c2p, n, shortcut)

    inputs = [x, kparams["cv1_w"], kparams["cv1_s"], kparams["cv1_b"]]
    in_specs = [
        pl.BlockSpec((1, H, W, c1), lambda b: (b, 0, 0, 0)),
        pl.BlockSpec((c1, 2 * cp), lambda b: (0, 0)),
        pl.BlockSpec((1, 2 * cp), lambda b: (0, 0)),
        pl.BlockSpec((1, 2 * cp), lambda b: (0, 0)),
    ]
    # TODO(synk): on v7x single-buffer the constant weight blocks below with
    #   pipeline_mode=pl.Buffered(1) to halve their VMEM footprint.
    for i in range(n):
        inputs += [kparams[f"m{i}_w1"], kparams[f"m{i}_s1"], kparams[f"m{i}_b1"],
                   kparams[f"m{i}_w2"], kparams[f"m{i}_s2"], kparams[f"m{i}_b2"]]
        in_specs += [
            pl.BlockSpec((9 * cp, cp), lambda b: (0, 0)),
            pl.BlockSpec((1, cp), lambda b: (0, 0)),
            pl.BlockSpec((1, cp), lambda b: (0, 0)),
            pl.BlockSpec((9 * cp, cp), lambda b: (0, 0)),
            pl.BlockSpec((1, cp), lambda b: (0, 0)),
            pl.BlockSpec((1, cp), lambda b: (0, 0)),
        ]
    inputs += [kparams["cv2_w"], kparams["cv2_s"], kparams["cv2_b"]]
    in_specs += [
        pl.BlockSpec(((2 + n) * cp, c2p), lambda b: (0, 0)),
        pl.BlockSpec((1, c2p), lambda b: (0, 0)),
        pl.BlockSpec((1, c2p), lambda b: (0, 0)),
    ]

    out = pl.pallas_call(
        kernel,
        out_shape=jax.ShapeDtypeStruct((N, H, W, c2p), jnp.float32),
        grid=(N,),
        in_specs=in_specs,
        out_specs=pl.BlockSpec((1, H, W, c2p), lambda b: (b, 0, 0, 0)),
        scratch_shapes=[
            pltpu.VMEM((HW, (2 + n) * cp), jnp.float32),   # in-VMEM "concat"
            pltpu.VMEM((H, W, 9 * cp), jnp.float32),       # im2col patch slab
        ],
        compiler_params=pltpu.CompilerParams(
            dimension_semantics=("parallel",)),            # megacore over batch
    )(*inputs)
    return out[..., :c2]                                   # drop lane padding


# ----------------------------- parameter setup ------------------------------

def _bn_fold(key, ch):
    """Deterministic synthetic BN params folded to (scale, bias), shape (1,C)."""
    k1, k2, k3, k4 = jax.random.split(key, 4)
    gamma = 1.0 + 0.1 * jax.random.normal(k1, (ch,), jnp.float32)
    beta = 0.1 * jax.random.normal(k2, (ch,), jnp.float32)
    mean = 0.1 * jax.random.normal(k3, (ch,), jnp.float32)
    var = 1.0 + 0.1 * jax.random.uniform(k4, (ch,), dtype=jnp.float32)
    scale = gamma / jnp.sqrt(var + _BN_EPS)
    bias = beta - mean * scale
    return scale.reshape(1, ch), bias.reshape(1, ch)


def init_c2f_params(key, c1, c2, n, e=0.5):
    """Logical (unpadded) params; c / n stay static Python ints."""
    c = int(c2 * e)
    keys = jax.random.split(key, 4 + 4 * n)
    p = {}
    # cv1: Conv(c1, 2c, 1) -> (Cin, Cout)
    p["cv1_w"] = 0.1 * jax.random.normal(keys[0], (c1, 2 * c), jnp.float32)
    p["cv1_s"], p["cv1_b"] = _bn_fold(keys[1], 2 * c)
    # Bottlenecks: two 3x3 Convs (c -> c), e=1.0; weights stored (9, Cin, Cout)
    for i in range(n):
        kw1, kb1, kw2, kb2 = keys[4 + 4 * i: 8 + 4 * i]
        p[f"m{i}_w1"] = 0.1 * jax.random.normal(kw1, (9, c, c), jnp.float32)
        p[f"m{i}_s1"], p[f"m{i}_b1"] = _bn_fold(kb1, c)
        p[f"m{i}_w2"] = 0.1 * jax.random.normal(kw2, (9, c, c), jnp.float32)
        p[f"m{i}_s2"], p[f"m{i}_b2"] = _bn_fold(kb2, c)
    # cv2: Conv((2+n)*c, c2, 1) -> (Cin, Cout)
    p["cv2_w"] = 0.1 * jax.random.normal(keys[2], ((2 + n) * c, c2), jnp.float32)
    p["cv2_s"], p["cv2_b"] = _bn_fold(keys[3], c2)
    return p, c


def pack_c2f_params(p, *, c, n, lane=_LANE):
    """One-time repack into the lane-dense kernel layout (zero channel pad).

    Padded lanes carry zero weights/bias, so they stay exactly zero through
    the whole chain and the padded math equals the logical math.
    """
    cp = _round_up(c, lane)
    c2 = p["cv2_s"].shape[-1]
    c2p = _round_up(c2, lane)
    c1 = p["cv1_w"].shape[0]
    kp = {}
    # cv1: (c1, 2c) -> (c1, 2*cp); chunk j occupies columns [j*cp, j*cp+c).
    w = jnp.zeros((c1, 2 * cp), jnp.float32)
    w = w.at[:, 0:c].set(p["cv1_w"][:, 0:c])
    w = w.at[:, cp:cp + c].set(p["cv1_w"][:, c:2 * c])
    kp["cv1_w"] = w
    s = jnp.zeros((1, 2 * cp), jnp.float32)
    b = jnp.zeros((1, 2 * cp), jnp.float32)
    s = s.at[:, 0:c].set(p["cv1_s"][:, 0:c]).at[:, cp:cp + c].set(p["cv1_s"][:, c:2 * c])
    b = b.at[:, 0:c].set(p["cv1_b"][:, 0:c]).at[:, cp:cp + c].set(p["cv1_b"][:, c:2 * c])
    kp["cv1_s"], kp["cv1_b"] = s, b
    # Bottleneck convs: (9, c, c) -> (9*cp, cp), tap j in rows [j*cp, j*cp+c).
    for i in range(n):
        for which in ("1", "2"):
            w9 = p[f"m{i}_w{which}"]
            wk = jnp.zeros((9 * cp, cp), jnp.float32)
            for j in range(9):
                wk = wk.at[j * cp:j * cp + c, 0:c].set(w9[j])
            kp[f"m{i}_w{which}"] = wk
            kp[f"m{i}_s{which}"] = jnp.zeros((1, cp), jnp.float32).at[:, 0:c].set(
                p[f"m{i}_s{which}"])
            kp[f"m{i}_b{which}"] = jnp.zeros((1, cp), jnp.float32).at[:, 0:c].set(
                p[f"m{i}_b{which}"])
    # cv2: ((2+n)*c, c2) -> ((2+n)*cp, c2p), chunk j rows at [j*cp, j*cp+c).
    wk = jnp.zeros(((2 + n) * cp, c2p), jnp.float32)
    for j in range(2 + n):
        wk = wk.at[j * cp:j * cp + c, 0:c2].set(p["cv2_w"][j * c:(j + 1) * c, :])
    kp["cv2_w"] = wk
    kp["cv2_s"] = jnp.zeros((1, c2p), jnp.float32).at[:, 0:c2].set(p["cv2_s"])
    kp["cv2_b"] = jnp.zeros((1, c2p), jnp.float32).at[:, 0:c2].set(p["cv2_b"])
    return kp


# --------------------------- pure-JAX reference ------------------------------

def _ref_conv1x1(x, w, s, b):
    y = jnp.einsum("nhwc,cd->nhwd", x, w, precision=jax.lax.Precision.HIGHEST)
    return _silu(y * s.reshape(1, 1, 1, -1) + b.reshape(1, 1, 1, -1))


def _ref_conv3(x, w9, s, b):
    w = w9.reshape(3, 3, w9.shape[1], w9.shape[2])
    y = jax.lax.conv_general_dilated(
        x, w, (1, 1), "SAME",
        dimension_numbers=("NHWC", "HWIO", "NHWC"),
        precision=jax.lax.Precision.HIGHEST)
    return _silu(y * s.reshape(1, 1, 1, -1) + b.reshape(1, 1, 1, -1))


def c2f_reference(x, params, *, c, n, shortcut=False):
    """NHWC reference identical to ultralytics C2f.forward (eval-mode BN)."""
    y = _ref_conv1x1(x, params["cv1_w"], params["cv1_s"], params["cv1_b"])
    ys = [y[..., :c], y[..., c:]]
    for i in range(n):
        t = ys[-1]
        h = _ref_conv3(t, params[f"m{i}_w1"], params[f"m{i}_s1"], params[f"m{i}_b1"])
        h = _ref_conv3(h, params[f"m{i}_w2"], params[f"m{i}_s2"], params[f"m{i}_b2"])
        if shortcut:
            h = t + h
        ys.append(h)
    ycat = jnp.concatenate(ys, axis=-1)
    return _ref_conv1x1(ycat, params["cv2_w"], params["cv2_s"], params["cv2_b"])


# ----------------------------------- main ------------------------------------

if __name__ == "__main__":
    key = jax.random.PRNGKey(0)
    kx, kp = jax.random.split(key)

    # C2f(c1=4, c2=4, n=1, e=0.5) -> hidden c = 2.  NHWC end-to-end.
    c1, c2, n = 4, 4, 1
    N, H, W = 2, 16, 16
    x = jax.random.normal(kx, (N, H, W, c1), jnp.float32)

    params, c = init_c2f_params(kp, c1, c2, n, e=0.5)
    kparams = pack_c2f_params(params, c=c, n=n)   # one-time lane-dense repack

    for shortcut in (False, True):
        fwd = jax.jit(functools.partial(c2f_forward, c2=c2, n=n, shortcut=shortcut))
        out = jax.block_until_ready(fwd(x, kparams))
        assert out.shape == (N, H, W, c2), out.shape
        assert bool(jnp.all(jnp.isfinite(out)))
        ref = c2f_reference(x, params, c=c, n=n, shortcut=shortcut)
        assert bool(jnp.allclose(out, ref, atol=2e-3, rtol=2e-3)), (
            shortcut, float(jnp.max(jnp.abs(out - ref))))

    print("KERNEL_OK")
</pallas_src>

<mosaic_0001>
module attributes {stable_mosaic.version = 11 : i64} {
  func.func @kernel(%arg0: i32, %arg1: memref<1x16x16x4xf32, #tpu.memory_space<vmem>>, %arg2: memref<4x256xf32, #tpu.memory_space<vmem>>, %arg3: memref<1x256xf32, #tpu.memory_space<vmem>>, %arg4: memref<1x256xf32, #tpu.memory_space<vmem>>, %arg5: memref<1152x128xf32, #tpu.memory_space<vmem>>, %arg6: memref<1x128xf32, #tpu.memory_space<vmem>>, %arg7: memref<1x128xf32, #tpu.memory_space<vmem>>, %arg8: memref<1152x128xf32, #tpu.memory_space<vmem>>, %arg9: memref<1x128xf32, #tpu.memory_space<vmem>>, %arg10: memref<1x128xf32, #tpu.memory_space<vmem>>, %arg11: memref<384x128xf32, #tpu.memory_space<vmem>>, %arg12: memref<1x128xf32, #tpu.memory_space<vmem>>, %arg13: memref<1x128xf32, #tpu.memory_space<vmem>>, %arg14: memref<1x16x16x128xf32, #tpu.memory_space<vmem>>, %arg15: memref<256x384xf32, #tpu.memory_space<vmem>>, %arg16: memref<16x16x1152xf32, #tpu.memory_space<vmem>>) attributes {dimension_semantics = [#tpu.dimension_semantics<parallel>], iteration_bounds = array<i64: 2>, scalar_prefetch = 0 : i64, scratch_operands = 2 : i64, tpu.core_type = #tpu.core_type<tc>, window_params = [{transform_indices = @transform_0, window_bounds = array<i64: 1, 16, 16, 4>}, {pipeline_mode = #tpu.pipeline_mode<synchronous>, transform_indices = @transform_1, window_bounds = array<i64: 4, 256>}, {pipeline_mode = #tpu.pipeline_mode<synchronous>, transform_indices = @transform_2, window_bounds = array<i64: 1, 256>}, {pipeline_mode = #tpu.pipeline_mode<synchronous>, transform_indices = @transform_3, window_bounds = array<i64: 1, 256>}, {pipeline_mode = #tpu.pipeline_mode<synchronous>, transform_indices = @transform_4, window_bounds = array<i64: 1152, 128>}, {pipeline_mode = #tpu.pipeline_mode<synchronous>, transform_indices = @transform_5, window_bounds = array<i64: 1, 128>}, {pipeline_mode = #tpu.pipeline_mode<synchronous>, transform_indices = @transform_6, window_bounds = array<i64: 1, 128>}, {pipeline_mode = #tpu.pipeline_mode<synchronous>, transform_indices = @transform_7, window_bounds = array<i64: 1152, 128>}, {pipeline_mode = #tpu.pipeline_mode<synchronous>, transform_indices = @transform_8, window_bounds = array<i64: 1, 128>}, {pipeline_mode = #tpu.pipeline_mode<synchronous>, transform_indices = @transform_9, window_bounds = array<i64: 1, 128>}, {pipeline_mode = #tpu.pipeline_mode<synchronous>, transform_indices = @transform_10, window_bounds = array<i64: 384, 128>}, {pipeline_mode = #tpu.pipeline_mode<synchronous>, transform_indices = @transform_11, window_bounds = array<i64: 1, 128>}, {pipeline_mode = #tpu.pipeline_mode<synchronous>, transform_indices = @transform_12, window_bounds = array<i64: 1, 128>}, {transform_indices = @transform_13, window_bounds = array<i64: 1, 16, 16, 128>}]} {
    %cst = arith.constant 0.000000e+00 : f32
    %0 = vector.broadcast %cst : f32 to vector<16x16x1152xf32>
    %c0 = arith.constant 0 : index
    %c0_0 = arith.constant 0 : index
    %c0_1 = arith.constant 0 : index
    %1 = vector.load %arg16[%c0, %c0_0, %c0_1] : memref<16x16x1152xf32, #tpu.memory_space<vmem>>, vector<16x16x1152xf32>
    tpu.vector_store %arg16[%c0, %c0_0, %c0_1], %0 {strides = array<i32>} : memref<16x16x1152xf32, #tpu.memory_space<vmem>>, vector<16x16x1152xf32>,
    %c0_2 = arith.constant 0 : index
    %c0_3 = arith.constant 0 : index
    %c0_4 = arith.constant 0 : index
    %c0_5 = arith.constant 0 : index
    %2 = vector.load %arg1[%c0_2, %c0_3, %c0_4, %c0_5] : memref<1x16x16x4xf32, #tpu.memory_space<vmem>>, vector<1x16x16x4xf32>
    %3 = vector.shape_cast %2 : vector<1x16x16x4xf32> to vector<256x4xf32>
    %c0_6 = arith.constant 0 : index
    %c0_7 = arith.constant 0 : index
    %4 = vector.load %arg2[%c0_6, %c0_7] : memref<4x256xf32, #tpu.memory_space<vmem>>, vector<4x256xf32>
    %cst_8 = arith.constant dense<0.000000e+00> : vector<256x256xf32>
    %5 = tpu.matmul %3, %4, %cst_8 {dimension_numbers = #tpu.dot_dimension_numbers<[1], [0], [0], [1], [0, 0, 1, 1], [], []>} : vector<256x4xf32>, vector<4x256xf32>, vector<256x256xf32> -> vector<256x256xf32>
    %c0_9 = arith.constant 0 : index
    %c0_10 = arith.constant 0 : index
    %6 = vector.load %arg3[%c0_9, %c0_10] : memref<1x256xf32, #tpu.memory_space<vmem>>, vector<1x256xf32>
    %7 = vector.broadcast %6 : vector<1x256xf32> to vector<256x256xf32>
    %8 = arith.mulf %5, %7 : vector<256x256xf32>
    %c0_11 = arith.constant 0 : index
    %c0_12 = arith.constant 0 : index
    %9 = vector.load %arg4[%c0_11, %c0_12] : memref<1x256xf32, #tpu.memory_space<vmem>>, vector<1x256xf32>
    %10 = vector.broadcast %9 : vector<1x256xf32> to vector<256x256xf32>
    %11 = arith.addf %8, %10 : vector<256x256xf32>
    %12 = arith.negf %11 : vector<256x256xf32>
    %13 = math.exp %12 : vector<256x256xf32>
    %cst_13 = arith.constant 1.000000e+00 : f32
    %14 = vector.broadcast %cst_13 : f32 to vector<256x256xf32>
    %15 = arith.addf %14, %13 : vector<256x256xf32>
    %16 = arith.divf %14, %15 : vector<256x256xf32>
    %17 = arith.mulf %11, %16 : vector<256x256xf32>
    %c0_14 = arith.constant 0 : index
    %c0_15 = arith.constant 0 : index
    %18 = vector.load %arg15[%c0_14, %c0_15] : memref<256x384xf32, #tpu.memory_space<vmem>>, vector<256x256xf32>
    tpu.vector_store %arg15[%c0_14, %c0_15], %17 {strides = array<i32>} : memref<256x384xf32, #tpu.memory_space<vmem>>, vector<256x256xf32>,
    %19 = vector.extract_strided_slice %17 {offsets = [0, 128], sizes = [256, 128], strides = [1, 1]} : vector<256x256xf32> to vector<256x128xf32>
    %20 = vector.shape_cast %19 : vector<256x128xf32> to vector<16x16x128xf32>
    %21 = vector.extract_strided_slice %20 {offsets = [0, 0, 0], sizes = [15, 15, 128], strides = [1, 1, 1]} : vector<16x16x128xf32> to vector<15x15x128xf32>
    %c1 = arith.constant 1 : index
    %c1_16 = arith.constant 1 : index
    %c0_17 = arith.constant 0 : index
    %22 = vector.load %arg16[%c1, %c1_16, %c0_17] : memref<16x16x1152xf32, #tpu.memory_space<vmem>>, vector<15x15x128xf32>
    tpu.vector_store %arg16[%c1, %c1_16, %c0_17], %21 {strides = array<i32>} : memref<16x16x1152xf32, #tpu.memory_space<vmem>>, vector<15x15x128xf32>,
    %23 = vector.extract_strided_slice %20 {offsets = [0, 0, 0], sizes = [15, 16, 128], strides = [1, 1, 1]} : vector<16x16x128xf32> to vector<15x16x128xf32>
    %c1_18 = arith.constant 1 : index
    %c0_19 = arith.constant 0 : index
    %c128 = arith.constant 128 : index
    %24 = vector.load %arg16[%c1_18, %c0_19, %c128] : memref<16x16x1152xf32, #tpu.memory_space<vmem>>, vector<15x16x128xf32>
    tpu.vector_store %arg16[%c1_18, %c0_19, %c128], %23 {strides = array<i32>} : memref<16x16x1152xf32, #tpu.memory_space<vmem>>, vector<15x16x128xf32>,
    %25 = vector.extract_strided_slice %20 {offsets = [0, 1, 0], sizes = [15, 15, 128], strides = [1, 1, 1]} : vector<16x16x128xf32> to vector<15x15x128xf32>
    %c1_20 = arith.constant 1 : index
    %c0_21 = arith.constant 0 : index
    %c256 = arith.constant 256 : index
    %26 = vector.load %arg16[%c1_20, %c0_21, %c256] : memref<16x16x1152xf32, #tpu.memory_space<vmem>>, vector<15x15x128xf32>
    tpu.vector_store %arg16[%c1_20, %c0_21, %c256], %25 {strides = array<i32>} : memref<16x16x1152xf32, #tpu.memory_space<vmem>>, vector<15x15x128xf32>,
    %27 = vector.extract_strided_slice %20 {offsets = [0, 0, 0], sizes = [16, 15, 128], strides = [1, 1, 1]} : vector<16x16x128xf32> to vector<16x15x128xf32>
    %c0_22 = arith.constant 0 : index
    %c1_23 = arith.constant 1 : index
    %c384 = arith.constant 384 : index
    %28 = vector.load %arg16[%c0_22, %c1_23, %c384] : memref<16x16x1152xf32, #tpu.memory_space<vmem>>, vector<16x15x128xf32>
    tpu.vector_store %arg16[%c0_22, %c1_23, %c384], %27 {strides = array<i32>} : memref<16x16x1152xf32, #tpu.memory_space<vmem>>, vector<16x15x128xf32>,
    %c0_24 = arith.constant 0 : index
    %c0_25 = arith.constant 0 : index
    %c512 = arith.constant 512 : index
    %29 = vector.load %arg16[%c0_24, %c0_25, %c512] : memref<16x16x1152xf32, #tpu.memory_space<vmem>>, vector<16x16x128xf32>
    tpu.vector_store %arg16[%c0_24, %c0_25, %c512], %20 {strides = array<i32>} : memref<16x16x1152xf32, #tpu.memory_space<vmem>>, vector<16x16x128xf32>,
    %30 = vector.extract_strided_slice %20 {offsets = [0, 1, 0], sizes = [16, 15, 128], strides = [1, 1, 1]} : vector<16x16x128xf32> to vector<16x15x128xf32>
    %c0_26 = arith.constant 0 : index
    %c0_27 = arith.constant 0 : index
    %c640 = arith.constant 640 : index
    %31 = vector.load %arg16[%c0_26, %c0_27, %c640] : memref<16x16x1152xf32, #tpu.memory_space<vmem>>, vector<16x15x128xf32>
    tpu.vector_store %arg16[%c0_26, %c0_27, %c640], %30 {strides = array<i32>} : memref<16x16x1152xf32, #tpu.memory_space<vmem>>, vector<16x15x128xf32>,
    %32 = vector.extract_strided_slice %20 {offsets = [1, 0, 0], sizes = [15, 15, 128], strides = [1, 1, 1]} : vector<16x16x128xf32> to vector<15x15x128xf32>
    %c0_28 = arith.constant 0 : index
    %c1_29 = arith.constant 1 : index
    %c768 = arith.constant 768 : index
    %33 = vector.load %arg16[%c0_28, %c1_29, %c768] : memref<16x16x1152xf32, #tpu.memory_space<vmem>>, vector<15x15x128xf32>
    tpu.vector_store %arg16[%c0_28, %c1_29, %c768], %32 {strides = array<i32>} : memref<16x16x1152xf32, #tpu.memory_space<vmem>>, vector<15x15x128xf32>,
    %34 = vector.extract_strided_slice %20 {offsets = [1, 0, 0], sizes = [15, 16, 128], strides = [1, 1, 1]} : vector<16x16x128xf32> to vector<15x16x128xf32>
    %c0_30 = arith.constant 0 : index
    %c0_31 = arith.constant 0 : index
    %c896 = arith.constant 896 : index
    %35 = vector.load %arg16[%c0_30, %c0_31, %c896] : memref<16x16x1152xf32, #tpu.memory_space<vmem>>, vector<15x16x128xf32>
    tpu.vector_store %arg16[%c0_30, %c0_31, %c896], %34 {strides = array<i32>} : memref<16x16x1152xf32, #tpu.memory_space<vmem>>, vector<15x16x128xf32>,
    %36 = vector.extract_strided_slice %20 {offsets = [1, 1, 0], sizes = [15, 15, 128], strides = [1, 1, 1]} : vector<16x16x128xf32> to vector<15x15x128xf32>
    %c0_32 = arith.constant 0 : index
    %c0_33 = arith.constant 0 : index
    %c1024 = arith.constant 1024 : index
    %37 = vector.load %arg16[%c0_32, %c0_33, %c1024] : memref<16x16x1152xf32, #tpu.memory_space<vmem>>, vector<15x15x128xf32>
    tpu.vector_store %arg16[%c0_32, %c0_33, %c1024], %36 {strides = array<i32>} : memref<16x16x1152xf32, #tpu.memory_space<vmem>>, vector<15x15x128xf32>,
    %c0_34 = arith.constant 0 : index
    %c0_35 = arith.constant 0 : index
    %c0_36 = arith.constant 0 : index
    %38 = vector.load %arg16[%c0_34, %c0_35, %c0_36] : memref<16x16x1152xf32, #tpu.memory_space<vmem>>, vector<16x16x1152xf32>
    %39 = vector.shape_cast %38 : vector<16x16x1152xf32> to vector<256x1152xf32>
    %c0_37 = arith.constant 0 : index
    %c0_38 = arith.constant 0 : index
    %40 = vector.load %arg5[%c0_37, %c0_38] : memref<1152x128xf32, #tpu.memory_space<vmem>>, vector<1152x128xf32>
    %cst_39 = arith.constant dense<0.000000e+00> : vector<256x128xf32>
    %41 = tpu.matmul %39, %40, %cst_39 {dimension_numbers = #tpu.dot_dimension_numbers<[1], [0], [0], [1], [0, 0, 1, 1], [], []>} : vector<256x1152xf32>, vector<1152x128xf32>, vector<256x128xf32> -> vector<256x128xf32>
    %c0_40 = arith.constant 0 : index
    %c0_41 = arith.constant 0 : index
    %42 = vector.load %arg6[%c0_40, %c0_41] : memref<1x128xf32, #tpu.memory_space<vmem>>, vector<1x128xf32>
    %43 = vector.broadcast %42 : vector<1x128xf32> to vector<256x128xf32>
    %44 = arith.mulf %41, %43 : vector<256x128xf32>
    %c0_42 = arith.constant 0 : index
    %c0_43 = arith.constant 0 : index
    %45 = vector.load %arg7[%c0_42, %c0_43] : memref<1x128xf32, #tpu.memory_space<vmem>>, vector<1x128xf32>
    %46 = vector.broadcast %45 : vector<1x128xf32> to vector<256x128xf32>
    %47 = arith.addf %44, %46 : vector<256x128xf32>
    %48 = arith.negf %47 : vector<256x128xf32>
    %49 = math.exp %48 : vector<256x128xf32>
    %cst_44 = arith.constant 1.000000e+00 : f32
    %50 = vector.broadcast %cst_44 : f32 to vector<256x128xf32>
    %51 = arith.addf %50, %49 : vector<256x128xf32>
    %52 = arith.divf %50, %51 : vector<256x128xf32>
    %53 = arith.mulf %47, %52 : vector<256x128xf32>
    %54 = vector.shape_cast %53 : vector<256x128xf32> to vector<16x16x128xf32>
    %55 = vector.extract_strided_slice %54 {offsets = [0, 0, 0], sizes = [15, 15, 128], strides = [1, 1, 1]} : vector<16x16x128xf32> to vector<15x15x128xf32>
    %c1_45 = arith.constant 1 : index
    %c1_46 = arith.constant 1 : index
    %c0_47 = arith.constant 0 : index
    %56 = vector.load %arg16[%c1_45, %c1_46, %c0_47] : memref<16x16x1152xf32, #tpu.memory_space<vmem>>, vector<15x15x128xf32>
    tpu.vector_store %arg16[%c1_45, %c1_46, %c0_47], %55 {strides = array<i32>} : memref<16x16x1152xf32, #tpu.memory_space<vmem>>, vector<15x15x128xf32>,
    %57 = vector.extract_strided_slice %54 {offsets = [0, 0, 0], sizes = [15, 16, 128], strides = [1, 1, 1]} : vector<16x16x128xf32> to vector<15x16x128xf32>
    %c1_48 = arith.constant 1 : index
    %c0_49 = arith.constant 0 : index
    %c128_50 = arith.constant 128 : index
    %58 = vector.load %arg16[%c1_48, %c0_49, %c128_50] : memref<16x16x1152xf32, #tpu.memory_space<vmem>>, vector<15x16x128xf32>
    tpu.vector_store %arg16[%c1_48, %c0_49, %c128_50], %57 {strides = array<i32>} : memref<16x16x1152xf32, #tpu.memory_space<vmem>>, vector<15x16x128xf32>,
    %59 = vector.extract_strided_slice %54 {offsets = [0, 1, 0], sizes = [15, 15, 128], strides = [1, 1, 1]} : vector<16x16x128xf32> to vector<15x15x128xf32>
    %c1_51 = arith.constant 1 : index
    %c0_52 = arith.constant 0 : index
    %c256_53 = arith.constant 256 : index
    %60 = vector.load %arg16[%c1_51, %c0_52, %c256_53] : memref<16x16x1152xf32, #tpu.memory_space<vmem>>, vector<15x15x128xf32>
    tpu.vector_store %arg16[%c1_51, %c0_52, %c256_53], %59 {strides = array<i32>} : memref<16x16x1152xf32, #tpu.memory_space<vmem>>, vector<15x15x128xf32>,
    %61 = vector.extract_strided_slice %54 {offsets = [0, 0, 0], sizes = [16, 15, 128], strides = [1, 1, 1]} : vector<16x16x128xf32> to vector<16x15x128xf32>
    %c0_54 = arith.constant 0 : index
    %c1_55 = arith.constant 1 : index
    %c384_56 = arith.constant 384 : index
    %62 = vector.load %arg16[%c0_54, %c1_55, %c384_56] : memref<16x16x1152xf32, #tpu.memory_space<vmem>>, vector<16x15x128xf32>
    tpu.vector_store %arg16[%c0_54, %c1_55, %c384_56], %61 {strides = array<i32>} : memref<16x16x1152xf32, #tpu.memory_space<vmem>>, vector<16x15x128xf32>,
    %c0_57 = arith.constant 0 : index
    %c0_58 = arith.constant 0 : index
    %c512_59 = arith.constant 512 : index
    %63 = vector.load %arg16[%c0_57, %c0_58, %c512_59] : memref<16x16x1152xf32, #tpu.memory_space<vmem>>, vector<16x16x128xf32>
    tpu.vector_store %arg16[%c0_57, %c0_58, %c512_59], %54 {strides = array<i32>} : memref<16x16x1152xf32, #tpu.memory_space<vmem>>, vector<16x16x128xf32>,
    %64 = vector.extract_strided_slice %54 {offsets = [0, 1, 0], sizes = [16, 15, 128], strides = [1, 1, 1]} : vector<16x16x128xf32> to vector<16x15x128xf32>
    %c0_60 = arith.constant 0 : index
    %c0_61 = arith.constant 0 : index
    %c640_62 = arith.constant 640 : index
    %65 = vector.load %arg16[%c0_60, %c0_61, %c640_62] : memref<16x16x1152xf32, #tpu.memory_space<vmem>>, vector<16x15x128xf32>
    tpu.vector_store %arg16[%c0_60, %c0_61, %c640_62], %64 {strides = array<i32>} : memref<16x16x1152xf32, #tpu.memory_space<vmem>>, vector<16x15x128xf32>,
    %66 = vector.extract_strided_slice %54 {offsets = [1, 0, 0], sizes = [15, 15, 128], strides = [1, 1, 1]} : vector<16x16x128xf32> to vector<15x15x128xf32>
    %c0_63 = arith.constant 0 : index
    %c1_64 = arith.constant 1 : index
    %c768_65 = arith.constant 768 : index
    %67 = vector.load %arg16[%c0_63, %c1_64, %c768_65] : memref<16x16x1152xf32, #tpu.memory_space<vmem>>, vector<15x15x128xf32>
    tpu.vector_store %arg16[%c0_63, %c1_64, %c768_65], %66 {strides = array<i32>} : memref<16x16x1152xf32, #tpu.memory_space<vmem>>, vector<15x15x128xf32>,
    %68 = vector.extract_strided_slice %54 {offsets = [1, 0, 0], sizes = [15, 16, 128], strides = [1, 1, 1]} : vector<16x16x128xf32> to vector<15x16x128xf32>
    %c0_66 = arith.constant 0 : index
    %c0_67 = arith.constant 0 : index
    %c896_68 = arith.constant 896 : index
    %69 = vector.load %arg16[%c0_66, %c0_67, %c896_68] : memref<16x16x1152xf32, #tpu.memory_space<vmem>>, vector<15x16x128xf32>
    tpu.vector_store %arg16[%c0_66, %c0_67, %c896_68], %68 {strides = array<i32>} : memref<16x16x1152xf32, #tpu.memory_space<vmem>>, vector<15x16x128xf32>,
    %70 = vector.extract_strided_slice %54 {offsets = [1, 1, 0], sizes = [15, 15, 128], strides = [1, 1, 1]} : vector<16x16x128xf32> to vector<15x15x128xf32>
    %c0_69 = arith.constant 0 : index
    %c0_70 = arith.constant 0 : index
    %c1024_71 = arith.constant 1024 : index
    %71 = vector.load %arg16[%c0_69, %c0_70, %c1024_71] : memref<16x16x1152xf32, #tpu.memory_space<vmem>>, vector<15x15x128xf32>
    tpu.vector_store %arg16[%c0_69, %c0_70, %c1024_71], %70 {strides = array<i32>} : memref<16x16x1152xf32, #tpu.memory_space<vmem>>, vector<15x15x128xf32>,
    %c0_72 = arith.constant 0 : index
    %c0_73 = arith.constant 0 : index
    %c0_74 = arith.constant 0 : index
    %72 = vector.load %arg16[%c0_72, %c0_73, %c0_74] : memref<16x16x1152xf32, #tpu.memory_space<vmem>>, vector<16x16x1152xf32>
    %73 = vector.shape_cast %72 : vector<16x16x1152xf32> to vector<256x1152xf32>
    %c0_75 = arith.constant 0 : index
    %c0_76 = arith.constant 0 : index
    %74 = vector.load %arg8[%c0_75, %c0_76] : memref<1152x128xf32, #tpu.memory_space<vmem>>, vector<1152x128xf32>
    %cst_77 = arith.constant dense<0.000000e+00> : vector<256x128xf32>
    %75 = tpu.matmul %73, %74, %cst_77 {dimension_numbers = #tpu.dot_dimension_numbers<[1], [0], [0], [1], [0, 0, 1, 1], [], []>} : vector<256x1152xf32>, vector<1152x128xf32>, vector<256x128xf32> -> vector<256x128xf32>
    %c0_78 = arith.constant 0 : index
    %c0_79 = arith.constant 0 : index
    %76 = vector.load %arg9[%c0_78, %c0_79] : memref<1x128xf32, #tpu.memory_space<vmem>>, vector<1x128xf32>
    %77 = vector.broadcast %76 : vector<1x128xf32> to vector<256x128xf32>
    %78 = arith.mulf %75, %77 : vector<256x128xf32>
    %c0_80 = arith.constant 0 : index
    %c0_81 = arith.constant 0 : index
    %79 = vector.load %arg10[%c0_80, %c0_81] : memref<1x128xf32, #tpu.memory_space<vmem>>, vector<1x128xf32>
    %80 = vector.broadcast %79 : vector<1x128xf32> to vector<256x128xf32>
    %81 = arith.addf %78, %80 : vector<256x128xf32>
    %82 = arith.negf %81 : vector<256x128xf32>
    %83 = math.exp %82 : vector<256x128xf32>
    %cst_82 = arith.constant 1.000000e+00 : f32
    %84 = vector.broadcast %cst_82 : f32 to vector<256x128xf32>
    %85 = arith.addf %84, %83 : vector<256x128xf32>
    %86 = arith.divf %84, %85 : vector<256x128xf32>
    %87 = arith.mulf %81, %86 : vector<256x128xf32>
    %c0_83 = arith.constant 0 : index
    %c256_84 = arith.constant 256 : index
    %88 = vector.load %arg15[%c0_83, %c256_84] : memref<256x384xf32, #tpu.memory_space<vmem>>, vector<256x128xf32>
    tpu.vector_store %arg15[%c0_83, %c256_84], %87 {strides = array<i32>} : memref<256x384xf32, #tpu.memory_space<vmem>>, vector<256x128xf32>,
    %c0_85 = arith.constant 0 : index
    %c0_86 = arith.constant 0 : index
    %89 = vector.load %arg15[%c0_85, %c0_86] : memref<256x384xf32, #tpu.memory_space<vmem>>, vector<256x384xf32>
    %c0_87 = arith.constant 0 : index
    %c0_88 = arith.constant 0 : index
    %90 = vector.load %arg11[%c0_87, %c0_88] : memref<384x128xf32, #tpu.memory_space<vmem>>, vector<384x128xf32>
    %cst_89 = arith.constant dense<0.000000e+00> : vector<256x128xf32>
    %91 = tpu.matmul %89, %90, %cst_89 {dimension_numbers = #tpu.dot_dimension_numbers<[1], [0], [0], [1], [0, 0, 1, 1], [], []>} : vector<256x384xf32>, vector<384x128xf32>, vector<256x128xf32> -> vector<256x128xf32>
    %c0_90 = arith.constant 0 : index
    %c0_91 = arith.constant 0 : index
    %92 = vector.load %arg12[%c0_90, %c0_91] : memref<1x128xf32, #tpu.memory_space<vmem>>, vector<1x128xf32>
    %93 = vector.broadcast %92 : vector<1x128xf32> to vector<256x128xf32>
    %94 = arith.mulf %91, %93 : vector<256x128xf32>
    %c0_92 = arith.constant 0 : index
    %c0_93 = arith.constant 0 : index
    %95 = vector.load %arg13[%c0_92, %c0_93] : memref<1x128xf32, #tpu.memory_space<vmem>>, vector<1x128xf32>
    %96 = vector.broadcast %95 : vector<1x128xf32> to vector<256x128xf32>
    %97 = arith.addf %94, %96 : vector<256x128xf32>
    %98 = arith.negf %97 : vector<256x128xf32>
    %99 = math.exp %98 : vector<256x128xf32>
    %cst_94 = arith.constant 1.000000e+00 : f32
    %100 = vector.broadcast %cst_94 : f32 to vector<256x128xf32>
    %101 = arith.addf %100, %99 : vector<256x128xf32>
    %102 = arith.divf %100, %101 : vector<256x128xf32>
    %103 = arith.mulf %97, %102 : vector<256x128xf32>
    %104 = vector.shape_cast %103 : vector<256x128xf32> to vector<1x16x16x128xf32>
    %c0_95 = arith.constant 0 : index
    %c0_96 = arith.constant 0 : index
    %c0_97 = arith.constant 0 : index
    %c0_98 = arith.constant 0 : index
    %105 = vector.load %arg14[%c0_95, %c0_96, %c0_97, %c0_98] : memref<1x16x16x128xf32, #tpu.memory_space<vmem>>, vector<1x16x16x128xf32>
    tpu.vector_store %arg14[%c0_95, %c0_96, %c0_97, %c0_98], %104 {strides = array<i32>} : memref<1x16x16x128xf32, #tpu.memory_space<vmem>>, vector<1x16x16x128xf32>,
    return
  }
  func.func @transform_0(%arg0: i32) -> (i32, i32, i32, i32) {
    %c0_i32 = arith.constant 0 : i32
    %c0_i32_0 = arith.constant 0 : i32
    %c0_i32_1 = arith.constant 0 : i32
    %c0_i32_2 = arith.constant 0 : i32
    return %arg0, %c0_i32, %c0_i32_0, %c0_i32_1 : i32, i32, i32, i32
  }
  func.func @transform_1(%arg0: i32) -> (i32, i32) {
    %c0_i32 = arith.constant 0 : i32
    %c0_i32_0 = arith.constant 0 : i32
    %c0_i32_1 = arith.constant 0 : i32
    return %c0_i32, %c0_i32_0 : i32, i32
  }
  func.func @transform_2(%arg0: i32) -> (i32, i32) {
    %c0_i32 = arith.constant 0 : i32
    %c0_i32_0 = arith.constant 0 : i32
    %c0_i32_1 = arith.constant 0 : i32
    return %c0_i32, %c0_i32_0 : i32, i32
  }
  func.func @transform_3(%arg0: i32) -> (i32, i32) {
    %c0_i32 = arith.constant 0 : i32
    %c0_i32_0 = arith.constant 0 : i32
    %c0_i32_1 = arith.constant 0 : i32
    return %c0_i32, %c0_i32_0 : i32, i32
  }
  func.func @transform_4(%arg0: i32) -> (i32, i32) {
    %c0_i32 = arith.constant 0 : i32
    %c0_i32_0 = arith.constant 0 : i32
    %c0_i32_1 = arith.constant 0 : i32
    return %c0_i32, %c0_i32_0 : i32, i32
  }
  func.func @transform_5(%arg0: i32) -> (i32, i32) {
    %c0_i32 = arith.constant 0 : i32
    %c0_i32_0 = arith.constant 0 : i32
    %c0_i32_1 = arith.constant 0 : i32
    return %c0_i32, %c0_i32_0 : i32, i32
  }
  func.func @transform_6(%arg0: i32) -> (i32, i32) {
    %c0_i32 = arith.constant 0 : i32
    %c0_i32_0 = arith.constant 0 : i32
    %c0_i32_1 = arith.constant 0 : i32
    return %c0_i32, %c0_i32_0 : i32, i32
  }
  func.func @transform_7(%arg0: i32) -> (i32, i32) {
    %c0_i32 = arith.constant 0 : i32
    %c0_i32_0 = arith.constant 0 : i32
    %c0_i32_1 = arith.constant 0 : i32
    return %c0_i32, %c0_i32_0 : i32, i32
  }
  func.func @transform_8(%arg0: i32) -> (i32, i32) {
    %c0_i32 = arith.constant 0 : i32
    %c0_i32_0 = arith.constant 0 : i32
    %c0_i32_1 = arith.constant 0 : i32
    return %c0_i32, %c0_i32_0 : i32, i32
  }
  func.func @transform_9(%arg0: i32) -> (i32, i32) {
    %c0_i32 = arith.constant 0 : i32
    %c0_i32_0 = arith.constant 0 : i32
    %c0_i32_1 = arith.constant 0 : i32
    return %c0_i32, %c0_i32_0 : i32, i32
  }
  func.func @transform_10(%arg0: i32) -> (i32, i32) {
    %c0_i32 = arith.constant 0 : i32
    %c0_i32_0 = arith.constant 0 : i32
    %c0_i32_1 = arith.constant 0 : i32
    return %c0_i32, %c0_i32_0 : i32, i32
  }
  func.func @transform_11(%arg0: i32) -> (i32, i32) {
    %c0_i32 = arith.constant 0 : i32
    %c0_i32_0 = arith.constant 0 : i32
    %c0_i32_1 = arith.constant 0 : i32
    return %c0_i32, %c0_i32_0 : i32, i32
  }
  func.func @transform_12(%arg0: i32) -> (i32, i32) {
    %c0_i32 = arith.constant 0 : i32
    %c0_i32_0 = arith.constant 0 : i32
    %c0_i32_1 = arith.constant 0 : i32
    return %c0_i32, %c0_i32_0 : i32, i32
  }
  func.func @transform_13(%arg0: i32) -> (i32, i32, i32, i32) {
    %c0_i32 = arith.constant 0 : i32
    %c0_i32_0 = arith.constant 0 : i32
    %c0_i32_1 = arith.constant 0 : i32
    %c0_i32_2 = arith.constant 0 : i32
    return %arg0, %c0_i32, %c0_i32_0, %c0_i32_1 : i32, i32, i32, i32
  }
}

</mosaic_0001>

<llo_original>
// kernel: c2f_forward.1
$region0: #{c2f_forward.1}
  #allocation0 [shape = 'u32[]', space=smem, size = 0x4, offset = 0x4, fixed_abs, tag = 'smem constant byte address 0x4 - core index']
  #allocation1 [shape = 'u32[144,128]{1,0:T(1,128)}', space=vmem, size = 0x12000, scoped, tag = 'internal scratch']
  #allocation2 [shape = 'f32[256,384]{1,0:T(8,128)}', space=vmem, size = 0x60000, scoped, tag = 'scratch operand']
  #allocation3 [shape = 'f32[16,16,1152]{2,1,0:T(8,128)}', space=vmem, size = 0x120000, scoped, tag = 'scratch operand']
  %s0 = inlined_call_operand.vmem [shape: f32[2,16,16,4], index: 0, kind: input, shape index: {}]
  %s1 = inlined_call_operand.vmem [shape: f32[4,256], index: 1, kind: input, shape index: {}]
  %s2 = inlined_call_operand.vmem [shape: f32[1,256], index: 2, kind: input, shape index: {}]
  %s3 = inlined_call_operand.vmem [shape: f32[1,256], index: 3, kind: input, shape index: {}]
  %s4 = inlined_call_operand.hbm [shape: f32[1152,128], index: 4, kind: input, shape index: {}]
  %s5 = inlined_call_operand.vmem [shape: f32[1,128], index: 5, kind: input, shape index: {}]
  %s6 = inlined_call_operand.vmem [shape: f32[1,128], index: 6, kind: input, shape index: {}]
  %s7 = inlined_call_operand.hbm [shape: f32[1152,128], index: 7, kind: input, shape index: {}]
  %s8 = inlined_call_operand.vmem [shape: f32[1,128], index: 8, kind: input, shape index: {}]
  %s9 = inlined_call_operand.vmem [shape: f32[1,128], index: 9, kind: input, shape index: {}]
  %s10 = inlined_call_operand.vmem [shape: f32[384,128], index: 10, kind: input, shape index: {}]
  %s11 = inlined_call_operand.vmem [shape: f32[1,128], index: 11, kind: input, shape index: {}]
  %s12 = inlined_call_operand.vmem [shape: f32[1,128], index: 12, kind: input, shape index: {}]
  %s13 = inlined_call_operand.vmem [shape: f32[2,16,16,128], index: 13, kind: output, shape index: {}]
  %s14 = sld [smem:[#allocation0]]
  $region93: #{c2f_forward.1} parent=0
    _
  %s16 = ssub.s32 1, %s14
  %s17 = scalar_select 0, %s16, %s14
  $region1: #{c2f_forward.1} parent=0
    #allocation4 [shape = 'u8[589824]{0}', space=vmem, size = 0x90000, scoped, tag = 'input window, operand 4, single buffered']
    #allocation5 [shape = 's32[2]{0}', space=sflag, size = 0x8, scoped, tag = 'scoped memory for c2f_forward.1']
    #allocation6 [shape = 'u8[589824]{0}', space=vmem, size = 0x90000, scoped, tag = 'input window, operand 7, single buffered']
    #allocation7 [shape = 's32[1]{0}', space=sflag, size = 0x4, scoped, tag = 'scoped memory for c2f_forward.1']
    %18 = vsyncpa [#allocation5], 0
    %19 = vsyncpa [#allocation7], 0
    loop: start=0, step=1, limit=4
    $region2: #{c2f_forward.1} parent=1 // loop_pre_header
      _
    $region3: #{c2f_forward.1} parent=1 // loop_header
      %s21 = sphi 0, %s25
      %p22 = scmp.ge.s32.totalorder %s21, 4
      %s31 = sphi 0, %s33
      %s34 = sphi 0, %s31
      %s35 = sphi 0, %s34
      %s51 = sphi 0, %s35
      %s55 = sphi 0, %s55
      %s57 = sphi 0, %s55
      %s58 = sphi 0, %s57
      %s72 = sphi 0, %s58
      %s76 = sphi 0, %s76
      %s78 = sphi 0, %s76
      %s79 = sphi 0, %s78
      %s93 = sphi 0, %s79
      %s97 = sphi 0, %s97
      %s99 = sphi 0, %s97
      %s100 = sphi 0, %s99
      %s114 = sphi 0, %s100
      %s118 = sphi 0, %s118
      %s120 = sphi 0, %s118
      %s121 = sphi 0, %s120
      %s135 = sphi 0, %s121
      %s139 = sphi 0, %s139
      %s141 = sphi 0, %s139
      %s142 = sphi 0, %s141
      %s156 = sphi 0, %s142
      %s160 = sphi 0, %s160
      %s162 = sphi 0, %s160
      %s163 = sphi 0, %s162
      %s177 = sphi 0, %s163
      %s181 = sphi 0, %s181
      %s183 = sphi 0, %s181
      %s184 = sphi 0, %s183
      %s198 = sphi 0, %s184
      %s202 = sphi 0, %s202
      %s204 = sphi 0, %s202
      %s205 = sphi 0, %s204
      %s219 = sphi 0, %s205
      %s223 = sphi 0, %s223
      %s225 = sphi 0, %s223
      %s226 = sphi 0, %s225
      %s240 = sphi 0, %s226
      %s244 = sphi 0, %s244
      %s246 = sphi 0, %s244
      %s247 = sphi 0, %s246
      %s261 = sphi 0, %s247
      %s265 = sphi 0, %s265
      %s267 = sphi 0, %s265
      %s268 = sphi 0, %s267
      %s282 = sphi 0, %s268
      %s286 = sphi 0, %s286
      %s288 = sphi 0, %s286
      %s289 = sphi 0, %s288
      %s303 = sphi 0, %s289
      %s309 = sphi 0, %s311
      %s312 = sphi 0, %s309
      %s313 = sphi 0, %s312
      %s329 = sphi 0, %s313
    $region4: #{c2f_forward.1} parent=1 // loop_header_branch
      %24 = sbr.rel (%p22) target = $region8
    $region5: #{c2f_forward.1} parent=1 // loop_body
      %s26 = ssub.s32 %s21, 1
      %s27 = ssub.s32 %s21, 2
      %s28 = sadd.s32 %s21, 1
      %s29 = ssub.s32 %s21, %s28
      %p30 = scmp.eq.s32.totalorder %s29, 0
      %s32 = sadd.s32 %s31, 1
      %s33 = scalar_select %p30, %s31, %s32
      %p36 = pneg %p30
      %p37 = scmp.eq.s32.totalorder %s21, 1
      %p38 = por %p36, %p37
      %p39 = scmp.ne.s32.totalorder %s31, %s34
      %p40 = scmp.eq.s32.totalorder %s21, 0
      %p41 = por %p39, %p40
      %p42 = scmp.ne.s32.totalorder %s31, %s34
      %p43 = scmp.eq.s32.totalorder %s26, 1
      %p44 = por %p42, %p43
      %p45 = scmp.ne.s32.totalorder %s34, %s35
      %p46 = scmp.eq.s32.totalorder %s26, 0
      %p47 = por %p45, %p46
      %p48 = scmp.ne.s32.totalorder %s34, %s35
      %p49 = scmp.eq.s32.totalorder %s27, 1
      %p50 = por %p48, %p49
      %p52 = scmp.ne.s32.totalorder %s35, %s51
      %p53 = scmp.eq.s32.totalorder %s27, 0
      %p54 = por %p52, %p53
      %s56 = sadd.s32 %s55, 1
      %p59 = scmp.eq.s32.totalorder %s21, 1
      %p60 = scmp.ne.s32.totalorder %s55, %s57
      %p61 = scmp.eq.s32.totalorder %s21, 0
      %p62 = por %p60, %p61
      %p63 = scmp.ne.s32.totalorder %s55, %s57
      %p64 = scmp.eq.s32.totalorder %s26, 1
      %p65 = por %p63, %p64
      %p66 = scmp.ne.s32.totalorder %s57, %s58
      %p67 = scmp.eq.s32.totalorder %s26, 0
      %p68 = por %p66, %p67
      %p69 = scmp.ne.s32.totalorder %s57, %s58
      %p70 = scmp.eq.s32.totalorder %s27, 1
      %p71 = por %p69, %p70
      %p73 = scmp.ne.s32.totalorder %s58, %s72
      %p74 = scmp.eq.s32.totalorder %s27, 0
      %p75 = por %p73, %p74
      %s77 = sadd.s32 %s76, 1
      %p80 = scmp.eq.s32.totalorder %s21, 1
      %p81 = scmp.ne.s32.totalorder %s76, %s78
      %p82 = scmp.eq.s32.totalorder %s21, 0
      %p83 = por %p81, %p82
      %p84 = scmp.ne.s32.totalorder %s76, %s78
      %p85 = scmp.eq.s32.totalorder %s26, 1
      %p86 = por %p84, %p85
      %p87 = scmp.ne.s32.totalorder %s78, %s79
      %p88 = scmp.eq.s32.totalorder %s26, 0
      %p89 = por %p87, %p88
      %p90 = scmp.ne.s32.totalorder %s78, %s79
      %p91 = scmp.eq.s32.totalorder %s27, 1
      %p92 = por %p90, %p91
      %p94 = scmp.ne.s32.totalorder %s79, %s93
      %p95 = scmp.eq.s32.totalorder %s27, 0
      %p96 = por %p94, %p95
      %s98 = sadd.s32 %s97, 1
      %p101 = scmp.eq.s32.totalorder %s21, 1
      %p102 = scmp.ne.s32.totalorder %s97, %s99
      %p103 = scmp.eq.s32.totalorder %s21, 0
      %p104 = por %p102, %p103
      %p105 = scmp.ne.s32.totalorder %s97, %s99
      %p106 = scmp.eq.s32.totalorder %s26, 1
      %p107 = por %p105, %p106
      %p108 = scmp.ne.s32.totalorder %s99, %s100
      %p109 = scmp.eq.s32.totalorder %s26, 0
      %p110 = por %p108, %p109
      %p111 = scmp.ne.s32.totalorder %s99, %s100
      %p112 = scmp.eq.s32.totalorder %s27, 1
      %p113 = por %p111, %p112
      %p115 = scmp.ne.s32.totalorder %s100, %s114
      %p116 = scmp.eq.s32.totalorder %s27, 0
      %p117 = por %p115, %p116
      %s119 = sadd.s32 %s118, 1
      %p122 = scmp.eq.s32.totalorder %s21, 1
      %p123 = scmp.ne.s32.totalorder %s118, %s120
      %p124 = scmp.eq.s32.totalorder %s21, 0
      %p125 = por %p123, %p124
      %p126 = scmp.ne.s32.totalorder %s118, %s120
      %p127 = scmp.eq.s32.totalorder %s26, 1
      %p128 = por %p126, %p127
      %p129 = scmp.ne.s32.totalorder %s120, %s121
      %p130 = scmp.eq.s32.totalorder %s26, 0
      %p131 = por %p129, %p130
      %p132 = scmp.ne.s32.totalorder %s120, %s121
      %p133 = scmp.eq.s32.totalorder %s27, 1
      %p134 = por %p132, %p133
      %p136 = scmp.ne.s32.totalorder %s121, %s135
      %p137 = scmp.eq.s32.totalorder %s27, 0
      %p138 = por %p136, %p137
      %s140 = sadd.s32 %s139, 1
      %p143 = scmp.eq.s32.totalorder %s21, 1
      %p144 = scmp.ne.s32.totalorder %s139, %s141
      %p145 = scmp.eq.s32.totalorder %s21, 0
      %p146 = por %p144, %p145
      %p147 = scmp.ne.s32.totalorder %s139, %s141
      %p148 = scmp.eq.s32.totalorder %s26, 1
      %p149 = por %p147, %p148
      %p150 = scmp.ne.s32.totalorder %s141, %s142
      %p151 = scmp.eq.s32.totalorder %s26, 0
      %p152 = por %p150, %p151
      %p153 = scmp.ne.s32.totalorder %s141, %s142
      %p154 = scmp.eq.s32.totalorder %s27, 1
      %p155 = por %p153, %p154
      %p157 = scmp.ne.s32.totalorder %s142, %s156
      %p158 = scmp.eq.s32.totalorder %s27, 0
      %p159 = por %p157, %p158
      %s161 = sadd.s32 %s160, 1
      %p164 = scmp.eq.s32.totalorder %s21, 1
      %p165 = scmp.ne.s32.totalorder %s160, %s162
      %p166 = scmp.eq.s32.totalorder %s21, 0
      %p167 = por %p165, %p166
      %p168 = scmp.ne.s32.totalorder %s160, %s162
      %p169 = scmp.eq.s32.totalorder %s26, 1
      %p170 = por %p168, %p169
      %p171 = scmp.ne.s32.totalorder %s162, %s163
      %p172 = scmp.eq.s32.totalorder %s26, 0
      %p173 = por %p171, %p172
      %p174 = scmp.ne.s32.totalorder %s162, %s163
      %p175 = scmp.eq.s32.totalorder %s27, 1
      %p176 = por %p174, %p175
      %p178 = scmp.ne.s32.totalorder %s163, %s177
      %p179 = scmp.eq.s32.totalorder %s27, 0
      %p180 = por %p178, %p179
      %s182 = sadd.s32 %s181, 1
      %p185 = scmp.eq.s32.totalorder %s21, 1
      %p186 = scmp.ne.s32.totalorder %s181, %s183
      %p187 = scmp.eq.s32.totalorder %s21, 0
      %p188 = por %p186, %p187
      %p189 = scmp.ne.s32.totalorder %s181, %s183
      %p190 = scmp.eq.s32.totalorder %s26, 1
      %p191 = por %p189, %p190
      %p192 = scmp.ne.s32.totalorder %s183, %s184
      %p193 = scmp.eq.s32.totalorder %s26, 0
      %p194 = por %p192, %p193
      %p195 = scmp.ne.s32.totalorder %s183, %s184
      %p196 = scmp.eq.s32.totalorder %s27, 1
      %p197 = por %p195, %p196
      %p199 = scmp.ne.s32.totalorder %s184, %s198
      %p200 = scmp.eq.s32.totalorder %s27, 0
      %p201 = por %p199, %p200
      %s203 = sadd.s32 %s202, 1
      %p206 = scmp.eq.s32.totalorder %s21, 1
      %p207 = scmp.ne.s32.totalorder %s202, %s204
      %p208 = scmp.eq.s32.totalorder %s21, 0
      %p209 = por %p207, %p208
      %p210 = scmp.ne.s32.totalorder %s202, %s204
      %p211 = scmp.eq.s32.totalorder %s26, 1
      %p212 = por %p210, %p211
      %p213 = scmp.ne.s32.totalorder %s204, %s205
      %p214 = scmp.eq.s32.totalorder %s26, 0
      %p215 = por %p213, %p214
      %p216 = scmp.ne.s32.totalorder %s204, %s205
      %p217 = scmp.eq.s32.totalorder %s27, 1
      %p218 = por %p216, %p217
      %p220 = scmp.ne.s32.totalorder %s205, %s219
      %p221 = scmp.eq.s32.totalorder %s27, 0
      %p222 = por %p220, %p221
      %s224 = sadd.s32 %s223, 1
      %p227 = scmp.eq.s32.totalorder %s21, 1
      %p228 = scmp.ne.s32.totalorder %s223, %s225
      %p229 = scmp.eq.s32.totalorder %s21, 0
      %p230 = por %p228, %p229
      %p231 = scmp.ne.s32.totalorder %s223, %s225
      %p232 = scmp.eq.s32.totalorder %s26, 1
      %p233 = por %p231, %p232
      %p234 = scmp.ne.s32.totalorder %s225, %s226
      %p235 = scmp.eq.s32.totalorder %s26, 0
      %p236 = por %p234, %p235
      %p237 = scmp.ne.s32.totalorder %s225, %s226
      %p238 = scmp.eq.s32.totalorder %s27, 1
      %p239 = por %p237, %p238
      %p241 = scmp.ne.s32.totalorder %s226, %s240
      %p242 = scmp.eq.s32.totalorder %s27, 0
      %p243 = por %p241, %p242
      %s245 = sadd.s32 %s244, 1
      %p248 = scmp.eq.s32.totalorder %s21, 1
      %p249 = scmp.ne.s32.totalorder %s244, %s246
      %p250 = scmp.eq.s32.totalorder %s21, 0
      %p251 = por %p249, %p250
      %p252 = scmp.ne.s32.totalorder %s244, %s246
      %p253 = scmp.eq.s32.totalorder %s26, 1
      %p254 = por %p252, %p253
      %p255 = scmp.ne.s32.totalorder %s246, %s247
      %p256 = scmp.eq.s32.totalorder %s26, 0
      %p257 = por %p255, %p256
      %p258 = scmp.ne.s32.totalorder %s246, %s247
      %p259 = scmp.eq.s32.totalorder %s27, 1
      %p260 = por %p258, %p259
      %p262 = scmp.ne.s32.totalorder %s247, %s261
      %p263 = scmp.eq.s32.totalorder %s27, 0
      %p264 = por %p262, %p263
      %s266 = sadd.s32 %s265, 1
      %p269 = scmp.eq.s32.totalorder %s21, 1
      %p270 = scmp.ne.s32.totalorder %s265, %s267
      %p271 = scmp.eq.s32.totalorder %s21, 0
      %p272 = por %p270, %p271
      %p273 = scmp.ne.s32.totalorder %s265, %s267
      %p274 = scmp.eq.s32.totalorder %s26, 1
      %p275 = por %p273, %p274
      %p276 = scmp.ne.s32.totalorder %s267, %s268
      %p277 = scmp.eq.s32.totalorder %s26, 0
      %p278 = por %p276, %p277
      %p279 = scmp.ne.s32.totalorder %s267, %s268
      %p280 = scmp.eq.s32.totalorder %s27, 1
      %p281 = por %p279, %p280
      %p283 = scmp.ne.s32.totalorder %s268, %s282
      %p284 = scmp.eq.s32.totalorder %s27, 0
      %p285 = por %p283, %p284
      %s287 = sadd.s32 %s286, 1
      %p290 = scmp.eq.s32.totalorder %s21, 1
      %p291 = scmp.ne.s32.totalorder %s286, %s288
      %p292 = scmp.eq.s32.totalorder %s21, 0
      %p293 = por %p291, %p292
      %p294 = scmp.ne.s32.totalorder %s286, %s288
      %p295 = scmp.eq.s32.totalorder %s26, 1
      %p296 = por %p294, %p295
      %p297 = scmp.ne.s32.totalorder %s288, %s289
      %p298 = scmp.eq.s32.totalorder %s26, 0
      %p299 = por %p297, %p298
      %p300 = scmp.ne.s32.totalorder %s288, %s289
      %p301 = scmp.eq.s32.totalorder %s27, 1
      %p302 = por %p300, %p301
      %p304 = scmp.ne.s32.totalorder %s289, %s303
      %p305 = scmp.eq.s32.totalorder %s27, 0
      %p306 = por %p304, %p305
      %s307 = ssub.s32 %s21, %s28
      %p308 = scmp.eq.s32.totalorder %s307, 0
      %s310 = sadd.s32 %s309, 1
      %s311 = scalar_select %p308, %s309, %s310
      %p314 = pneg %p308
      %p315 = scmp.eq.s32.totalorder %s21, 1
      %p316 = por %p314, %p315
      %p317 = scmp.ne.s32.totalorder %s309, %s312
      %p318 = scmp.eq.s32.totalorder %s21, 0
      %p319 = por %p317, %p318
      %p320 = scmp.ne.s32.totalorder %s309, %s312
      %p321 = scmp.eq.s32.totalorder %s26, 1
      %p322 = por %p320, %p321
      %p323 = scmp.ne.s32.totalorder %s312, %s313
      %p324 = scmp.eq.s32.totalorder %s26, 0
      %p325 = por %p323, %p324
      %p326 = scmp.ne.s32.totalorder %s312, %s313
      %p327 = scmp.eq.s32.totalorder %s27, 1
      %p328 = por %p326, %p327
      %p330 = scmp.ne.s32.totalorder %s313, %s329
      %p331 = scmp.eq.s32.totalorder %s27, 0
      %p332 = por %p330, %p331
      %p333 = scmp.le.s32.totalorder 1, %s21
      %p334 = scmp.lt.s32.totalorder %s21, 3
      %p335 = pnand %p333, %p334
      %p336 = pneg %p335
      // Predicated region
      $region9: #{c2f_forward.1} parent=5 // pred_check
        _
      $region10: #{c2f_forward.1} parent=5 // pred_check_branch
        %338 = sbr.rel (%p335) target = $region12
      $region11: #{c2f_forward.1} parent=5 // pred_region
        %s339 = ssub.s32 %s21, 1
        // Predicated region
        $region13: #{c2f_forward.1} parent=11 // pred_check
          %p340 = pneg %p68
        $region14: #{c2f_forward.1} parent=11 // pred_check_branch
          %342 = sbr.rel (%p340) target = $region16
        $region15: #{c2f_forward.1} parent=11 // pred_region
          _
        $region16: #{c2f_forward.1} parent=11 // pred_fallthru
          _
        // Predicated region
        $region17: #{c2f_forward.1} parent=11 // pred_check
          %p343 = pneg %p89
        $region18: #{c2f_forward.1} parent=11 // pred_check_branch
          %345 = sbr.rel (%p343) target = $region20
        $region19: #{c2f_forward.1} parent=11 // pred_region
          _
        $region20: #{c2f_forward.1} parent=11 // pred_fallthru
          _
        // Predicated region
        $region21: #{c2f_forward.1} parent=11 // pred_check
          %p346 = pneg %p110
        $region22: #{c2f_forward.1} parent=11 // pred_check_branch
          %348 = sbr.rel (%p346) target = $region24
        $region23: #{c2f_forward.1} parent=11 // pred_region
          _
        $region24: #{c2f_forward.1} parent=11 // pred_fallthru
          _
        // Predicated region
        $region25: #{c2f_forward.1} parent=11 // pred_check
          %p349 = pneg %p131
        $region26: #{c2f_forward.1} parent=11 // pred_check_branch
          %351 = sbr.rel (%p349) target = $region28
        $region27: #{c2f_forward.1} parent=11 // pred_region
          %s353 = ssub.s32 18432, 18432
          %354 = vsyncadd [#allocation5], %s353
          %s355 = sshll.u32 [#allocation4], 4
          %s356 = int_to_ptr.vmem [resolvable:$true] %s355
          %361 = dma.hbm_to_vmem [thread:$0]  %s4, 18432, %s356, [#allocation5], 128, 128, 8
        $region28: #{c2f_forward.1} parent=11 // pred_fallthru
          _
        // Predicated region
        $region29: #{c2f_forward.1} parent=11 // pred_check
          %p362 = pneg %p152
        $region30: #{c2f_forward.1} parent=11 // pred_check_branch
          %364 = sbr.rel (%p362) target = $region32
        $region31: #{c2f_forward.1} parent=11 // pred_region
          _
        $region32: #{c2f_forward.1} parent=11 // pred_fallthru
          _
        // Predicated region
        $region33: #{c2f_forward.1} parent=11 // pred_check
          %p365 = pneg %p173
        $region34: #{c2f_forward.1} parent=11 // pred_check_branch
          %367 = sbr.rel (%p365) target = $region36
        $region35: #{c2f_forward.1} parent=11 // pred_region
          _
        $region36: #{c2f_forward.1} parent=11 // pred_fallthru
          _
        // Predicated region
        $region37: #{c2f_forward.1} parent=11 // pred_check
          %p368 = pneg %p194
        $region38: #{c2f_forward.1} parent=11 // pred_check_branch
          %370 = sbr.rel (%p368) target = $region40
        $region39: #{c2f_forward.1} parent=11 // pred_region
          %s372 = ssub.s32 18432, 18432
          %373 = vsyncadd [#allocation7], %s372
          %s374 = sshll.u32 [#allocation6], 4
          %s375 = int_to_ptr.vmem [resolvable:$true] %s374
          %380 = dma.hbm_to_vmem [thread:$0]  %s7, 18432, %s375, [#allocation7], 128, 128, 8
        $region40: #{c2f_forward.1} parent=11 // pred_fallthru
          _
        // Predicated region
        $region41: #{c2f_forward.1} parent=11 // pred_check
          %p381 = pneg %p215
        $region42: #{c2f_forward.1} parent=11 // pred_check_branch
          %383 = sbr.rel (%p381) target = $region44
        $region43: #{c2f_forward.1} parent=11 // pred_region
          _
        $region44: #{c2f_forward.1} parent=11 // pred_fallthru
          _
        // Predicated region
        $region45: #{c2f_forward.1} parent=11 // pred_check
          %p384 = pneg %p236
        $region46: #{c2f_forward.1} parent=11 // pred_check_branch
          %386 = sbr.rel (%p384) target = $region48
        $region47: #{c2f_forward.1} parent=11 // pred_region
          _
        $region48: #{c2f_forward.1} parent=11 // pred_fallthru
          _
        // Predicated region
        $region49: #{c2f_forward.1} parent=11 // pred_check
          %p387 = pneg %p257
        $region50: #{c2f_forward.1} parent=11 // pred_check_branch
          %389 = sbr.rel (%p387) target = $region52
        $region51: #{c2f_forward.1} parent=11 // pred_region
          _
        $region52: #{c2f_forward.1} parent=11 // pred_fallthru
          _
        // Predicated region
        $region53: #{c2f_forward.1} parent=11 // pred_check
          %p390 = pneg %p278
        $region54: #{c2f_forward.1} parent=11 // pred_check_branch
          %392 = sbr.rel (%p390) target = $region56
        $region55: #{c2f_forward.1} parent=11 // pred_region
          _
        $region56: #{c2f_forward.1} parent=11 // pred_fallthru
          _
        // Predicated region
        $region57: #{c2f_forward.1} parent=11 // pred_check
          %p393 = pneg %p299
        $region58: #{c2f_forward.1} parent=11 // pred_check_branch
          %395 = sbr.rel (%p393) target = $region60
        $region59: #{c2f_forward.1} parent=11 // pred_region
          _
        $region60: #{c2f_forward.1} parent=11 // pred_fallthru
          _
      $region12: #{c2f_forward.1} parent=5 // pred_fallthru
        _
      %p396 = scmp.lt.s32.totalorder %s21, 2
      // Predicated region
      $region61: #{c2f_forward.1} parent=5 // pred_check
        %p397 = pneg %p396
      $region62: #{c2f_forward.1} parent=5 // pred_check_branch
        %399 = sbr.rel (%p397) target = $region64
      $region63: #{c2f_forward.1} parent=5 // pred_region
        // Predicated region
        $region65: #{c2f_forward.1} parent=63 // pred_check
          %p400 = pneg %p41
        $region66: #{c2f_forward.1} parent=63 // pred_check_branch
          %402 = sbr.rel (%p400) target = $region68
        $region67: #{c2f_forward.1} parent=63 // pred_region
          %p403 = scmp.lt.s32.totalorder %s21, 1
          %s404 = scalar_select %p403, %s21, 1
          %s405 = smul.addr %s404, 32
          %s406 = smul.addr %s405, 8
          %s407 = scalar_lea.vmem %s0, %s406
        $region68: #{c2f_forward.1} parent=63 // pred_fallthru
          _
      $region64: #{c2f_forward.1} parent=5 // pred_fallthru
        _
      %p408 = scmp.le.s32.totalorder 1, %s21
      %p409 = scmp.lt.s32.totalorder %s21, 3
      %p410 = pnand %p408, %p409
      %p411 = pneg %p410
      // Predicated region
      $region69: #{c2f_forward.1} parent=5 // pred_check
        _
      $region70: #{c2f_forward.1} parent=5 // pred_check_branch
        %413 = sbr.rel (%p410) target = $region72
      $region71: #{c2f_forward.1} parent=5 // pred_region
        %s414 = ssub.s32 %s21, 1
        // Predicated region
        $region73: #{c2f_forward.1} parent=71 // pred_check
          %p415 = pneg %p131
        $region74: #{c2f_forward.1} parent=71 // pred_check_branch
          %417 = sbr.rel (%p415) target = $region76
        $region75: #{c2f_forward.1} parent=71 // pred_region
          %418 = dma.done [#allocation5], 18432
        $region76: #{c2f_forward.1} parent=71 // pred_fallthru
          _
        // Predicated region
        $region77: #{c2f_forward.1} parent=71 // pred_check
          %p419 = pneg %p194
        $region78: #{c2f_forward.1} parent=71 // pred_check_branch
          %421 = sbr.rel (%p419) target = $region80
        $region79: #{c2f_forward.1} parent=71 // pred_region
          %422 = dma.done [#allocation7], 18432
        $region80: #{c2f_forward.1} parent=71 // pred_fallthru
          _
        %p423 = scmp.lt.s32.totalorder %s26, 1
        %s424 = scalar_select %p423, %s26, 1
        %s425 = smul.addr %s424, 32
        %s426 = smul.addr %s425, 8
        %s427 = scalar_lea.vmem %s0, %s426
        %p428 = pneg %p47
        %p429 = pneg %p44
        %p430 = pneg %p68
        %p431 = pneg %p65
        %p432 = pneg %p89
        %p433 = pneg %p86
        %p434 = pneg %p110
        %p435 = pneg %p107
        %p436 = pneg %p131
        %p437 = pneg %p128
        %p438 = pneg %p152
        %p439 = pneg %p149
        %p440 = pneg %p173
        %p441 = pneg %p170
        %p442 = pneg %p194
        %p443 = pneg %p191
        %p444 = pneg %p215
        %p445 = pneg %p212
        %p446 = pneg %p236
        %p447 = pneg %p233
        %p448 = pneg %p257
        %p449 = pneg %p254
        %p450 = pneg %p278
        %p451 = pneg %p275
        %p452 = pneg %p299
        %p453 = pneg %p296
        %p454 = pneg %p325
        %p455 = pneg %p322
        %p456 = scmp.lt.s32.totalorder %s26, 1
        %s457 = scalar_select %p456, %s26, 1
        %s458 = smul.addr %s457, 32
        %s459 = smul.addr %s458, 8
        %s460 = scalar_lea.vmem %s13, %s459
        %p461 = scmp.lt.s32.totalorder %s26, 1
        %s462 = scalar_select %p461, %s26, 1
        %s463 = smul.addr %s462, 32
        %s464 = smul.addr %s463, 8
        %s465 = scalar_lea.vmem %s0, %s464
        %p466 = scmp.lt.s32.totalorder %s26, 1
        %s467 = scalar_select %p466, %s26, 1
        %s468 = smul.addr %s467, 32
        %s469 = smul.addr %s468, 8
        %s470 = scalar_lea.vmem %s13, %s469
        %471 = vst [vmem:[#allocation3] sm:$0xff] 0.0
        %472 = vst [vmem:[#allocation3 + $0x8] sm:$0xff] 0.0
        %473 = vst [vmem:[#allocation3 + $0x10] sm:$0xff] 0.0
        %474 = vst [vmem:[#allocation3 + $0x18] sm:$0xff] 0.0
        %475 = vst [vmem:[#allocation3 + $0x20] sm:$0xff] 0.0
        %476 = vst [vmem:[#allocation3 + $0x28] sm:$0xff] 0.0
        %477 = vst [vmem:[#allocation3 + $0x30] sm:$0xff] 0.0
        %478 = vst [vmem:[#allocation3 + $0x38] sm:$0xff] 0.0
        %479 = vst [vmem:[#allocation3 + $0x40] sm:$0xff] 0.0
        %480 = vst [vmem:[#allocation3 + $0x48] sm:$0xff] 0.0
        %481 = vst [vmem:[#allocation3 + $0x50] sm:$0xff] 0.0
        %482 = vst [vmem:[#allocation3 + $0x58] sm:$0xff] 0.0
        %483 = vst [vmem:[#allocation3 + $0x60] sm:$0xff] 0.0
        %484 = vst [vmem:[#allocation3 + $0x68] sm:$0xff] 0.0
        %485 = vst [vmem:[#allocation3 + $0x70] sm:$0xff] 0.0
        %486 = vst [vmem:[#allocation3 + $0x78] sm:$0xff] 0.0
        %487 = vst [vmem:[#allocation3 + $0x80] sm:$0xff] 0.0
        %488 = vst [vmem:[#allocation3 + $0x88] sm:$0xff] 0.0
        %489 = vst [vmem:[#allocation3 + $0x90] sm:$0xff] 0.0
        %490 = vst [vmem:[#allocation3 + $0x98] sm:$0xff] 0.0
        %491 = vst [vmem:[#allocation3 + $0xa0] sm:$0xff] 0.0
        %492 = vst [vmem:[#allocation3 + $0xa8] sm:$0xff] 0.0
        %493 = vst [vmem:[#allocation3 + $0xb0] sm:$0xff] 0.0
        %494 = vst [vmem:[#allocation3 + $0xb8] sm:$0xff] 0.0
        %495 = vst [vmem:[#allocation3 + $0xc0] sm:$0xff] 0.0
        %496 = vst [vmem:[#allocation3 + $0xc8] sm:$0xff] 0.0
        %497 = vst [vmem:[#allocation3 + $0xd0] sm:$0xff] 0.0
        %498 = vst [vmem:[#allocation3 + $0xd8] sm:$0xff] 0.0
        %499 = vst [vmem:[#allocation3 + $0xe0] sm:$0xff] 0.0
        %500 = vst [vmem:[#allocation3 + $0xe8] sm:$0xff] 0.0
        %501 = vst [vmem:[#allocation3 + $0xf0] sm:$0xff] 0.0
        %502 = vst [vmem:[#allocation3 + $0xf8] sm:$0xff] 0.0
        %503 = vst [vmem:[#allocation3 + $0x100] sm:$0xff] 0.0
        %504 = vst [vmem:[#allocation3 + $0x108] sm:$0xff] 0.0
        %505 = vst [vmem:[#allocation3 + $0x110] sm:$0xff] 0.0
        %506 = vst [vmem:[#allocation3 + $0x118] sm:$0xff] 0.0
        %507 = vst [vmem:[#allocation3 + $0x120] sm:$0xff] 0.0
        %508 = vst [vmem:[#allocation3 + $0x128] sm:$0xff] 0.0
        %509 = vst [vmem:[#allocation3 + $0x130] sm:$0xff] 0.0
        %510 = vst [vmem:[#allocation3 + $0x138] sm:$0xff] 0.0
        %511 = vst [vmem:[#allocation3 + $0x140] sm:$0xff] 0.0
        %512 = vst [vmem:[#allocation3 + $0x148] sm:$0xff] 0.0
        %513 = vst [vmem:[#allocation3 + $0x150] sm:$0xff] 0.0
        %514 = vst [vmem:[#allocation3 + $0x158] sm:$0xff] 0.0
        %515 = vst [vmem:[#allocation3 + $0x160] sm:$0xff] 0.0
        %516 = vst [vmem:[#allocation3 + $0x168] sm:$0xff] 0.0
        %517 = vst [vmem:[#allocation3 + $0x170] sm:$0xff] 0.0
        %518 = vst [vmem:[#allocation3 + $0x178] sm:$0xff] 0.0
        %519 = vst [vmem:[#allocation3 + $0x180] sm:$0xff] 0.0
        %520 = vst [vmem:[#allocation3 + $0x188] sm:$0xff] 0.0
        %521 = vst [vmem:[#allocation3 + $0x190] sm:$0xff] 0.0
        %522 = vst [vmem:[#allocation3 + $0x198] sm:$0xff] 0.0
        %523 = vst [vmem:[#allocation3 + $0x1a0] sm:$0xff] 0.0
        %524 = vst [vmem:[#allocation3 + $0x1a8] sm:$0xff] 0.0
        %525 = vst [vmem:[#allocation3 + $0x1b0] sm:$0xff] 0.0
        %526 = vst [vmem:[#allocation3 + $0x1b8] sm:$0xff] 0.0
        %527 = vst [vmem:[#allocation3 + $0x1c0] sm:$0xff] 0.0
        %528 = vst [vmem:[#allocation3 + $0x1c8] sm:$0xff] 0.0
        %529 = vst [vmem:[#allocation3 + $0x1d0] sm:$0xff] 0.0
        %530 = vst [vmem:[#allocation3 + $0x1d8] sm:$0xff] 0.0
        %531 = vst [vmem:[#allocation3 + $0x1e0] sm:$0xff] 0.0
        %532 = vst [vmem:[#allocation3 + $0x1e8] sm:$0xff] 0.0
        %533 = vst [vmem:[#allocation3 + $0x1f0] sm:$0xff] 0.0
        %534 = vst [vmem:[#allocation3 + $0x1f8] sm:$0xff] 0.0
        %535 = vst [vmem:[#allocation3 + $0x200] sm:$0xff] 0.0
        %536 = vst [vmem:[#allocation3 + $0x208] sm:$0xff] 0.0
        %537 = vst [vmem:[#allocation3 + $0x210] sm:$0xff] 0.0
        %538 = vst [vmem:[#allocation3 + $0x218] sm:$0xff] 0.0
        %539 = vst [vmem:[#allocation3 + $0x220] sm:$0xff] 0.0
        %540 = vst [vmem:[#allocation3 + $0x228] sm:$0xff] 0.0
        %541 = vst [vmem:[#allocation3 + $0x230] sm:$0xff] 0.0
        %542 = vst [vmem:[#allocation3 + $0x238] sm:$0xff] 0.0
        %543 = vst [vmem:[#allocation3 + $0x240] sm:$0xff] 0.0
        %544 = vst [vmem:[#allocation3 + $0x248] sm:$0xff] 0.0
        %545 = vst [vmem:[#allocation3 + $0x250] sm:$0xff] 0.0
        %546 = vst [vmem:[#allocation3 + $0x258] sm:$0xff] 0.0
        %547 = vst [vmem:[#allocation3 + $0x260] sm:$0xff] 0.0
        %548 = vst [vmem:[#allocation3 + $0x268] sm:$0xff] 0.0
        %549 = vst [vmem:[#allocation3 + $0x270] sm:$0xff] 0.0
        %550 = vst [vmem:[#allocation3 + $0x278] sm:$0xff] 0.0
        %551 = vst [vmem:[#allocation3 + $0x280] sm:$0xff] 0.0
        %552 = vst [vmem:[#allocation3 + $0x288] sm:$0xff] 0.0
        %553 = vst [vmem:[#allocation3 + $0x290] sm:$0xff] 0.0
        %554 = vst [vmem:[#allocation3 + $0x298] sm:$0xff] 0.0
        %555 = vst [vmem:[#allocation3 + $0x2a0] sm:$0xff] 0.0
        %556 = vst [vmem:[#allocation3 + $0x2a8] sm:$0xff] 0.0
        %557 = vst [vmem:[#allocation3 + $0x2b0] sm:$0xff] 0.0
        %558 = vst [vmem:[#allocation3 + $0x2b8] sm:$0xff] 0.0
        %559 = vst [vmem:[#allocation3 + $0x2c0] sm:$0xff] 0.0
        %560 = vst [vmem:[#allocation3 + $0x2c8] sm:$0xff] 0.0
        %561 = vst [vmem:[#allocation3 + $0x2d0] sm:$0xff] 0.0
        %562 = vst [vmem:[#allocation3 + $0x2d8] sm:$0xff] 0.0
        %563 = vst [vmem:[#allocation3 + $0x2e0] sm:$0xff] 0.0
        %564 = vst [vmem:[#allocation3 + $0x2e8] sm:$0xff] 0.0
        %565 = vst [vmem:[#allocation3 + $0x2f0] sm:$0xff] 0.0
        %566 = vst [vmem:[#allocation3 + $0x2f8] sm:$0xff] 0.0
        %567 = vst [vmem:[#allocation3 + $0x300] sm:$0xff] 0.0
        %568 = vst [vmem:[#allocation3 + $0x308] sm:$0xff] 0.0
        %569 = vst [vmem:[#allocation3 + $0x310] sm:$0xff] 0.0
        %570 = vst [vmem:[#allocation3 + $0x318] sm:$0xff] 0.0
        %571 = vst [vmem:[#allocation3 + $0x320] sm:$0xff] 0.0
        %572 = vst [vmem:[#allocation3 + $0x328] sm:$0xff] 0.0
        %573 = vst [vmem:[#allocation3 + $0x330] sm:$0xff] 0.0
        %574 = vst [vmem:[#allocation3 + $0x338] sm:$0xff] 0.0
        %575 = vst [vmem:[#allocation3 + $0x340] sm:$0xff] 0.0
        %576 = vst [vmem:[#allocation3 + $0x348] sm:$0xff] 0.0
        %577 = vst [vmem:[#allocation3 + $0x350] sm:$0xff] 0.0
        %578 = vst [vmem:[#allocation3 + $0x358] sm:$0xff] 0.0
        %579 = vst [vmem:[#allocation3 + $0x360] sm:$0xff] 0.0
        %580 = vst [vmem:[#allocation3 + $0x368] sm:$0xff] 0.0
        %581 = vst [vmem:[#allocation3 + $0x370] sm:$0xff] 0.0
        %582 = vst [vmem:[#allocation3 + $0x378] sm:$0xff] 0.0
        %583 = vst [vmem:[#allocation3 + $0x380] sm:$0xff] 0.0
        %584 = vst [vmem:[#allocation3 + $0x388] sm:$0xff] 0.0
        %585 = vst [vmem:[#allocation3 + $0x390] sm:$0xff] 0.0
        %586 = vst [vmem:[#allocation3 + $0x398] sm:$0xff] 0.0
        %587 = vst [vmem:[#allocation3 + $0x3a0] sm:$0xff] 0.0
        %588 = vst [vmem:[#allocation3 + $0x3a8] sm:$0xff] 0.0
        %589 = vst [vmem:[#allocation3 + $0x3b0] sm:$0xff] 0.0
        %590 = vst [vmem:[#allocation3 + $0x3b8] sm:$0xff] 0.0
        %591 = vst [vmem:[#allocation3 + $0x3c0] sm:$0xff] 0.0
        %592 = vst [vmem:[#allocation3 + $0x3c8] sm:$0xff] 0.0
        %593 = vst [vmem:[#allocation3 + $0x3d0] sm:$0xff] 0.0
        %594 = vst [vmem:[#allocation3 + $0x3d8] sm:$0xff] 0.0
        %595 = vst [vmem:[#allocation3 + $0x3e0] sm:$0xff] 0.0
        %596 = vst [vmem:[#allocation3 + $0x3e8] sm:$0xff] 0.0
        %597 = vst [vmem:[#allocation3 + $0x3f0] sm:$0xff] 0.0
        %598 = vst [vmem:[#allocation3 + $0x3f8] sm:$0xff] 0.0
        %599 = vst [vmem:[#allocation3 + $0x400] sm:$0xff] 0.0
        %600 = vst [vmem:[#allocation3 + $0x408] sm:$0xff] 0.0
        %601 = vst [vmem:[#allocation3 + $0x410] sm:$0xff] 0.0
        %602 = vst [vmem:[#allocation3 + $0x418] sm:$0xff] 0.0
        %603 = vst [vmem:[#allocation3 + $0x420] sm:$0xff] 0.0
        %604 = vst [vmem:[#allocation3 + $0x428] sm:$0xff] 0.0
        %605 = vst [vmem:[#allocation3 + $0x430] sm:$0xff] 0.0
        %606 = vst [vmem:[#allocation3 + $0x438] sm:$0xff] 0.0
        %607 = vst [vmem:[#allocation3 + $0x440] sm:$0xff] 0.0
        %608 = vst [vmem:[#allocation3 + $0x448] sm:$0xff] 0.0
        %609 = vst [vmem:[#allocation3 + $0x450] sm:$0xff] 0.0
        %610 = vst [vmem:[#allocation3 + $0x458] sm:$0xff] 0.0
        %611 = vst [vmem:[#allocation3 + $0x460] sm:$0xff] 0.0
        %612 = vst [vmem:[#allocation3 + $0x468] sm:$0xff] 0.0
        %613 = vst [vmem:[#allocation3 + $0x470] sm:$0xff] 0.0
        %614 = vst [vmem:[#allocation3 + $0x478] sm:$0xff] 0.0
        %615 = vst [vmem:[#allocation3 + $0x480] sm:$0xff] 0.0
        %616 = vst [vmem:[#allocation3 + $0x488] sm:$0xff] 0.0
        %617 = vst [vmem:[#allocation3 + $0x490] sm:$0xff] 0.0
        %618 = vst [vmem:[#allocation3 + $0x498] sm:$0xff] 0.0
        %619 = vst [vmem:[#allocation3 + $0x4a0] sm:$0xff] 0.0
        %620 = vst [vmem:[#allocation3 + $0x4a8] sm:$0xff] 0.0
        %621 = vst [vmem:[#allocation3 + $0x4b0] sm:$0xff] 0.0
        %622 = vst [vmem:[#allocation3 + $0x4b8] sm:$0xff] 0.0
        %623 = vst [vmem:[#allocation3 + $0x4c0] sm:$0xff] 0.0
        %624 = vst [vmem:[#allocation3 + $0x4c8] sm:$0xff] 0.0
        %625 = vst [vmem:[#allocation3 + $0x4d0] sm:$0xff] 0.0
        %626 = vst [vmem:[#allocation3 + $0x4d8] sm:$0xff] 0.0
        %627 = vst [vmem:[#allocation3 + $0x4e0] sm:$0xff] 0.0
        %628 = vst [vmem:[#allocation3 + $0x4e8] sm:$0xff] 0.0
        %629 = vst [vmem:[#allocation3 + $0x4f0] sm:$0xff] 0.0
        %630 = vst [vmem:[#allocation3 + $0x4f8] sm:$0xff] 0.0
        %631 = vst [vmem:[#allocation3 + $0x500] sm:$0xff] 0.0
        %632 = vst [vmem:[#allocation3 + $0x508] sm:$0xff] 0.0
        %633 = vst [vmem:[#allocation3 + $0x510] sm:$0xff] 0.0
        %634 = vst [vmem:[#allocation3 + $0x518] sm:$0xff] 0.0
        %635 = vst [vmem:[#allocation3 + $0x520] sm:$0xff] 0.0
        %636 = vst [vmem:[#allocation3 + $0x528] sm:$0xff] 0.0
        %637 = vst [vmem:[#allocation3 + $0x530] sm:$0xff] 0.0
        %638 = vst [vmem:[#allocation3 + $0x538] sm:$0xff] 0.0
        %639 = vst [vmem:[#allocation3 + $0x540] sm:$0xff] 0.0
        %640 = vst [vmem:[#allocation3 + $0x548] sm:$0xff] 0.0
        %641 = vst [vmem:[#allocation3 + $0x550] sm:$0xff] 0.0
        %642 = vst [vmem:[#allocation3 + $0x558] sm:$0xff] 0.0
        %643 = vst [vmem:[#allocation3 + $0x560] sm:$0xff] 0.0
        %644 = vst [vmem:[#allocation3 + $0x568] sm:$0xff] 0.0
        %645 = vst [vmem:[#allocation3 + $0x570] sm:$0xff] 0.0
        %646 = vst [vmem:[#allocation3 + $0x578] sm:$0xff] 0.0
        %647 = vst [vmem:[#allocation3 + $0x580] sm:$0xff] 0.0
        %648 = vst [vmem:[#allocation3 + $0x588] sm:$0xff] 0.0
        %649 = vst [vmem:[#allocation3 + $0x590] sm:$0xff] 0.0
        %650 = vst [vmem:[#allocation3 + $0x598] sm:$0xff] 0.0
        %651 = vst [vmem:[#allocation3 + $0x5a0] sm:$0xff] 0.0
        %652 = vst [vmem:[#allocation3 + $0x5a8] sm:$0xff] 0.0
        %653 = vst [vmem:[#allocation3 + $0x5b0] sm:$0xff] 0.0
        %654 = vst [vmem:[#allocation3 + $0x5b8] sm:$0xff] 0.0
        %655 = vst [vmem:[#allocation3 + $0x5c0] sm:$0xff] 0.0
        %656 = vst [vmem:[#allocation3 + $0x5c8] sm:$0xff] 0.0
        %657 = vst [vmem:[#allocation3 + $0x5d0] sm:$0xff] 0.0
        %658 = vst [vmem:[#allocation3 + $0x5d8] sm:$0xff] 0.0
        %659 = vst [vmem:[#allocation3 + $0x5e0] sm:$0xff] 0.0
        %660 = vst [vmem:[#allocation3 + $0x5e8] sm:$0xff] 0.0
        %661 = vst [vmem:[#allocation3 + $0x5f0] sm:$0xff] 0.0
        %662 = vst [vmem:[#allocation3 + $0x5f8] sm:$0xff] 0.0
        %663 = vst [vmem:[#allocation3 + $0x600] sm:$0xff] 0.0
        %664 = vst [vmem:[#allocation3 + $0x608] sm:$0xff] 0.0
        %665 = vst [vmem:[#allocation3 + $0x610] sm:$0xff] 0.0
        %666 = vst [vmem:[#allocation3 + $0x618] sm:$0xff] 0.0
        %667 = vst [vmem:[#allocation3 + $0x620] sm:$0xff] 0.0
        %668 = vst [vmem:[#allocation3 + $0x628] sm:$0xff] 0.0
        %669 = vst [vmem:[#allocation3 + $0x630] sm:$0xff] 0.0
        %670 = vst [vmem:[#allocation3 + $0x638] sm:$0xff] 0.0
        %671 = vst [vmem:[#allocation3 + $0x640] sm:$0xff] 0.0
        %672 = vst [vmem:[#allocation3 + $0x648] sm:$0xff] 0.0
        %673 = vst [vmem:[#allocation3 + $0x650] sm:$0xff] 0.0
        %674 = vst [vmem:[#allocation3 + $0x658] sm:$0xff] 0.0
        %675 = vst [vmem:[#allocation3 + $0x660] sm:$0xff] 0.0
        %676 = vst [vmem:[#allocation3 + $0x668] sm:$0xff] 0.0
        %677 = vst [vmem:[#allocation3 + $0x670] sm:$0xff] 0.0
        %678 = vst [vmem:[#allocation3 + $0x678] sm:$0xff] 0.0
        %679 = vst [vmem:[#allocation3 + $0x680] sm:$0xff] 0.0
        %680 = vst [vmem:[#allocation3 + $0x688] sm:$0xff] 0.0
        %681 = vst [vmem:[#allocation3 + $0x690] sm:$0xff] 0.0
        %682 = vst [vmem:[#allocation3 + $0x698] sm:$0xff] 0.0
        %683 = vst [vmem:[#allocation3 + $0x6a0] sm:$0xff] 0.0
        %684 = vst [vmem:[#allocation3 + $0x6a8] sm:$0xff] 0.0
        %685 = vst [vmem:[#allocation3 + $0x6b0] sm:$0xff] 0.0
        %686 = vst [vmem:[#allocation3 + $0x6b8] sm:$0xff] 0.0
        %687 = vst [vmem:[#allocation3 + $0x6c0] sm:$0xff] 0.0
        %688 = vst [vmem:[#allocation3 + $0x6c8] sm:$0xff] 0.0
        %689 = vst [vmem:[#allocation3 + $0x6d0] sm:$0xff] 0.0
        %690 = vst [vmem:[#allocation3 + $0x6d8] sm:$0xff] 0.0
        %691 = vst [vmem:[#allocation3 + $0x6e0] sm:$0xff] 0.0
        %692 = vst [vmem:[#allocation3 + $0x6e8] sm:$0xff] 0.0
        %693 = vst [vmem:[#allocation3 + $0x6f0] sm:$0xff] 0.0
        %694 = vst [vmem:[#allocation3 + $0x6f8] sm:$0xff] 0.0
        %695 = vst [vmem:[#allocation3 + $0x700] sm:$0xff] 0.0
        %696 = vst [vmem:[#allocation3 + $0x708] sm:$0xff] 0.0
        %697 = vst [vmem:[#allocation3 + $0x710] sm:$0xff] 0.0
        %698 = vst [vmem:[#allocation3 + $0x718] sm:$0xff] 0.0
        %699 = vst [vmem:[#allocation3 + $0x720] sm:$0xff] 0.0
        %700 = vst [vmem:[#allocation3 + $0x728] sm:$0xff] 0.0
        %701 = vst [vmem:[#allocation3 + $0x730] sm:$0xff] 0.0
        %702 = vst [vmem:[#allocation3 + $0x738] sm:$0xff] 0.0
        %703 = vst [vmem:[#allocation3 + $0x740] sm:$0xff] 0.0
        %704 = vst [vmem:[#allocation3 + $0x748] sm:$0xff] 0.0
        %705 = vst [vmem:[#allocation3 + $0x750] sm:$0xff] 0.0
        %706 = vst [vmem:[#allocation3 + $0x758] sm:$0xff] 0.0
        %707 = vst [vmem:[#allocation3 + $0x760] sm:$0xff] 0.0
        %708 = vst [vmem:[#allocation3 + $0x768] sm:$0xff] 0.0
        %709 = vst [vmem:[#allocation3 + $0x770] sm:$0xff] 0.0
        %710 = vst [vmem:[#allocation3 + $0x778] sm:$0xff] 0.0
        %711 = vst [vmem:[#allocation3 + $0x780] sm:$0xff] 0.0
        %712 = vst [vmem:[#allocation3 + $0x788] sm:$0xff] 0.0
        %713 = vst [vmem:[#allocation3 + $0x790] sm:$0xff] 0.0
        %714 = vst [vmem:[#allocation3 + $0x798] sm:$0xff] 0.0
        %715 = vst [vmem:[#allocation3 + $0x7a0] sm:$0xff] 0.0
        %716 = vst [vmem:[#allocation3 + $0x7a8] sm:$0xff] 0.0
        %717 = vst [vmem:[#allocation3 + $0x7b0] sm:$0xff] 0.0
        %718 = vst [vmem:[#allocation3 + $0x7b8] sm:$0xff] 0.0
        %719 = vst [vmem:[#allocation3 + $0x7c0] sm:$0xff] 0.0
        %720 = vst [vmem:[#allocation3 + $0x7c8] sm:$0xff] 0.0
        %721 = vst [vmem:[#allocation3 + $0x7d0] sm:$0xff] 0.0
        %722 = vst [vmem:[#allocation3 + $0x7d8] sm:$0xff] 0.0
        %723 = vst [vmem:[#allocation3 + $0x7e0] sm:$0xff] 0.0
        %724 = vst [vmem:[#allocation3 + $0x7e8] sm:$0xff] 0.0
        %725 = vst [vmem:[#allocation3 + $0x7f0] sm:$0xff] 0.0
        %726 = vst [vmem:[#allocation3 + $0x7f8] sm:$0xff] 0.0
        %727 = vst [vmem:[#allocation3 + $0x800] sm:$0xff] 0.0
        %728 = vst [vmem:[#allocation3 + $0x808] sm:$0xff] 0.0
        %729 = vst [vmem:[#allocation3 + $0x810] sm:$0xff] 0.0
        %730 = vst [vmem:[#allocation3 + $0x818] sm:$0xff] 0.0
        %731 = vst [vmem:[#allocation3 + $0x820] sm:$0xff] 0.0
        %732 = vst [vmem:[#allocation3 + $0x828] sm:$0xff] 0.0
        %733 = vst [vmem:[#allocation3 + $0x830] sm:$0xff] 0.0
        %734 = vst [vmem:[#allocation3 + $0x838] sm:$0xff] 0.0
        %735 = vst [vmem:[#allocation3 + $0x840] sm:$0xff] 0.0
        %736 = vst [vmem:[#allocation3 + $0x848] sm:$0xff] 0.0
        %737 = vst [vmem:[#allocation3 + $0x850] sm:$0xff] 0.0
        %738 = vst [vmem:[#allocation3 + $0x858] sm:$0xff] 0.0
        %739 = vst [vmem:[#allocation3 + $0x860] sm:$0xff] 0.0
        %740 = vst [vmem:[#allocation3 + $0x868] sm:$0xff] 0.0
        %741 = vst [vmem:[#allocation3 + $0x870] sm:$0xff] 0.0
        %742 = vst [vmem:[#allocation3 + $0x878] sm:$0xff] 0.0
        %743 = vst [vmem:[#allocation3 + $0x880] sm:$0xff] 0.0
        %744 = vst [vmem:[#allocation3 + $0x888] sm:$0xff] 0.0
        %745 = vst [vmem:[#allocation3 + $0x890] sm:$0xff] 0.0
        %746 = vst [vmem:[#allocation3 + $0x898] sm:$0xff] 0.0
        %747 = vst [vmem:[#allocation3 + $0x8a0] sm:$0xff] 0.0
        %748 = vst [vmem:[#allocation3 + $0x8a8] sm:$0xff] 0.0
        %749 = vst [vmem:[#allocation3 + $0x8b0] sm:$0xff] 0.0
        %750 = vst [vmem:[#allocation3 + $0x8b8] sm:$0xff] 0.0
        %751 = vst [vmem:[#allocation3 + $0x8c0] sm:$0xff] 0.0
        %752 = vst [vmem:[#allocation3 + $0x8c8] sm:$0xff] 0.0
        %753 = vst [vmem:[#allocation3 + $0x8d0] sm:$0xff] 0.0
        %754 = vst [vmem:[#allocation3 + $0x8d8] sm:$0xff] 0.0
        %755 = vst [vmem:[#allocation3 + $0x8e0] sm:$0xff] 0.0
        %756 = vst [vmem:[#allocation3 + $0x8e8] sm:$0xff] 0.0
        %757 = vst [vmem:[#allocation3 + $0x8f0] sm:$0xff] 0.0
        %758 = vst [vmem:[#allocation3 + $0x8f8] sm:$0xff] 0.0
        %v759 = vld [vmem:[%s465] sm:$0xff]
        %v760 = vld [vmem:[%s465 + $0x8] sm:$0xff]
        %v761 = vld [vmem:[%s465 + $0x10] sm:$0xff]
        %v762 = vld [vmem:[%s465 + $0x18] sm:$0xff]
        %v763 = vld [vmem:[%s465 + $0x20] sm:$0xff]
        %v764 = vld [vmem:[%s465 + $0x28] sm:$0xff]
        %v765 = vld [vmem:[%s465 + $0x30] sm:$0xff]
        %v766 = vld [vmem:[%s465 + $0x38] sm:$0xff]
        %v767 = vld [vmem:[%s465 + $0x40] sm:$0xff]
        %v768 = vld [vmem:[%s465 + $0x48] sm:$0xff]
        %v769 = vld [vmem:[%s465 + $0x50] sm:$0xff]
        %v770 = vld [vmem:[%s465 + $0x58] sm:$0xff]
        %v771 = vld [vmem:[%s465 + $0x60] sm:$0xff]
        %v772 = vld [vmem:[%s465 + $0x68] sm:$0xff]
        %v773 = vld [vmem:[%s465 + $0x70] sm:$0xff]
        %v774 = vld [vmem:[%s465 + $0x78] sm:$0xff]
        %v775 = vld [vmem:[%s465 + $0x80] sm:$0xff]
        %v776 = vld [vmem:[%s465 + $0x88] sm:$0xff]
        %v777 = vld [vmem:[%s465 + $0x90] sm:$0xff]
        %v778 = vld [vmem:[%s465 + $0x98] sm:$0xff]
        %v779 = vld [vmem:[%s465 + $0xa0] sm:$0xff]
        %v780 = vld [vmem:[%s465 + $0xa8] sm:$0xff]
        %v781 = vld [vmem:[%s465 + $0xb0] sm:$0xff]
        %v782 = vld [vmem:[%s465 + $0xb8] sm:$0xff]
        %v783 = vld [vmem:[%s465 + $0xc0] sm:$0xff]
        %v784 = vld [vmem:[%s465 + $0xc8] sm:$0xff]
        %v785 = vld [vmem:[%s465 + $0xd0] sm:$0xff]
        %v786 = vld [vmem:[%s465 + $0xd8] sm:$0xff]
        %v787 = vld [vmem:[%s465 + $0xe0] sm:$0xff]
        %v788 = vld [vmem:[%s465 + $0xe8] sm:$0xff]
        %v789 = vld [vmem:[%s465 + $0xf0] sm:$0xff]
        %v790 = vld [vmem:[%s465 + $0xf8] sm:$0xff]
        %v791 = vld [vmem:[%s1] sm:$0xff]
        %v793 = vcombine.high %v791, %v791
        %vm794 = vcmask 31744
        %v796 = vsel %vm794, %v759, 0
        %v799 = vsel %vm794, %v760, 0
        %v802 = vsel %vm794, %v761, 0
        %v805 = vsel %vm794, %v762, 0
        %v808 = vsel %vm794, %v763, 0
        %v811 = vsel %vm794, %v764, 0
        %v814 = vsel %vm794, %v765, 0
        %v817 = vsel %vm794, %v766, 0
        %v820 = vsel %vm794, %v767, 0
        %v823 = vsel %vm794, %v768, 0
        %v826 = vsel %vm794, %v769, 0
        %v829 = vsel %vm794, %v770, 0
        %v832 = vsel %vm794, %v771, 0
        %v835 = vsel %vm794, %v772, 0
        %v838 = vsel %vm794, %v773, 0
        %v841 = vsel %vm794, %v774, 0
        %v844 = vsel %vm794, %v775, 0
        %v847 = vsel %vm794, %v776, 0
        %v850 = vsel %vm794, %v777, 0
        %v853 = vsel %vm794, %v778, 0
        %v856 = vsel %vm794, %v779, 0
        %v859 = vsel %vm794, %v780, 0
        %v862 = vsel %vm794, %v781, 0
        %v865 = vsel %vm794, %v782, 0
        %v868 = vsel %vm794, %v783, 0
        %v871 = vsel %vm794, %v784, 0
        %v874 = vsel %vm794, %v785, 0
        %v877 = vsel %vm794, %v786, 0
        %v880 = vsel %vm794, %v787, 0
        %v883 = vsel %vm794, %v788, 0
        %v886 = vsel %vm794, %v789, 0
        %v889 = vsel %vm794, %v790, 0
        %vm891 = vcmask 1043456
        %v892 = vsel %vm891, %v791, 0
        %v894 = vsel %vm891, %v793, 0
        %896 = vmatprep.subr.mxu0 0.0
        %897 = vmatpush1.msra.mxu0 0.0
        %898 = vmatprep.subr.mxu0 0.0
        %899 = vmatpush1.msra.mxu0 0.0
        %900 = vmatprep.subr.mxu0 0.0
        %901 = vmatpush1.msra.mxu0 0.0
        %902 = vmatprep.subr.mxu0 0.0
        %903 = vmatpush1.msra.mxu0 0.0
        %904 = vmatprep.subr.mxu0 0.0
        %905 = vmatpush1.msra.mxu0 0.0
        %906 = vmatprep.subr.mxu0 0.0
        %907 = vmatpush1.msra.mxu0 0.0
        %908 = vmatprep.subr.mxu0 0.0
        %909 = vmatpush1.msra.mxu0 0.0
        %910 = vmatprep.subr.mxu0 0.0
        %911 = vmatpush1.msra.mxu0 0.0
        %912 = vmatprep.subr.mxu0 0.0
        %913 = vmatpush1.msra.mxu0 0.0
        %914 = vmatprep.subr.mxu0 0.0
        %915 = vmatpush1.msra.mxu0 0.0
        %916 = vmatprep.subr.mxu0 0.0
        %917 = vmatpush1.msra.mxu0 0.0
        %918 = vmatprep.subr.mxu0 0.0
        %919 = vmatpush1.msra.mxu0 0.0
        %920 = vmatprep.subr.mxu0 0.0
        %921 = vmatpush1.msra.mxu0 0.0
        %922 = vmatprep.subr.mxu0 0.0
        %923 = vmatpush1.msra.mxu0 0.0
        %924 = vmatprep.subr.mxu0 0.0
        %925 = vmatpush1.msra.mxu0 0.0
        %926 = vmatprep.subr.mxu0 %v894
        %927 = vmatpush1.msra.mxu0 %v892
        %928 = vmatprep.subr.mxu0 0.0
        %929 = vmatpush2.msra.mxu0 0.0
        %930 = vmatprep.subr.mxu0 0.0
        %931 = vmatpush2.msra.mxu0 0.0
        %932 = vmatprep.subr.mxu0 0.0
        %933 = vmatpush2.msra.mxu0 0.0
        %934 = vmatprep.subr.mxu0 0.0
        %935 = vmatpush2.msra.mxu0 0.0
        %936 = vmatprep.subr.mxu0 0.0
        %937 = vmatpush2.msra.mxu0 0.0
        %938 = vmatprep.subr.mxu0 0.0
        %939 = vmatpush2.msra.mxu0 0.0
        %940 = vmatprep.subr.mxu0 0.0
        %941 = vmatpush2.msra.mxu0 0.0
        %942 = vmatprep.subr.mxu0 0.0
        %943 = vmatpush2.msra.mxu0 0.0
        %944 = vmatprep.subr.mxu0 0.0
        %945 = vmatpush2.msra.mxu0 0.0
        %946 = vmatprep.subr.mxu0 0.0
        %947 = vmatpush2.msra.mxu0 0.0
        %948 = vmatprep.subr.mxu0 0.0
        %949 = vmatpush2.msra.mxu0 0.0
        %950 = vmatprep.subr.mxu0 0.0
        %951 = vmatpush2.msra.mxu0 0.0
        %952 = vmatprep.subr.mxu0 0.0
        %953 = vmatpush2.msra.mxu0 0.0
        %954 = vmatprep.subr.mxu0 0.0
        %955 = vmatpush2.msra.mxu0 0.0
        %956 = vmatprep.subr.mxu0 0.0
        %957 = vmatpush2.msra.mxu0 0.0
        %958 = vmatprep.subr.mxu0 0.0
        %959 = vmatpush2.msra.mxu0 0.0
        %960 = vmatprep.mubr.f32.mxu0 0.0
        %961 = vmatmul.mubr.f32.gmra.mxu0 %v796
        %v962 = vpop.f32.mrf.mxu0
        %v963 = vadd.f32 0.0, %v962
        %v964 = vpop.f32.mrf.mxu0
        %v965 = vadd.f32 0.0, %v964
        %966 = vmatprep.mubr.f32.mxu0 0.0
        %967 = vmatmul.mubr.f32.gmra.mxu0 %v799
        %v968 = vpop.f32.mrf.mxu0
        %v969 = vadd.f32 0.0, %v968
        %v970 = vpop.f32.mrf.mxu0
        %v971 = vadd.f32 0.0, %v970
        %972 = vmatprep.mubr.f32.mxu0 0.0
        %973 = vmatmul.mubr.f32.gmra.mxu0 %v802
        %v974 = vpop.f32.mrf.mxu0
        %v975 = vadd.f32 0.0, %v974
        %v976 = vpop.f32.mrf.mxu0
        %v977 = vadd.f32 0.0, %v976
        %978 = vmatprep.mubr.f32.mxu0 0.0
        %979 = vmatmul.mubr.f32.gmra.mxu0 %v805
        %v980 = vpop.f32.mrf.mxu0
        %v981 = vadd.f32 0.0, %v980
        %v982 = vpop.f32.mrf.mxu0
        %v983 = vadd.f32 0.0, %v982
        %984 = vmatprep.mubr.f32.mxu0 0.0
        %985 = vmatmul.mubr.f32.gmra.mxu0 %v808
        %v986 = vpop.f32.mrf.mxu0
        %v987 = vadd.f32 0.0, %v986
        %v988 = vpop.f32.mrf.mxu0
        %v989 = vadd.f32 0.0, %v988
        %990 = vmatprep.mubr.f32.mxu0 0.0
        %991 = vmatmul.mubr.f32.gmra.mxu0 %v811
        %v992 = vpop.f32.mrf.mxu0
        %v993 = vadd.f32 0.0, %v992
        %v994 = vpop.f32.mrf.mxu0
        %v995 = vadd.f32 0.0, %v994
        %996 = vmatprep.mubr.f32.mxu0 0.0
        %997 = vmatmul.mubr.f32.gmra.mxu0 %v814
        %v998 = vpop.f32.mrf.mxu0
        %v999 = vadd.f32 0.0, %v998
        %v1000 = vpop.f32.mrf.mxu0
        %v1001 = vadd.f32 0.0, %v1000
        %1002 = vmatprep.mubr.f32.mxu0 0.0
        %1003 = vmatmul.mubr.f32.gmra.mxu0 %v817
        %v1004 = vpop.f32.mrf.mxu0
        %v1005 = vadd.f32 0.0, %v1004
        %v1006 = vpop.f32.mrf.mxu0
        %v1007 = vadd.f32 0.0, %v1006
        %1008 = vmatprep.mubr.f32.mxu0 0.0
        %1009 = vmatmul.mubr.f32.gmra.mxu0 %v820
        %v1010 = vpop.f32.mrf.mxu0
        %v1011 = vadd.f32 0.0, %v1010
        %v1012 = vpop.f32.mrf.mxu0
        %v1013 = vadd.f32 0.0, %v1012
        %1014 = vmatprep.mubr.f32.mxu0 0.0
        %1015 = vmatmul.mubr.f32.gmra.mxu0 %v823
        %v1016 = vpop.f32.mrf.mxu0
        %v1017 = vadd.f32 0.0, %v1016
        %v1018 = vpop.f32.mrf.mxu0
        %v1019 = vadd.f32 0.0, %v1018
        %1020 = vmatprep.mubr.f32.mxu0 0.0
        %1021 = vmatmul.mubr.f32.gmra.mxu0 %v826
        %v1022 = vpop.f32.mrf.mxu0
        %v1023 = vadd.f32 0.0, %v1022
        %v1024 = vpop.f32.mrf.mxu0
        %v1025 = vadd.f32 0.0, %v1024
        %1026 = vmatprep.mubr.f32.mxu0 0.0
        %1027 = vmatmul.mubr.f32.gmra.mxu0 %v829
        %v1028 = vpop.f32.mrf.mxu0
        %v1029 = vadd.f32 0.0, %v1028
        %v1030 = vpop.f32.mrf.mxu0
        %v1031 = vadd.f32 0.0, %v1030
        %1032 = vmatprep.mubr.f32.mxu0 0.0
        %1033 = vmatmul.mubr.f32.gmra.mxu0 %v832
        %v1034 = vpop.f32.mrf.mxu0
        %v1035 = vadd.f32 0.0, %v1034
        %v1036 = vpop.f32.mrf.mxu0
        %v1037 = vadd.f32 0.0, %v1036
        %1038 = vmatprep.mubr.f32.mxu0 0.0
        %1039 = vmatmul.mubr.f32.gmra.mxu0 %v835
        %v1040 = vpop.f32.mrf.mxu0
        %v1041 = vadd.f32 0.0, %v1040
        %v1042 = vpop.f32.mrf.mxu0
        %v1043 = vadd.f32 0.0, %v1042
        %1044 = vmatprep.mubr.f32.mxu0 0.0
        %1045 = vmatmul.mubr.f32.gmra.mxu0 %v838
        %v1046 = vpop.f32.mrf.mxu0
        %v1047 = vadd.f32 0.0, %v1046
        %v1048 = vpop.f32.mrf.mxu0
        %v1049 = vadd.f32 0.0, %v1048
        %1050 = vmatprep.mubr.f32.mxu0 0.0
        %1051 = vmatmul.mubr.f32.gmra.mxu0 %v841
        %v1052 = vpop.f32.mrf.mxu0
        %v1053 = vadd.f32 0.0, %v1052
        %v1054 = vpop.f32.mrf.mxu0
        %v1055 = vadd.f32 0.0, %v1054
        %1056 = vmatprep.mubr.f32.mxu0 0.0
        %1057 = vmatmul.mubr.f32.gmra.mxu0 %v844
        %v1058 = vpop.f32.mrf.mxu0
        %v1059 = vadd.f32 0.0, %v1058
        %v1060 = vpop.f32.mrf.mxu0
        %v1061 = vadd.f32 0.0, %v1060
        %1062 = vmatprep.mubr.f32.mxu0 0.0
        %1063 = vmatmul.mubr.f32.gmra.mxu0 %v847
        %v1064 = vpop.f32.mrf.mxu0
        %v1065 = vadd.f32 0.0, %v1064
        %v1066 = vpop.f32.mrf.mxu0
        %v1067 = vadd.f32 0.0, %v1066
        %1068 = vmatprep.mubr.f32.mxu0 0.0
        %1069 = vmatmul.mubr.f32.gmra.mxu0 %v850
        %v1070 = vpop.f32.mrf.mxu0
        %v1071 = vadd.f32 0.0, %v1070
        %v1072 = vpop.f32.mrf.mxu0
        %v1073 = vadd.f32 0.0, %v1072
        %1074 = vmatprep.mubr.f32.mxu0 0.0
        %1075 = vmatmul.mubr.f32.gmra.mxu0 %v853
        %v1076 = vpop.f32.mrf.mxu0
        %v1077 = vadd.f32 0.0, %v1076
        %v1078 = vpop.f32.mrf.mxu0
        %v1079 = vadd.f32 0.0, %v1078
        %1080 = vmatprep.mubr.f32.mxu0 0.0
        %1081 = vmatmul.mubr.f32.gmra.mxu0 %v856
        %v1082 = vpop.f32.mrf.mxu0
        %v1083 = vadd.f32 0.0, %v1082
        %v1084 = vpop.f32.mrf.mxu0
        %v1085 = vadd.f32 0.0, %v1084
        %1086 = vmatprep.mubr.f32.mxu0 0.0
        %1087 = vmatmul.mubr.f32.gmra.mxu0 %v859
        %v1088 = vpop.f32.mrf.mxu0
        %v1089 = vadd.f32 0.0, %v1088
        %v1090 = vpop.f32.mrf.mxu0
        %v1091 = vadd.f32 0.0, %v1090
        %1092 = vmatprep.mubr.f32.mxu0 0.0
        %1093 = vmatmul.mubr.f32.gmra.mxu0 %v862
        %v1094 = vpop.f32.mrf.mxu0
        %v1095 = vadd.f32 0.0, %v1094
        %v1096 = vpop.f32.mrf.mxu0
        %v1097 = vadd.f32 0.0, %v1096
        %1098 = vmatprep.mubr.f32.mxu0 0.0
        %1099 = vmatmul.mubr.f32.gmra.mxu0 %v865
        %v1100 = vpop.f32.mrf.mxu0
        %v1101 = vadd.f32 0.0, %v1100
        %v1102 = vpop.f32.mrf.mxu0
        %v1103 = vadd.f32 0.0, %v1102
        %1104 = vmatprep.mubr.f32.mxu0 0.0
        %1105 = vmatmul.mubr.f32.gmra.mxu0 %v868
        %v1106 = vpop.f32.mrf.mxu0
        %v1107 = vadd.f32 0.0, %v1106
        %v1108 = vpop.f32.mrf.mxu0
        %v1109 = vadd.f32 0.0, %v1108
        %1110 = vmatprep.mubr.f32.mxu0 0.0
        %1111 = vmatmul.mubr.f32.gmra.mxu0 %v871
        %v1112 = vpop.f32.mrf.mxu0
        %v1113 = vadd.f32 0.0, %v1112
        %v1114 = vpop.f32.mrf.mxu0
        %v1115 = vadd.f32 0.0, %v1114
        %1116 = vmatprep.mubr.f32.mxu0 0.0
        %1117 = vmatmul.mubr.f32.gmra.mxu0 %v874
        %v1118 = vpop.f32.mrf.mxu0
        %v1119 = vadd.f32 0.0, %v1118
        %v1120 = vpop.f32.mrf.mxu0
        %v1121 = vadd.f32 0.0, %v1120
        %1122 = vmatprep.mubr.f32.mxu0 0.0
        %1123 = vmatmul.mubr.f32.gmra.mxu0 %v877
        %v1124 = vpop.f32.mrf.mxu0
        %v1125 = vadd.f32 0.0, %v1124
        %v1126 = vpop.f32.mrf.mxu0
        %v1127 = vadd.f32 0.0, %v1126
        %1128 = vmatprep.mubr.f32.mxu0 0.0
        %1129 = vmatmul.mubr.f32.gmra.mxu0 %v880
        %v1130 = vpop.f32.mrf.mxu0
        %v1131 = vadd.f32 0.0, %v1130
        %v1132 = vpop.f32.mrf.mxu0
        %v1133 = vadd.f32 0.0, %v1132
        %1134 = vmatprep.mubr.f32.mxu0 0.0
        %1135 = vmatmul.mubr.f32.gmra.mxu0 %v883
        %v1136 = vpop.f32.mrf.mxu0
        %v1137 = vadd.f32 0.0, %v1136
        %v1138 = vpop.f32.mrf.mxu0
        %v1139 = vadd.f32 0.0, %v1138
        %1140 = vmatprep.mubr.f32.mxu0 0.0
        %1141 = vmatmul.mubr.f32.gmra.mxu0 %v886
        %v1142 = vpop.f32.mrf.mxu0
        %v1143 = vadd.f32 0.0, %v1142
        %v1144 = vpop.f32.mrf.mxu0
        %v1145 = vadd.f32 0.0, %v1144
        %1146 = vmatprep.mubr.f32.mxu0 0.0
        %1147 = vmatmul.mubr.f32.gmra.mxu0 %v889
        %v1148 = vpop.f32.mrf.mxu0
        %v1149 = vadd.f32 0.0, %v1148
        %v1150 = vpop.f32.mrf.mxu0
        %v1151 = vadd.f32 0.0, %v1150
        %1152 = vdwg.mxu0
        %v1153 = vld [vmem:[%s2] sm:$0x3]
        %v1155 = vlaneseq
        %v1156 = vshrl.u32 %v1155, 7
        %v1157 = vsub.s32 0, %v1156
        %v1158 = vrot.slane %v1153, %v1157
        %v1159 = vlaneseq
        %v1160 = vshrl.u32 %v1159, 7
        %v1161 = vsub.s32 1, %v1160
        %v1162 = vrot.slane %v1153, %v1161
        %v1165 = vmul.f32 %v963, %v1158
        %v1166 = vmul.f32 %v965, %v1162
        %v1167 = vmul.f32 %v969, %v1158
        %v1168 = vmul.f32 %v971, %v1162
        %v1169 = vmul.f32 %v975, %v1158
        %v1170 = vmul.f32 %v977, %v1162
        %v1171 = vmul.f32 %v981, %v1158
        %v1172 = vmul.f32 %v983, %v1162
        %v1173 = vmul.f32 %v987, %v1158
        %v1174 = vmul.f32 %v989, %v1162
        %v1175 = vmul.f32 %v993, %v1158
        %v1176 = vmul.f32 %v995, %v1162
        %v1177 = vmul.f32 %v999, %v1158
        %v1178 = vmul.f32 %v1001, %v1162
        %v1179 = vmul.f32 %v1005, %v1158
        %v1180 = vmul.f32 %v1007, %v1162
        %v1181 = vmul.f32 %v1011, %v1158
        %v1182 = vmul.f32 %v1013, %v1162
        %v1183 = vmul.f32 %v1017, %v1158
        %v1184 = vmul.f32 %v1019, %v1162
        %v1185 = vmul.f32 %v1023, %v1158
        %v1186 = vmul.f32 %v1025, %v1162
        %v1187 = vmul.f32 %v1029, %v1158
        %v1188 = vmul.f32 %v1031, %v1162
        %v1189 = vmul.f32 %v1035, %v1158
        %v1190 = vmul.f32 %v1037, %v1162
        %v1191 = vmul.f32 %v1041, %v1158
        %v1192 = vmul.f32 %v1043, %v1162
        %v1193 = vmul.f32 %v1047, %v1158
        %v1194 = vmul.f32 %v1049, %v1162
        %v1195 = vmul.f32 %v1053, %v1158
        %v1196 = vmul.f32 %v1055, %v1162
        %v1197 = vmul.f32 %v1059, %v1158
        %v1198 = vmul.f32 %v1061, %v1162
        %v1199 = vmul.f32 %v1065, %v1158
        %v1200 = vmul.f32 %v1067, %v1162
        %v1201 = vmul.f32 %v1071, %v1158
        %v1202 = vmul.f32 %v1073, %v1162
        %v1203 = vmul.f32 %v1077, %v1158
        %v1204 = vmul.f32 %v1079, %v1162
        %v1205 = vmul.f32 %v1083, %v1158
        %v1206 = vmul.f32 %v1085, %v1162
        %v1207 = vmul.f32 %v1089, %v1158
        %v1208 = vmul.f32 %v1091, %v1162
        %v1209 = vmul.f32 %v1095, %v1158
        %v1210 = vmul.f32 %v1097, %v1162
        %v1211 = vmul.f32 %v1101, %v1158
        %v1212 = vmul.f32 %v1103, %v1162
        %v1213 = vmul.f32 %v1107, %v1158
        %v1214 = vmul.f32 %v1109, %v1162
        %v1215 = vmul.f32 %v1113, %v1158
        %v1216 = vmul.f32 %v1115, %v1162
        %v1217 = vmul.f32 %v1119, %v1158
        %v1218 = vmul.f32 %v1121, %v1162
        %v1219 = vmul.f32 %v1125, %v1158
        %v1220 = vmul.f32 %v1127, %v1162
        %v1221 = vmul.f32 %v1131, %v1158
        %v1222 = vmul.f32 %v1133, %v1162
        %v1223 = vmul.f32 %v1137, %v1158
        %v1224 = vmul.f32 %v1139, %v1162
        %v1225 = vmul.f32 %v1143, %v1158
        %v1226 = vmul.f32 %v1145, %v1162
        %v1227 = vmul.f32 %v1149, %v1158
        %v1228 = vmul.f32 %v1151, %v1162
        %v1229 = vld [vmem:[%s3] sm:$0x3]
        %v1231 = vlaneseq
        %v1232 = vshrl.u32 %v1231, 7
        %v1233 = vsub.s32 0, %v1232
        %v1234 = vrot.slane %v1229, %v1233
        %v1235 = vlaneseq
        %v1236 = vshrl.u32 %v1235, 7
        %v1237 = vsub.s32 1, %v1236
        %v1238 = vrot.slane %v1229, %v1237
        %v1241 = vadd.f32 %v1165, %v1234
        %v1242 = vadd.f32 %v1166, %v1238
        %v1243 = vadd.f32 %v1167, %v1234
        %v1244 = vadd.f32 %v1168, %v1238
        %v1245 = vadd.f32 %v1169, %v1234
        %v1246 = vadd.f32 %v1170, %v1238
        %v1247 = vadd.f32 %v1171, %v1234
        %v1248 = vadd.f32 %v1172, %v1238
        %v1249 = vadd.f32 %v1173, %v1234
        %v1250 = vadd.f32 %v1174, %v1238
        %v1251 = vadd.f32 %v1175, %v1234
        %v1252 = vadd.f32 %v1176, %v1238
        %v1253 = vadd.f32 %v1177, %v1234
        %v1254 = vadd.f32 %v1178, %v1238
        %v1255 = vadd.f32 %v1179, %v1234
        %v1256 = vadd.f32 %v1180, %v1238
        %v1257 = vadd.f32 %v1181, %v1234
        %v1258 = vadd.f32 %v1182, %v1238
        %v1259 = vadd.f32 %v1183, %v1234
        %v1260 = vadd.f32 %v1184, %v1238
        %v1261 = vadd.f32 %v1185, %v1234
        %v1262 = vadd.f32 %v1186, %v1238
        %v1263 = vadd.f32 %v1187, %v1234
        %v1264 = vadd.f32 %v1188, %v1238
        %v1265 = vadd.f32 %v1189, %v1234
        %v1266 = vadd.f32 %v1190, %v1238
        %v1267 = vadd.f32 %v1191, %v1234
        %v1268 = vadd.f32 %v1192, %v1238
        %v1269 = vadd.f32 %v1193, %v1234
        %v1270 = vadd.f32 %v1194, %v1238
        %v1271 = vadd.f32 %v1195, %v1234
        %v1272 = vadd.f32 %v1196, %v1238
        %v1273 = vadd.f32 %v1197, %v1234
        %v1274 = vadd.f32 %v1198, %v1238
        %v1275 = vadd.f32 %v1199, %v1234
        %v1276 = vadd.f32 %v1200, %v1238
        %v1277 = vadd.f32 %v1201, %v1234
        %v1278 = vadd.f32 %v1202, %v1238
        %v1279 = vadd.f32 %v1203, %v1234
        %v1280 = vadd.f32 %v1204, %v1238
        %v1281 = vadd.f32 %v1205, %v1234
        %v1282 = vadd.f32 %v1206, %v1238
        %v1283 = vadd.f32 %v1207, %v1234
        %v1284 = vadd.f32 %v1208, %v1238
        %v1285 = vadd.f32 %v1209, %v1234
        %v1286 = vadd.f32 %v1210, %v1238
        %v1287 = vadd.f32 %v1211, %v1234
        %v1288 = vadd.f32 %v1212, %v1238
        %v1289 = vadd.f32 %v1213, %v1234
        %v1290 = vadd.f32 %v1214, %v1238
        %v1291 = vadd.f32 %v1215, %v1234
        %v1292 = vadd.f32 %v1216, %v1238
        %v1293 = vadd.f32 %v1217, %v1234
        %v1294 = vadd.f32 %v1218, %v1238
        %v1295 = vadd.f32 %v1219, %v1234
        %v1296 = vadd.f32 %v1220, %v1238
        %v1297 = vadd.f32 %v1221, %v1234
        %v1298 = vadd.f32 %v1222, %v1238
        %v1299 = vadd.f32 %v1223, %v1234
        %v1300 = vadd.f32 %v1224, %v1238
        %v1301 = vadd.f32 %v1225, %v1234
        %v1302 = vadd.f32 %v1226, %v1238
        %v1303 = vadd.f32 %v1227, %v1234
        %v1304 = vadd.f32 %v1228, %v1238
        %v1305 = vxor.u32 %v1241, 2147483648
        %v1306 = vxor.u32 %v1242, 2147483648
        %v1307 = vxor.u32 %v1243, 2147483648
        %v1308 = vxor.u32 %v1244, 2147483648
        %v1309 = vxor.u32 %v1245, 2147483648
        %v1310 = vxor.u32 %v1246, 2147483648
        %v1311 = vxor.u32 %v1247, 2147483648
        %v1312 = vxor.u32 %v1248, 2147483648
        %v1313 = vxor.u32 %v1249, 2147483648
        %v1314 = vxor.u32 %v1250, 2147483648
        %v1315 = vxor.u32 %v1251, 2147483648
        %v1316 = vxor.u32 %v1252, 2147483648
        %v1317 = vxor.u32 %v1253, 2147483648
        %v1318 = vxor.u32 %v1254, 2147483648
        %v1319 = vxor.u32 %v1255, 2147483648
        %v1320 = vxor.u32 %v1256, 2147483648
        %v1321 = vxor.u32 %v1257, 2147483648
        %v1322 = vxor.u32 %v1258, 2147483648
        %v1323 = vxor.u32 %v1259, 2147483648
        %v1324 = vxor.u32 %v1260, 2147483648
        %v1325 = vxor.u32 %v1261, 2147483648
        %v1326 = vxor.u32 %v1262, 2147483648
        %v1327 = vxor.u32 %v1263, 2147483648
        %v1328 = vxor.u32 %v1264, 2147483648
        %v1329 = vxor.u32 %v1265, 2147483648
        %v1330 = vxor.u32 %v1266, 2147483648
        %v1331 = vxor.u32 %v1267, 2147483648
        %v1332 = vxor.u32 %v1268, 2147483648
        %v1333 = vxor.u32 %v1269, 2147483648
        %v1334 = vxor.u32 %v1270, 2147483648
        %v1335 = vxor.u32 %v1271, 2147483648
        %v1336 = vxor.u32 %v1272, 2147483648
        %v1337 = vxor.u32 %v1273, 2147483648
        %v1338 = vxor.u32 %v1274, 2147483648
        %v1339 = vxor.u32 %v1275, 2147483648
        %v1340 = vxor.u32 %v1276, 2147483648
        %v1341 = vxor.u32 %v1277, 2147483648
        %v1342 = vxor.u32 %v1278, 2147483648
        %v1343 = vxor.u32 %v1279, 2147483648
        %v1344 = vxor.u32 %v1280, 2147483648
        %v1345 = vxor.u32 %v1281, 2147483648
        %v1346 = vxor.u32 %v1282, 2147483648
        %v1347 = vxor.u32 %v1283, 2147483648
        %v1348 = vxor.u32 %v1284, 2147483648
        %v1349 = vxor.u32 %v1285, 2147483648
        %v1350 = vxor.u32 %v1286, 2147483648
        %v1351 = vxor.u32 %v1287, 2147483648
        %v1352 = vxor.u32 %v1288, 2147483648
        %v1353 = vxor.u32 %v1289, 2147483648
        %v1354 = vxor.u32 %v1290, 2147483648
        %v1355 = vxor.u32 %v1291, 2147483648
        %v1356 = vxor.u32 %v1292, 2147483648
        %v1357 = vxor.u32 %v1293, 2147483648
        %v1358 = vxor.u32 %v1294, 2147483648
        %v1359 = vxor.u32 %v1295, 2147483648
        %v1360 = vxor.u32 %v1296, 2147483648
        %v1361 = vxor.u32 %v1297, 2147483648
        %v1362 = vxor.u32 %v1298, 2147483648
        %v1363 = vxor.u32 %v1299, 2147483648
        %v1364 = vxor.u32 %v1300, 2147483648
        %v1365 = vxor.u32 %v1301, 2147483648
        %v1366 = vxor.u32 %v1302, 2147483648
        %v1367 = vxor.u32 %v1303, 2147483648
        %v1368 = vxor.u32 %v1304, 2147483648
        %v1369 = vmul.f32 %v1305, 1.442695
        %v1370 = vpow.pop %v1369
        %v1371 = vmul.f32 %v1306, 1.442695
        %v1372 = vpow.pop %v1371
        %v1373 = vmul.f32 %v1307, 1.442695
        %v1374 = vpow.pop %v1373
        %v1375 = vmul.f32 %v1308, 1.442695
        %v1376 = vpow.pop %v1375
        %v1377 = vmul.f32 %v1309, 1.442695
        %v1378 = vpow.pop %v1377
        %v1379 = vmul.f32 %v1310, 1.442695
        %v1380 = vpow.pop %v1379
        %v1381 = vmul.f32 %v1311, 1.442695
        %v1382 = vpow.pop %v1381
        %v1383 = vmul.f32 %v1312, 1.442695
        %v1384 = vpow.pop %v1383
        %v1385 = vmul.f32 %v1313, 1.442695
        %v1386 = vpow.pop %v1385
        %v1387 = vmul.f32 %v1314, 1.442695
        %v1388 = vpow.pop %v1387
        %v1389 = vmul.f32 %v1315, 1.442695
        %v1390 = vpow.pop %v1389
        %v1391 = vmul.f32 %v1316, 1.442695
        %v1392 = vpow.pop %v1391
        %v1393 = vmul.f32 %v1317, 1.442695
        %v1394 = vpow.pop %v1393
        %v1395 = vmul.f32 %v1318, 1.442695
        %v1396 = vpow.pop %v1395
        %v1397 = vmul.f32 %v1319, 1.442695
        %v1398 = vpow.pop %v1397
        %v1399 = vmul.f32 %v1320, 1.442695
        %v1400 = vpow.pop %v1399
        %v1401 = vmul.f32 %v1321, 1.442695
        %v1402 = vpow.pop %v1401
        %v1403 = vmul.f32 %v1322, 1.442695
        %v1404 = vpow.pop %v1403
        %v1405 = vmul.f32 %v1323, 1.442695
        %v1406 = vpow.pop %v1405
        %v1407 = vmul.f32 %v1324, 1.442695
        %v1408 = vpow.pop %v1407
        %v1409 = vmul.f32 %v1325, 1.442695
        %v1410 = vpow.pop %v1409
        %v1411 = vmul.f32 %v1326, 1.442695
        %v1412 = vpow.pop %v1411
        %v1413 = vmul.f32 %v1327, 1.442695
        %v1414 = vpow.pop %v1413
        %v1415 = vmul.f32 %v1328, 1.442695
        %v1416 = vpow.pop %v1415
        %v1417 = vmul.f32 %v1329, 1.442695
        %v1418 = vpow.pop %v1417
        %v1419 = vmul.f32 %v1330, 1.442695
        %v1420 = vpow.pop %v1419
        %v1421 = vmul.f32 %v1331, 1.442695
        %v1422 = vpow.pop %v1421
        %v1423 = vmul.f32 %v1332, 1.442695
        %v1424 = vpow.pop %v1423
        %v1425 = vmul.f32 %v1333, 1.442695
        %v1426 = vpow.pop %v1425
        %v1427 = vmul.f32 %v1334, 1.442695
        %v1428 = vpow.pop %v1427
        %v1429 = vmul.f32 %v1335, 1.442695
        %v1430 = vpow.pop %v1429
        %v1431 = vmul.f32 %v1336, 1.442695
        %v1432 = vpow.pop %v1431
        %v1433 = vmul.f32 %v1337, 1.442695
        %v1434 = vpow.pop %v1433
        %v1435 = vmul.f32 %v1338, 1.442695
        %v1436 = vpow.pop %v1435
        %v1437 = vmul.f32 %v1339, 1.442695
        %v1438 = vpow.pop %v1437
        %v1439 = vmul.f32 %v1340, 1.442695
        %v1440 = vpow.pop %v1439
        %v1441 = vmul.f32 %v1341, 1.442695
        %v1442 = vpow.pop %v1441
        %v1443 = vmul.f32 %v1342, 1.442695
        %v1444 = vpow.pop %v1443
        %v1445 = vmul.f32 %v1343, 1.442695
        %v1446 = vpow.pop %v1445
        %v1447 = vmul.f32 %v1344, 1.442695
        %v1448 = vpow.pop %v1447
        %v1449 = vmul.f32 %v1345, 1.442695
        %v1450 = vpow.pop %v1449
        %v1451 = vmul.f32 %v1346, 1.442695
        %v1452 = vpow.pop %v1451
        %v1453 = vmul.f32 %v1347, 1.442695
        %v1454 = vpow.pop %v1453
        %v1455 = vmul.f32 %v1348, 1.442695
        %v1456 = vpow.pop %v1455
        %v1457 = vmul.f32 %v1349, 1.442695
        %v1458 = vpow.pop %v1457
        %v1459 = vmul.f32 %v1350, 1.442695
        %v1460 = vpow.pop %v1459
        %v1461 = vmul.f32 %v1351, 1.442695
        %v1462 = vpow.pop %v1461
        %v1463 = vmul.f32 %v1352, 1.442695
        %v1464 = vpow.pop %v1463
        %v1465 = vmul.f32 %v1353, 1.442695
        %v1466 = vpow.pop %v1465
        %v1467 = vmul.f32 %v1354, 1.442695
        %v1468 = vpow.pop %v1467
        %v1469 = vmul.f32 %v1355, 1.442695
        %v1470 = vpow.pop %v1469
        %v1471 = vmul.f32 %v1356, 1.442695
        %v1472 = vpow.pop %v1471
        %v1473 = vmul.f32 %v1357, 1.442695
        %v1474 = vpow.pop %v1473
        %v1475 = vmul.f32 %v1358, 1.442695
        %v1476 = vpow.pop %v1475
        %v1477 = vmul.f32 %v1359, 1.442695
        %v1478 = vpow.pop %v1477
        %v1479 = vmul.f32 %v1360, 1.442695
        %v1480 = vpow.pop %v1479
        %v1481 = vmul.f32 %v1361, 1.442695
        %v1482 = vpow.pop %v1481
        %v1483 = vmul.f32 %v1362, 1.442695
        %v1484 = vpow.pop %v1483
        %v1485 = vmul.f32 %v1363, 1.442695
        %v1486 = vpow.pop %v1485
        %v1487 = vmul.f32 %v1364, 1.442695
        %v1488 = vpow.pop %v1487
        %v1489 = vmul.f32 %v1365, 1.442695
        %v1490 = vpow.pop %v1489
        %v1491 = vmul.f32 %v1366, 1.442695
        %v1492 = vpow.pop %v1491
        %v1493 = vmul.f32 %v1367, 1.442695
        %v1494 = vpow.pop %v1493
        %v1495 = vmul.f32 %v1368, 1.442695
        %v1496 = vpow.pop %v1495
        %v1497 = vadd.f32 %v1370, 1.0
        %v1498 = vadd.f32 %v1372, 1.0
        %v1499 = vadd.f32 %v1374, 1.0
        %v1500 = vadd.f32 %v1376, 1.0
        %v1501 = vadd.f32 %v1378, 1.0
        %v1502 = vadd.f32 %v1380, 1.0
        %v1503 = vadd.f32 %v1382, 1.0
        %v1504 = vadd.f32 %v1384, 1.0
        %v1505 = vadd.f32 %v1386, 1.0
        %v1506 = vadd.f32 %v1388, 1.0
        %v1507 = vadd.f32 %v1390, 1.0
        %v1508 = vadd.f32 %v1392, 1.0
        %v1509 = vadd.f32 %v1394, 1.0
        %v1510 = vadd.f32 %v1396, 1.0
        %v1511 = vadd.f32 %v1398, 1.0
        %v1512 = vadd.f32 %v1400, 1.0
        %v1513 = vadd.f32 %v1402, 1.0
        %v1514 = vadd.f32 %v1404, 1.0
        %v1515 = vadd.f32 %v1406, 1.0
        %v1516 = vadd.f32 %v1408, 1.0
        %v1517 = vadd.f32 %v1410, 1.0
        %v1518 = vadd.f32 %v1412, 1.0
        %v1519 = vadd.f32 %v1414, 1.0
        %v1520 = vadd.f32 %v1416, 1.0
        %v1521 = vadd.f32 %v1418, 1.0
        %v1522 = vadd.f32 %v1420, 1.0
        %v1523 = vadd.f32 %v1422, 1.0
        %v1524 = vadd.f32 %v1424, 1.0
        %v1525 = vadd.f32 %v1426, 1.0
        %v1526 = vadd.f32 %v1428, 1.0
        %v1527 = vadd.f32 %v1430, 1.0
        %v1528 = vadd.f32 %v1432, 1.0
        %v1529 = vadd.f32 %v1434, 1.0
        %v1530 = vadd.f32 %v1436, 1.0
        %v1531 = vadd.f32 %v1438, 1.0
        %v1532 = vadd.f32 %v1440, 1.0
        %v1533 = vadd.f32 %v1442, 1.0
        %v1534 = vadd.f32 %v1444, 1.0
        %v1535 = vadd.f32 %v1446, 1.0
        %v1536 = vadd.f32 %v1448, 1.0
        %v1537 = vadd.f32 %v1450, 1.0
        %v1538 = vadd.f32 %v1452, 1.0
        %v1539 = vadd.f32 %v1454, 1.0
        %v1540 = vadd.f32 %v1456, 1.0
        %v1541 = vadd.f32 %v1458, 1.0
        %v1542 = vadd.f32 %v1460, 1.0
        %v1543 = vadd.f32 %v1462, 1.0
        %v1544 = vadd.f32 %v1464, 1.0
        %v1545 = vadd.f32 %v1466, 1.0
        %v1546 = vadd.f32 %v1468, 1.0
        %v1547 = vadd.f32 %v1470, 1.0
        %v1548 = vadd.f32 %v1472, 1.0
        %v1549 = vadd.f32 %v1474, 1.0
        %v1550 = vadd.f32 %v1476, 1.0
        %v1551 = vadd.f32 %v1478, 1.0
        %v1552 = vadd.f32 %v1480, 1.0
        %v1553 = vadd.f32 %v1482, 1.0
        %v1554 = vadd.f32 %v1484, 1.0
        %v1555 = vadd.f32 %v1486, 1.0
        %v1556 = vadd.f32 %v1488, 1.0
        %v1557 = vadd.f32 %v1490, 1.0
        %v1558 = vadd.f32 %v1492, 1.0
        %v1559 = vadd.f32 %v1494, 1.0
        %v1560 = vadd.f32 %v1496, 1.0
        %v1561 = vrcp.pop %v1497
        %v1562 = vmul.f32 1.0, %v1561
        %v1563 = vrcp.pop %v1498
        %v1564 = vmul.f32 1.0, %v1563
        %v1565 = vrcp.pop %v1499
        %v1566 = vmul.f32 1.0, %v1565
        %v1567 = vrcp.pop %v1500
        %v1568 = vmul.f32 1.0, %v1567
        %v1569 = vrcp.pop %v1501
        %v1570 = vmul.f32 1.0, %v1569
        %v1571 = vrcp.pop %v1502
        %v1572 = vmul.f32 1.0, %v1571
        %v1573 = vrcp.pop %v1503
        %v1574 = vmul.f32 1.0, %v1573
        %v1575 = vrcp.pop %v1504
        %v1576 = vmul.f32 1.0, %v1575
        %v1577 = vrcp.pop %v1505
        %v1578 = vmul.f32 1.0, %v1577
        %v1579 = vrcp.pop %v1506
        %v1580 = vmul.f32 1.0, %v1579
        %v1581 = vrcp.pop %v1507
        %v1582 = vmul.f32 1.0, %v1581
        %v1583 = vrcp.pop %v1508
        %v1584 = vmul.f32 1.0, %v1583
        %v1585 = vrcp.pop %v1509
        %v1586 = vmul.f32 1.0, %v1585
        %v1587 = vrcp.pop %v1510
        %v1588 = vmul.f32 1.0, %v1587
        %v1589 = vrcp.pop %v1511
        %v1590 = vmul.f32 1.0, %v1589
        %v1591 = vrcp.pop %v1512
        %v1592 = vmul.f32 1.0, %v1591
        %v1593 = vrcp.pop %v1513
        %v1594 = vmul.f32 1.0, %v1593
        %v1595 = vrcp.pop %v1514
        %v1596 = vmul.f32 1.0, %v1595
        %v1597 = vrcp.pop %v1515
        %v1598 = vmul.f32 1.0, %v1597
        %v1599 = vrcp.pop %v1516
        %v1600 = vmul.f32 1.0, %v1599
        %v1601 = vrcp.pop %v1517
        %v1602 = vmul.f32 1.0, %v1601
        %v1603 = vrcp.pop %v1518
        %v1604 = vmul.f32 1.0, %v1603
        %v1605 = vrcp.pop %v1519
        %v1606 = vmul.f32 1.0, %v1605
        %v1607 = vrcp.pop %v1520
        %v1608 = vmul.f32 1.0, %v1607
        %v1609 = vrcp.pop %v1521
        %v1610 = vmul.f32 1.0, %v1609
        %v1611 = vrcp.pop %v1522
        %v1612 = vmul.f32 1.0, %v1611
        %v1613 = vrcp.pop %v1523
        %v1614 = vmul.f32 1.0, %v1613
        %v1615 = vrcp.pop %v1524
        %v1616 = vmul.f32 1.0, %v1615
        %v1617 = vrcp.pop %v1525
        %v1618 = vmul.f32 1.0, %v1617
        %v1619 = vrcp.pop %v1526
        %v1620 = vmul.f32 1.0, %v1619
        %v1621 = vrcp.pop %v1527
        %v1622 = vmul.f32 1.0, %v1621
        %v1623 = vrcp.pop %v1528
        %v1624 = vmul.f32 1.0, %v1623
        %v1625 = vrcp.pop %v1529
        %v1626 = vmul.f32 1.0, %v1625
        %v1627 = vrcp.pop %v1530
        %v1628 = vmul.f32 1.0, %v1627
        %v1629 = vrcp.pop %v1531
        %v1630 = vmul.f32 1.0, %v1629
        %v1631 = vrcp.pop %v1532
        %v1632 = vmul.f32 1.0, %v1631
        %v1633 = vrcp.pop %v1533
        %v1634 = vmul.f32 1.0, %v1633
        %v1635 = vrcp.pop %v1534
        %v1636 = vmul.f32 1.0, %v1635
        %v1637 = vrcp.pop %v1535
        %v1638 = vmul.f32 1.0, %v1637
        %v1639 = vrcp.pop %v1536
        %v1640 = vmul.f32 1.0, %v1639
        %v1641 = vrcp.pop %v1537
        %v1642 = vmul.f32 1.0, %v1641
        %v1643 = vrcp.pop %v1538
        %v1644 = vmul.f32 1.0, %v1643
        %v1645 = vrcp.pop %v1539
        %v1646 = vmul.f32 1.0, %v1645
        %v1647 = vrcp.pop %v1540
        %v1648 = vmul.f32 1.0, %v1647
        %v1649 = vrcp.pop %v1541
        %v1650 = vmul.f32 1.0, %v1649
        %v1651 = vrcp.pop %v1542
        %v1652 = vmul.f32 1.0, %v1651
        %v1653 = vrcp.pop %v1543
        %v1654 = vmul.f32 1.0, %v1653
        %v1655 = vrcp.pop %v1544
        %v1656 = vmul.f32 1.0, %v1655
        %v1657 = vrcp.pop %v1545
        %v1658 = vmul.f32 1.0, %v1657
        %v1659 = vrcp.pop %v1546
        %v1660 = vmul.f32 1.0, %v1659
        %v1661 = vrcp.pop %v1547
        %v1662 = vmul.f32 1.0, %v1661
        %v1663 = vrcp.pop %v1548
        %v1664 = vmul.f32 1.0, %v1663
        %v1665 = vrcp.pop %v1549
        %v1666 = vmul.f32 1.0, %v1665
        %v1667 = vrcp.pop %v1550
        %v1668 = vmul.f32 1.0, %v1667
        %v1669 = vrcp.pop %v1551
        %v1670 = vmul.f32 1.0, %v1669
        %v1671 = vrcp.pop %v1552
        %v1672 = vmul.f32 1.0, %v1671
        %v1673 = vrcp.pop %v1553
        %v1674 = vmul.f32 1.0, %v1673
        %v1675 = vrcp.pop %v1554
        %v1676 = vmul.f32 1.0, %v1675
        %v1677 = vrcp.pop %v1555
        %v1678 = vmul.f32 1.0, %v1677
        %v1679 = vrcp.pop %v1556
        %v1680 = vmul.f32 1.0, %v1679
        %v1681 = vrcp.pop %v1557
        %v1682 = vmul.f32 1.0, %v1681
        %v1683 = vrcp.pop %v1558
        %v1684 = vmul.f32 1.0, %v1683
        %v1685 = vrcp.pop %v1559
        %v1686 = vmul.f32 1.0, %v1685
        %v1687 = vrcp.pop %v1560
        %v1688 = vmul.f32 1.0, %v1687
        %v1689 = vmul.f32 %v1241, %v1562
        %v1690 = vmul.f32 %v1242, %v1564
        %v1691 = vmul.f32 %v1243, %v1566
        %v1692 = vmul.f32 %v1244, %v1568
        %v1693 = vmul.f32 %v1245, %v1570
        %v1694 = vmul.f32 %v1246, %v1572
        %v1695 = vmul.f32 %v1247, %v1574
        %v1696 = vmul.f32 %v1248, %v1576
        %v1697 = vmul.f32 %v1249, %v1578
        %v1698 = vmul.f32 %v1250, %v1580
        %v1699 = vmul.f32 %v1251, %v1582
        %v1700 = vmul.f32 %v1252, %v1584
        %v1701 = vmul.f32 %v1253, %v1586
        %v1702 = vmul.f32 %v1254, %v1588
        %v1703 = vmul.f32 %v1255, %v1590
        %v1704 = vmul.f32 %v1256, %v1592
        %v1705 = vmul.f32 %v1257, %v1594
        %v1706 = vmul.f32 %v1258, %v1596
        %v1707 = vmul.f32 %v1259, %v1598
        %v1708 = vmul.f32 %v1260, %v1600
        %v1709 = vmul.f32 %v1261, %v1602
        %v1710 = vmul.f32 %v1262, %v1604
        %v1711 = vmul.f32 %v1263, %v1606
        %v1712 = vmul.f32 %v1264, %v1608
        %v1713 = vmul.f32 %v1265, %v1610
        %v1714 = vmul.f32 %v1266, %v1612
        %v1715 = vmul.f32 %v1267, %v1614
        %v1716 = vmul.f32 %v1268, %v1616
        %v1717 = vmul.f32 %v1269, %v1618
        %v1718 = vmul.f32 %v1270, %v1620
        %v1719 = vmul.f32 %v1271, %v1622
        %v1720 = vmul.f32 %v1272, %v1624
        %v1721 = vmul.f32 %v1273, %v1626
        %v1722 = vmul.f32 %v1274, %v1628
        %v1723 = vmul.f32 %v1275, %v1630
        %v1724 = vmul.f32 %v1276, %v1632
        %v1725 = vmul.f32 %v1277, %v1634
        %v1726 = vmul.f32 %v1278, %v1636
        %v1727 = vmul.f32 %v1279, %v1638
        %v1728 = vmul.f32 %v1280, %v1640
        %v1729 = vmul.f32 %v1281, %v1642
        %v1730 = vmul.f32 %v1282, %v1644
        %v1731 = vmul.f32 %v1283, %v1646
        %v1732 = vmul.f32 %v1284, %v1648
        %v1733 = vmul.f32 %v1285, %v1650
        %v1734 = vmul.f32 %v1286, %v1652
        %v1735 = vmul.f32 %v1287, %v1654
        %v1736 = vmul.f32 %v1288, %v1656
        %v1737 = vmul.f32 %v1289, %v1658
        %v1738 = vmul.f32 %v1290, %v1660
        %v1739 = vmul.f32 %v1291, %v1662
        %v1740 = vmul.f32 %v1292, %v1664
        %v1741 = vmul.f32 %v1293, %v1666
        %v1742 = vmul.f32 %v1294, %v1668
        %v1743 = vmul.f32 %v1295, %v1670
        %v1744 = vmul.f32 %v1296, %v1672
        %v1745 = vmul.f32 %v1297, %v1674
        %v1746 = vmul.f32 %v1298, %v1676
        %v1747 = vmul.f32 %v1299, %v1678
        %v1748 = vmul.f32 %v1300, %v1680
        %v1749 = vmul.f32 %v1301, %v1682
        %v1750 = vmul.f32 %v1302, %v1684
        %v1751 = vmul.f32 %v1303, %v1686
        %v1752 = vmul.f32 %v1304, %v1688
        %1753 = vst [vmem:[#allocation2] sm:$0xff] %v1689
        %1754 = vst [vmem:[#allocation2 + $0x8] sm:$0xff] %v1690
        %1755 = vst [vmem:[#allocation2 + $0x18] sm:$0xff] %v1691
        %1756 = vst [vmem:[#allocation2 + $0x20] sm:$0xff] %v1692
        %1757 = vst [vmem:[#allocation2 + $0x30] sm:$0xff] %v1693
        %1758 = vst [vmem:[#allocation2 + $0x38] sm:$0xff] %v1694
        %1759 = vst [vmem:[#allocation2 + $0x48] sm:$0xff] %v1695
        %1760 = vst [vmem:[#allocation2 + $0x50] sm:$0xff] %v1696
        %1761 = vst [vmem:[#allocation2 + $0x60] sm:$0xff] %v1697
        %1762 = vst [vmem:[#allocation2 + $0x68] sm:$0xff] %v1698
        %1763 = vst [vmem:[#allocation2 + $0x78] sm:$0xff] %v1699
        %1764 = vst [vmem:[#allocation2 + $0x80] sm:$0xff] %v1700
        %1765 = vst [vmem:[#allocation2 + $0x90] sm:$0xff] %v1701
        %1766 = vst [vmem:[#allocation2 + $0x98] sm:$0xff] %v1702
        %1767 = vst [vmem:[#allocation2 + $0xa8] sm:$0xff] %v1703
        %1768 = vst [vmem:[#allocation2 + $0xb0] sm:$0xff] %v1704
        %1769 = vst [vmem:[#allocation2 + $0xc0] sm:$0xff] %v1705
        %1770 = vst [vmem:[#allocation2 + $0xc8] sm:$0xff] %v1706
        %1771 = vst [vmem:[#allocation2 + $0xd8] sm:$0xff] %v1707
        %1772 = vst [vmem:[#allocation2 + $0xe0] sm:$0xff] %v1708
        %1773 = vst [vmem:[#allocation2 + $0xf0] sm:$0xff] %v1709
        %1774 = vst [vmem:[#allocation2 + $0xf8] sm:$0xff] %v1710
        %1775 = vst [vmem:[#allocation2 + $0x108] sm:$0xff] %v1711
        %1776 = vst [vmem:[#allocation2 + $0x110] sm:$0xff] %v1712
        %1777 = vst [vmem:[#allocation2 + $0x120] sm:$0xff] %v1713
        %1778 = vst [vmem:[#allocation2 + $0x128] sm:$0xff] %v1714
        %1779 = vst [vmem:[#allocation2 + $0x138] sm:$0xff] %v1715
        %1780 = vst [vmem:[#allocation2 + $0x140] sm:$0xff] %v1716
        %1781 = vst [vmem:[#allocation2 + $0x150] sm:$0xff] %v1717
        %1782 = vst [vmem:[#allocation2 + $0x158] sm:$0xff] %v1718
        %1783 = vst [vmem:[#allocation2 + $0x168] sm:$0xff] %v1719
        %1784 = vst [vmem:[#allocation2 + $0x170] sm:$0xff] %v1720
        %1785 = vst [vmem:[#allocation2 + $0x180] sm:$0xff] %v1721
        %1786 = vst [vmem:[#allocation2 + $0x188] sm:$0xff] %v1722
        %1787 = vst [vmem:[#allocation2 + $0x198] sm:$0xff] %v1723
        %1788 = vst [vmem:[#allocation2 + $0x1a0] sm:$0xff] %v1724
        %1789 = vst [vmem:[#allocation2 + $0x1b0] sm:$0xff] %v1725
        %1790 = vst [vmem:[#allocation2 + $0x1b8] sm:$0xff] %v1726
        %1791 = vst [vmem:[#allocation2 + $0x1c8] sm:$0xff] %v1727
        %1792 = vst [vmem:[#allocation2 + $0x1d0] sm:$0xff] %v1728
        %1793 = vst [vmem:[#allocation2 + $0x1e0] sm:$0xff] %v1729
        %1794 = vst [vmem:[#allocation2 + $0x1e8] sm:$0xff] %v1730
        %1795 = vst [vmem:[#allocation2 + $0x1f8] sm:$0xff] %v1731
        %1796 = vst [vmem:[#allocation2 + $0x200] sm:$0xff] %v1732
        %1797 = vst [vmem:[#allocation2 + $0x210] sm:$0xff] %v1733
        %1798 = vst [vmem:[#allocation2 + $0x218] sm:$0xff] %v1734
        %1799 = vst [vmem:[#allocation2 + $0x228] sm:$0xff] %v1735
        %1800 = vst [vmem:[#allocation2 + $0x230] sm:$0xff] %v1736
        %1801 = vst [vmem:[#allocation2 + $0x240] sm:$0xff] %v1737
        %1802 = vst [vmem:[#allocation2 + $0x248] sm:$0xff] %v1738
        %1803 = vst [vmem:[#allocation2 + $0x258] sm:$0xff] %v1739
        %1804 = vst [vmem:[#allocation2 + $0x260] sm:$0xff] %v1740
        %1805 = vst [vmem:[#allocation2 + $0x270] sm:$0xff] %v1741
        %1806 = vst [vmem:[#allocation2 + $0x278] sm:$0xff] %v1742
        %1807 = vst [vmem:[#allocation2 + $0x288] sm:$0xff] %v1743
        %1808 = vst [vmem:[#allocation2 + $0x290] sm:$0xff] %v1744
        %1809 = vst [vmem:[#allocation2 + $0x2a0] sm:$0xff] %v1745
        %1810 = vst [vmem:[#allocation2 + $0x2a8] sm:$0xff] %v1746
        %1811 = vst [vmem:[#allocation2 + $0x2b8] sm:$0xff] %v1747
        %1812 = vst [vmem:[#allocation2 + $0x2c0] sm:$0xff] %v1748
        %1813 = vst [vmem:[#allocation2 + $0x2d0] sm:$0xff] %v1749
        %1814 = vst [vmem:[#allocation2 + $0x2d8] sm:$0xff] %v1750
        %1815 = vst [vmem:[#allocation2 + $0x2e8] sm:$0xff] %v1751
        %1816 = vst [vmem:[#allocation2 + $0x2f0] sm:$0xff] %v1752
        %vm1847 = vcmask 1040384
        %v1848 = vrot.slane %v1690, 7
        %v1849 = vrot.slane %v1692, 7
        %v1850 = vsel %vm1847, %v1848, %v1849
        %v1851 = vrot.slane %v1694, 7
        %v1852 = vrot.slane %v1696, 7
        %v1853 = vsel %vm1847, %v1851, %v1852
        %v1854 = vrot.slane %v1698, 7
        %v1855 = vrot.slane %v1700, 7
        %v1856 = vsel %vm1847, %v1854, %v1855
        %v1857 = vrot.slane %v1702, 7
        %v1858 = vrot.slane %v1704, 7
        %v1859 = vsel %vm1847, %v1857, %v1858
        %v1860 = vrot.slane %v1706, 7
        %v1861 = vrot.slane %v1708, 7
        %v1862 = vsel %vm1847, %v1860, %v1861
        %v1863 = vrot.slane %v1710, 7
        %v1864 = vrot.slane %v1712, 7
        %v1865 = vsel %vm1847, %v1863, %v1864
        %v1866 = vrot.slane %v1714, 7
        %v1867 = vrot.slane %v1716, 7
        %v1868 = vsel %vm1847, %v1866, %v1867
        %v1869 = vrot.slane %v1718, 7
        %v1870 = vrot.slane %v1720, 7
        %v1871 = vsel %vm1847, %v1869, %v1870
        %v1872 = vrot.slane %v1722, 7
        %v1873 = vrot.slane %v1724, 7
        %v1874 = vsel %vm1847, %v1872, %v1873
        %v1875 = vrot.slane %v1726, 7
        %v1876 = vrot.slane %v1728, 7
        %v1877 = vsel %vm1847, %v1875, %v1876
        %v1878 = vrot.slane %v1730, 7
        %v1879 = vrot.slane %v1732, 7
        %v1880 = vsel %vm1847, %v1878, %v1879
        %v1881 = vrot.slane %v1734, 7
        %v1882 = vrot.slane %v1736, 7
        %v1883 = vsel %vm1847, %v1881, %v1882
        %v1884 = vrot.slane %v1738, 7
        %v1885 = vrot.slane %v1740, 7
        %v1886 = vsel %vm1847, %v1884, %v1885
        %v1887 = vrot.slane %v1742, 7
        %v1888 = vrot.slane %v1744, 7
        %v1889 = vsel %vm1847, %v1887, %v1888
        %v1890 = vrot.slane %v1746, 7
        %v1891 = vrot.slane %v1748, 7
        %v1892 = vsel %vm1847, %v1890, %v1891
        %s1923 = scalar_lea.vmem [#allocation3], 144
        %1924 = vst [vmem:[%s1923] sm:$0xfe] %v1848
        %1925 = vst [vmem:[%s1923 + $0x48] sm:$0xff] %v1850
        %1926 = vst [vmem:[%s1923 + $0x90] sm:$0xfe] %v1851
        %1927 = vst [vmem:[%s1923 + $0xd8] sm:$0xff] %v1853
        %1928 = vst [vmem:[%s1923 + $0x120] sm:$0xfe] %v1854
        %1929 = vst [vmem:[%s1923 + $0x168] sm:$0xff] %v1856
        %1930 = vst [vmem:[%s1923 + $0x1b0] sm:$0xfe] %v1857
        %1931 = vst [vmem:[%s1923 + $0x1f8] sm:$0xff] %v1859
        %1932 = vst [vmem:[%s1923 + $0x240] sm:$0xfe] %v1860
        %1933 = vst [vmem:[%s1923 + $0x288] sm:$0xff] %v1862
        %1934 = vst [vmem:[%s1923 + $0x2d0] sm:$0xfe] %v1863
        %1935 = vst [vmem:[%s1923 + $0x318] sm:$0xff] %v1865
        %1936 = vst [vmem:[%s1923 + $0x360] sm:$0xfe] %v1866
        %1937 = vst [vmem:[%s1923 + $0x3a8] sm:$0xff] %v1868
        %1938 = vst [vmem:[%s1923 + $0x3f0] sm:$0xfe] %v1869
        %1939 = vst [vmem:[%s1923 + $0x438] sm:$0xff] %v1871
        %1940 = vst [vmem:[%s1923 + $0x480] sm:$0xfe] %v1872
        %1941 = vst [vmem:[%s1923 + $0x4c8] sm:$0xff] %v1874
        %1942 = vst [vmem:[%s1923 + $0x510] sm:$0xfe] %v1875
        %1943 = vst [vmem:[%s1923 + $0x558] sm:$0xff] %v1877
        %1944 = vst [vmem:[%s1923 + $0x5a0] sm:$0xfe] %v1878
        %1945 = vst [vmem:[%s1923 + $0x5e8] sm:$0xff] %v1880
        %1946 = vst [vmem:[%s1923 + $0x630] sm:$0xfe] %v1881
        %1947 = vst [vmem:[%s1923 + $0x678] sm:$0xff] %v1883
        %1948 = vst [vmem:[%s1923 + $0x6c0] sm:$0xfe] %v1884
        %1949 = vst [vmem:[%s1923 + $0x708] sm:$0xff] %v1886
        %1950 = vst [vmem:[%s1923 + $0x750] sm:$0xfe] %v1887
        %1951 = vst [vmem:[%s1923 + $0x798] sm:$0xff] %v1889
        %1952 = vst [vmem:[%s1923 + $0x7e0] sm:$0xfe] %v1890
        %1953 = vst [vmem:[%s1923 + $0x828] sm:$0xff] %v1892
        %1954 = vst [vmem:[%s1923 + $0x8] sm:$0xff] %v1690
        %1955 = vst [vmem:[%s1923 + $0x50] sm:$0xff] %v1692
        %1956 = vst [vmem:[%s1923 + $0x98] sm:$0xff] %v1694
        %1957 = vst [vmem:[%s1923 + $0xe0] sm:$0xff] %v1696
        %1958 = vst [vmem:[%s1923 + $0x128] sm:$0xff] %v1698
        %1959 = vst [vmem:[%s1923 + $0x170] sm:$0xff] %v1700
        %1960 = vst [vmem:[%s1923 + $0x1b8] sm:$0xff] %v1702
        %1961 = vst [vmem:[%s1923 + $0x200] sm:$0xff] %v1704
        %1962 = vst [vmem:[%s1923 + $0x248] sm:$0xff] %v1706
        %1963 = vst [vmem:[%s1923 + $0x290] sm:$0xff] %v1708
        %1964 = vst [vmem:[%s1923 + $0x2d8] sm:$0xff] %v1710
        %1965 = vst [vmem:[%s1923 + $0x320] sm:$0xff] %v1712
        %1966 = vst [vmem:[%s1923 + $0x368] sm:$0xff] %v1714
        %1967 = vst [vmem:[%s1923 + $0x3b0] sm:$0xff] %v1716
        %1968 = vst [vmem:[%s1923 + $0x3f8] sm:$0xff] %v1718
        %1969 = vst [vmem:[%s1923 + $0x440] sm:$0xff] %v1720
        %1970 = vst [vmem:[%s1923 + $0x488] sm:$0xff] %v1722
        %1971 = vst [vmem:[%s1923 + $0x4d0] sm:$0xff] %v1724
        %1972 = vst [vmem:[%s1923 + $0x518] sm:$0xff] %v1726
        %1973 = vst [vmem:[%s1923 + $0x560] sm:$0xff] %v1728
        %1974 = vst [vmem:[%s1923 + $0x5a8] sm:$0xff] %v1730
        %1975 = vst [vmem:[%s1923 + $0x5f0] sm:$0xff] %v1732
        %1976 = vst [vmem:[%s1923 + $0x638] sm:$0xff] %v1734
        %1977 = vst [vmem:[%s1923 + $0x680] sm:$0xff] %v1736
        %1978 = vst [vmem:[%s1923 + $0x6c8] sm:$0xff] %v1738
        %1979 = vst [vmem:[%s1923 + $0x710] sm:$0xff] %v1740
        %1980 = vst [vmem:[%s1923 + $0x758] sm:$0xff] %v1742
        %1981 = vst [vmem:[%s1923 + $0x7a0] sm:$0xff] %v1744
        %1982 = vst [vmem:[%s1923 + $0x7e8] sm:$0xff] %v1746
        %1983 = vst [vmem:[%s1923 + $0x830] sm:$0xff] %v1748
        %vm1984 = vcmask 1046528
        %v1985 = vrot.slane %v1690, 1
        %v1986 = vrot.slane %v1692, 1
        %v1987 = vsel %vm1984, %v1985, %v1986
        %v1988 = vrot.slane %v1694, 1
        %v1989 = vrot.slane %v1696, 1
        %v1990 = vsel %vm1984, %v1988, %v1989
        %v1991 = vrot.slane %v1698, 1
        %v1992 = vrot.slane %v1700, 1
        %v1993 = vsel %vm1984, %v1991, %v1992
        %v1994 = vrot.slane %v1702, 1
        %v1995 = vrot.slane %v1704, 1
        %v1996 = vsel %vm1984, %v1994, %v1995
        %v1997 = vrot.slane %v1706, 1
        %v1998 = vrot.slane %v1708, 1
        %v1999 = vsel %vm1984, %v1997, %v1998
        %v2000 = vrot.slane %v1710, 1
        %v2001 = vrot.slane %v1712, 1
        %v2002 = vsel %vm1984, %v2000, %v2001
        %v2003 = vrot.slane %v1714, 1
        %v2004 = vrot.slane %v1716, 1
        %v2005 = vsel %vm1984, %v2003, %v2004
        %v2006 = vrot.slane %v1718, 1
        %v2007 = vrot.slane %v1720, 1
        %v2008 = vsel %vm1984, %v2006, %v2007
        %v2009 = vrot.slane %v1722, 1
        %v2010 = vrot.slane %v1724, 1
        %v2011 = vsel %vm1984, %v2009, %v2010
        %v2012 = vrot.slane %v1726, 1
        %v2013 = vrot.slane %v1728, 1
        %v2014 = vsel %vm1984, %v2012, %v2013
        %v2015 = vrot.slane %v1730, 1
        %v2016 = vrot.slane %v1732, 1
        %v2017 = vsel %vm1984, %v2015, %v2016
        %v2018 = vrot.slane %v1734, 1
        %v2019 = vrot.slane %v1736, 1
        %v2020 = vsel %vm1984, %v2018, %v2019
        %v2021 = vrot.slane %v1738, 1
        %v2022 = vrot.slane %v1740, 1
        %v2023 = vsel %vm1984, %v2021, %v2022
        %v2024 = vrot.slane %v1742, 1
        %v2025 = vrot.slane %v1744, 1
        %v2026 = vsel %vm1984, %v2024, %v2025
        %v2027 = vrot.slane %v1746, 1
        %v2028 = vrot.slane %v1748, 1
        %v2029 = vsel %vm1984, %v2027, %v2028
        %2060 = vst [vmem:[%s1923 + $0x10] sm:$0xff] %v1987
        %2061 = vst [vmem:[%s1923 + $0x58] sm:$0x7f] %v1986
        %2062 = vst [vmem:[%s1923 + $0xa0] sm:$0xff] %v1990
        %2063 = vst [vmem:[%s1923 + $0xe8] sm:$0x7f] %v1989
        %2064 = vst [vmem:[%s1923 + $0x130] sm:$0xff] %v1993
        %2065 = vst [vmem:[%s1923 + $0x178] sm:$0x7f] %v1992
        %2066 = vst [vmem:[%s1923 + $0x1c0] sm:$0xff] %v1996
        %2067 = vst [vmem:[%s1923 + $0x208] sm:$0x7f] %v1995
        %2068 = vst [vmem:[%s1923 + $0x250] sm:$0xff] %v1999
        %2069 = vst [vmem:[%s1923 + $0x298] sm:$0x7f] %v1998
        %2070 = vst [vmem:[%s1923 + $0x2e0] sm:$0xff] %v2002
        %2071 = vst [vmem:[%s1923 + $0x328] sm:$0x7f] %v2001
        %2072 = vst [vmem:[%s1923 + $0x370] sm:$0xff] %v2005
        %2073 = vst [vmem:[%s1923 + $0x3b8] sm:$0x7f] %v2004
        %2074 = vst [vmem:[%s1923 + $0x400] sm:$0xff] %v2008
        %2075 = vst [vmem:[%s1923 + $0x448] sm:$0x7f] %v2007
        %2076 = vst [vmem:[%s1923 + $0x490] sm:$0xff] %v2011
        %2077 = vst [vmem:[%s1923 + $0x4d8] sm:$0x7f] %v2010
        %2078 = vst [vmem:[%s1923 + $0x520] sm:$0xff] %v2014
        %2079 = vst [vmem:[%s1923 + $0x568] sm:$0x7f] %v2013
        %2080 = vst [vmem:[%s1923 + $0x5b0] sm:$0xff] %v2017
        %2081 = vst [vmem:[%s1923 + $0x5f8] sm:$0x7f] %v2016
        %2082 = vst [vmem:[%s1923 + $0x640] sm:$0xff] %v2020
        %2083 = vst [vmem:[%s1923 + $0x688] sm:$0x7f] %v2019
        %2084 = vst [vmem:[%s1923 + $0x6d0] sm:$0xff] %v2023
        %2085 = vst [vmem:[%s1923 + $0x718] sm:$0x7f] %v2022
        %2086 = vst [vmem:[%s1923 + $0x760] sm:$0xff] %v2026
        %2087 = vst [vmem:[%s1923 + $0x7a8] sm:$0x7f] %v2025
        %2088 = vst [vmem:[%s1923 + $0x7f0] sm:$0xff] %v2029
        %2089 = vst [vmem:[%s1923 + $0x838] sm:$0x7f] %v2028
        %v2092 = vrot.slane %v1750, 7
        %v2093 = vrot.slane %v1752, 7
        %v2094 = vsel %vm1847, %v2092, %v2093
        %2097 = vst [vmem:[#allocation3 + $0x18] sm:$0xfe] %v1848
        %2098 = vst [vmem:[#allocation3 + $0x60] sm:$0xff] %v1850
        %2099 = vst [vmem:[#allocation3 + $0xa8] sm:$0xfe] %v1851
        %2100 = vst [vmem:[#allocation3 + $0xf0] sm:$0xff] %v1853
        %2101 = vst [vmem:[#allocation3 + $0x138] sm:$0xfe] %v1854
        %2102 = vst [vmem:[#allocation3 + $0x180] sm:$0xff] %v1856
        %2103 = vst [vmem:[#allocation3 + $0x1c8] sm:$0xfe] %v1857
        %2104 = vst [vmem:[#allocation3 + $0x210] sm:$0xff] %v1859
        %2105 = vst [vmem:[#allocation3 + $0x258] sm:$0xfe] %v1860
        %2106 = vst [vmem:[#allocation3 + $0x2a0] sm:$0xff] %v1862
        %2107 = vst [vmem:[#allocation3 + $0x2e8] sm:$0xfe] %v1863
        %2108 = vst [vmem:[#allocation3 + $0x330] sm:$0xff] %v1865
        %2109 = vst [vmem:[#allocation3 + $0x378] sm:$0xfe] %v1866
        %2110 = vst [vmem:[#allocation3 + $0x3c0] sm:$0xff] %v1868
        %2111 = vst [vmem:[#allocation3 + $0x408] sm:$0xfe] %v1869
        %2112 = vst [vmem:[#allocation3 + $0x450] sm:$0xff] %v1871
        %2113 = vst [vmem:[#allocation3 + $0x498] sm:$0xfe] %v1872
        %2114 = vst [vmem:[#allocation3 + $0x4e0] sm:$0xff] %v1874
        %2115 = vst [vmem:[#allocation3 + $0x528] sm:$0xfe] %v1875
        %2116 = vst [vmem:[#allocation3 + $0x570] sm:$0xff] %v1877
        %2117 = vst [vmem:[#allocation3 + $0x5b8] sm:$0xfe] %v1878
        %2118 = vst [vmem:[#allocation3 + $0x600] sm:$0xff] %v1880
        %2119 = vst [vmem:[#allocation3 + $0x648] sm:$0xfe] %v1881
        %2120 = vst [vmem:[#allocation3 + $0x690] sm:$0xff] %v1883
        %2121 = vst [vmem:[#allocation3 + $0x6d8] sm:$0xfe] %v1884
        %2122 = vst [vmem:[#allocation3 + $0x720] sm:$0xff] %v1886
        %2123 = vst [vmem:[#allocation3 + $0x768] sm:$0xfe] %v1887
        %2124 = vst [vmem:[#allocation3 + $0x7b0] sm:$0xff] %v1889
        %2125 = vst [vmem:[#allocation3 + $0x7f8] sm:$0xfe] %v1890
        %2126 = vst [vmem:[#allocation3 + $0x840] sm:$0xff] %v1892
        %2127 = vst [vmem:[#allocation3 + $0x888] sm:$0xfe] %v2092
        %2128 = vst [vmem:[#allocation3 + $0x8d0] sm:$0xff] %v2094
        %2129 = vst [vmem:[#allocation3 + $0x20] sm:$0xff] %v1690
        %2130 = vst [vmem:[#allocation3 + $0x68] sm:$0xff] %v1692
        %2131 = vst [vmem:[#allocation3 + $0xb0] sm:$0xff] %v1694
        %2132 = vst [vmem:[#allocation3 + $0xf8] sm:$0xff] %v1696
        %2133 = vst [vmem:[#allocation3 + $0x140] sm:$0xff] %v1698
        %2134 = vst [vmem:[#allocation3 + $0x188] sm:$0xff] %v1700
        %2135 = vst [vmem:[#allocation3 + $0x1d0] sm:$0xff] %v1702
        %2136 = vst [vmem:[#allocation3 + $0x218] sm:$0xff] %v1704
        %2137 = vst [vmem:[#allocation3 + $0x260] sm:$0xff] %v1706
        %2138 = vst [vmem:[#allocation3 + $0x2a8] sm:$0xff] %v1708
        %2139 = vst [vmem:[#allocation3 + $0x2f0] sm:$0xff] %v1710
        %2140 = vst [vmem:[#allocation3 + $0x338] sm:$0xff] %v1712
        %2141 = vst [vmem:[#allocation3 + $0x380] sm:$0xff] %v1714
        %2142 = vst [vmem:[#allocation3 + $0x3c8] sm:$0xff] %v1716
        %2143 = vst [vmem:[#allocation3 + $0x410] sm:$0xff] %v1718
        %2144 = vst [vmem:[#allocation3 + $0x458] sm:$0xff] %v1720
        %2145 = vst [vmem:[#allocation3 + $0x4a0] sm:$0xff] %v1722
        %2146 = vst [vmem:[#allocation3 + $0x4e8] sm:$0xff] %v1724
        %2147 = vst [vmem:[#allocation3 + $0x530] sm:$0xff] %v1726
        %2148 = vst [vmem:[#allocation3 + $0x578] sm:$0xff] %v1728
        %2149 = vst [vmem:[#allocation3 + $0x5c0] sm:$0xff] %v1730
        %2150 = vst [vmem:[#allocation3 + $0x608] sm:$0xff] %v1732
        %2151 = vst [vmem:[#allocation3 + $0x650] sm:$0xff] %v1734
        %2152 = vst [vmem:[#allocation3 + $0x698] sm:$0xff] %v1736
        %2153 = vst [vmem:[#allocation3 + $0x6e0] sm:$0xff] %v1738
        %2154 = vst [vmem:[#allocation3 + $0x728] sm:$0xff] %v1740
        %2155 = vst [vmem:[#allocation3 + $0x770] sm:$0xff] %v1742
        %2156 = vst [vmem:[#allocation3 + $0x7b8] sm:$0xff] %v1744
        %2157 = vst [vmem:[#allocation3 + $0x800] sm:$0xff] %v1746
        %2158 = vst [vmem:[#allocation3 + $0x848] sm:$0xff] %v1748
        %2159 = vst [vmem:[#allocation3 + $0x890] sm:$0xff] %v1750
        %2160 = vst [vmem:[#allocation3 + $0x8d8] sm:$0xff] %v1752
        %v2161 = vrot.slane %v1750, 1
        %v2162 = vrot.slane %v1752, 1
        %v2163 = vsel %vm1984, %v2161, %v2162
        %2166 = vst [vmem:[#allocation3 + $0x28] sm:$0xff] %v1987
        %2167 = vst [vmem:[#allocation3 + $0x70] sm:$0x7f] %v1986
        %2168 = vst [vmem:[#allocation3 + $0xb8] sm:$0xff] %v1990
        %2169 = vst [vmem:[#allocation3 + $0x100] sm:$0x7f] %v1989
        %2170 = vst [vmem:[#allocation3 + $0x148] sm:$0xff] %v1993
        %2171 = vst [vmem:[#allocation3 + $0x190] sm:$0x7f] %v1992
        %2172 = vst [vmem:[#allocation3 + $0x1d8] sm:$0xff] %v1996
        %2173 = vst [vmem:[#allocation3 + $0x220] sm:$0x7f] %v1995
        %2174 = vst [vmem:[#allocation3 + $0x268] sm:$0xff] %v1999
        %2175 = vst [vmem:[#allocation3 + $0x2b0] sm:$0x7f] %v1998
        %2176 = vst [vmem:[#allocation3 + $0x2f8] sm:$0xff] %v2002
        %2177 = vst [vmem:[#allocation3 + $0x340] sm:$0x7f] %v2001
        %2178 = vst [vmem:[#allocation3 + $0x388] sm:$0xff] %v2005
        %2179 = vst [vmem:[#allocation3 + $0x3d0] sm:$0x7f] %v2004
        %2180 = vst [vmem:[#allocation3 + $0x418] sm:$0xff] %v2008
        %2181 = vst [vmem:[#allocation3 + $0x460] sm:$0x7f] %v2007
        %2182 = vst [vmem:[#allocation3 + $0x4a8] sm:$0xff] %v2011
        %2183 = vst [vmem:[#allocation3 + $0x4f0] sm:$0x7f] %v2010
        %2184 = vst [vmem:[#allocation3 + $0x538] sm:$0xff] %v2014
        %2185 = vst [vmem:[#allocation3 + $0x580] sm:$0x7f] %v2013
        %2186 = vst [vmem:[#allocation3 + $0x5c8] sm:$0xff] %v2017
        %2187 = vst [vmem:[#allocation3 + $0x610] sm:$0x7f] %v2016
        %2188 = vst [vmem:[#allocation3 + $0x658] sm:$0xff] %v2020
        %2189 = vst [vmem:[#allocation3 + $0x6a0] sm:$0x7f] %v2019
        %2190 = vst [vmem:[#allocation3 + $0x6e8] sm:$0xff] %v2023
        %2191 = vst [vmem:[#allocation3 + $0x730] sm:$0x7f] %v2022
        %2192 = vst [vmem:[#allocation3 + $0x778] sm:$0xff] %v2026
        %2193 = vst [vmem:[#allocation3 + $0x7c0] sm:$0x7f] %v2025
        %2194 = vst [vmem:[#allocation3 + $0x808] sm:$0xff] %v2029
        %2195 = vst [vmem:[#allocation3 + $0x850] sm:$0x7f] %v2028
        %2196 = vst [vmem:[#allocation3 + $0x898] sm:$0xff] %v2163
        %2197 = vst [vmem:[#allocation3 + $0x8e0] sm:$0x7f] %v2162
        %2198 = vst [vmem:[#allocation3 + $0x30] sm:$0xfe] %v1851
        %2199 = vst [vmem:[#allocation3 + $0x78] sm:$0xff] %v1853
        %2200 = vst [vmem:[#allocation3 + $0xc0] sm:$0xfe] %v1854
        %2201 = vst [vmem:[#allocation3 + $0x108] sm:$0xff] %v1856
        %2202 = vst [vmem:[#allocation3 + $0x150] sm:$0xfe] %v1857
        %2203 = vst [vmem:[#allocation3 + $0x198] sm:$0xff] %v1859
        %2204 = vst [vmem:[#allocation3 + $0x1e0] sm:$0xfe] %v1860
        %2205 = vst [vmem:[#allocation3 + $0x228] sm:$0xff] %v1862
        %2206 = vst [vmem:[#allocation3 + $0x270] sm:$0xfe] %v1863
        %2207 = vst [vmem:[#allocation3 + $0x2b8] sm:$0xff] %v1865
        %2208 = vst [vmem:[#allocation3 + $0x300] sm:$0xfe] %v1866
        %2209 = vst [vmem:[#allocation3 + $0x348] sm:$0xff] %v1868
        %2210 = vst [vmem:[#allocation3 + $0x390] sm:$0xfe] %v1869
        %2211 = vst [vmem:[#allocation3 + $0x3d8] sm:$0xff] %v1871
        %2212 = vst [vmem:[#allocation3 + $0x420] sm:$0xfe] %v1872
        %2213 = vst [vmem:[#allocation3 + $0x468] sm:$0xff] %v1874
        %2214 = vst [vmem:[#allocation3 + $0x4b0] sm:$0xfe] %v1875
        %2215 = vst [vmem:[#allocation3 + $0x4f8] sm:$0xff] %v1877
        %2216 = vst [vmem:[#allocation3 + $0x540] sm:$0xfe] %v1878
        %2217 = vst [vmem:[#allocation3 + $0x588] sm:$0xff] %v1880
        %2218 = vst [vmem:[#allocation3 + $0x5d0] sm:$0xfe] %v1881
        %2219 = vst [vmem:[#allocation3 + $0x618] sm:$0xff] %v1883
        %2220 = vst [vmem:[#allocation3 + $0x660] sm:$0xfe] %v1884
        %2221 = vst [vmem:[#allocation3 + $0x6a8] sm:$0xff] %v1886
        %2222 = vst [vmem:[#allocation3 + $0x6f0] sm:$0xfe] %v1887
        %2223 = vst [vmem:[#allocation3 + $0x738] sm:$0xff] %v1889
        %2224 = vst [vmem:[#allocation3 + $0x780] sm:$0xfe] %v1890
        %2225 = vst [vmem:[#allocation3 + $0x7c8] sm:$0xff] %v1892
        %2226 = vst [vmem:[#allocation3 + $0x810] sm:$0xfe] %v2092
        %2227 = vst [vmem:[#allocation3 + $0x858] sm:$0xff] %v2094
        %2228 = vst [vmem:[#allocation3 + $0x38] sm:$0xff] %v1694
        %2229 = vst [vmem:[#allocation3 + $0x80] sm:$0xff] %v1696
        %2230 = vst [vmem:[#allocation3 + $0xc8] sm:$0xff] %v1698
        %2231 = vst [vmem:[#allocation3 + $0x110] sm:$0xff] %v1700
        %2232 = vst [vmem:[#allocation3 + $0x158] sm:$0xff] %v1702
        %2233 = vst [vmem:[#allocation3 + $0x1a0] sm:$0xff] %v1704
        %2234 = vst [vmem:[#allocation3 + $0x1e8] sm:$0xff] %v1706
        %2235 = vst [vmem:[#allocation3 + $0x230] sm:$0xff] %v1708
        %2236 = vst [vmem:[#allocation3 + $0x278] sm:$0xff] %v1710
        %2237 = vst [vmem:[#allocation3 + $0x2c0] sm:$0xff] %v1712
        %2238 = vst [vmem:[#allocation3 + $0x308] sm:$0xff] %v1714
        %2239 = vst [vmem:[#allocation3 + $0x350] sm:$0xff] %v1716
        %2240 = vst [vmem:[#allocation3 + $0x398] sm:$0xff] %v1718
        %2241 = vst [vmem:[#allocation3 + $0x3e0] sm:$0xff] %v1720
        %2242 = vst [vmem:[#allocation3 + $0x428] sm:$0xff] %v1722
        %2243 = vst [vmem:[#allocation3 + $0x470] sm:$0xff] %v1724
        %2244 = vst [vmem:[#allocation3 + $0x4b8] sm:$0xff] %v1726
        %2245 = vst [vmem:[#allocation3 + $0x500] sm:$0xff] %v1728
        %2246 = vst [vmem:[#allocation3 + $0x548] sm:$0xff] %v1730
        %2247 = vst [vmem:[#allocation3 + $0x590] sm:$0xff] %v1732
        %2248 = vst [vmem:[#allocation3 + $0x5d8] sm:$0xff] %v1734
        %2249 = vst [vmem:[#allocation3 + $0x620] sm:$0xff] %v1736
        %2250 = vst [vmem:[#allocation3 + $0x668] sm:$0xff] %v1738
        %2251 = vst [vmem:[#allocation3 + $0x6b0] sm:$0xff] %v1740
        %2252 = vst [vmem:[#allocation3 + $0x6f8] sm:$0xff] %v1742
        %2253 = vst [vmem:[#allocation3 + $0x740] sm:$0xff] %v1744
        %2254 = vst [vmem:[#allocation3 + $0x788] sm:$0xff] %v1746
        %2255 = vst [vmem:[#allocation3 + $0x7d0] sm:$0xff] %v1748
        %2256 = vst [vmem:[#allocation3 + $0x818] sm:$0xff] %v1750
        %2257 = vst [vmem:[#allocation3 + $0x860] sm:$0xff] %v1752
        %2258 = vst [vmem:[#allocation3 + $0x40] sm:$0xff] %v1990
        %2259 = vst [vmem:[#allocation3 + $0x88] sm:$0x7f] %v1989
        %2260 = vst [vmem:[#allocation3 + $0xd0] sm:$0xff] %v1993
        %2261 = vst [vmem:[#allocation3 + $0x118] sm:$0x7f] %v1992
        %2262 = vst [vmem:[#allocation3 + $0x160] sm:$0xff] %v1996
        %2263 = vst [vmem:[#allocation3 + $0x1a8] sm:$0x7f] %v1995
        %2264 = vst [vmem:[#allocation3 + $0x1f0] sm:$0xff] %v1999
        %2265 = vst [vmem:[#allocation3 + $0x238] sm:$0x7f] %v1998
        %2266 = vst [vmem:[#allocation3 + $0x280] sm:$0xff] %v2002
        %2267 = vst [vmem:[#allocation3 + $0x2c8] sm:$0x7f] %v2001
        %2268 = vst [vmem:[#allocation3 + $0x310] sm:$0xff] %v2005
        %2269 = vst [vmem:[#allocation3 + $0x358] sm:$0x7f] %v2004
        %2270 = vst [vmem:[#allocation3 + $0x3a0] sm:$0xff] %v2008
        %2271 = vst [vmem:[#allocation3 + $0x3e8] sm:$0x7f] %v2007
        %2272 = vst [vmem:[#allocation3 + $0x430] sm:$0xff] %v2011
        %2273 = vst [vmem:[#allocation3 + $0x478] sm:$0x7f] %v2010
        %2274 = vst [vmem:[#allocation3 + $0x4c0] sm:$0xff] %v2014
        %2275 = vst [vmem:[#allocation3 + $0x508] sm:$0x7f] %v2013
        %2276 = vst [vmem:[#allocation3 + $0x550] sm:$0xff] %v2017
        %2277 = vst [vmem:[#allocation3 + $0x598] sm:$0x7f] %v2016
        %2278 = vst [vmem:[#allocation3 + $0x5e0] sm:$0xff] %v2020
        %2279 = vst [vmem:[#allocation3 + $0x628] sm:$0x7f] %v2019
        %2280 = vst [vmem:[#allocation3 + $0x670] sm:$0xff] %v2023
        %2281 = vst [vmem:[#allocation3 + $0x6b8] sm:$0x7f] %v2022
        %2282 = vst [vmem:[#allocation3 + $0x700] sm:$0xff] %v2026
        %2283 = vst [vmem:[#allocation3 + $0x748] sm:$0x7f] %v2025
        %2284 = vst [vmem:[#allocation3 + $0x790] sm:$0xff] %v2029
        %2285 = vst [vmem:[#allocation3 + $0x7d8] sm:$0x7f] %v2028
        %2286 = vst [vmem:[#allocation3 + $0x820] sm:$0xff] %v2163
        %2287 = vst [vmem:[#allocation3 + $0x868] sm:$0x7f] %v2162
        %v2288 = vld [vmem:[#allocation3] sm:$0xff]
        %v2289 = vld [vmem:[#allocation3 + $0x8] sm:$0xff]
        %v2290 = vld [vmem:[#allocation3 + $0x10] sm:$0xff]
        %v2291 = vld [vmem:[#allocation3 + $0x18] sm:$0xff]
        %v2292 = vld [vmem:[#allocation3 + $0x20] sm:$0xff]
        %v2293 = vld [vmem:[#allocation3 + $0x28] sm:$0xff]
        %v2294 = vld [vmem:[#allocation3 + $0x30] sm:$0xff]
        %v2295 = vld [vmem:[#allocation3 + $0x38] sm:$0xff]
        %v2296 = vld [vmem:[#allocation3 + $0x40] sm:$0xff]
        %v2297 = vld [vmem:[#allocation3 + $0x48] sm:$0xff]
        %v2298 = vld [vmem:[#allocation3 + $0x50] sm:$0xff]
        %v2299 = vld [vmem:[#allocation3 + $0x58] sm:$0xff]
        %v2300 = vld [vmem:[#allocation3 + $0x60] sm:$0xff]
        %v2301 = vld [vmem:[#allocation3 + $0x68] sm:$0xff]
        %v2302 = vld [vmem:[#allocation3 + $0x70] sm:$0xff]
        %v2303 = vld [vmem:[#allocation3 + $0x78] sm:$0xff]
        %v2304 = vld [vmem:[#allocation3 + $0x80] sm:$0xff]
        %v2305 = vld [vmem:[#allocation3 + $0x88] sm:$0xff]
        %v2306 = vld [vmem:[#allocation3 + $0x90] sm:$0xff]
        %v2307 = vld [vmem:[#allocation3 + $0x98] sm:$0xff]
        %v2308 = vld [vmem:[#allocation3 + $0xa0] sm:$0xff]
        %v2309 = vld [vmem:[#allocation3 + $0xa8] sm:$0xff]
        %v2310 = vld [vmem:[#allocation3 + $0xb0] sm:$0xff]
        %v2311 = vld [vmem:[#allocation3 + $0xb8] sm:$0xff]
        %v2312 = vld [vmem:[#allocation3 + $0xc0] sm:$0xff]
        %v2313 = vld [vmem:[#allocation3 + $0xc8] sm:$0xff]
        %v2314 = vld [vmem:[#allocation3 + $0xd0] sm:$0xff]
        %v2315 = vld [vmem:[#allocation3 + $0xd8] sm:$0xff]
        %v2316 = vld [vmem:[#allocation3 + $0xe0] sm:$0xff]
        %v2317 = vld [vmem:[#allocation3 + $0xe8] sm:$0xff]
        %v2318 = vld [vmem:[#allocation3 + $0xf0] sm:$0xff]
        %v2319 = vld [vmem:[#allocation3 + $0xf8] sm:$0xff]
        %v2320 = vld [vmem:[#allocation3 + $0x100] sm:$0xff]
        %v2321 = vld [vmem:[#allocation3 + $0x108] sm:$0xff]
        %v2322 = vld [vmem:[#allocation3 + $0x110] sm:$0xff]
        %v2323 = vld [vmem:[#allocation3 + $0x118] sm:$0xff]
        %v2324 = vld [vmem:[#allocation3 + $0x120] sm:$0xff]
        %v2325 = vld [vmem:[#allocation3 + $0x128] sm:$0xff]
        %v2326 = vld [vmem:[#allocation3 + $0x130] sm:$0xff]
        %v2327 = vld [vmem:[#allocation3 + $0x138] sm:$0xff]
        %v2328 = vld [vmem:[#allocation3 + $0x140] sm:$0xff]
        %v2329 = vld [vmem:[#allocation3 + $0x148] sm:$0xff]
        %v2330 = vld [vmem:[#allocation3 + $0x150] sm:$0xff]
        %v2331 = vld [vmem:[#allocation3 + $0x158] sm:$0xff]
        %v2332 = vld [vmem:[#allocation3 + $0x160] sm:$0xff]
        %v2333 = vld [vmem:[#allocation3 + $0x168] sm:$0xff]
        %v2334 = vld [vmem:[#allocation3 + $0x170] sm:$0xff]
        %v2335 = vld [vmem:[#allocation3 + $0x178] sm:$0xff]
        %v2336 = vld [vmem:[#allocation3 + $0x180] sm:$0xff]
        %v2337 = vld [vmem:[#allocation3 + $0x188] sm:$0xff]
        %v2338 = vld [vmem:[#allocation3 + $0x190] sm:$0xff]
        %v2339 = vld [vmem:[#allocation3 + $0x198] sm:$0xff]
        %v2340 = vld [vmem:[#allocation3 + $0x1a0] sm:$0xff]
        %v2341 = vld [vmem:[#allocation3 + $0x1a8] sm:$0xff]
        %v2342 = vld [vmem:[#allocation3 + $0x1b0] sm:$0xff]
        %v2343 = vld [vmem:[#allocation3 + $0x1b8] sm:$0xff]
        %v2344 = vld [vmem:[#allocation3 + $0x1c0] sm:$0xff]
        %v2345 = vld [vmem:[#allocation3 + $0x1c8] sm:$0xff]
        %v2346 = vld [vmem:[#allocation3 + $0x1d0] sm:$0xff]
        %v2347 = vld [vmem:[#allocation3 + $0x1d8] sm:$0xff]
        %v2348 = vld [vmem:[#allocation3 + $0x1e0] sm:$0xff]
        %v2349 = vld [vmem:[#allocation3 + $0x1e8] sm:$0xff]
        %v2350 = vld [vmem:[#allocation3 + $0x1f0] sm:$0xff]
        %v2351 = vld [vmem:[#allocation3 + $0x1f8] sm:$0xff]
        %v2352 = vld [vmem:[#allocation3 + $0x200] sm:$0xff]
        %v2353 = vld [vmem:[#allocation3 + $0x208] sm:$0xff]
        %v2354 = vld [vmem:[#allocation3 + $0x210] sm:$0xff]
        %v2355 = vld [vmem:[#allocation3 + $0x218] sm:$0xff]
        %v2356 = vld [vmem:[#allocation3 + $0x220] sm:$0xff]
        %v2357 = vld [vmem:[#allocation3 + $0x228] sm:$0xff]
        %v2358 = vld [vmem:[#allocation3 + $0x230] sm:$0xff]
        %v2359 = vld [vmem:[#allocation3 + $0x238] sm:$0xff]
        %v2360 = vld [vmem:[#allocation3 + $0x240] sm:$0xff]
        %v2361 = vld [vmem:[#allocation3 + $0x248] sm:$0xff]
        %v2362 = vld [vmem:[#allocation3 + $0x250] sm:$0xff]
        %v2363 = vld [vmem:[#allocation3 + $0x258] sm:$0xff]
        %v2364 = vld [vmem:[#allocation3 + $0x260] sm:$0xff]
        %v2365 = vld [vmem:[#allocation3 + $0x268] sm:$0xff]
        %v2366 = vld [vmem:[#allocation3 + $0x270] sm:$0xff]
        %v2367 = vld [vmem:[#allocation3 + $0x278] sm:$0xff]
        %v2368 = vld [vmem:[#allocation3 + $0x280] sm:$0xff]
        %v2369 = vld [vmem:[#allocation3 + $0x288] sm:$0xff]
        %v2370 = vld [vmem:[#allocation3 + $0x290] sm:$0xff]
        %v2371 = vld [vmem:[#allocation3 + $0x298] sm:$0xff]
        %v2372 = vld [vmem:[#allocation3 + $0x2a0] sm:$0xff]
        %v2373 = vld [vmem:[#allocation3 + $0x2a8] sm:$0xff]
        %v2374 = vld [vmem:[#allocation3 + $0x2b0] sm:$0xff]
        %v2375 = vld [vmem:[#allocation3 + $0x2b8] sm:$0xff]
        %v2376 = vld [vmem:[#allocation3 + $0x2c0] sm:$0xff]
        %v2377 = vld [vmem:[#allocation3 + $0x2c8] sm:$0xff]
        %v2378 = vld [vmem:[#allocation3 + $0x2d0] sm:$0xff]
        %v2379 = vld [vmem:[#allocation3 + $0x2d8] sm:$0xff]
        %v2380 = vld [vmem:[#allocation3 + $0x2e0] sm:$0xff]
        %v2381 = vld [vmem:[#allocation3 + $0x2e8] sm:$0xff]
        %v2382 = vld [vmem:[#allocation3 + $0x2f0] sm:$0xff]
        %v2383 = vld [vmem:[#allocation3 + $0x2f8] sm:$0xff]
        %v2384 = vld [vmem:[#allocation3 + $0x300] sm:$0xff]
        %v2385 = vld [vmem:[#allocation3 + $0x308] sm:$0xff]
        %v2386 = vld [vmem:[#allocation3 + $0x310] sm:$0xff]
        %v2387 = vld [vmem:[#allocation3 + $0x318] sm:$0xff]
        %v2388 = vld [vmem:[#allocation3 + $0x320] sm:$0xff]
        %v2389 = vld [vmem:[#allocation3 + $0x328] sm:$0xff]
        %v2390 = vld [vmem:[#allocation3 + $0x330] sm:$0xff]
        %v2391 = vld [vmem:[#allocation3 + $0x338] sm:$0xff]
        %v2392 = vld [vmem:[#allocation3 + $0x340] sm:$0xff]
        %v2393 = vld [vmem:[#allocation3 + $0x348] sm:$0xff]
        %v2394 = vld [vmem:[#allocation3 + $0x350] sm:$0xff]
        %v2395 = vld [vmem:[#allocation3 + $0x358] sm:$0xff]
        %v2396 = vld [vmem:[#allocation3 + $0x360] sm:$0xff]
        %v2397 = vld [vmem:[#allocation3 + $0x368] sm:$0xff]
        %v2398 = vld [vmem:[#allocation3 + $0x370] sm:$0xff]
        %v2399 = vld [vmem:[#allocation3 + $0x378] sm:$0xff]
        %v2400 = vld [vmem:[#allocation3 + $0x380] sm:$0xff]
        %v2401 = vld [vmem:[#allocation3 + $0x388] sm:$0xff]
        %v2402 = vld [vmem:[#allocation3 + $0x390] sm:$0xff]
        %v2403 = vld [vmem:[#allocation3 + $0x398] sm:$0xff]
        %v2404 = vld [vmem:[#allocation3 + $0x3a0] sm:$0xff]
        %v2405 = vld [vmem:[#allocation3 + $0x3a8] sm:$0xff]
        %v2406 = vld [vmem:[#allocation3 + $0x3b0] sm:$0xff]
        %v2407 = vld [vmem:[#allocation3 + $0x3b8] sm:$0xff]
        %v2408 = vld [vmem:[#allocation3 + $0x3c0] sm:$0xff]
        %v2409 = vld [vmem:[#allocation3 + $0x3c8] sm:$0xff]
        %v2410 = vld [vmem:[#allocation3 + $0x3d0] sm:$0xff]
        %v2411 = vld [vmem:[#allocation3 + $0x3d8] sm:$0xff]
        %v2412 = vld [vmem:[#allocation3 + $0x3e0] sm:$0xff]
        %v2413 = vld [vmem:[#allocation3 + $0x3e8] sm:$0xff]
        %v2414 = vld [vmem:[#allocation3 + $0x3f0] sm:$0xff]
        %v2415 = vld [vmem:[#allocation3 + $0x3f8] sm:$0xff]
        %v2416 = vld [vmem:[#allocation3 + $0x400] sm:$0xff]
        %v2417 = vld [vmem:[#allocation3 + $0x408] sm:$0xff]
        %v2418 = vld [vmem:[#allocation3 + $0x410] sm:$0xff]
        %v2419 = vld [vmem:[#allocation3 + $0x418] sm:$0xff]
        %v2420 = vld [vmem:[#allocation3 + $0x420] sm:$0xff]
        %v2421 = vld [vmem:[#allocation3 + $0x428] sm:$0xff]
        %v2422 = vld [vmem:[#allocation3 + $0x430] sm:$0xff]
        %v2423 = vld [vmem:[#allocation3 + $0x438] sm:$0xff]
        %v2424 = vld [vmem:[#allocation3 + $0x440] sm:$0xff]
        %v2425 = vld [vmem:[#allocation3 + $0x448] sm:$0xff]
        %v2426 = vld [vmem:[#allocation3 + $0x450] sm:$0xff]
        %v2427 = vld [vmem:[#allocation3 + $0x458] sm:$0xff]
        %v2428 = vld [vmem:[#allocation3 + $0x460] sm:$0xff]
        %v2429 = vld [vmem:[#allocation3 + $0x468] sm:$0xff]
        %v2430 = vld [vmem:[#allocation3 + $0x470] sm:$0xff]
        %v2431 = vld [vmem:[#allocation3 + $0x478] sm:$0xff]
        %v2432 = vld [vmem:[#allocation3 + $0x480] sm:$0xff]
        %v2433 = vld [vmem:[#allocation3 + $0x488] sm:$0xff]
        %v2434 = vld [vmem:[#allocation3 + $0x490] sm:$0xff]
        %v2435 = vld [vmem:[#allocation3 + $0x498] sm:$0xff]
        %v2436 = vld [vmem:[#allocation3 + $0x4a0] sm:$0xff]
        %v2437 = vld [vmem:[#allocation3 + $0x4a8] sm:$0xff]
        %v2438 = vld [vmem:[#allocation3 + $0x4b0] sm:$0xff]
        %v2439 = vld [vmem:[#allocation3 + $0x4b8] sm:$0xff]
        %v2440 = vld [vmem:[#allocation3 + $0x4c0] sm:$0xff]
        %v2441 = vld [vmem:[#allocation3 + $0x4c8] sm:$0xff]
        %v2442 = vld [vmem:[#allocation3 + $0x4d0] sm:$0xff]
        %v2443 = vld [vmem:[#allocation3 + $0x4d8] sm:$0xff]
        %v2444 = vld [vmem:[#allocation3 + $0x4e0] sm:$0xff]
        %v2445 = vld [vmem:[#allocation3 + $0x4e8] sm:$0xff]
        %v2446 = vld [vmem:[#allocation3 + $0x4f0] sm:$0xff]
        %v2447 = vld [vmem:[#allocation3 + $0x4f8] sm:$0xff]
        %v2448 = vld [vmem:[#allocation3 + $0x500] sm:$0xff]
        %v2449 = vld [vmem:[#allocation3 + $0x508] sm:$0xff]
        %v2450 = vld [vmem:[#allocation3 + $0x510] sm:$0xff]
        %v2451 = vld [vmem:[#allocation3 + $0x518] sm:$0xff]
        %v2452 = vld [vmem:[#allocation3 + $0x520] sm:$0xff]
        %v2453 = vld [vmem:[#allocation3 + $0x528] sm:$0xff]
        %v2454 = vld [vmem:[#allocation3 + $0x530] sm:$0xff]
        %v2455 = vld [vmem:[#allocation3 + $0x538] sm:$0xff]
        %v2456 = vld [vmem:[#allocation3 + $0x540] sm:$0xff]
        %v2457 = vld [vmem:[#allocation3 + $0x548] sm:$0xff]
        %v2458 = vld [vmem:[#allocation3 + $0x550] sm:$0xff]
        %v2459 = vld [vmem:[#allocation3 + $0x558] sm:$0xff]
        %v2460 = vld [vmem:[#allocation3 + $0x560] sm:$0xff]
        %v2461 = vld [vmem:[#allocation3 + $0x568] sm:$0xff]
        %v2462 = vld [vmem:[#allocation3 + $0x570] sm:$0xff]
        %v2463 = vld [vmem:[#allocation3 + $0x578] sm:$0xff]
        %v2464 = vld [vmem:[#allocation3 + $0x580] sm:$0xff]
        %v2465 = vld [vmem:[#allocation3 + $0x588] sm:$0xff]
        %v2466 = vld [vmem:[#allocation3 + $0x590] sm:$0xff]
        %v2467 = vld [vmem:[#allocation3 + $0x598] sm:$0xff]
        %v2468 = vld [vmem:[#allocation3 + $0x5a0] sm:$0xff]
        %v2469 = vld [vmem:[#allocation3 + $0x5a8] sm:$0xff]
        %v2470 = vld [vmem:[#allocation3 + $0x5b0] sm:$0xff]
        %v2471 = vld [vmem:[#allocation3 + $0x5b8] sm:$0xff]
        %v2472 = vld [vmem:[#allocation3 + $0x5c0] sm:$0xff]
        %v2473 = vld [vmem:[#allocation3 + $0x5c8] sm:$0xff]
        %v2474 = vld [vmem:[#allocation3 + $0x5d0] sm:$0xff]
        %v2475 = vld [vmem:[#allocation3 + $0x5d8] sm:$0xff]
        %v2476 = vld [vmem:[#allocation3 + $0x5e0] sm:$0xff]
        %v2477 = vld [vmem:[#allocation3 + $0x5e8] sm:$0xff]
        %v2478 = vld [vmem:[#allocation3 + $0x5f0] sm:$0xff]
        %v2479 = vld [vmem:[#allocation3 + $0x5f8] sm:$0xff]
        %v2480 = vld [vmem:[#allocation3 + $0x600] sm:$0xff]
        %v2481 = vld [vmem:[#allocation3 + $0x608] sm:$0xff]
        %v2482 = vld [vmem:[#allocation3 + $0x610] sm:$0xff]
        %v2483 = vld [vmem:[#allocation3 + $0x618] sm:$0xff]
        %v2484 = vld [vmem:[#allocation3 + $0x620] sm:$0xff]
        %v2485 = vld [vmem:[#allocation3 + $0x628] sm:$0xff]
        %v2486 = vld [vmem:[#allocation3 + $0x630] sm:$0xff]
        %v2487 = vld [vmem:[#allocation3 + $0x638] sm:$0xff]
        %v2488 = vld [vmem:[#allocation3 + $0x640] sm:$0xff]
        %v2489 = vld [vmem:[#allocation3 + $0x648] sm:$0xff]
        %v2490 = vld [vmem:[#allocation3 + $0x650] sm:$0xff]
        %v2491 = vld [vmem:[#allocation3 + $0x658] sm:$0xff]
        %v2492 = vld [vmem:[#allocation3 + $0x660] sm:$0xff]
        %v2493 = vld [vmem:[#allocation3 + $0x668] sm:$0xff]
        %v2494 = vld [vmem:[#allocation3 + $0x670] sm:$0xff]
        %v2495 = vld [vmem:[#allocation3 + $0x678] sm:$0xff]
        %v2496 = vld [vmem:[#allocation3 + $0x680] sm:$0xff]
        %v2497 = vld [vmem:[#allocation3 + $0x688] sm:$0xff]
        %v2498 = vld [vmem:[#allocation3 + $0x690] sm:$0xff]
        %v2499 = vld [vmem:[#allocation3 + $0x698] sm:$0xff]
        %v2500 = vld [vmem:[#allocation3 + $0x6a0] sm:$0xff]
        %v2501 = vld [vmem:[#allocation3 + $0x6a8] sm:$0xff]
        %v2502 = vld [vmem:[#allocation3 + $0x6b0] sm:$0xff]
        %v2503 = vld [vmem:[#allocation3 + $0x6b8] sm:$0xff]
        %v2504 = vld [vmem:[#allocation3 + $0x6c0] sm:$0xff]
        %v2505 = vld [vmem:[#allocation3 + $0x6c8] sm:$0xff]
        %v2506 = vld [vmem:[#allocation3 + $0x6d0] sm:$0xff]
        %v2507 = vld [vmem:[#allocation3 + $0x6d8] sm:$0xff]
        %v2508 = vld [vmem:[#allocation3 + $0x6e0] sm:$0xff]
        %v2509 = vld [vmem:[#allocation3 + $0x6e8] sm:$0xff]
        %v2510 = vld [vmem:[#allocation3 + $0x6f0] sm:$0xff]
        %v2511 = vld [vmem:[#allocation3 + $0x6f8] sm:$0xff]
        %v2512 = vld [vmem:[#allocation3 + $0x700] sm:$0xff]
        %v2513 = vld [vmem:[#allocation3 + $0x708] sm:$0xff]
        %v2514 = vld [vmem:[#allocation3 + $0x710] sm:$0xff]
        %v2515 = vld [vmem:[#allocation3 + $0x718] sm:$0xff]
        %v2516 = vld [vmem:[#allocation3 + $0x720] sm:$0xff]
        %v2517 = vld [vmem:[#allocation3 + $0x728] sm:$0xff]
        %v2518 = vld [vmem:[#allocation3 + $0x730] sm:$0xff]
        %v2519 = vld [vmem:[#allocation3 + $0x738] sm:$0xff]
        %v2520 = vld [vmem:[#allocation3 + $0x740] sm:$0xff]
        %v2521 = vld [vmem:[#allocation3 + $0x748] sm:$0xff]
        %v2522 = vld [vmem:[#allocation3 + $0x750] sm:$0xff]
        %v2523 = vld [vmem:[#allocation3 + $0x758] sm:$0xff]
        %v2524 = vld [vmem:[#allocation3 + $0x760] sm:$0xff]
        %v2525 = vld [vmem:[#allocation3 + $0x768] sm:$0xff]
        %v2526 = vld [vmem:[#allocation3 + $0x770] sm:$0xff]
        %v2527 = vld [vmem:[#allocation3 + $0x778] sm:$0xff]
        %v2528 = vld [vmem:[#allocation3 + $0x780] sm:$0xff]
        %v2529 = vld [vmem:[#allocation3 + $0x788] sm:$0xff]
        %v2530 = vld [vmem:[#allocation3 + $0x790] sm:$0xff]
        %v2531 = vld [vmem:[#allocation3 + $0x798] sm:$0xff]
        %v2532 = vld [vmem:[#allocation3 + $0x7a0] sm:$0xff]
        %v2533 = vld [vmem:[#allocation3 + $0x7a8] sm:$0xff]
        %v2534 = vld [vmem:[#allocation3 + $0x7b0] sm:$0xff]
        %v2535 = vld [vmem:[#allocation3 + $0x7b8] sm:$0xff]
        %v2536 = vld [vmem:[#allocation3 + $0x7c0] sm:$0xff]
        %v2537 = vld [vmem:[#allocation3 + $0x7c8] sm:$0xff]
        %v2538 = vld [vmem:[#allocation3 + $0x7d0] sm:$0xff]
        %v2539 = vld [vmem:[#allocation3 + $0x7d8] sm:$0xff]
        %v2540 = vld [vmem:[#allocation3 + $0x7e0] sm:$0xff]
        %v2541 = vld [vmem:[#allocation3 + $0x7e8] sm:$0xff]
        %v2542 = vld [vmem:[#allocation3 + $0x7f0] sm:$0xff]
        %v2543 = vld [vmem:[#allocation3 + $0x7f8] sm:$0xff]
        %v2544 = vld [vmem:[#allocation3 + $0x800] sm:$0xff]
        %v2545 = vld [vmem:[#allocation3 + $0x808] sm:$0xff]
        %v2546 = vld [vmem:[#allocation3 + $0x810] sm:$0xff]
        %v2547 = vld [vmem:[#allocation3 + $0x818] sm:$0xff]
        %v2548 = vld [vmem:[#allocation3 + $0x820] sm:$0xff]
        %v2549 = vld [vmem:[#allocation3 + $0x828] sm:$0xff]
        %v2550 = vld [vmem:[#allocation3 + $0x830] sm:$0xff]
        %v2551 = vld [vmem:[#allocation3 + $0x838] sm:$0xff]
        %v2552 = vld [vmem:[#allocation3 + $0x840] sm:$0xff]
        %v2553 = vld [vmem:[#allocation3 + $0x848] sm:$0xff]
        %v2554 = vld [vmem:[#allocation3 + $0x850] sm:$0xff]
        %v2555 = vld [vmem:[#allocation3 + $0x858] sm:$0xff]
        %v2556 = vld [vmem:[#allocation3 + $0x860] sm:$0xff]
        %v2557 = vld [vmem:[#allocation3 + $0x868] sm:$0xff]
        %v2558 = vld [vmem:[#allocation3 + $0x870] sm:$0xff]
        %v2559 = vld [vmem:[#allocation3 + $0x878] sm:$0xff]
        %v2560 = vld [vmem:[#allocation3 + $0x880] sm:$0xff]
        %v2561 = vld [vmem:[#allocation3 + $0x888] sm:$0xff]
        %v2562 = vld [vmem:[#allocation3 + $0x890] sm:$0xff]
        %v2563 = vld [vmem:[#allocation3 + $0x898] sm:$0xff]
        %v2564 = vld [vmem:[#allocation3 + $0x8a0] sm:$0xff]
        %v2565 = vld [vmem:[#allocation3 + $0x8a8] sm:$0xff]
        %v2566 = vld [vmem:[#allocation3 + $0x8b0] sm:$0xff]
        %v2567 = vld [vmem:[#allocation3 + $0x8b8] sm:$0xff]
        %v2568 = vld [vmem:[#allocation3 + $0x8c0] sm:$0xff]
        %v2569 = vld [vmem:[#allocation3 + $0x8c8] sm:$0xff]
        %v2570 = vld [vmem:[#allocation3 + $0x8d0] sm:$0xff]
        %v2571 = vld [vmem:[#allocation3 + $0x8d8] sm:$0xff]
        %v2572 = vld [vmem:[#allocation3 + $0x8e0] sm:$0xff]
        %v2573 = vld [vmem:[#allocation3 + $0x8e8] sm:$0xff]
        %v2574 = vld [vmem:[#allocation3 + $0x8f0] sm:$0xff]
        %v2575 = vld [vmem:[#allocation3 + $0x8f8] sm:$0xff]
        %v2576 = vld [vmem:[#allocation4] sm:$0xff]
        %v2577 = vld [vmem:[#allocation4 + $0x8] sm:$0xff]
        %v2578 = vld [vmem:[#allocation4 + $0x10] sm:$0xff]
        %v2579 = vld [vmem:[#allocation4 + $0x18] sm:$0xff]
        %v2580 = vld [vmem:[#allocation4 + $0x20] sm:$0xff]
        %v2581 = vld [vmem:[#allocation4 + $0x28] sm:$0xff]
        %v2582 = vld [vmem:[#allocation4 + $0x30] sm:$0xff]
        %v2583 = vld [vmem:[#allocation4 + $0x38] sm:$0xff]
        %v2584 = vld [vmem:[#allocation4 + $0x40] sm:$0xff]
        %v2585 = vld [vmem:[#allocation4 + $0x48] sm:$0xff]
        %v2586 = vld [vmem:[#allocation4 + $0x50] sm:$0xff]
        %v2587 = vld [vmem:[#allocation4 + $0x58] sm:$0xff]
        %v2588 = vld [vmem:[#allocation4 + $0x60] sm:$0xff]
        %v2589 = vld [vmem:[#allocation4 + $0x68] sm:$0xff]
        %v2590 = vld [vmem:[#allocation4 + $0x70] sm:$0xff]
        %v2591 = vld [vmem:[#allocation4 + $0x78] sm:$0xff]
        %v2592 = vld [vmem:[#allocation4 + $0x80] sm:$0xff]
        %v2593 = vld [vmem:[#allocation4 + $0x88] sm:$0xff]
        %v2594 = vld [vmem:[#allocation4 + $0x90] sm:$0xff]
        %v2595 = vld [vmem:[#allocation4 + $0x98] sm:$0xff]
        %v2596 = vld [vmem:[#allocation4 + $0xa0] sm:$0xff]
        %v2597 = vld [vmem:[#allocation4 + $0xa8] sm:$0xff]
        %v2598 = vld [vmem:[#allocation4 + $0xb0] sm:$0xff]
        %v2599 = vld [vmem:[#allocation4 + $0xb8] sm:$0xff]
        %v2600 = vld [vmem:[#allocation4 + $0xc0] sm:$0xff]
        %v2601 = vld [vmem:[#allocation4 + $0xc8] sm:$0xff]
        %v2602 = vld [vmem:[#allocation4 + $0xd0] sm:$0xff]
        %v2603 = vld [vmem:[#allocation4 + $0xd8] sm:$0xff]
        %v2604 = vld [vmem:[#allocation4 + $0xe0] sm:$0xff]
        %v2605 = vld [vmem:[#allocation4 + $0xe8] sm:$0xff]
        %v2606 = vld [vmem:[#allocation4 + $0xf0] sm:$0xff]
        %v2607 = vld [vmem:[#allocation4 + $0xf8] sm:$0xff]
        %v2608 = vld [vmem:[#allocation4 + $0x100] sm:$0xff]
        %v2609 = vld [vmem:[#allocation4 + $0x108] sm:$0xff]
        %v2610 = vld [vmem:[#allocation4 + $0x110] sm:$0xff]
        %v2611 = vld [vmem:[#allocation4 + $0x118] sm:$0xff]
        %v2612 = vld [vmem:[#allocation4 + $0x120] sm:$0xff]
        %v2613 = vld [vmem:[#allocation4 + $0x128] sm:$0xff]
        %v2614 = vld [vmem:[#allocation4 + $0x130] sm:$0xff]
        %v2615 = vld [vmem:[#allocation4 + $0x138] sm:$0xff]
        %v2616 = vld [vmem:[#allocation4 + $0x140] sm:$0xff]
        %v2617 = vld [vmem:[#allocation4 + $0x148] sm:$0xff]
        %v2618 = vld [vmem:[#allocation4 + $0x150] sm:$0xff]
        %v2619 = vld [vmem:[#allocation4 + $0x158] sm:$0xff]
        %v2620 = vld [vmem:[#allocation4 + $0x160] sm:$0xff]
        %v2621 = vld [vmem:[#allocation4 + $0x168] sm:$0xff]
        %v2622 = vld [vmem:[#allocation4 + $0x170] sm:$0xff]
        %v2623 = vld [vmem:[#allocation4 + $0x178] sm:$0xff]
        %v2624 = vld [vmem:[#allocation4 + $0x180] sm:$0xff]
        %v2625 = vld [vmem:[#allocation4 + $0x188] sm:$0xff]
        %v2626 = vld [vmem:[#allocation4 + $0x190] sm:$0xff]
        %v2627 = vld [vmem:[#allocation4 + $0x198] sm:$0xff]
        %v2628 = vld [vmem:[#allocation4 + $0x1a0] sm:$0xff]
        %v2629 = vld [vmem:[#allocation4 + $0x1a8] sm:$0xff]
        %v2630 = vld [vmem:[#allocation4 + $0x1b0] sm:$0xff]
        %v2631 = vld [vmem:[#allocation4 + $0x1b8] sm:$0xff]
        %v2632 = vld [vmem:[#allocation4 + $0x1c0] sm:$0xff]
        %v2633 = vld [vmem:[#allocation4 + $0x1c8] sm:$0xff]
        %v2634 = vld [vmem:[#allocation4 + $0x1d0] sm:$0xff]
        %v2635 = vld [vmem:[#allocation4 + $0x1d8] sm:$0xff]
        %v2636 = vld [vmem:[#allocation4 + $0x1e0] sm:$0xff]
        %v2637 = vld [vmem:[#allocation4 + $0x1e8] sm:$0xff]
        %v2638 = vld [vmem:[#allocation4 + $0x1f0] sm:$0xff]
        %v2639 = vld [vmem:[#allocation4 + $0x1f8] sm:$0xff]
        %v2640 = vld [vmem:[#allocation4 + $0x200] sm:$0xff]
        %v2641 = vld [vmem:[#allocation4 + $0x208] sm:$0xff]
        %v2642 = vld [vmem:[#allocation4 + $0x210] sm:$0xff]
        %v2643 = vld [vmem:[#allocation4 + $0x218] sm:$0xff]
        %v2644 = vld [vmem:[#allocation4 + $0x220] sm:$0xff]
        %v2645 = vld [vmem:[#allocation4 + $0x228] sm:$0xff]
        %v2646 = vld [vmem:[#allocation4 + $0x230] sm:$0xff]
        %v2647 = vld [vmem:[#allocation4 + $0x238] sm:$0xff]
        %v2648 = vld [vmem:[#allocation4 + $0x240] sm:$0xff]
        %v2649 = vld [vmem:[#allocation4 + $0x248] sm:$0xff]
        %v2650 = vld [vmem:[#allocation4 + $0x250] sm:$0xff]
        %v2651 = vld [vmem:[#allocation4 + $0x258] sm:$0xff]
        %v2652 = vld [vmem:[#allocation4 + $0x260] sm:$0xff]
        %v2653 = vld [vmem:[#allocation4 + $0x268] sm:$0xff]
        %v2654 = vld [vmem:[#allocation4 + $0x270] sm:$0xff]
        %v2655 = vld [vmem:[#allocation4 + $0x278] sm:$0xff]
        %v2656 = vld [vmem:[#allocation4 + $0x280] sm:$0xff]
        %v2657 = vld [vmem:[#allocation4 + $0x288] sm:$0xff]
        %v2658 = vld [vmem:[#allocation4 + $0x290] sm:$0xff]
        %v2659 = vld [vmem:[#allocation4 + $0x298] sm:$0xff]
        %v2660 = vld [vmem:[#allocation4 + $0x2a0] sm:$0xff]
        %v2661 = vld [vmem:[#allocation4 + $0x2a8] sm:$0xff]
        %v2662 = vld [vmem:[#allocation4 + $0x2b0] sm:$0xff]
        %v2663 = vld [vmem:[#allocation4 + $0x2b8] sm:$0xff]
        %v2664 = vld [vmem:[#allocation4 + $0x2c0] sm:$0xff]
        %v2665 = vld [vmem:[#allocation4 + $0x2c8] sm:$0xff]
        %v2666 = vld [vmem:[#allocation4 + $0x2d0] sm:$0xff]
        %v2667 = vld [vmem:[#allocation4 + $0x2d8] sm:$0xff]
        %v2668 = vld [vmem:[#allocation4 + $0x2e0] sm:$0xff]
        %v2669 = vld [vmem:[#allocation4 + $0x2e8] sm:$0xff]
        %v2670 = vld [vmem:[#allocation4 + $0x2f0] sm:$0xff]
        %v2671 = vld [vmem:[#allocation4 + $0x2f8] sm:$0xff]
        %v2672 = vld [vmem:[#allocation4 + $0x300] sm:$0xff]
        %v2673 = vld [vmem:[#allocation4 + $0x308] sm:$0xff]
        %v2674 = vld [vmem:[#allocation4 + $0x310] sm:$0xff]
        %v2675 = vld [vmem:[#allocation4 + $0x318] sm:$0xff]
        %v2676 = vld [vmem:[#allocation4 + $0x320] sm:$0xff]
        %v2677 = vld [vmem:[#allocation4 + $0x328] sm:$0xff]
        %v2678 = vld [vmem:[#allocation4 + $0x330] sm:$0xff]
        %v2679 = vld [vmem:[#allocation4 + $0x338] sm:$0xff]
        %v2680 = vld [vmem:[#allocation4 + $0x340] sm:$0xff]
        %v2681 = vld [vmem:[#allocation4 + $0x348] sm:$0xff]
        %v2682 = vld [vmem:[#allocation4 + $0x350] sm:$0xff]
        %v2683 = vld [vmem:[#allocation4 + $0x358] sm:$0xff]
        %v2684 = vld [vmem:[#allocation4 + $0x360] sm:$0xff]
        %v2685 = vld [vmem:[#allocation4 + $0x368] sm:$0xff]
        %v2686 = vld [vmem:[#allocation4 + $0x370] sm:$0xff]
        %v2687 = vld [vmem:[#allocation4 + $0x378] sm:$0xff]
        %v2688 = vld [vmem:[#allocation4 + $0x380] sm:$0xff]
        %v2689 = vld [vmem:[#allocation4 + $0x388] sm:$0xff]
        %v2690 = vld [vmem:[#allocation4 + $0x390] sm:$0xff]
        %v2691 = vld [vmem:[#allocation4 + $0x398] sm:$0xff]
        %v2692 = vld [vmem:[#allocation4 + $0x3a0] sm:$0xff]
        %v2693 = vld [vmem:[#allocation4 + $0x3a8] sm:$0xff]
        %v2694 = vld [vmem:[#allocation4 + $0x3b0] sm:$0xff]
        %v2695 = vld [vmem:[#allocation4 + $0x3b8] sm:$0xff]
        %v2696 = vld [vmem:[#allocation4 + $0x3c0] sm:$0xff]
        %v2697 = vld [vmem:[#allocation4 + $0x3c8] sm:$0xff]
        %v2698 = vld [vmem:[#allocation4 + $0x3d0] sm:$0xff]
        %v2699 = vld [vmem:[#allocation4 + $0x3d8] sm:$0xff]
        %v2700 = vld [vmem:[#allocation4 + $0x3e0] sm:$0xff]
        %v2701 = vld [vmem:[#allocation4 + $0x3e8] sm:$0xff]
        %v2702 = vld [vmem:[#allocation4 + $0x3f0] sm:$0xff]
        %v2703 = vld [vmem:[#allocation4 + $0x3f8] sm:$0xff]
        %v2704 = vld [vmem:[#allocation4 + $0x400] sm:$0xff]
        %v2705 = vld [vmem:[#allocation4 + $0x408] sm:$0xff]
        %v2706 = vld [vmem:[#allocation4 + $0x410] sm:$0xff]
        %v2707 = vld [vmem:[#allocation4 + $0x418] sm:$0xff]
        %v2708 = vld [vmem:[#allocation4 + $0x420] sm:$0xff]
        %v2709 = vld [vmem:[#allocation4 + $0x428] sm:$0xff]
        %v2710 = vld [vmem:[#allocation4 + $0x430] sm:$0xff]
        %v2711 = vld [vmem:[#allocation4 + $0x438] sm:$0xff]
        %v2712 = vld [vmem:[#allocation4 + $0x440] sm:$0xff]
        %v2713 = vld [vmem:[#allocation4 + $0x448] sm:$0xff]
        %v2714 = vld [vmem:[#allocation4 + $0x450] sm:$0xff]
        %v2715 = vld [vmem:[#allocation4 + $0x458] sm:$0xff]
        %v2716 = vld [vmem:[#allocation4 + $0x460] sm:$0xff]
        %v2717 = vld [vmem:[#allocation4 + $0x468] sm:$0xff]
        %v2718 = vld [vmem:[#allocation4 + $0x470] sm:$0xff]
        %v2719 = vld [vmem:[#allocation4 + $0x478] sm:$0xff]
        %2720 = vmatprep.subr.mxu0 0.0
        %2721 = vmatpush1.msra.mxu0 %v2591
        %2722 = vmatprep.subr.mxu0 0.0
        %2723 = vmatpush1.msra.mxu0 %v2590
        %2724 = vmatprep.subr.mxu0 0.0
        %2725 = vmatpush1.msra.mxu0 %v2589
        %2726 = vmatprep.subr.mxu0 0.0
        %2727 = vmatpush1.msra.mxu0 %v2588
        %2728 = vmatprep.subr.mxu0 0.0
        %2729 = vmatpush1.msra.mxu0 %v2587
        %2730 = vmatprep.subr.mxu0 0.0
        %2731 = vmatpush1.msra.mxu0 %v2586
        %2732 = vmatprep.subr.mxu0 0.0
        %2733 = vmatpush1.msra.mxu0 %v2585
        %2734 = vmatprep.subr.mxu0 0.0
        %2735 = vmatpush1.msra.mxu0 %v2584
        %2736 = vmatprep.subr.mxu0 0.0
        %2737 = vmatpush1.msra.mxu0 %v2583
        %2738 = vmatprep.subr.mxu0 0.0
        %2739 = vmatpush1.msra.mxu0 %v2582
        %2740 = vmatprep.subr.mxu0 0.0
        %2741 = vmatpush1.msra.mxu0 %v2581
        %2742 = vmatprep.subr.mxu0 0.0
        %2743 = vmatpush1.msra.mxu0 %v2580
        %2744 = vmatprep.subr.mxu0 0.0
        %2745 = vmatpush1.msra.mxu0 %v2579
        %2746 = vmatprep.subr.mxu0 0.0
        %2747 = vmatpush1.msra.mxu0 %v2578
        %2748 = vmatprep.subr.mxu0 0.0
        %2749 = vmatpush1.msra.mxu0 %v2577
        %2750 = vmatprep.subr.mxu0 0.0
        %2751 = vmatpush1.msra.mxu0 %v2576
        %2752 = vmatprep.subr.mxu0 0.0
        %2753 = vmatpush2.msra.mxu0 %v2607
        %2754 = vmatprep.subr.mxu0 0.0
        %2755 = vmatpush2.msra.mxu0 %v2606
        %2756 = vmatprep.subr.mxu0 0.0
        %2757 = vmatpush2.msra.mxu0 %v2605
        %2758 = vmatprep.subr.mxu0 0.0
        %2759 = vmatpush2.msra.mxu0 %v2604
        %2760 = vmatprep.subr.mxu0 0.0
        %2761 = vmatpush2.msra.mxu0 %v2603
        %2762 = vmatprep.subr.mxu0 0.0
        %2763 = vmatpush2.msra.mxu0 %v2602
        %2764 = vmatprep.subr.mxu0 0.0
        %2765 = vmatpush2.msra.mxu0 %v2601
        %2766 = vmatprep.subr.mxu0 0.0
        %2767 = vmatpush2.msra.mxu0 %v2600
        %2768 = vmatprep.subr.mxu0 0.0
        %2769 = vmatpush2.msra.mxu0 %v2599
        %2770 = vmatprep.subr.mxu0 0.0
        %2771 = vmatpush2.msra.mxu0 %v2598
        %2772 = vmatprep.subr.mxu0 0.0
        %2773 = vmatpush2.msra.mxu0 %v2597
        %2774 = vmatprep.subr.mxu0 0.0
        %2775 = vmatpush2.msra.mxu0 %v2596
        %2776 = vmatprep.subr.mxu0 0.0
        %2777 = vmatpush2.msra.mxu0 %v2595
        %2778 = vmatprep.subr.mxu0 0.0
        %2779 = vmatpush2.msra.mxu0 %v2594
        %2780 = vmatprep.subr.mxu0 0.0
        %2781 = vmatpush2.msra.mxu0 %v2593
        %2782 = vmatprep.subr.mxu0 0.0
        %2783 = vmatpush2.msra.mxu0 %v2592
        %2784 = vmatprep.mubr.f32.mxu0 %v2289
        %2785 = vmatmul.mubr.f32.gmra.mxu0 %v2288
        %v2786 = vpop.f32.mrf.mxu0
        %v2787 = vadd.f32 0.0, %v2786
        %v2788 = vpop.f32.mrf.mxu0
        %2789 = vmatprep.mubr.f32.mxu0 %v2298
        %2790 = vmatmul.mubr.f32.gmra.mxu0 %v2297
        %v2791 = vpop.f32.mrf.mxu0
        %v2792 = vadd.f32 0.0, %v2791
        %v2793 = vpop.f32.mrf.mxu0
        %2794 = vmatprep.mubr.f32.mxu0 %v2307
        %2795 = vmatmul.mubr.f32.gmra.mxu0 %v2306
        %v2796 = vpop.f32.mrf.mxu0
        %v2797 = vadd.f32 0.0, %v2796
        %v2798 = vpop.f32.mrf.mxu0
        %2799 = vmatprep.mubr.f32.mxu0 %v2316
        %2800 = vmatmul.mubr.f32.gmra.mxu0 %v2315
        %v2801 = vpop.f32.mrf.mxu0
        %v2802 = vadd.f32 0.0, %v2801
        %v2803 = vpop.f32.mrf.mxu0
        %2804 = vmatprep.mubr.f32.mxu0 %v2325
        %2805 = vmatmul.mubr.f32.gmra.mxu0 %v2324
        %v2806 = vpop.f32.mrf.mxu0
        %v2807 = vadd.f32 0.0, %v2806
        %v2808 = vpop.f32.mrf.mxu0
        %2809 = vmatprep.mubr.f32.mxu0 %v2334
        %2810 = vmatmul.mubr.f32.gmra.mxu0 %v2333
        %v2811 = vpop.f32.mrf.mxu0
        %v2812 = vadd.f32 0.0, %v2811
        %v2813 = vpop.f32.mrf.mxu0
        %2814 = vmatprep.mubr.f32.mxu0 %v2343
        %2815 = vmatmul.mubr.f32.gmra.mxu0 %v2342
        %v2816 = vpop.f32.mrf.mxu0
        %v2817 = vadd.f32 0.0, %v2816
        %v2818 = vpop.f32.mrf.mxu0
        %2819 = vmatprep.mubr.f32.mxu0 %v2352
        %2820 = vmatmul.mubr.f32.gmra.mxu0 %v2351
        %v2821 = vpop.f32.mrf.mxu0
        %v2822 = vadd.f32 0.0, %v2821
        %v2823 = vpop.f32.mrf.mxu0
        %2824 = vmatprep.mubr.f32.mxu0 %v2361
        %2825 = vmatmul.mubr.f32.gmra.mxu0 %v2360
        %v2826 = vpop.f32.mrf.mxu0
        %v2827 = vadd.f32 0.0, %v2826
        %v2828 = vpop.f32.mrf.mxu0
        %2829 = vmatprep.mubr.f32.mxu0 %v2370
        %2830 = vmatmul.mubr.f32.gmra.mxu0 %v2369
        %v2831 = vpop.f32.mrf.mxu0
        %v2832 = vadd.f32 0.0, %v2831
        %v2833 = vpop.f32.mrf.mxu0
        %2834 = vmatprep.mubr.f32.mxu0 %v2379
        %2835 = vmatmul.mubr.f32.gmra.mxu0 %v2378
        %v2836 = vpop.f32.mrf.mxu0
        %v2837 = vadd.f32 0.0, %v2836
        %v2838 = vpop.f32.mrf.mxu0
        %2839 = vmatprep.mubr.f32.mxu0 %v2388
        %2840 = vmatmul.mubr.f32.gmra.mxu0 %v2387
        %v2841 = vpop.f32.mrf.mxu0
        %v2842 = vadd.f32 0.0, %v2841
        %v2843 = vpop.f32.mrf.mxu0
        %2844 = vmatprep.mubr.f32.mxu0 %v2397
        %2845 = vmatmul.mubr.f32.gmra.mxu0 %v2396
        %v2846 = vpop.f32.mrf.mxu0
        %v2847 = vadd.f32 0.0, %v2846
        %v2848 = vpop.f32.mrf.mxu0
        %2849 = vmatprep.mubr.f32.mxu0 %v2406
        %2850 = vmatmul.mubr.f32.gmra.mxu0 %v2405
        %v2851 = vpop.f32.mrf.mxu0
        %v2852 = vadd.f32 0.0, %v2851
        %v2853 = vpop.f32.mrf.mxu0
        %2854 = vmatprep.mubr.f32.mxu0 %v2415
        %2855 = vmatmul.mubr.f32.gmra.mxu0 %v2414
        %v2856 = vpop.f32.mrf.mxu0
        %v2857 = vadd.f32 0.0, %v2856
        %v2858 = vpop.f32.mrf.mxu0
        %2859 = vmatprep.mubr.f32.mxu0 %v2424
        %2860 = vmatmul.mubr.f32.gmra.mxu0 %v2423
        %v2861 = vpop.f32.mrf.mxu0
        %v2862 = vadd.f32 0.0, %v2861
        %v2863 = vpop.f32.mrf.mxu0
        %2864 = vmatprep.mubr.f32.mxu0 %v2433
        %2865 = vmatmul.mubr.f32.gmra.mxu0 %v2432
        %v2866 = vpop.f32.mrf.mxu0
        %v2867 = vadd.f32 0.0, %v2866
        %v2868 = vpop.f32.mrf.mxu0
        %2869 = vmatprep.mubr.f32.mxu0 %v2442
        %2870 = vmatmul.mubr.f32.gmra.mxu0 %v2441
        %v2871 = vpop.f32.mrf.mxu0
        %v2872 = vadd.f32 0.0, %v2871
        %v2873 = vpop.f32.mrf.mxu0
        %2874 = vmatprep.mubr.f32.mxu0 %v2451
        %2875 = vmatmul.mubr.f32.gmra.mxu0 %v2450
        %v2876 = vpop.f32.mrf.mxu0
        %v2877 = vadd.f32 0.0, %v2876
        %v2878 = vpop.f32.mrf.mxu0
        %2879 = vmatprep.mubr.f32.mxu0 %v2460
        %2880 = vmatmul.mubr.f32.gmra.mxu0 %v2459
        %v2881 = vpop.f32.mrf.mxu0
        %v2882 = vadd.f32 0.0, %v2881
        %v2883 = vpop.f32.mrf.mxu0
        %2884 = vmatprep.mubr.f32.mxu0 %v2469
        %2885 = vmatmul.mubr.f32.gmra.mxu0 %v2468
        %v2886 = vpop.f32.mrf.mxu0
        %v2887 = vadd.f32 0.0, %v2886
        %v2888 = vpop.f32.mrf.mxu0
        %2889 = vmatprep.mubr.f32.mxu0 %v2478
        %2890 = vmatmul.mubr.f32.gmra.mxu0 %v2477
        %v2891 = vpop.f32.mrf.mxu0
        %v2892 = vadd.f32 0.0, %v2891
        %v2893 = vpop.f32.mrf.mxu0
        %2894 = vmatprep.mubr.f32.mxu0 %v2487
        %2895 = vmatmul.mubr.f32.gmra.mxu0 %v2486
        %v2896 = vpop.f32.mrf.mxu0
        %v2897 = vadd.f32 0.0, %v2896
        %v2898 = vpop.f32.mrf.mxu0
        %2899 = vmatprep.mubr.f32.mxu0 %v2496
        %2900 = vmatmul.mubr.f32.gmra.mxu0 %v2495
        %v2901 = vpop.f32.mrf.mxu0
        %v2902 = vadd.f32 0.0, %v2901
        %v2903 = vpop.f32.mrf.mxu0
        %2904 = vmatprep.mubr.f32.mxu0 %v2505
        %2905 = vmatmul.mubr.f32.gmra.mxu0 %v2504
        %v2906 = vpop.f32.mrf.mxu0
        %v2907 = vadd.f32 0.0, %v2906
        %v2908 = vpop.f32.mrf.mxu0
        %2909 = vmatprep.mubr.f32.mxu0 %v2514
        %2910 = vmatmul.mubr.f32.gmra.mxu0 %v2513
        %v2911 = vpop.f32.mrf.mxu0
        %v2912 = vadd.f32 0.0, %v2911
        %v2913 = vpop.f32.mrf.mxu0
        %2914 = vmatprep.mubr.f32.mxu0 %v2523
        %2915 = vmatmul.mubr.f32.gmra.mxu0 %v2522
        %v2916 = vpop.f32.mrf.mxu0
        %v2917 = vadd.f32 0.0, %v2916
        %v2918 = vpop.f32.mrf.mxu0
        %2919 = vmatprep.mubr.f32.mxu0 %v2532
        %2920 = vmatmul.mubr.f32.gmra.mxu0 %v2531
        %v2921 = vpop.f32.mrf.mxu0
        %v2922 = vadd.f32 0.0, %v2921
        %v2923 = vpop.f32.mrf.mxu0
        %2924 = vmatprep.mubr.f32.mxu0 %v2541
        %2925 = vmatmul.mubr.f32.gmra.mxu0 %v2540
        %v2926 = vpop.f32.mrf.mxu0
        %v2927 = vadd.f32 0.0, %v2926
        %v2928 = vpop.f32.mrf.mxu0
        %2929 = vmatprep.mubr.f32.mxu0 %v2550
        %2930 = vmatmul.mubr.f32.gmra.mxu0 %v2549
        %v2931 = vpop.f32.mrf.mxu0
        %v2932 = vadd.f32 0.0, %v2931
        %v2933 = vpop.f32.mrf.mxu0
        %2934 = vmatprep.mubr.f32.mxu0 %v2559
        %2935 = vmatmul.mubr.f32.gmra.mxu0 %v2558
        %v2936 = vpop.f32.mrf.mxu0
        %v2937 = vadd.f32 0.0, %v2936
        %v2938 = vpop.f32.mrf.mxu0
        %2939 = vmatprep.mubr.f32.mxu0 %v2568
        %2940 = vmatmul.mubr.f32.gmra.mxu0 %v2567
        %v2941 = vpop.f32.mrf.mxu0
        %v2942 = vadd.f32 0.0, %v2941
        %v2943 = vpop.f32.mrf.mxu0
        %2944 = vdwg.mxu0
        %2945 = vmatprep.subr.mxu0 0.0
        %2946 = vmatpush1.msra.mxu0 %v2623
        %2947 = vmatprep.subr.mxu0 0.0
        %2948 = vmatpush1.msra.mxu0 %v2622
        %2949 = vmatprep.subr.mxu0 0.0
        %2950 = vmatpush1.msra.mxu0 %v2621
        %2951 = vmatprep.subr.mxu0 0.0
        %2952 = vmatpush1.msra.mxu0 %v2620
        %2953 = vmatprep.subr.mxu0 0.0
        %2954 = vmatpush1.msra.mxu0 %v2619
        %2955 = vmatprep.subr.mxu0 0.0
        %2956 = vmatpush1.msra.mxu0 %v2618
        %2957 = vmatprep.subr.mxu0 0.0
        %2958 = vmatpush1.msra.mxu0 %v2617
        %2959 = vmatprep.subr.mxu0 0.0
        %2960 = vmatpush1.msra.mxu0 %v2616
        %2961 = vmatprep.subr.mxu0 0.0
        %2962 = vmatpush1.msra.mxu0 %v2615
        %2963 = vmatprep.subr.mxu0 0.0
        %2964 = vmatpush1.msra.mxu0 %v2614
        %2965 = vmatprep.subr.mxu0 0.0
        %2966 = vmatpush1.msra.mxu0 %v2613
        %2967 = vmatprep.subr.mxu0 0.0
        %2968 = vmatpush1.msra.mxu0 %v2612
        %2969 = vmatprep.subr.mxu0 0.0
        %2970 = vmatpush1.msra.mxu0 %v2611
        %2971 = vmatprep.subr.mxu0 0.0
        %2972 = vmatpush1.msra.mxu0 %v2610
        %2973 = vmatprep.subr.mxu0 0.0
        %2974 = vmatpush1.msra.mxu0 %v2609
        %2975 = vmatprep.subr.mxu0 0.0
        %2976 = vmatpush1.msra.mxu0 %v2608
        %2977 = vmatprep.subr.mxu0 0.0
        %2978 = vmatpush2.msra.mxu0 %v2639
        %2979 = vmatprep.subr.mxu0 0.0
        %2980 = vmatpush2.msra.mxu0 %v2638
        %2981 = vmatprep.subr.mxu0 0.0
        %2982 = vmatpush2.msra.mxu0 %v2637
        %2983 = vmatprep.subr.mxu0 0.0
        %2984 = vmatpush2.msra.mxu0 %v2636
        %2985 = vmatprep.subr.mxu0 0.0
        %2986 = vmatpush2.msra.mxu0 %v2635
        %2987 = vmatprep.subr.mxu0 0.0
        %2988 = vmatpush2.msra.mxu0 %v2634
        %2989 = vmatprep.subr.mxu0 0.0
        %2990 = vmatpush2.msra.mxu0 %v2633
        %2991 = vmatprep.subr.mxu0 0.0
        %2992 = vmatpush2.msra.mxu0 %v2632
        %2993 = vmatprep.subr.mxu0 0.0
        %2994 = vmatpush2.msra.mxu0 %v2631
        %2995 = vmatprep.subr.mxu0 0.0
        %2996 = vmatpush2.msra.mxu0 %v2630
        %2997 = vmatprep.subr.mxu0 0.0
        %2998 = vmatpush2.msra.mxu0 %v2629
        %2999 = vmatprep.subr.mxu0 0.0
        %3000 = vmatpush2.msra.mxu0 %v2628
        %3001 = vmatprep.subr.mxu0 0.0
        %3002 = vmatpush2.msra.mxu0 %v2627
        %3003 = vmatprep.subr.mxu0 0.0
        %3004 = vmatpush2.msra.mxu0 %v2626
        %3005 = vmatprep.subr.mxu0 0.0
        %3006 = vmatpush2.msra.mxu0 %v2625
        %3007 = vmatprep.subr.mxu0 0.0
        %3008 = vmatpush2.msra.mxu0 %v2624
        %3009 = vmatprep.mubr.f32.mxu0 %v2291
        %3010 = vmatmul.mubr.f32.gmra.mxu0 %v2290
        %v3011 = vpop.f32.mrf.mxu0
        %v3012 = vadd.f32 %v2787, %v3011
        %v3013 = vpop.f32.mrf.mxu0
        %3014 = vmatprep.mubr.f32.mxu0 %v2300
        %3015 = vmatmul.mubr.f32.gmra.mxu0 %v2299
        %v3016 = vpop.f32.mrf.mxu0
        %v3017 = vadd.f32 %v2792, %v3016
        %v3018 = vpop.f32.mrf.mxu0
        %3019 = vmatprep.mubr.f32.mxu0 %v2309
        %3020 = vmatmul.mubr.f32.gmra.mxu0 %v2308
        %v3021 = vpop.f32.mrf.mxu0
        %v3022 = vadd.f32 %v2797, %v3021
        %v3023 = vpop.f32.mrf.mxu0
        %3024 = vmatprep.mubr.f32.mxu0 %v2318
        %3025 = vmatmul.mubr.f32.gmra.mxu0 %v2317
        %v3026 = vpop.f32.mrf.mxu0
        %v3027 = vadd.f32 %v2802, %v3026
        %v3028 = vpop.f32.mrf.mxu0
        %3029 = vmatprep.mubr.f32.mxu0 %v2327
        %3030 = vmatmul.mubr.f32.gmra.mxu0 %v2326
        %v3031 = vpop.f32.mrf.mxu0
        %v3032 = vadd.f32 %v2807, %v3031
        %v3033 = vpop.f32.mrf.mxu0
        %3034 = vmatprep.mubr.f32.mxu0 %v2336
        %3035 = vmatmul.mubr.f32.gmra.mxu0 %v2335
        %v3036 = vpop.f32.mrf.mxu0
        %v3037 = vadd.f32 %v2812, %v3036
        %v3038 = vpop.f32.mrf.mxu0
        %3039 = vmatprep.mubr.f32.mxu0 %v2345
        %3040 = vmatmul.mubr.f32.gmra.mxu0 %v2344
        %v3041 = vpop.f32.mrf.mxu0
        %v3042 = vadd.f32 %v2817, %v3041
        %v3043 = vpop.f32.mrf.mxu0
        %3044 = vmatprep.mubr.f32.mxu0 %v2354
        %3045 = vmatmul.mubr.f32.gmra.mxu0 %v2353
        %v3046 = vpop.f32.mrf.mxu0
        %v3047 = vadd.f32 %v2822, %v3046
        %v3048 = vpop.f32.mrf.mxu0
        %3049 = vmatprep.mubr.f32.mxu0 %v2363
        %3050 = vmatmul.mubr.f32.gmra.mxu0 %v2362
        %v3051 = vpop.f32.mrf.mxu0
        %v3052 = vadd.f32 %v2827, %v3051
        %v3053 = vpop.f32.mrf.mxu0
        %3054 = vmatprep.mubr.f32.mxu0 %v2372
        %3055 = vmatmul.mubr.f32.gmra.mxu0 %v2371
        %v3056 = vpop.f32.mrf.mxu0
        %v3057 = vadd.f32 %v2832, %v3056
        %v3058 = vpop.f32.mrf.mxu0
        %3059 = vmatprep.mubr.f32.mxu0 %v2381
        %3060 = vmatmul.mubr.f32.gmra.mxu0 %v2380
        %v3061 = vpop.f32.mrf.mxu0
        %v3062 = vadd.f32 %v2837, %v3061
        %v3063 = vpop.f32.mrf.mxu0
        %3064 = vmatprep.mubr.f32.mxu0 %v2390
        %3065 = vmatmul.mubr.f32.gmra.mxu0 %v2389
        %v3066 = vpop.f32.mrf.mxu0
        %v3067 = vadd.f32 %v2842, %v3066
        %v3068 = vpop.f32.mrf.mxu0
        %3069 = vmatprep.mubr.f32.mxu0 %v2399
        %3070 = vmatmul.mubr.f32.gmra.mxu0 %v2398
        %v3071 = vpop.f32.mrf.mxu0
        %v3072 = vadd.f32 %v2847, %v3071
        %v3073 = vpop.f32.mrf.mxu0
        %3074 = vmatprep.mubr.f32.mxu0 %v2408
        %3075 = vmatmul.mubr.f32.gmra.mxu0 %v2407
        %v3076 = vpop.f32.mrf.mxu0
        %v3077 = vadd.f32 %v2852, %v3076
        %v3078 = vpop.f32.mrf.mxu0
        %3079 = vmatprep.mubr.f32.mxu0 %v2417
        %3080 = vmatmul.mubr.f32.gmra.mxu0 %v2416
        %v3081 = vpop.f32.mrf.mxu0
        %v3082 = vadd.f32 %v2857, %v3081
        %v3083 = vpop.f32.mrf.mxu0
        %3084 = vmatprep.mubr.f32.mxu0 %v2426
        %3085 = vmatmul.mubr.f32.gmra.mxu0 %v2425
        %v3086 = vpop.f32.mrf.mxu0
        %v3087 = vadd.f32 %v2862, %v3086
        %v3088 = vpop.f32.mrf.mxu0
        %3089 = vmatprep.mubr.f32.mxu0 %v2435
        %3090 = vmatmul.mubr.f32.gmra.mxu0 %v2434
        %v3091 = vpop.f32.mrf.mxu0
        %v3092 = vadd.f32 %v2867, %v3091
        %v3093 = vpop.f32.mrf.mxu0
        %3094 = vmatprep.mubr.f32.mxu0 %v2444
        %3095 = vmatmul.mubr.f32.gmra.mxu0 %v2443
        %v3096 = vpop.f32.mrf.mxu0
        %v3097 = vadd.f32 %v2872, %v3096
        %v3098 = vpop.f32.mrf.mxu0
        %3099 = vmatprep.mubr.f32.mxu0 %v2453
        %3100 = vmatmul.mubr.f32.gmra.mxu0 %v2452
        %v3101 = vpop.f32.mrf.mxu0
        %v3102 = vadd.f32 %v2877, %v3101
        %v3103 = vpop.f32.mrf.mxu0
        %3104 = vmatprep.mubr.f32.mxu0 %v2462
        %3105 = vmatmul.mubr.f32.gmra.mxu0 %v2461
        %v3106 = vpop.f32.mrf.mxu0
        %v3107 = vadd.f32 %v2882, %v3106
        %v3108 = vpop.f32.mrf.mxu0
        %3109 = vmatprep.mubr.f32.mxu0 %v2471
        %3110 = vmatmul.mubr.f32.gmra.mxu0 %v2470
        %v3111 = vpop.f32.mrf.mxu0
        %v3112 = vadd.f32 %v2887, %v3111
        %v3113 = vpop.f32.mrf.mxu0
        %3114 = vmatprep.mubr.f32.mxu0 %v2480
        %3115 = vmatmul.mubr.f32.gmra.mxu0 %v2479
        %v3116 = vpop.f32.mrf.mxu0
        %v3117 = vadd.f32 %v2892, %v3116
        %v3118 = vpop.f32.mrf.mxu0
        %3119 = vmatprep.mubr.f32.mxu0 %v2489
        %3120 = vmatmul.mubr.f32.gmra.mxu0 %v2488
        %v3121 = vpop.f32.mrf.mxu0
        %v3122 = vadd.f32 %v2897, %v3121
        %v3123 = vpop.f32.mrf.mxu0
        %3124 = vmatprep.mubr.f32.mxu0 %v2498
        %3125 = vmatmul.mubr.f32.gmra.mxu0 %v2497
        %v3126 = vpop.f32.mrf.mxu0
        %v3127 = vadd.f32 %v2902, %v3126
        %v3128 = vpop.f32.mrf.mxu0
        %3129 = vmatprep.mubr.f32.mxu0 %v2507
        %3130 = vmatmul.mubr.f32.gmra.mxu0 %v2506
        %v3131 = vpop.f32.mrf.mxu0
        %v3132 = vadd.f32 %v2907, %v3131
        %v3133 = vpop.f32.mrf.mxu0
        %3134 = vmatprep.mubr.f32.mxu0 %v2516
        %3135 = vmatmul.mubr.f32.gmra.mxu0 %v2515
        %v3136 = vpop.f32.mrf.mxu0
        %v3137 = vadd.f32 %v2912, %v3136
        %v3138 = vpop.f32.mrf.mxu0
        %3139 = vmatprep.mubr.f32.mxu0 %v2525
        %3140 = vmatmul.mubr.f32.gmra.mxu0 %v2524
        %v3141 = vpop.f32.mrf.mxu0
        %v3142 = vadd.f32 %v2917, %v3141
        %v3143 = vpop.f32.mrf.mxu0
        %3144 = vmatprep.mubr.f32.mxu0 %v2534
        %3145 = vmatmul.mubr.f32.gmra.mxu0 %v2533
        %v3146 = vpop.f32.mrf.mxu0
        %v3147 = vadd.f32 %v2922, %v3146
        %v3148 = vpop.f32.mrf.mxu0
        %3149 = vmatprep.mubr.f32.mxu0 %v2543
        %3150 = vmatmul.mubr.f32.gmra.mxu0 %v2542
        %v3151 = vpop.f32.mrf.mxu0
        %v3152 = vadd.f32 %v2927, %v3151
        %v3153 = vpop.f32.mrf.mxu0
        %3154 = vmatprep.mubr.f32.mxu0 %v2552
        %3155 = vmatmul.mubr.f32.gmra.mxu0 %v2551
        %v3156 = vpop.f32.mrf.mxu0
        %v3157 = vadd.f32 %v2932, %v3156
        %v3158 = vpop.f32.mrf.mxu0
        %3159 = vmatprep.mubr.f32.mxu0 %v2561
        %3160 = vmatmul.mubr.f32.gmra.mxu0 %v2560
        %v3161 = vpop.f32.mrf.mxu0
        %v3162 = vadd.f32 %v2937, %v3161
        %v3163 = vpop.f32.mrf.mxu0
        %3164 = vmatprep.mubr.f32.mxu0 %v2570
        %3165 = vmatmul.mubr.f32.gmra.mxu0 %v2569
        %v3166 = vpop.f32.mrf.mxu0
        %v3167 = vadd.f32 %v2942, %v3166
        %v3168 = vpop.f32.mrf.mxu0
        %3169 = vdwg.mxu0
        %3170 = vmatprep.subr.mxu0 0.0
        %3171 = vmatpush1.msra.mxu0 %v2655
        %3172 = vmatprep.subr.mxu0 0.0
        %3173 = vmatpush1.msra.mxu0 %v2654
        %3174 = vmatprep.subr.mxu0 0.0
        %3175 = vmatpush1.msra.mxu0 %v2653
        %3176 = vmatprep.subr.mxu0 0.0
        %3177 = vmatpush1.msra.mxu0 %v2652
        %3178 = vmatprep.subr.mxu0 0.0
        %3179 = vmatpush1.msra.mxu0 %v2651
        %3180 = vmatprep.subr.mxu0 0.0
        %3181 = vmatpush1.msra.mxu0 %v2650
        %3182 = vmatprep.subr.mxu0 0.0
        %3183 = vmatpush1.msra.mxu0 %v2649
        %3184 = vmatprep.subr.mxu0 0.0
        %3185 = vmatpush1.msra.mxu0 %v2648
        %3186 = vmatprep.subr.mxu0 0.0
        %3187 = vmatpush1.msra.mxu0 %v2647
        %3188 = vmatprep.subr.mxu0 0.0
        %3189 = vmatpush1.msra.mxu0 %v2646
        %3190 = vmatprep.subr.mxu0 0.0
        %3191 = vmatpush1.msra.mxu0 %v2645
        %3192 = vmatprep.subr.mxu0 0.0
        %3193 = vmatpush1.msra.mxu0 %v2644
        %3194 = vmatprep.subr.mxu0 0.0
        %3195 = vmatpush1.msra.mxu0 %v2643
        %3196 = vmatprep.subr.mxu0 0.0
        %3197 = vmatpush1.msra.mxu0 %v2642
        %3198 = vmatprep.subr.mxu0 0.0
        %3199 = vmatpush1.msra.mxu0 %v2641
        %3200 = vmatprep.subr.mxu0 0.0
        %3201 = vmatpush1.msra.mxu0 %v2640
        %3202 = vmatprep.subr.mxu0 0.0
        %3203 = vmatpush2.msra.mxu0 %v2671
        %3204 = vmatprep.subr.mxu0 0.0
        %3205 = vmatpush2.msra.mxu0 %v2670
        %3206 = vmatprep.subr.mxu0 0.0
        %3207 = vmatpush2.msra.mxu0 %v2669
        %3208 = vmatprep.subr.mxu0 0.0
        %3209 = vmatpush2.msra.mxu0 %v2668
        %3210 = vmatprep.subr.mxu0 0.0
        %3211 = vmatpush2.msra.mxu0 %v2667
        %3212 = vmatprep.subr.mxu0 0.0
        %3213 = vmatpush2.msra.mxu0 %v2666
        %3214 = vmatprep.subr.mxu0 0.0
        %3215 = vmatpush2.msra.mxu0 %v2665
        %3216 = vmatprep.subr.mxu0 0.0
        %3217 = vmatpush2.msra.mxu0 %v2664
        %3218 = vmatprep.subr.mxu0 0.0
        %3219 = vmatpush2.msra.mxu0 %v2663
        %3220 = vmatprep.subr.mxu0 0.0
        %3221 = vmatpush2.msra.mxu0 %v2662
        %3222 = vmatprep.subr.mxu0 0.0
        %3223 = vmatpush2.msra.mxu0 %v2661
        %3224 = vmatprep.subr.mxu0 0.0
        %3225 = vmatpush2.msra.mxu0 %v2660
        %3226 = vmatprep.subr.mxu0 0.0
        %3227 = vmatpush2.msra.mxu0 %v2659
        %3228 = vmatprep.subr.mxu0 0.0
        %3229 = vmatpush2.msra.mxu0 %v2658
        %3230 = vmatprep.subr.mxu0 0.0
        %3231 = vmatpush2.msra.mxu0 %v2657
        %3232 = vmatprep.subr.mxu0 0.0
        %3233 = vmatpush2.msra.mxu0 %v2656
        %3234 = vmatprep.mubr.f32.mxu0 %v2293
        %3235 = vmatmul.mubr.f32.gmra.mxu0 %v2292
        %v3236 = vpop.f32.mrf.mxu0
        %v3237 = vadd.f32 %v3012, %v3236
        %v3238 = vpop.f32.mrf.mxu0
        %3239 = vmatprep.mubr.f32.mxu0 %v2302
        %3240 = vmatmul.mubr.f32.gmra.mxu0 %v2301
        %v3241 = vpop.f32.mrf.mxu0
        %v3242 = vadd.f32 %v3017, %v3241
        %v3243 = vpop.f32.mrf.mxu0
        %3244 = vmatprep.mubr.f32.mxu0 %v2311
        %3245 = vmatmul.mubr.f32.gmra.mxu0 %v2310
        %v3246 = vpop.f32.mrf.mxu0
        %v3247 = vadd.f32 %v3022, %v3246
        %v3248 = vpop.f32.mrf.mxu0
        %3249 = vmatprep.mubr.f32.mxu0 %v2320
        %3250 = vmatmul.mubr.f32.gmra.mxu0 %v2319
        %v3251 = vpop.f32.mrf.mxu0
        %v3252 = vadd.f32 %v3027, %v3251
        %v3253 = vpop.f32.mrf.mxu0
        %3254 = vmatprep.mubr.f32.mxu0 %v2329
        %3255 = vmatmul.mubr.f32.gmra.mxu0 %v2328
        %v3256 = vpop.f32.mrf.mxu0
        %v3257 = vadd.f32 %v3032, %v3256
        %v3258 = vpop.f32.mrf.mxu0
        %3259 = vmatprep.mubr.f32.mxu0 %v2338
        %3260 = vmatmul.mubr.f32.gmra.mxu0 %v2337
        %v3261 = vpop.f32.mrf.mxu0
        %v3262 = vadd.f32 %v3037, %v3261
        %v3263 = vpop.f32.mrf.mxu0
        %3264 = vmatprep.mubr.f32.mxu0 %v2347
        %3265 = vmatmul.mubr.f32.gmra.mxu0 %v2346
        %v3266 = vpop.f32.mrf.mxu0
        %v3267 = vadd.f32 %v3042, %v3266
        %v3268 = vpop.f32.mrf.mxu0
        %3269 = vmatprep.mubr.f32.mxu0 %v2356
        %3270 = vmatmul.mubr.f32.gmra.mxu0 %v2355
        %v3271 = vpop.f32.mrf.mxu0
        %v3272 = vadd.f32 %v3047, %v3271
        %v3273 = vpop.f32.mrf.mxu0
        %3274 = vmatprep.mubr.f32.mxu0 %v2365
        %3275 = vmatmul.mubr.f32.gmra.mxu0 %v2364
        %v3276 = vpop.f32.mrf.mxu0
        %v3277 = vadd.f32 %v3052, %v3276
        %v3278 = vpop.f32.mrf.mxu0
        %3279 = vmatprep.mubr.f32.mxu0 %v2374
        %3280 = vmatmul.mubr.f32.gmra.mxu0 %v2373
        %v3281 = vpop.f32.mrf.mxu0
        %v3282 = vadd.f32 %v3057, %v3281
        %v3283 = vpop.f32.mrf.mxu0
        %3284 = vmatprep.mubr.f32.mxu0 %v2383
        %3285 = vmatmul.mubr.f32.gmra.mxu0 %v2382
        %v3286 = vpop.f32.mrf.mxu0
        %v3287 = vadd.f32 %v3062, %v3286
        %v3288 = vpop.f32.mrf.mxu0
        %3289 = vmatprep.mubr.f32.mxu0 %v2392
        %3290 = vmatmul.mubr.f32.gmra.mxu0 %v2391
        %v3291 = vpop.f32.mrf.mxu0
        %v3292 = vadd.f32 %v3067, %v3291
        %v3293 = vpop.f32.mrf.mxu0
        %3294 = vmatprep.mubr.f32.mxu0 %v2401
        %3295 = vmatmul.mubr.f32.gmra.mxu0 %v2400
        %v3296 = vpop.f32.mrf.mxu0
        %v3297 = vadd.f32 %v3072, %v3296
        %v3298 = vpop.f32.mrf.mxu0
        %3299 = vmatprep.mubr.f32.mxu0 %v2410
        %3300 = vmatmul.mubr.f32.gmra.mxu0 %v2409
        %v3301 = vpop.f32.mrf.mxu0
        %v3302 = vadd.f32 %v3077, %v3301
        %v3303 = vpop.f32.mrf.mxu0
        %3304 = vmatprep.mubr.f32.mxu0 %v2419
        %3305 = vmatmul.mubr.f32.gmra.mxu0 %v2418
        %v3306 = vpop.f32.mrf.mxu0
        %v3307 = vadd.f32 %v3082, %v3306
        %v3308 = vpop.f32.mrf.mxu0
        %3309 = vmatprep.mubr.f32.mxu0 %v2428
        %3310 = vmatmul.mubr.f32.gmra.mxu0 %v2427
        %v3311 = vpop.f32.mrf.mxu0
        %v3312 = vadd.f32 %v3087, %v3311
        %v3313 = vpop.f32.mrf.mxu0
        %3314 = vmatprep.mubr.f32.mxu0 %v2437
        %3315 = vmatmul.mubr.f32.gmra.mxu0 %v2436
        %v3316 = vpop.f32.mrf.mxu0
        %v3317 = vadd.f32 %v3092, %v3316
        %v3318 = vpop.f32.mrf.mxu0
        %3319 = vmatprep.mubr.f32.mxu0 %v2446
        %3320 = vmatmul.mubr.f32.gmra.mxu0 %v2445
        %v3321 = vpop.f32.mrf.mxu0
        %v3322 = vadd.f32 %v3097, %v3321
        %v3323 = vpop.f32.mrf.mxu0
        %3324 = vmatprep.mubr.f32.mxu0 %v2455
        %3325 = vmatmul.mubr.f32.gmra.mxu0 %v2454
        %v3326 = vpop.f32.mrf.mxu0
        %v3327 = vadd.f32 %v3102, %v3326
        %v3328 = vpop.f32.mrf.mxu0
        %3329 = vmatprep.mubr.f32.mxu0 %v2464
        %3330 = vmatmul.mubr.f32.gmra.mxu0 %v2463
        %v3331 = vpop.f32.mrf.mxu0
        %v3332 = vadd.f32 %v3107, %v3331
        %v3333 = vpop.f32.mrf.mxu0
        %3334 = vmatprep.mubr.f32.mxu0 %v2473
        %3335 = vmatmul.mubr.f32.gmra.mxu0 %v2472
        %v3336 = vpop.f32.mrf.mxu0
        %v3337 = vadd.f32 %v3112, %v3336
        %v3338 = vpop.f32.mrf.mxu0
        %3339 = vmatprep.mubr.f32.mxu0 %v2482
        %3340 = vmatmul.mubr.f32.gmra.mxu0 %v2481
        %v3341 = vpop.f32.mrf.mxu0
        %v3342 = vadd.f32 %v3117, %v3341
        %v3343 = vpop.f32.mrf.mxu0
        %3344 = vmatprep.mubr.f32.mxu0 %v2491
        %3345 = vmatmul.mubr.f32.gmra.mxu0 %v2490
        %v3346 = vpop.f32.mrf.mxu0
        %v3347 = vadd.f32 %v3122, %v3346
        %v3348 = vpop.f32.mrf.mxu0
        %3349 = vmatprep.mubr.f32.mxu0 %v2500
        %3350 = vmatmul.mubr.f32.gmra.mxu0 %v2499
        %v3351 = vpop.f32.mrf.mxu0
        %v3352 = vadd.f32 %v3127, %v3351
        %v3353 = vpop.f32.mrf.mxu0
        %3354 = vmatprep.mubr.f32.mxu0 %v2509
        %3355 = vmatmul.mubr.f32.gmra.mxu0 %v2508
        %v3356 = vpop.f32.mrf.mxu0
        %v3357 = vadd.f32 %v3132, %v3356
        %v3358 = vpop.f32.mrf.mxu0
        %3359 = vmatprep.mubr.f32.mxu0 %v2518
        %3360 = vmatmul.mubr.f32.gmra.mxu0 %v2517
        %v3361 = vpop.f32.mrf.mxu0
        %v3362 = vadd.f32 %v3137, %v3361
        %v3363 = vpop.f32.mrf.mxu0
        %3364 = vmatprep.mubr.f32.mxu0 %v2527
        %3365 = vmatmul.mubr.f32.gmra.mxu0 %v2526
        %v3366 = vpop.f32.mrf.mxu0
        %v3367 = vadd.f32 %v3142, %v3366
        %v3368 = vpop.f32.mrf.mxu0
        %3369 = vmatprep.mubr.f32.mxu0 %v2536
        %3370 = vmatmul.mubr.f32.gmra.mxu0 %v2535
        %v3371 = vpop.f32.mrf.mxu0
        %v3372 = vadd.f32 %v3147, %v3371
        %v3373 = vpop.f32.mrf.mxu0
        %3374 = vmatprep.mubr.f32.mxu0 %v2545
        %3375 = vmatmul.mubr.f32.gmra.mxu0 %v2544
        %v3376 = vpop.f32.mrf.mxu0
        %v3377 = vadd.f32 %v3152, %v3376
        %v3378 = vpop.f32.mrf.mxu0
        %3379 = vmatprep.mubr.f32.mxu0 %v2554
        %3380 = vmatmul.mubr.f32.gmra.mxu0 %v2553
        %v3381 = vpop.f32.mrf.mxu0
        %v3382 = vadd.f32 %v3157, %v3381
        %v3383 = vpop.f32.mrf.mxu0
        %3384 = vmatprep.mubr.f32.mxu0 %v2563
        %3385 = vmatmul.mubr.f32.gmra.mxu0 %v2562
        %v3386 = vpop.f32.mrf.mxu0
        %v3387 = vadd.f32 %v3162, %v3386
        %v3388 = vpop.f32.mrf.mxu0
        %3389 = vmatprep.mubr.f32.mxu0 %v2572
        %3390 = vmatmul.mubr.f32.gmra.mxu0 %v2571
        %v3391 = vpop.f32.mrf.mxu0
        %v3392 = vadd.f32 %v3167, %v3391
        %v3393 = vpop.f32.mrf.mxu0
        %3394 = vdwg.mxu0
        %3395 = vmatprep.subr.mxu0 0.0
        %3396 = vmatpush1.msra.mxu0 %v2687
        %3397 = vmatprep.subr.mxu0 0.0
        %3398 = vmatpush1.msra.mxu0 %v2686
        %3399 = vmatprep.subr.mxu0 0.0
        %3400 = vmatpush1.msra.mxu0 %v2685
        %3401 = vmatprep.subr.mxu0 0.0
        %3402 = vmatpush1.msra.mxu0 %v2684
        %3403 = vmatprep.subr.mxu0 0.0
        %3404 = vmatpush1.msra.mxu0 %v2683
        %3405 = vmatprep.subr.mxu0 0.0
        %3406 = vmatpush1.msra.mxu0 %v2682
        %3407 = vmatprep.subr.mxu0 0.0
        %3408 = vmatpush1.msra.mxu0 %v2681
        %3409 = vmatprep.subr.mxu0 0.0
        %3410 = vmatpush1.msra.mxu0 %v2680
        %3411 = vmatprep.subr.mxu0 0.0
        %3412 = vmatpush1.msra.mxu0 %v2679
        %3413 = vmatprep.subr.mxu0 0.0
        %3414 = vmatpush1.msra.mxu0 %v2678
        %3415 = vmatprep.subr.mxu0 0.0
        %3416 = vmatpush1.msra.mxu0 %v2677
        %3417 = vmatprep.subr.mxu0 0.0
        %3418 = vmatpush1.msra.mxu0 %v2676
        %3419 = vmatprep.subr.mxu0 0.0
        %3420 = vmatpush1.msra.mxu0 %v2675
        %3421 = vmatprep.subr.mxu0 0.0
        %3422 = vmatpush1.msra.mxu0 %v2674
        %3423 = vmatprep.subr.mxu0 0.0
        %3424 = vmatpush1.msra.mxu0 %v2673
        %3425 = vmatprep.subr.mxu0 0.0
        %3426 = vmatpush1.msra.mxu0 %v2672
        %3427 = vmatprep.subr.mxu0 0.0
        %3428 = vmatpush2.msra.mxu0 %v2703
        %3429 = vmatprep.subr.mxu0 0.0
        %3430 = vmatpush2.msra.mxu0 %v2702
        %3431 = vmatprep.subr.mxu0 0.0
        %3432 = vmatpush2.msra.mxu0 %v2701
        %3433 = vmatprep.subr.mxu0 0.0
        %3434 = vmatpush2.msra.mxu0 %v2700
        %3435 = vmatprep.subr.mxu0 0.0
        %3436 = vmatpush2.msra.mxu0 %v2699
        %3437 = vmatprep.subr.mxu0 0.0
        %3438 = vmatpush2.msra.mxu0 %v2698
        %3439 = vmatprep.subr.mxu0 0.0
        %3440 = vmatpush2.msra.mxu0 %v2697
        %3441 = vmatprep.subr.mxu0 0.0
        %3442 = vmatpush2.msra.mxu0 %v2696
        %3443 = vmatprep.subr.mxu0 0.0
        %3444 = vmatpush2.msra.mxu0 %v2695
        %3445 = vmatprep.subr.mxu0 0.0
        %3446 = vmatpush2.msra.mxu0 %v2694
        %3447 = vmatprep.subr.mxu0 0.0
        %3448 = vmatpush2.msra.mxu0 %v2693
        %3449 = vmatprep.subr.mxu0 0.0
        %3450 = vmatpush2.msra.mxu0 %v2692
        %3451 = vmatprep.subr.mxu0 0.0
        %3452 = vmatpush2.msra.mxu0 %v2691
        %3453 = vmatprep.subr.mxu0 0.0
        %3454 = vmatpush2.msra.mxu0 %v2690
        %3455 = vmatprep.subr.mxu0 0.0
        %3456 = vmatpush2.msra.mxu0 %v2689
        %3457 = vmatprep.subr.mxu0 0.0
        %3458 = vmatpush2.msra.mxu0 %v2688
        %3459 = vmatprep.mubr.f32.mxu0 %v2295
        %3460 = vmatmul.mubr.f32.gmra.mxu0 %v2294
        %v3461 = vpop.f32.mrf.mxu0
        %v3462 = vadd.f32 %v3237, %v3461
        %v3463 = vpop.f32.mrf.mxu0
        %3464 = vmatprep.mubr.f32.mxu0 %v2304
        %3465 = vmatmul.mubr.f32.gmra.mxu0 %v2303
        %v3466 = vpop.f32.mrf.mxu0
        %v3467 = vadd.f32 %v3242, %v3466
        %v3468 = vpop.f32.mrf.mxu0
        %3469 = vmatprep.mubr.f32.mxu0 %v2313
        %3470 = vmatmul.mubr.f32.gmra.mxu0 %v2312
        %v3471 = vpop.f32.mrf.mxu0
        %v3472 = vadd.f32 %v3247, %v3471
        %v3473 = vpop.f32.mrf.mxu0
        %3474 = vmatprep.mubr.f32.mxu0 %v2322
        %3475 = vmatmul.mubr.f32.gmra.mxu0 %v2321
        %v3476 = vpop.f32.mrf.mxu0
        %v3477 = vadd.f32 %v3252, %v3476
        %v3478 = vpop.f32.mrf.mxu0
        %3479 = vmatprep.mubr.f32.mxu0 %v2331
        %3480 = vmatmul.mubr.f32.gmra.mxu0 %v2330
        %v3481 = vpop.f32.mrf.mxu0
        %v3482 = vadd.f32 %v3257, %v3481
        %v3483 = vpop.f32.mrf.mxu0
        %3484 = vmatprep.mubr.f32.mxu0 %v2340
        %3485 = vmatmul.mubr.f32.gmra.mxu0 %v2339
        %v3486 = vpop.f32.mrf.mxu0
        %v3487 = vadd.f32 %v3262, %v3486
        %v3488 = vpop.f32.mrf.mxu0
        %3489 = vmatprep.mubr.f32.mxu0 %v2349
        %3490 = vmatmul.mubr.f32.gmra.mxu0 %v2348
        %v3491 = vpop.f32.mrf.mxu0
        %v3492 = vadd.f32 %v3267, %v3491
        %v3493 = vpop.f32.mrf.mxu0
        %3494 = vmatprep.mubr.f32.mxu0 %v2358
        %3495 = vmatmul.mubr.f32.gmra.mxu0 %v2357
        %v3496 = vpop.f32.mrf.mxu0
        %v3497 = vadd.f32 %v3272, %v3496
        %v3498 = vpop.f32.mrf.mxu0
        %3499 = vmatprep.mubr.f32.mxu0 %v2367
        %3500 = vmatmul.mubr.f32.gmra.mxu0 %v2366
        %v3501 = vpop.f32.mrf.mxu0
        %v3502 = vadd.f32 %v3277, %v3501
        %v3503 = vpop.f32.mrf.mxu0
        %3504 = vmatprep.mubr.f32.mxu0 %v2376
        %3505 = vmatmul.mubr.f32.gmra.mxu0 %v2375
        %v3506 = vpop.f32.mrf.mxu0
        %v3507 = vadd.f32 %v3282, %v3506
        %v3508 = vpop.f32.mrf.mxu0
        %3509 = vmatprep.mubr.f32.mxu0 %v2385
        %3510 = vmatmul.mubr.f32.gmra.mxu0 %v2384
        %v3511 = vpop.f32.mrf.mxu0
        %v3512 = vadd.f32 %v3287, %v3511
        %v3513 = vpop.f32.mrf.mxu0
        %3514 = vmatprep.mubr.f32.mxu0 %v2394
        %3515 = vmatmul.mubr.f32.gmra.mxu0 %v2393
        %v3516 = vpop.f32.mrf.mxu0
        %v3517 = vadd.f32 %v3292, %v3516
        %v3518 = vpop.f32.mrf.mxu0
        %3519 = vmatprep.mubr.f32.mxu0 %v2403
        %3520 = vmatmul.mubr.f32.gmra.mxu0 %v2402
        %v3521 = vpop.f32.mrf.mxu0
        %v3522 = vadd.f32 %v3297, %v3521
        %v3523 = vpop.f32.mrf.mxu0
        %3524 = vmatprep.mubr.f32.mxu0 %v2412
        %3525 = vmatmul.mubr.f32.gmra.mxu0 %v2411
        %v3526 = vpop.f32.mrf.mxu0
        %v3527 = vadd.f32 %v3302, %v3526
        %v3528 = vpop.f32.mrf.mxu0
        %3529 = vmatprep.mubr.f32.mxu0 %v2421
        %3530 = vmatmul.mubr.f32.gmra.mxu0 %v2420
        %v3531 = vpop.f32.mrf.mxu0
        %v3532 = vadd.f32 %v3307, %v3531
        %v3533 = vpop.f32.mrf.mxu0
        %3534 = vmatprep.mubr.f32.mxu0 %v2430
        %3535 = vmatmul.mubr.f32.gmra.mxu0 %v2429
        %v3536 = vpop.f32.mrf.mxu0
        %v3537 = vadd.f32 %v3312, %v3536
        %v3538 = vpop.f32.mrf.mxu0
        %3539 = vmatprep.mubr.f32.mxu0 %v2439
        %3540 = vmatmul.mubr.f32.gmra.mxu0 %v2438
        %v3541 = vpop.f32.mrf.mxu0
        %v3542 = vadd.f32 %v3317, %v3541
        %v3543 = vpop.f32.mrf.mxu0
        %3544 = vmatprep.mubr.f32.mxu0 %v2448
        %3545 = vmatmul.mubr.f32.gmra.mxu0 %v2447
        %v3546 = vpop.f32.mrf.mxu0
        %v3547 = vadd.f32 %v3322, %v3546
        %v3548 = vpop.f32.mrf.mxu0
        %3549 = vmatprep.mubr.f32.mxu0 %v2457
        %3550 = vmatmul.mubr.f32.gmra.mxu0 %v2456
        %v3551 = vpop.f32.mrf.mxu0
        %v3552 = vadd.f32 %v3327, %v3551
        %v3553 = vpop.f32.mrf.mxu0
        %3554 = vmatprep.mubr.f32.mxu0 %v2466
        %3555 = vmatmul.mubr.f32.gmra.mxu0 %v2465
        %v3556 = vpop.f32.mrf.mxu0
        %v3557 = vadd.f32 %v3332, %v3556
        %v3558 = vpop.f32.mrf.mxu0
        %3559 = vmatprep.mubr.f32.mxu0 %v2475
        %3560 = vmatmul.mubr.f32.gmra.mxu0 %v2474
        %v3561 = vpop.f32.mrf.mxu0
        %v3562 = vadd.f32 %v3337, %v3561
        %v3563 = vpop.f32.mrf.mxu0
        %3564 = vmatprep.mubr.f32.mxu0 %v2484
        %3565 = vmatmul.mubr.f32.gmra.mxu0 %v2483
        %v3566 = vpop.f32.mrf.mxu0
        %v3567 = vadd.f32 %v3342, %v3566
        %v3568 = vpop.f32.mrf.mxu0
        %3569 = vmatprep.mubr.f32.mxu0 %v2493
        %3570 = vmatmul.mubr.f32.gmra.mxu0 %v2492
        %v3571 = vpop.f32.mrf.mxu0
        %v3572 = vadd.f32 %v3347, %v3571
        %v3573 = vpop.f32.mrf.mxu0
        %3574 = vmatprep.mubr.f32.mxu0 %v2502
        %3575 = vmatmul.mubr.f32.gmra.mxu0 %v2501
        %v3576 = vpop.f32.mrf.mxu0
        %v3577 = vadd.f32 %v3352, %v3576
        %v3578 = vpop.f32.mrf.mxu0
        %3579 = vmatprep.mubr.f32.mxu0 %v2511
        %3580 = vmatmul.mubr.f32.gmra.mxu0 %v2510
        %v3581 = vpop.f32.mrf.mxu0
        %v3582 = vadd.f32 %v3357, %v3581
        %v3583 = vpop.f32.mrf.mxu0
        %3584 = vmatprep.mubr.f32.mxu0 %v2520
        %3585 = vmatmul.mubr.f32.gmra.mxu0 %v2519
        %v3586 = vpop.f32.mrf.mxu0
        %v3587 = vadd.f32 %v3362, %v3586
        %v3588 = vpop.f32.mrf.mxu0
        %3589 = vmatprep.mubr.f32.mxu0 %v2529
        %3590 = vmatmul.mubr.f32.gmra.mxu0 %v2528
        %v3591 = vpop.f32.mrf.mxu0
        %v3592 = vadd.f32 %v3367, %v3591
        %v3593 = vpop.f32.mrf.mxu0
        %3594 = vmatprep.mubr.f32.mxu0 %v2538
        %3595 = vmatmul.mubr.f32.gmra.mxu0 %v2537
        %v3596 = vpop.f32.mrf.mxu0
        %v3597 = vadd.f32 %v3372, %v3596
        %v3598 = vpop.f32.mrf.mxu0
        %3599 = vmatprep.mubr.f32.mxu0 %v2547
        %3600 = vmatmul.mubr.f32.gmra.mxu0 %v2546
        %v3601 = vpop.f32.mrf.mxu0
        %v3602 = vadd.f32 %v3377, %v3601
        %v3603 = vpop.f32.mrf.mxu0
        %3604 = vmatprep.mubr.f32.mxu0 %v2556
        %3605 = vmatmul.mubr.f32.gmra.mxu0 %v2555
        %v3606 = vpop.f32.mrf.mxu0
        %v3607 = vadd.f32 %v3382, %v3606
        %v3608 = vpop.f32.mrf.mxu0
        %3609 = vmatprep.mubr.f32.mxu0 %v2565
        %3610 = vmatmul.mubr.f32.gmra.mxu0 %v2564
        %v3611 = vpop.f32.mrf.mxu0
        %v3612 = vadd.f32 %v3387, %v3611
        %v3613 = vpop.f32.mrf.mxu0
        %3614 = vmatprep.mubr.f32.mxu0 %v2574
        %3615 = vmatmul.mubr.f32.gmra.mxu0 %v2573
        %v3616 = vpop.f32.mrf.mxu0
        %v3617 = vadd.f32 %v3392, %v3616
        %v3618 = vpop.f32.mrf.mxu0
        %3619 = vdwg.mxu0
        %3620 = vmatprep.subr.mxu0 0.0
        %3621 = vmatpush1.msra.mxu0 %v2719
        %3622 = vmatprep.subr.mxu0 0.0
        %3623 = vmatpush1.msra.mxu0 %v2718
        %3624 = vmatprep.subr.mxu0 0.0
        %3625 = vmatpush1.msra.mxu0 %v2717
        %3626 = vmatprep.subr.mxu0 0.0
        %3627 = vmatpush1.msra.mxu0 %v2716
        %3628 = vmatprep.subr.mxu0 0.0
        %3629 = vmatpush1.msra.mxu0 %v2715
        %3630 = vmatprep.subr.mxu0 0.0
        %3631 = vmatpush1.msra.mxu0 %v2714
        %3632 = vmatprep.subr.mxu0 0.0
        %3633 = vmatpush1.msra.mxu0 %v2713
        %3634 = vmatprep.subr.mxu0 0.0
        %3635 = vmatpush1.msra.mxu0 %v2712
        %3636 = vmatprep.subr.mxu0 0.0
        %3637 = vmatpush1.msra.mxu0 %v2711
        %3638 = vmatprep.subr.mxu0 0.0
        %3639 = vmatpush1.msra.mxu0 %v2710
        %3640 = vmatprep.subr.mxu0 0.0
        %3641 = vmatpush1.msra.mxu0 %v2709
        %3642 = vmatprep.subr.mxu0 0.0
        %3643 = vmatpush1.msra.mxu0 %v2708
        %3644 = vmatprep.subr.mxu0 0.0
        %3645 = vmatpush1.msra.mxu0 %v2707
        %3646 = vmatprep.subr.mxu0 0.0
        %3647 = vmatpush1.msra.mxu0 %v2706
        %3648 = vmatprep.subr.mxu0 0.0
        %3649 = vmatpush1.msra.mxu0 %v2705
        %3650 = vmatprep.subr.mxu0 0.0
        %3651 = vmatpush1.msra.mxu0 %v2704
        %3652 = vmatprep.subr.mxu0 0.0
        %3653 = vmatpush2.msra.mxu0 0.0
        %3654 = vmatprep.subr.mxu0 0.0
        %3655 = vmatpush2.msra.mxu0 0.0
        %3656 = vmatprep.subr.mxu0 0.0
        %3657 = vmatpush2.msra.mxu0 0.0
        %3658 = vmatprep.subr.mxu0 0.0
        %3659 = vmatpush2.msra.mxu0 0.0
        %3660 = vmatprep.subr.mxu0 0.0
        %3661 = vmatpush2.msra.mxu0 0.0
        %3662 = vmatprep.subr.mxu0 0.0
        %3663 = vmatpush2.msra.mxu0 0.0
        %3664 = vmatprep.subr.mxu0 0.0
        %3665 = vmatpush2.msra.mxu0 0.0
        %3666 = vmatprep.subr.mxu0 0.0
        %3667 = vmatpush2.msra.mxu0 0.0
        %3668 = vmatprep.subr.mxu0 0.0
        %3669 = vmatpush2.msra.mxu0 0.0
        %3670 = vmatprep.subr.mxu0 0.0
        %3671 = vmatpush2.msra.mxu0 0.0
        %3672 = vmatprep.subr.mxu0 0.0
        %3673 = vmatpush2.msra.mxu0 0.0
        %3674 = vmatprep.subr.mxu0 0.0
        %3675 = vmatpush2.msra.mxu0 0.0
        %3676 = vmatprep.subr.mxu0 0.0
        %3677 = vmatpush2.msra.mxu0 0.0
        %3678 = vmatprep.subr.mxu0 0.0
        %3679 = vmatpush2.msra.mxu0 0.0
        %3680 = vmatprep.subr.mxu0 0.0
        %3681 = vmatpush2.msra.mxu0 0.0
        %3682 = vmatprep.subr.mxu0 0.0
        %3683 = vmatpush2.msra.mxu0 0.0
        %3684 = vmatprep.mubr.f32.mxu0 0.0
        %3685 = vmatmul.mubr.f32.gmra.mxu0 %v2296
        %v3686 = vpop.f32.mrf.mxu0
        %v3687 = vadd.f32 %v3462, %v3686
        %v3688 = vpop.f32.mrf.mxu0
        %3689 = vmatprep.mubr.f32.mxu0 0.0
        %3690 = vmatmul.mubr.f32.gmra.mxu0 %v2305
        %v3691 = vpop.f32.mrf.mxu0
        %v3692 = vadd.f32 %v3467, %v3691
        %v3693 = vpop.f32.mrf.mxu0
        %3694 = vmatprep.mubr.f32.mxu0 0.0
        %3695 = vmatmul.mubr.f32.gmra.mxu0 %v2314
        %v3696 = vpop.f32.mrf.mxu0
        %v3697 = vadd.f32 %v3472, %v3696
        %v3698 = vpop.f32.mrf.mxu0
        %3699 = vmatprep.mubr.f32.mxu0 0.0
        %3700 = vmatmul.mubr.f32.gmra.mxu0 %v2323
        %v3701 = vpop.f32.mrf.mxu0
        %v3702 = vadd.f32 %v3477, %v3701
        %v3703 = vpop.f32.mrf.mxu0
        %3704 = vmatprep.mubr.f32.mxu0 0.0
        %3705 = vmatmul.mubr.f32.gmra.mxu0 %v2332
        %v3706 = vpop.f32.mrf.mxu0
        %v3707 = vadd.f32 %v3482, %v3706
        %v3708 = vpop.f32.mrf.mxu0
        %3709 = vmatprep.mubr.f32.mxu0 0.0
        %3710 = vmatmul.mubr.f32.gmra.mxu0 %v2341
        %v3711 = vpop.f32.mrf.mxu0
        %v3712 = vadd.f32 %v3487, %v3711
        %v3713 = vpop.f32.mrf.mxu0
        %3714 = vmatprep.mubr.f32.mxu0 0.0
        %3715 = vmatmul.mubr.f32.gmra.mxu0 %v2350
        %v3716 = vpop.f32.mrf.mxu0
        %v3717 = vadd.f32 %v3492, %v3716
        %v3718 = vpop.f32.mrf.mxu0
        %3719 = vmatprep.mubr.f32.mxu0 0.0
        %3720 = vmatmul.mubr.f32.gmra.mxu0 %v2359
        %v3721 = vpop.f32.mrf.mxu0
        %v3722 = vadd.f32 %v3497, %v3721
        %v3723 = vpop.f32.mrf.mxu0
        %3724 = vmatprep.mubr.f32.mxu0 0.0
        %3725 = vmatmul.mubr.f32.gmra.mxu0 %v2368
        %v3726 = vpop.f32.mrf.mxu0
        %v3727 = vadd.f32 %v3502, %v3726
        %v3728 = vpop.f32.mrf.mxu0
        %3729 = vmatprep.mubr.f32.mxu0 0.0
        %3730 = vmatmul.mubr.f32.gmra.mxu0 %v2377
        %v3731 = vpop.f32.mrf.mxu0
        %v3732 = vadd.f32 %v3507, %v3731
        %v3733 = vpop.f32.mrf.mxu0
        %3734 = vmatprep.mubr.f32.mxu0 0.0
        %3735 = vmatmul.mubr.f32.gmra.mxu0 %v2386
        %v3736 = vpop.f32.mrf.mxu0
        %v3737 = vadd.f32 %v3512, %v3736
        %v3738 = vpop.f32.mrf.mxu0
        %3739 = vmatprep.mubr.f32.mxu0 0.0
        %3740 = vmatmul.mubr.f32.gmra.mxu0 %v2395
        %v3741 = vpop.f32.mrf.mxu0
        %v3742 = vadd.f32 %v3517, %v3741
        %v3743 = vpop.f32.mrf.mxu0
        %3744 = vmatprep.mubr.f32.mxu0 0.0
        %3745 = vmatmul.mubr.f32.gmra.mxu0 %v2404
        %v3746 = vpop.f32.mrf.mxu0
        %v3747 = vadd.f32 %v3522, %v3746
        %v3748 = vpop.f32.mrf.mxu0
        %3749 = vmatprep.mubr.f32.mxu0 0.0
        %3750 = vmatmul.mubr.f32.gmra.mxu0 %v2413
        %v3751 = vpop.f32.mrf.mxu0
        %v3752 = vadd.f32 %v3527, %v3751
        %v3753 = vpop.f32.mrf.mxu0
        %3754 = vmatprep.mubr.f32.mxu0 0.0
        %3755 = vmatmul.mubr.f32.gmra.mxu0 %v2422
        %v3756 = vpop.f32.mrf.mxu0
        %v3757 = vadd.f32 %v3532, %v3756
        %v3758 = vpop.f32.mrf.mxu0
        %3759 = vmatprep.mubr.f32.mxu0 0.0
        %3760 = vmatmul.mubr.f32.gmra.mxu0 %v2431
        %v3761 = vpop.f32.mrf.mxu0
        %v3762 = vadd.f32 %v3537, %v3761
        %v3763 = vpop.f32.mrf.mxu0
        %3764 = vmatprep.mubr.f32.mxu0 0.0
        %3765 = vmatmul.mubr.f32.gmra.mxu0 %v2440
        %v3766 = vpop.f32.mrf.mxu0
        %v3767 = vadd.f32 %v3542, %v3766
        %v3768 = vpop.f32.mrf.mxu0
        %3769 = vmatprep.mubr.f32.mxu0 0.0
        %3770 = vmatmul.mubr.f32.gmra.mxu0 %v2449
        %v3771 = vpop.f32.mrf.mxu0
        %v3772 = vadd.f32 %v3547, %v3771
        %v3773 = vpop.f32.mrf.mxu0
        %3774 = vmatprep.mubr.f32.mxu0 0.0
        %3775 = vmatmul.mubr.f32.gmra.mxu0 %v2458
        %v3776 = vpop.f32.mrf.mxu0
        %v3777 = vadd.f32 %v3552, %v3776
        %v3778 = vpop.f32.mrf.mxu0
        %3779 = vmatprep.mubr.f32.mxu0 0.0
        %3780 = vmatmul.mubr.f32.gmra.mxu0 %v2467
        %v3781 = vpop.f32.mrf.mxu0
        %v3782 = vadd.f32 %v3557, %v3781
        %v3783 = vpop.f32.mrf.mxu0
        %3784 = vmatprep.mubr.f32.mxu0 0.0
        %3785 = vmatmul.mubr.f32.gmra.mxu0 %v2476
        %v3786 = vpop.f32.mrf.mxu0
        %v3787 = vadd.f32 %v3562, %v3786
        %v3788 = vpop.f32.mrf.mxu0
        %3789 = vmatprep.mubr.f32.mxu0 0.0
        %3790 = vmatmul.mubr.f32.gmra.mxu0 %v2485
        %v3791 = vpop.f32.mrf.mxu0
        %v3792 = vadd.f32 %v3567, %v3791
        %v3793 = vpop.f32.mrf.mxu0
        %3794 = vmatprep.mubr.f32.mxu0 0.0
        %3795 = vmatmul.mubr.f32.gmra.mxu0 %v2494
        %v3796 = vpop.f32.mrf.mxu0
        %v3797 = vadd.f32 %v3572, %v3796
        %v3798 = vpop.f32.mrf.mxu0
        %3799 = vmatprep.mubr.f32.mxu0 0.0
        %3800 = vmatmul.mubr.f32.gmra.mxu0 %v2503
        %v3801 = vpop.f32.mrf.mxu0
        %v3802 = vadd.f32 %v3577, %v3801
        %v3803 = vpop.f32.mrf.mxu0
        %3804 = vmatprep.mubr.f32.mxu0 0.0
        %3805 = vmatmul.mubr.f32.gmra.mxu0 %v2512
        %v3806 = vpop.f32.mrf.mxu0
        %v3807 = vadd.f32 %v3582, %v3806
        %v3808 = vpop.f32.mrf.mxu0
        %3809 = vmatprep.mubr.f32.mxu0 0.0
        %3810 = vmatmul.mubr.f32.gmra.mxu0 %v2521
        %v3811 = vpop.f32.mrf.mxu0
        %v3812 = vadd.f32 %v3587, %v3811
        %v3813 = vpop.f32.mrf.mxu0
        %3814 = vmatprep.mubr.f32.mxu0 0.0
        %3815 = vmatmul.mubr.f32.gmra.mxu0 %v2530
        %v3816 = vpop.f32.mrf.mxu0
        %v3817 = vadd.f32 %v3592, %v3816
        %v3818 = vpop.f32.mrf.mxu0
        %3819 = vmatprep.mubr.f32.mxu0 0.0
        %3820 = vmatmul.mubr.f32.gmra.mxu0 %v2539
        %v3821 = vpop.f32.mrf.mxu0
        %v3822 = vadd.f32 %v3597, %v3821
        %v3823 = vpop.f32.mrf.mxu0
        %3824 = vmatprep.mubr.f32.mxu0 0.0
        %3825 = vmatmul.mubr.f32.gmra.mxu0 %v2548
        %v3826 = vpop.f32.mrf.mxu0
        %v3827 = vadd.f32 %v3602, %v3826
        %v3828 = vpop.f32.mrf.mxu0
        %3829 = vmatprep.mubr.f32.mxu0 0.0
        %3830 = vmatmul.mubr.f32.gmra.mxu0 %v2557
        %v3831 = vpop.f32.mrf.mxu0
        %v3832 = vadd.f32 %v3607, %v3831
        %v3833 = vpop.f32.mrf.mxu0
        %3834 = vmatprep.mubr.f32.mxu0 0.0
        %3835 = vmatmul.mubr.f32.gmra.mxu0 %v2566
        %v3836 = vpop.f32.mrf.mxu0
        %v3837 = vadd.f32 %v3612, %v3836
        %v3838 = vpop.f32.mrf.mxu0
        %3839 = vmatprep.mubr.f32.mxu0 0.0
        %3840 = vmatmul.mubr.f32.gmra.mxu0 %v2575
        %v3841 = vpop.f32.mrf.mxu0
        %v3842 = vadd.f32 %v3617, %v3841
        %v3843 = vpop.f32.mrf.mxu0
        %3844 = vdwg.mxu0
        %v3845 = vld [vmem:[%s5] sm:$0x1]
        %v3847 = vlaneseq
        %v3848 = vshrl.u32 %v3847, 7
        %v3849 = vsub.s32 0, %v3848
        %v3850 = vrot.slane %v3845, %v3849
        %v3852 = vmul.f32 %v3687, %v3850
        %v3853 = vmul.f32 %v3692, %v3850
        %v3854 = vmul.f32 %v3697, %v3850
        %v3855 = vmul.f32 %v3702, %v3850
        %v3856 = vmul.f32 %v3707, %v3850
        %v3857 = vmul.f32 %v3712, %v3850
        %v3858 = vmul.f32 %v3717, %v3850
        %v3859 = vmul.f32 %v3722, %v3850
        %v3860 = vmul.f32 %v3727, %v3850
        %v3861 = vmul.f32 %v3732, %v3850
        %v3862 = vmul.f32 %v3737, %v3850
        %v3863 = vmul.f32 %v3742, %v3850
        %v3864 = vmul.f32 %v3747, %v3850
        %v3865 = vmul.f32 %v3752, %v3850
        %v3866 = vmul.f32 %v3757, %v3850
        %v3867 = vmul.f32 %v3762, %v3850
        %v3868 = vmul.f32 %v3767, %v3850
        %v3869 = vmul.f32 %v3772, %v3850
        %v3870 = vmul.f32 %v3777, %v3850
        %v3871 = vmul.f32 %v3782, %v3850
        %v3872 = vmul.f32 %v3787, %v3850
        %v3873 = vmul.f32 %v3792, %v3850
        %v3874 = vmul.f32 %v3797, %v3850
        %v3875 = vmul.f32 %v3802, %v3850
        %v3876 = vmul.f32 %v3807, %v3850
        %v3877 = vmul.f32 %v3812, %v3850
        %v3878 = vmul.f32 %v3817, %v3850
        %v3879 = vmul.f32 %v3822, %v3850
        %v3880 = vmul.f32 %v3827, %v3850
        %v3881 = vmul.f32 %v3832, %v3850
        %v3882 = vmul.f32 %v3837, %v3850
        %v3883 = vmul.f32 %v3842, %v3850
        %v3884 = vld [vmem:[%s6] sm:$0x1]
        %v3886 = vlaneseq
        %v3887 = vshrl.u32 %v3886, 7
        %v3888 = vsub.s32 0, %v3887
        %v3889 = vrot.slane %v3884, %v3888
        %v3891 = vadd.f32 %v3852, %v3889
        %v3892 = vadd.f32 %v3853, %v3889
        %v3893 = vadd.f32 %v3854, %v3889
        %v3894 = vadd.f32 %v3855, %v3889
        %v3895 = vadd.f32 %v3856, %v3889
        %v3896 = vadd.f32 %v3857, %v3889
        %v3897 = vadd.f32 %v3858, %v3889
        %v3898 = vadd.f32 %v3859, %v3889
        %v3899 = vadd.f32 %v3860, %v3889
        %v3900 = vadd.f32 %v3861, %v3889
        %v3901 = vadd.f32 %v3862, %v3889
        %v3902 = vadd.f32 %v3863, %v3889
        %v3903 = vadd.f32 %v3864, %v3889
        %v3904 = vadd.f32 %v3865, %v3889
        %v3905 = vadd.f32 %v3866, %v3889
        %v3906 = vadd.f32 %v3867, %v3889
        %v3907 = vadd.f32 %v3868, %v3889
        %v3908 = vadd.f32 %v3869, %v3889
        %v3909 = vadd.f32 %v3870, %v3889
        %v3910 = vadd.f32 %v3871, %v3889
        %v3911 = vadd.f32 %v3872, %v3889
        %v3912 = vadd.f32 %v3873, %v3889
        %v3913 = vadd.f32 %v3874, %v3889
        %v3914 = vadd.f32 %v3875, %v3889
        %v3915 = vadd.f32 %v3876, %v3889
        %v3916 = vadd.f32 %v3877, %v3889
        %v3917 = vadd.f32 %v3878, %v3889
        %v3918 = vadd.f32 %v3879, %v3889
        %v3919 = vadd.f32 %v3880, %v3889
        %v3920 = vadd.f32 %v3881, %v3889
        %v3921 = vadd.f32 %v3882, %v3889
        %v3922 = vadd.f32 %v3883, %v3889
        %v3923 = vxor.u32 %v3891, 2147483648
        %v3924 = vxor.u32 %v3892, 2147483648
        %v3925 = vxor.u32 %v3893, 2147483648
        %v3926 = vxor.u32 %v3894, 2147483648
        %v3927 = vxor.u32 %v3895, 2147483648
        %v3928 = vxor.u32 %v3896, 2147483648
        %v3929 = vxor.u32 %v3897, 2147483648
        %v3930 = vxor.u32 %v3898, 2147483648
        %v3931 = vxor.u32 %v3899, 2147483648
        %v3932 = vxor.u32 %v3900, 2147483648
        %v3933 = vxor.u32 %v3901, 2147483648
        %v3934 = vxor.u32 %v3902, 2147483648
        %v3935 = vxor.u32 %v3903, 2147483648
        %v3936 = vxor.u32 %v3904, 2147483648
        %v3937 = vxor.u32 %v3905, 2147483648
        %v3938 = vxor.u32 %v3906, 2147483648
        %v3939 = vxor.u32 %v3907, 2147483648
        %v3940 = vxor.u32 %v3908, 2147483648
        %v3941 = vxor.u32 %v3909, 2147483648
        %v3942 = vxor.u32 %v3910, 2147483648
        %v3943 = vxor.u32 %v3911, 2147483648
        %v3944 = vxor.u32 %v3912, 2147483648
        %v3945 = vxor.u32 %v3913, 2147483648
        %v3946 = vxor.u32 %v3914, 2147483648
        %v3947 = vxor.u32 %v3915, 2147483648
        %v3948 = vxor.u32 %v3916, 2147483648
        %v3949 = vxor.u32 %v3917, 2147483648
        %v3950 = vxor.u32 %v3918, 2147483648
        %v3951 = vxor.u32 %v3919, 2147483648
        %v3952 = vxor.u32 %v3920, 2147483648
        %v3953 = vxor.u32 %v3921, 2147483648
        %v3954 = vxor.u32 %v3922, 2147483648
        %v3955 = vmul.f32 %v3923, 1.442695
        %v3956 = vpow.pop %v3955
        %v3957 = vmul.f32 %v3924, 1.442695
        %v3958 = vpow.pop %v3957
        %v3959 = vmul.f32 %v3925, 1.442695
        %v3960 = vpow.pop %v3959
        %v3961 = vmul.f32 %v3926, 1.442695
        %v3962 = vpow.pop %v3961
        %v3963 = vmul.f32 %v3927, 1.442695
        %v3964 = vpow.pop %v3963
        %v3965 = vmul.f32 %v3928, 1.442695
        %v3966 = vpow.pop %v3965
        %v3967 = vmul.f32 %v3929, 1.442695
        %v3968 = vpow.pop %v3967
        %v3969 = vmul.f32 %v3930, 1.442695
        %v3970 = vpow.pop %v3969
        %v3971 = vmul.f32 %v3931, 1.442695
        %v3972 = vpow.pop %v3971
        %v3973 = vmul.f32 %v3932, 1.442695
        %v3974 = vpow.pop %v3973
        %v3975 = vmul.f32 %v3933, 1.442695
        %v3976 = vpow.pop %v3975
        %v3977 = vmul.f32 %v3934, 1.442695
        %v3978 = vpow.pop %v3977
        %v3979 = vmul.f32 %v3935, 1.442695
        %v3980 = vpow.pop %v3979
        %v3981 = vmul.f32 %v3936, 1.442695
        %v3982 = vpow.pop %v3981
        %v3983 = vmul.f32 %v3937, 1.442695
        %v3984 = vpow.pop %v3983
        %v3985 = vmul.f32 %v3938, 1.442695
        %v3986 = vpow.pop %v3985
        %v3987 = vmul.f32 %v3939, 1.442695
        %v3988 = vpow.pop %v3987
        %v3989 = vmul.f32 %v3940, 1.442695
        %v3990 = vpow.pop %v3989
        %v3991 = vmul.f32 %v3941, 1.442695
        %v3992 = vpow.pop %v3991
        %v3993 = vmul.f32 %v3942, 1.442695
        %v3994 = vpow.pop %v3993
        %v3995 = vmul.f32 %v3943, 1.442695
        %v3996 = vpow.pop %v3995
        %v3997 = vmul.f32 %v3944, 1.442695
        %v3998 = vpow.pop %v3997
        %v3999 = vmul.f32 %v3945, 1.442695
        %v4000 = vpow.pop %v3999
        %v4001 = vmul.f32 %v3946, 1.442695
        %v4002 = vpow.pop %v4001
        %v4003 = vmul.f32 %v3947, 1.442695
        %v4004 = vpow.pop %v4003
        %v4005 = vmul.f32 %v3948, 1.442695
        %v4006 = vpow.pop %v4005
        %v4007 = vmul.f32 %v3949, 1.442695
        %v4008 = vpow.pop %v4007
        %v4009 = vmul.f32 %v3950, 1.442695
        %v4010 = vpow.pop %v4009
        %v4011 = vmul.f32 %v3951, 1.442695
        %v4012 = vpow.pop %v4011
        %v4013 = vmul.f32 %v3952, 1.442695
        %v4014 = vpow.pop %v4013
        %v4015 = vmul.f32 %v3953, 1.442695
        %v4016 = vpow.pop %v4015
        %v4017 = vmul.f32 %v3954, 1.442695
        %v4018 = vpow.pop %v4017
        %v4019 = vadd.f32 %v3956, 1.0
        %v4020 = vadd.f32 %v3958, 1.0
        %v4021 = vadd.f32 %v3960, 1.0
        %v4022 = vadd.f32 %v3962, 1.0
        %v4023 = vadd.f32 %v3964, 1.0
        %v4024 = vadd.f32 %v3966, 1.0
        %v4025 = vadd.f32 %v3968, 1.0
        %v4026 = vadd.f32 %v3970, 1.0
        %v4027 = vadd.f32 %v3972, 1.0
        %v4028 = vadd.f32 %v3974, 1.0
        %v4029 = vadd.f32 %v3976, 1.0
        %v4030 = vadd.f32 %v3978, 1.0
        %v4031 = vadd.f32 %v3980, 1.0
        %v4032 = vadd.f32 %v3982, 1.0
        %v4033 = vadd.f32 %v3984, 1.0
        %v4034 = vadd.f32 %v3986, 1.0
        %v4035 = vadd.f32 %v3988, 1.0
        %v4036 = vadd.f32 %v3990, 1.0
        %v4037 = vadd.f32 %v3992, 1.0
        %v4038 = vadd.f32 %v3994, 1.0
        %v4039 = vadd.f32 %v3996, 1.0
        %v4040 = vadd.f32 %v3998, 1.0
        %v4041 = vadd.f32 %v4000, 1.0
        %v4042 = vadd.f32 %v4002, 1.0
        %v4043 = vadd.f32 %v4004, 1.0
        %v4044 = vadd.f32 %v4006, 1.0
        %v4045 = vadd.f32 %v4008, 1.0
        %v4046 = vadd.f32 %v4010, 1.0
        %v4047 = vadd.f32 %v4012, 1.0
        %v4048 = vadd.f32 %v4014, 1.0
        %v4049 = vadd.f32 %v4016, 1.0
        %v4050 = vadd.f32 %v4018, 1.0
        %v4051 = vrcp.pop %v4019
        %v4052 = vmul.f32 1.0, %v4051
        %v4053 = vrcp.pop %v4020
        %v4054 = vmul.f32 1.0, %v4053
        %v4055 = vrcp.pop %v4021
        %v4056 = vmul.f32 1.0, %v4055
        %v4057 = vrcp.pop %v4022
        %v4058 = vmul.f32 1.0, %v4057
        %v4059 = vrcp.pop %v4023
        %v4060 = vmul.f32 1.0, %v4059
        %v4061 = vrcp.pop %v4024
        %v4062 = vmul.f32 1.0, %v4061
        %v4063 = vrcp.pop %v4025
        %v4064 = vmul.f32 1.0, %v4063
        %v4065 = vrcp.pop %v4026
        %v4066 = vmul.f32 1.0, %v4065
        %v4067 = vrcp.pop %v4027
        %v4068 = vmul.f32 1.0, %v4067
        %v4069 = vrcp.pop %v4028
        %v4070 = vmul.f32 1.0, %v4069
        %v4071 = vrcp.pop %v4029
        %v4072 = vmul.f32 1.0, %v4071
        %v4073 = vrcp.pop %v4030
        %v4074 = vmul.f32 1.0, %v4073
        %v4075 = vrcp.pop %v4031
        %v4076 = vmul.f32 1.0, %v4075
        %v4077 = vrcp.pop %v4032
        %v4078 = vmul.f32 1.0, %v4077
        %v4079 = vrcp.pop %v4033
        %v4080 = vmul.f32 1.0, %v4079
        %v4081 = vrcp.pop %v4034
        %v4082 = vmul.f32 1.0, %v4081
        %v4083 = vrcp.pop %v4035
        %v4084 = vmul.f32 1.0, %v4083
        %v4085 = vrcp.pop %v4036
        %v4086 = vmul.f32 1.0, %v4085
        %v4087 = vrcp.pop %v4037
        %v4088 = vmul.f32 1.0, %v4087
        %v4089 = vrcp.pop %v4038
        %v4090 = vmul.f32 1.0, %v4089
        %v4091 = vrcp.pop %v4039
        %v4092 = vmul.f32 1.0, %v4091
        %v4093 = vrcp.pop %v4040
        %v4094 = vmul.f32 1.0, %v4093
        %v4095 = vrcp.pop %v4041
        %v4096 = vmul.f32 1.0, %v4095
        %v4097 = vrcp.pop %v4042
        %v4098 = vmul.f32 1.0, %v4097
        %v4099 = vrcp.pop %v4043
        %v4100 = vmul.f32 1.0, %v4099
        %v4101 = vrcp.pop %v4044
        %v4102 = vmul.f32 1.0, %v4101
        %v4103 = vrcp.pop %v4045
        %v4104 = vmul.f32 1.0, %v4103
        %v4105 = vrcp.pop %v4046
        %v4106 = vmul.f32 1.0, %v4105
        %v4107 = vrcp.pop %v4047
        %v4108 = vmul.f32 1.0, %v4107
        %v4109 = vrcp.pop %v4048
        %v4110 = vmul.f32 1.0, %v4109
        %v4111 = vrcp.pop %v4049
        %v4112 = vmul.f32 1.0, %v4111
        %v4113 = vrcp.pop %v4050
        %v4114 = vmul.f32 1.0, %v4113
        %v4115 = vmul.f32 %v3891, %v4052
        %v4116 = vmul.f32 %v3892, %v4054
        %v4117 = vmul.f32 %v3893, %v4056
        %v4118 = vmul.f32 %v3894, %v4058
        %v4119 = vmul.f32 %v3895, %v4060
        %v4120 = vmul.f32 %v3896, %v4062
        %v4121 = vmul.f32 %v3897, %v4064
        %v4122 = vmul.f32 %v3898, %v4066
        %v4123 = vmul.f32 %v3899, %v4068
        %v4124 = vmul.f32 %v3900, %v4070
        %v4125 = vmul.f32 %v3901, %v4072
        %v4126 = vmul.f32 %v3902, %v4074
        %v4127 = vmul.f32 %v3903, %v4076
        %v4128 = vmul.f32 %v3904, %v4078
        %v4129 = vmul.f32 %v3905, %v4080
        %v4130 = vmul.f32 %v3906, %v4082
        %v4131 = vmul.f32 %v3907, %v4084
        %v4132 = vmul.f32 %v3908, %v4086
        %v4133 = vmul.f32 %v3909, %v4088
        %v4134 = vmul.f32 %v3910, %v4090
        %v4135 = vmul.f32 %v3911, %v4092
        %v4136 = vmul.f32 %v3912, %v4094
        %v4137 = vmul.f32 %v3913, %v4096
        %v4138 = vmul.f32 %v3914, %v4098
        %v4139 = vmul.f32 %v3915, %v4100
        %v4140 = vmul.f32 %v3916, %v4102
        %v4141 = vmul.f32 %v3917, %v4104
        %v4142 = vmul.f32 %v3918, %v4106
        %v4143 = vmul.f32 %v3919, %v4108
        %v4144 = vmul.f32 %v3920, %v4110
        %v4145 = vmul.f32 %v3921, %v4112
        %v4146 = vmul.f32 %v3922, %v4114
        %v4177 = vrot.slane %v4115, 7
        %v4178 = vrot.slane %v4116, 7
        %v4179 = vsel %vm1847, %v4177, %v4178
        %v4180 = vrot.slane %v4117, 7
        %v4181 = vrot.slane %v4118, 7
        %v4182 = vsel %vm1847, %v4180, %v4181
        %v4183 = vrot.slane %v4119, 7
        %v4184 = vrot.slane %v4120, 7
        %v4185 = vsel %vm1847, %v4183, %v4184
        %v4186 = vrot.slane %v4121, 7
        %v4187 = vrot.slane %v4122, 7
        %v4188 = vsel %vm1847, %v4186, %v4187
        %v4189 = vrot.slane %v4123, 7
        %v4190 = vrot.slane %v4124, 7
        %v4191 = vsel %vm1847, %v4189, %v4190
        %v4192 = vrot.slane %v4125, 7
        %v4193 = vrot.slane %v4126, 7
        %v4194 = vsel %vm1847, %v4192, %v4193
        %v4195 = vrot.slane %v4127, 7
        %v4196 = vrot.slane %v4128, 7
        %v4197 = vsel %vm1847, %v4195, %v4196
        %v4198 = vrot.slane %v4129, 7
        %v4199 = vrot.slane %v4130, 7
        %v4200 = vsel %vm1847, %v4198, %v4199
        %v4201 = vrot.slane %v4131, 7
        %v4202 = vrot.slane %v4132, 7
        %v4203 = vsel %vm1847, %v4201, %v4202
        %v4204 = vrot.slane %v4133, 7
        %v4205 = vrot.slane %v4134, 7
        %v4206 = vsel %vm1847, %v4204, %v4205
        %v4207 = vrot.slane %v4135, 7
        %v4208 = vrot.slane %v4136, 7
        %v4209 = vsel %vm1847, %v4207, %v4208
        %v4210 = vrot.slane %v4137, 7
        %v4211 = vrot.slane %v4138, 7
        %v4212 = vsel %vm1847, %v4210, %v4211
        %v4213 = vrot.slane %v4139, 7
        %v4214 = vrot.slane %v4140, 7
        %v4215 = vsel %vm1847, %v4213, %v4214
        %v4216 = vrot.slane %v4141, 7
        %v4217 = vrot.slane %v4142, 7
        %v4218 = vsel %vm1847, %v4216, %v4217
        %v4219 = vrot.slane %v4143, 7
        %v4220 = vrot.slane %v4144, 7
        %v4221 = vsel %vm1847, %v4219, %v4220
        %4252 = vst [vmem:[%s1923] sm:$0xfe] %v4177
        %4253 = vst [vmem:[%s1923 + $0x48] sm:$0xff] %v4179
        %4254 = vst [vmem:[%s1923 + $0x90] sm:$0xfe] %v4180
        %4255 = vst [vmem:[%s1923 + $0xd8] sm:$0xff] %v4182
        %4256 = vst [vmem:[%s1923 + $0x120] sm:$0xfe] %v4183
        %4257 = vst [vmem:[%s1923 + $0x168] sm:$0xff] %v4185
        %4258 = vst [vmem:[%s1923 + $0x1b0] sm:$0xfe] %v4186
        %4259 = vst [vmem:[%s1923 + $0x1f8] sm:$0xff] %v4188
        %4260 = vst [vmem:[%s1923 + $0x240] sm:$0xfe] %v4189
        %4261 = vst [vmem:[%s1923 + $0x288] sm:$0xff] %v4191
        %4262 = vst [vmem:[%s1923 + $0x2d0] sm:$0xfe] %v4192
        %4263 = vst [vmem:[%s1923 + $0x318] sm:$0xff] %v4194
        %4264 = vst [vmem:[%s1923 + $0x360] sm:$0xfe] %v4195
        %4265 = vst [vmem:[%s1923 + $0x3a8] sm:$0xff] %v4197
        %4266 = vst [vmem:[%s1923 + $0x3f0] sm:$0xfe] %v4198
        %4267 = vst [vmem:[%s1923 + $0x438] sm:$0xff] %v4200
        %4268 = vst [vmem:[%s1923 + $0x480] sm:$0xfe] %v4201
        %4269 = vst [vmem:[%s1923 + $0x4c8] sm:$0xff] %v4203
        %4270 = vst [vmem:[%s1923 + $0x510] sm:$0xfe] %v4204
        %4271 = vst [vmem:[%s1923 + $0x558] sm:$0xff] %v4206
        %4272 = vst [vmem:[%s1923 + $0x5a0] sm:$0xfe] %v4207
        %4273 = vst [vmem:[%s1923 + $0x5e8] sm:$0xff] %v4209
        %4274 = vst [vmem:[%s1923 + $0x630] sm:$0xfe] %v4210
        %4275 = vst [vmem:[%s1923 + $0x678] sm:$0xff] %v4212
        %4276 = vst [vmem:[%s1923 + $0x6c0] sm:$0xfe] %v4213
        %4277 = vst [vmem:[%s1923 + $0x708] sm:$0xff] %v4215
        %4278 = vst [vmem:[%s1923 + $0x750] sm:$0xfe] %v4216
        %4279 = vst [vmem:[%s1923 + $0x798] sm:$0xff] %v4218
        %4280 = vst [vmem:[%s1923 + $0x7e0] sm:$0xfe] %v4219
        %4281 = vst [vmem:[%s1923 + $0x828] sm:$0xff] %v4221
        %4282 = vst [vmem:[%s1923 + $0x8] sm:$0xff] %v4115
        %4283 = vst [vmem:[%s1923 + $0x50] sm:$0xff] %v4116
        %4284 = vst [vmem:[%s1923 + $0x98] sm:$0xff] %v4117
        %4285 = vst [vmem:[%s1923 + $0xe0] sm:$0xff] %v4118
        %4286 = vst [vmem:[%s1923 + $0x128] sm:$0xff] %v4119
        %4287 = vst [vmem:[%s1923 + $0x170] sm:$0xff] %v4120
        %4288 = vst [vmem:[%s1923 + $0x1b8] sm:$0xff] %v4121
        %4289 = vst [vmem:[%s1923 + $0x200] sm:$0xff] %v4122
        %4290 = vst [vmem:[%s1923 + $0x248] sm:$0xff] %v4123
        %4291 = vst [vmem:[%s1923 + $0x290] sm:$0xff] %v4124
        %4292 = vst [vmem:[%s1923 + $0x2d8] sm:$0xff] %v4125
        %4293 = vst [vmem:[%s1923 + $0x320] sm:$0xff] %v4126
        %4294 = vst [vmem:[%s1923 + $0x368] sm:$0xff] %v4127
        %4295 = vst [vmem:[%s1923 + $0x3b0] sm:$0xff] %v4128
        %4296 = vst [vmem:[%s1923 + $0x3f8] sm:$0xff] %v4129
        %4297 = vst [vmem:[%s1923 + $0x440] sm:$0xff] %v4130
        %4298 = vst [vmem:[%s1923 + $0x488] sm:$0xff] %v4131
        %4299 = vst [vmem:[%s1923 + $0x4d0] sm:$0xff] %v4132
        %4300 = vst [vmem:[%s1923 + $0x518] sm:$0xff] %v4133
        %4301 = vst [vmem:[%s1923 + $0x560] sm:$0xff] %v4134
        %4302 = vst [vmem:[%s1923 + $0x5a8] sm:$0xff] %v4135
        %4303 = vst [vmem:[%s1923 + $0x5f0] sm:$0xff] %v4136
        %4304 = vst [vmem:[%s1923 + $0x638] sm:$0xff] %v4137
        %4305 = vst [vmem:[%s1923 + $0x680] sm:$0xff] %v4138
        %4306 = vst [vmem:[%s1923 + $0x6c8] sm:$0xff] %v4139
        %4307 = vst [vmem:[%s1923 + $0x710] sm:$0xff] %v4140
        %4308 = vst [vmem:[%s1923 + $0x758] sm:$0xff] %v4141
        %4309 = vst [vmem:[%s1923 + $0x7a0] sm:$0xff] %v4142
        %4310 = vst [vmem:[%s1923 + $0x7e8] sm:$0xff] %v4143
        %4311 = vst [vmem:[%s1923 + $0x830] sm:$0xff] %v4144
        %v4312 = vrot.slane %v4115, 1
        %v4313 = vrot.slane %v4116, 1
        %v4314 = vsel %vm1984, %v4312, %v4313
        %v4315 = vrot.slane %v4117, 1
        %v4316 = vrot.slane %v4118, 1
        %v4317 = vsel %vm1984, %v4315, %v4316
        %v4318 = vrot.slane %v4119, 1
        %v4319 = vrot.slane %v4120, 1
        %v4320 = vsel %vm1984, %v4318, %v4319
        %v4321 = vrot.slane %v4121, 1
        %v4322 = vrot.slane %v4122, 1
        %v4323 = vsel %vm1984, %v4321, %v4322
        %v4324 = vrot.slane %v4123, 1
        %v4325 = vrot.slane %v4124, 1
        %v4326 = vsel %vm1984, %v4324, %v4325
        %v4327 = vrot.slane %v4125, 1
        %v4328 = vrot.slane %v4126, 1
        %v4329 = vsel %vm1984, %v4327, %v4328
        %v4330 = vrot.slane %v4127, 1
        %v4331 = vrot.slane %v4128, 1
        %v4332 = vsel %vm1984, %v4330, %v4331
        %v4333 = vrot.slane %v4129, 1
        %v4334 = vrot.slane %v4130, 1
        %v4335 = vsel %vm1984, %v4333, %v4334
        %v4336 = vrot.slane %v4131, 1
        %v4337 = vrot.slane %v4132, 1
        %v4338 = vsel %vm1984, %v4336, %v4337
        %v4339 = vrot.slane %v4133, 1
        %v4340 = vrot.slane %v4134, 1
        %v4341 = vsel %vm1984, %v4339, %v4340
        %v4342 = vrot.slane %v4135, 1
        %v4343 = vrot.slane %v4136, 1
        %v4344 = vsel %vm1984, %v4342, %v4343
        %v4345 = vrot.slane %v4137, 1
        %v4346 = vrot.slane %v4138, 1
        %v4347 = vsel %vm1984, %v4345, %v4346
        %v4348 = vrot.slane %v4139, 1
        %v4349 = vrot.slane %v4140, 1
        %v4350 = vsel %vm1984, %v4348, %v4349
        %v4351 = vrot.slane %v4141, 1
        %v4352 = vrot.slane %v4142, 1
        %v4353 = vsel %vm1984, %v4351, %v4352
        %v4354 = vrot.slane %v4143, 1
        %v4355 = vrot.slane %v4144, 1
        %v4356 = vsel %vm1984, %v4354, %v4355
        %4387 = vst [vmem:[%s1923 + $0x10] sm:$0xff] %v4314
        %4388 = vst [vmem:[%s1923 + $0x58] sm:$0x7f] %v4313
        %4389 = vst [vmem:[%s1923 + $0xa0] sm:$0xff] %v4317
        %4390 = vst [vmem:[%s1923 + $0xe8] sm:$0x7f] %v4316
        %4391 = vst [vmem:[%s1923 + $0x130] sm:$0xff] %v4320
        %4392 = vst [vmem:[%s1923 + $0x178] sm:$0x7f] %v4319
        %4393 = vst [vmem:[%s1923 + $0x1c0] sm:$0xff] %v4323
        %4394 = vst [vmem:[%s1923 + $0x208] sm:$0x7f] %v4322
        %4395 = vst [vmem:[%s1923 + $0x250] sm:$0xff] %v4326
        %4396 = vst [vmem:[%s1923 + $0x298] sm:$0x7f] %v4325
        %4397 = vst [vmem:[%s1923 + $0x2e0] sm:$0xff] %v4329
        %4398 = vst [vmem:[%s1923 + $0x328] sm:$0x7f] %v4328
        %4399 = vst [vmem:[%s1923 + $0x370] sm:$0xff] %v4332
        %4400 = vst [vmem:[%s1923 + $0x3b8] sm:$0x7f] %v4331
        %4401 = vst [vmem:[%s1923 + $0x400] sm:$0xff] %v4335
        %4402 = vst [vmem:[%s1923 + $0x448] sm:$0x7f] %v4334
        %4403 = vst [vmem:[%s1923 + $0x490] sm:$0xff] %v4338
        %4404 = vst [vmem:[%s1923 + $0x4d8] sm:$0x7f] %v4337
        %4405 = vst [vmem:[%s1923 + $0x520] sm:$0xff] %v4341
        %4406 = vst [vmem:[%s1923 + $0x568] sm:$0x7f] %v4340
        %4407 = vst [vmem:[%s1923 + $0x5b0] sm:$0xff] %v4344
        %4408 = vst [vmem:[%s1923 + $0x5f8] sm:$0x7f] %v4343
        %4409 = vst [vmem:[%s1923 + $0x640] sm:$0xff] %v4347
        %4410 = vst [vmem:[%s1923 + $0x688] sm:$0x7f] %v4346
        %4411 = vst [vmem:[%s1923 + $0x6d0] sm:$0xff] %v4350
        %4412 = vst [vmem:[%s1923 + $0x718] sm:$0x7f] %v4349
        %4413 = vst [vmem:[%s1923 + $0x760] sm:$0xff] %v4353
        %4414 = vst [vmem:[%s1923 + $0x7a8] sm:$0x7f] %v4352
        %4415 = vst [vmem:[%s1923 + $0x7f0] sm:$0xff] %v4356
        %4416 = vst [vmem:[%s1923 + $0x838] sm:$0x7f] %v4355
        %v4419 = vrot.slane %v4145, 7
        %v4420 = vrot.slane %v4146, 7
        %v4421 = vsel %vm1847, %v4419, %v4420
        %4424 = vst [vmem:[#allocation3 + $0x18] sm:$0xfe] %v4177
        %4425 = vst [vmem:[#allocation3 + $0x60] sm:$0xff] %v4179
        %4426 = vst [vmem:[#allocation3 + $0xa8] sm:$0xfe] %v4180
        %4427 = vst [vmem:[#allocation3 + $0xf0] sm:$0xff] %v4182
        %4428 = vst [vmem:[#allocation3 + $0x138] sm:$0xfe] %v4183
        %4429 = vst [vmem:[#allocation3 + $0x180] sm:$0xff] %v4185
        %4430 = vst [vmem:[#allocation3 + $0x1c8] sm:$0xfe] %v4186
        %4431 = vst [vmem:[#allocation3 + $0x210] sm:$0xff] %v4188
        %4432 = vst [vmem:[#allocation3 + $0x258] sm:$0xfe] %v4189
        %4433 = vst [vmem:[#allocation3 + $0x2a0] sm:$0xff] %v4191
        %4434 = vst [vmem:[#allocation3 + $0x2e8] sm:$0xfe] %v4192
        %4435 = vst [vmem:[#allocation3 + $0x330] sm:$0xff] %v4194
        %4436 = vst [vmem:[#allocation3 + $0x378] sm:$0xfe] %v4195
        %4437 = vst [vmem:[#allocation3 + $0x3c0] sm:$0xff] %v4197
        %4438 = vst [vmem:[#allocation3 + $0x408] sm:$0xfe] %v4198
        %4439 = vst [vmem:[#allocation3 + $0x450] sm:$0xff] %v4200
        %4440 = vst [vmem:[#allocation3 + $0x498] sm:$0xfe] %v4201
        %4441 = vst [vmem:[#allocation3 + $0x4e0] sm:$0xff] %v4203
        %4442 = vst [vmem:[#allocation3 + $0x528] sm:$0xfe] %v4204
        %4443 = vst [vmem:[#allocation3 + $0x570] sm:$0xff] %v4206
        %4444 = vst [vmem:[#allocation3 + $0x5b8] sm:$0xfe] %v4207
        %4445 = vst [vmem:[#allocation3 + $0x600] sm:$0xff] %v4209
        %4446 = vst [vmem:[#allocation3 + $0x648] sm:$0xfe] %v4210
        %4447 = vst [vmem:[#allocation3 + $0x690] sm:$0xff] %v4212
        %4448 = vst [vmem:[#allocation3 + $0x6d8] sm:$0xfe] %v4213
        %4449 = vst [vmem:[#allocation3 + $0x720] sm:$0xff] %v4215
        %4450 = vst [vmem:[#allocation3 + $0x768] sm:$0xfe] %v4216
        %4451 = vst [vmem:[#allocation3 + $0x7b0] sm:$0xff] %v4218
        %4452 = vst [vmem:[#allocation3 + $0x7f8] sm:$0xfe] %v4219
        %4453 = vst [vmem:[#allocation3 + $0x840] sm:$0xff] %v4221
        %4454 = vst [vmem:[#allocation3 + $0x888] sm:$0xfe] %v4419
        %4455 = vst [vmem:[#allocation3 + $0x8d0] sm:$0xff] %v4421
        %4456 = vst [vmem:[#allocation3 + $0x20] sm:$0xff] %v4115
        %4457 = vst [vmem:[#allocation3 + $0x68] sm:$0xff] %v4116
        %4458 = vst [vmem:[#allocation3 + $0xb0] sm:$0xff] %v4117
        %4459 = vst [vmem:[#allocation3 + $0xf8] sm:$0xff] %v4118
        %4460 = vst [vmem:[#allocation3 + $0x140] sm:$0xff] %v4119
        %4461 = vst [vmem:[#allocation3 + $0x188] sm:$0xff] %v4120
        %4462 = vst [vmem:[#allocation3 + $0x1d0] sm:$0xff] %v4121
        %4463 = vst [vmem:[#allocation3 + $0x218] sm:$0xff] %v4122
        %4464 = vst [vmem:[#allocation3 + $0x260] sm:$0xff] %v4123
        %4465 = vst [vmem:[#allocation3 + $0x2a8] sm:$0xff] %v4124
        %4466 = vst [vmem:[#allocation3 + $0x2f0] sm:$0xff] %v4125
        %4467 = vst [vmem:[#allocation3 + $0x338] sm:$0xff] %v4126
        %4468 = vst [vmem:[#allocation3 + $0x380] sm:$0xff] %v4127
        %4469 = vst [vmem:[#allocation3 + $0x3c8] sm:$0xff] %v4128
        %4470 = vst [vmem:[#allocation3 + $0x410] sm:$0xff] %v4129
        %4471 = vst [vmem:[#allocation3 + $0x458] sm:$0xff] %v4130
        %4472 = vst [vmem:[#allocation3 + $0x4a0] sm:$0xff] %v4131
        %4473 = vst [vmem:[#allocation3 + $0x4e8] sm:$0xff] %v4132
        %4474 = vst [vmem:[#allocation3 + $0x530] sm:$0xff] %v4133
        %4475 = vst [vmem:[#allocation3 + $0x578] sm:$0xff] %v4134
        %4476 = vst [vmem:[#allocation3 + $0x5c0] sm:$0xff] %v4135
        %4477 = vst [vmem:[#allocation3 + $0x608] sm:$0xff] %v4136
        %4478 = vst [vmem:[#allocation3 + $0x650] sm:$0xff] %v4137
        %4479 = vst [vmem:[#allocation3 + $0x698] sm:$0xff] %v4138
        %4480 = vst [vmem:[#allocation3 + $0x6e0] sm:$0xff] %v4139
        %4481 = vst [vmem:[#allocation3 + $0x728] sm:$0xff] %v4140
        %4482 = vst [vmem:[#allocation3 + $0x770] sm:$0xff] %v4141
        %4483 = vst [vmem:[#allocation3 + $0x7b8] sm:$0xff] %v4142
        %4484 = vst [vmem:[#allocation3 + $0x800] sm:$0xff] %v4143
        %4485 = vst [vmem:[#allocation3 + $0x848] sm:$0xff] %v4144
        %4486 = vst [vmem:[#allocation3 + $0x890] sm:$0xff] %v4145
        %4487 = vst [vmem:[#allocation3 + $0x8d8] sm:$0xff] %v4146
        %v4488 = vrot.slane %v4145, 1
        %v4489 = vrot.slane %v4146, 1
        %v4490 = vsel %vm1984, %v4488, %v4489
        %4493 = vst [vmem:[#allocation3 + $0x28] sm:$0xff] %v4314
        %4494 = vst [vmem:[#allocation3 + $0x70] sm:$0x7f] %v4313
        %4495 = vst [vmem:[#allocation3 + $0xb8] sm:$0xff] %v4317
        %4496 = vst [vmem:[#allocation3 + $0x100] sm:$0x7f] %v4316
        %4497 = vst [vmem:[#allocation3 + $0x148] sm:$0xff] %v4320
        %4498 = vst [vmem:[#allocation3 + $0x190] sm:$0x7f] %v4319
        %4499 = vst [vmem:[#allocation3 + $0x1d8] sm:$0xff] %v4323
        %4500 = vst [vmem:[#allocation3 + $0x220] sm:$0x7f] %v4322
        %4501 = vst [vmem:[#allocation3 + $0x268] sm:$0xff] %v4326
        %4502 = vst [vmem:[#allocation3 + $0x2b0] sm:$0x7f] %v4325
        %4503 = vst [vmem:[#allocation3 + $0x2f8] sm:$0xff] %v4329
        %4504 = vst [vmem:[#allocation3 + $0x340] sm:$0x7f] %v4328
        %4505 = vst [vmem:[#allocation3 + $0x388] sm:$0xff] %v4332
        %4506 = vst [vmem:[#allocation3 + $0x3d0] sm:$0x7f] %v4331
        %4507 = vst [vmem:[#allocation3 + $0x418] sm:$0xff] %v4335
        %4508 = vst [vmem:[#allocation3 + $0x460] sm:$0x7f] %v4334
        %4509 = vst [vmem:[#allocation3 + $0x4a8] sm:$0xff] %v4338
        %4510 = vst [vmem:[#allocation3 + $0x4f0] sm:$0x7f] %v4337
        %4511 = vst [vmem:[#allocation3 + $0x538] sm:$0xff] %v4341
        %4512 = vst [vmem:[#allocation3 + $0x580] sm:$0x7f] %v4340
        %4513 = vst [vmem:[#allocation3 + $0x5c8] sm:$0xff] %v4344
        %4514 = vst [vmem:[#allocation3 + $0x610] sm:$0x7f] %v4343
        %4515 = vst [vmem:[#allocation3 + $0x658] sm:$0xff] %v4347
        %4516 = vst [vmem:[#allocation3 + $0x6a0] sm:$0x7f] %v4346
        %4517 = vst [vmem:[#allocation3 + $0x6e8] sm:$0xff] %v4350
        %4518 = vst [vmem:[#allocation3 + $0x730] sm:$0x7f] %v4349
        %4519 = vst [vmem:[#allocation3 + $0x778] sm:$0xff] %v4353
        %4520 = vst [vmem:[#allocation3 + $0x7c0] sm:$0x7f] %v4352
        %4521 = vst [vmem:[#allocation3 + $0x808] sm:$0xff] %v4356
        %4522 = vst [vmem:[#allocation3 + $0x850] sm:$0x7f] %v4355
        %4523 = vst [vmem:[#allocation3 + $0x898] sm:$0xff] %v4490
        %4524 = vst [vmem:[#allocation3 + $0x8e0] sm:$0x7f] %v4489
        %4525 = vst [vmem:[#allocation3 + $0x30] sm:$0xfe] %v4180
        %4526 = vst [vmem:[#allocation3 + $0x78] sm:$0xff] %v4182
        %4527 = vst [vmem:[#allocation3 + $0xc0] sm:$0xfe] %v4183
        %4528 = vst [vmem:[#allocation3 + $0x108] sm:$0xff] %v4185
        %4529 = vst [vmem:[#allocation3 + $0x150] sm:$0xfe] %v4186
        %4530 = vst [vmem:[#allocation3 + $0x198] sm:$0xff] %v4188
        %4531 = vst [vmem:[#allocation3 + $0x1e0] sm:$0xfe] %v4189
        %4532 = vst [vmem:[#allocation3 + $0x228] sm:$0xff] %v4191
        %4533 = vst [vmem:[#allocation3 + $0x270] sm:$0xfe] %v4192
        %4534 = vst [vmem:[#allocation3 + $0x2b8] sm:$0xff] %v4194
        %4535 = vst [vmem:[#allocation3 + $0x300] sm:$0xfe] %v4195
        %4536 = vst [vmem:[#allocation3 + $0x348] sm:$0xff] %v4197
        %4537 = vst [vmem:[#allocation3 + $0x390] sm:$0xfe] %v4198
        %4538 = vst [vmem:[#allocation3 + $0x3d8] sm:$0xff] %v4200
        %4539 = vst [vmem:[#allocation3 + $0x420] sm:$0xfe] %v4201
        %4540 = vst [vmem:[#allocation3 + $0x468] sm:$0xff] %v4203
        %4541 = vst [vmem:[#allocation3 + $0x4b0] sm:$0xfe] %v4204
        %4542 = vst [vmem:[#allocation3 + $0x4f8] sm:$0xff] %v4206
        %4543 = vst [vmem:[#allocation3 + $0x540] sm:$0xfe] %v4207
        %4544 = vst [vmem:[#allocation3 + $0x588] sm:$0xff] %v4209
        %4545 = vst [vmem:[#allocation3 + $0x5d0] sm:$0xfe] %v4210
        %4546 = vst [vmem:[#allocation3 + $0x618] sm:$0xff] %v4212
        %4547 = vst [vmem:[#allocation3 + $0x660] sm:$0xfe] %v4213
        %4548 = vst [vmem:[#allocation3 + $0x6a8] sm:$0xff] %v4215
        %4549 = vst [vmem:[#allocation3 + $0x6f0] sm:$0xfe] %v4216
        %4550 = vst [vmem:[#allocation3 + $0x738] sm:$0xff] %v4218
        %4551 = vst [vmem:[#allocation3 + $0x780] sm:$0xfe] %v4219
        %4552 = vst [vmem:[#allocation3 + $0x7c8] sm:$0xff] %v4221
        %4553 = vst [vmem:[#allocation3 + $0x810] sm:$0xfe] %v4419
        %4554 = vst [vmem:[#allocation3 + $0x858] sm:$0xff] %v4421
        %4555 = vst [vmem:[#allocation3 + $0x38] sm:$0xff] %v4117
        %4556 = vst [vmem:[#allocation3 + $0x80] sm:$0xff] %v4118
        %4557 = vst [vmem:[#allocation3 + $0xc8] sm:$0xff] %v4119
        %4558 = vst [vmem:[#allocation3 + $0x110] sm:$0xff] %v4120
        %4559 = vst [vmem:[#allocation3 + $0x158] sm:$0xff] %v4121
        %4560 = vst [vmem:[#allocation3 + $0x1a0] sm:$0xff] %v4122
        %4561 = vst [vmem:[#allocation3 + $0x1e8] sm:$0xff] %v4123
        %4562 = vst [vmem:[#allocation3 + $0x230] sm:$0xff] %v4124
        %4563 = vst [vmem:[#allocation3 + $0x278] sm:$0xff] %v4125
        %4564 = vst [vmem:[#allocation3 + $0x2c0] sm:$0xff] %v4126
        %4565 = vst [vmem:[#allocation3 + $0x308] sm:$0xff] %v4127
        %4566 = vst [vmem:[#allocation3 + $0x350] sm:$0xff] %v4128
        %4567 = vst [vmem:[#allocation3 + $0x398] sm:$0xff] %v4129
        %4568 = vst [vmem:[#allocation3 + $0x3e0] sm:$0xff] %v4130
        %4569 = vst [vmem:[#allocation3 + $0x428] sm:$0xff] %v4131
        %4570 = vst [vmem:[#allocation3 + $0x470] sm:$0xff] %v4132
        %4571 = vst [vmem:[#allocation3 + $0x4b8] sm:$0xff] %v4133
        %4572 = vst [vmem:[#allocation3 + $0x500] sm:$0xff] %v4134
        %4573 = vst [vmem:[#allocation3 + $0x548] sm:$0xff] %v4135
        %4574 = vst [vmem:[#allocation3 + $0x590] sm:$0xff] %v4136
        %4575 = vst [vmem:[#allocation3 + $0x5d8] sm:$0xff] %v4137
        %4576 = vst [vmem:[#allocation3 + $0x620] sm:$0xff] %v4138
        %4577 = vst [vmem:[#allocation3 + $0x668] sm:$0xff] %v4139
        %4578 = vst [vmem:[#allocation3 + $0x6b0] sm:$0xff] %v4140
        %4579 = vst [vmem:[#allocation3 + $0x6f8] sm:$0xff] %v4141
        %4580 = vst [vmem:[#allocation3 + $0x740] sm:$0xff] %v4142
        %4581 = vst [vmem:[#allocation3 + $0x788] sm:$0xff] %v4143
        %4582 = vst [vmem:[#allocation3 + $0x7d0] sm:$0xff] %v4144
        %4583 = vst [vmem:[#allocation3 + $0x818] sm:$0xff] %v4145
        %4584 = vst [vmem:[#allocation3 + $0x860] sm:$0xff] %v4146
        %4585 = vst [vmem:[#allocation3 + $0x40] sm:$0xff] %v4317
        %4586 = vst [vmem:[#allocation3 + $0x88] sm:$0x7f] %v4316
        %4587 = vst [vmem:[#allocation3 + $0xd0] sm:$0xff] %v4320
        %4588 = vst [vmem:[#allocation3 + $0x118] sm:$0x7f] %v4319
        %4589 = vst [vmem:[#allocation3 + $0x160] sm:$0xff] %v4323
        %4590 = vst [vmem:[#allocation3 + $0x1a8] sm:$0x7f] %v4322
        %4591 = vst [vmem:[#allocation3 + $0x1f0] sm:$0xff] %v4326
        %4592 = vst [vmem:[#allocation3 + $0x238] sm:$0x7f] %v4325
        %4593 = vst [vmem:[#allocation3 + $0x280] sm:$0xff] %v4329
        %4594 = vst [vmem:[#allocation3 + $0x2c8] sm:$0x7f] %v4328
        %4595 = vst [vmem:[#allocation3 + $0x310] sm:$0xff] %v4332
        %4596 = vst [vmem:[#allocation3 + $0x358] sm:$0x7f] %v4331
        %4597 = vst [vmem:[#allocation3 + $0x3a0] sm:$0xff] %v4335
        %4598 = vst [vmem:[#allocation3 + $0x3e8] sm:$0x7f] %v4334
        %4599 = vst [vmem:[#allocation3 + $0x430] sm:$0xff] %v4338
        %4600 = vst [vmem:[#allocation3 + $0x478] sm:$0x7f] %v4337
        %4601 = vst [vmem:[#allocation3 + $0x4c0] sm:$0xff] %v4341
        %4602 = vst [vmem:[#allocation3 + $0x508] sm:$0x7f] %v4340
        %4603 = vst [vmem:[#allocation3 + $0x550] sm:$0xff] %v4344
        %4604 = vst [vmem:[#allocation3 + $0x598] sm:$0x7f] %v4343
        %4605 = vst [vmem:[#allocation3 + $0x5e0] sm:$0xff] %v4347
        %4606 = vst [vmem:[#allocation3 + $0x628] sm:$0x7f] %v4346
        %4607 = vst [vmem:[#allocation3 + $0x670] sm:$0xff] %v4350
        %4608 = vst [vmem:[#allocation3 + $0x6b8] sm:$0x7f] %v4349
        %4609 = vst [vmem:[#allocation3 + $0x700] sm:$0xff] %v4353
        %4610 = vst [vmem:[#allocation3 + $0x748] sm:$0x7f] %v4352
        %4611 = vst [vmem:[#allocation3 + $0x790] sm:$0xff] %v4356
        %4612 = vst [vmem:[#allocation3 + $0x7d8] sm:$0x7f] %v4355
        %4613 = vst [vmem:[#allocation3 + $0x820] sm:$0xff] %v4490
        %4614 = vst [vmem:[#allocation3 + $0x868] sm:$0x7f] %v4489
        %v4615 = vld [vmem:[#allocation3] sm:$0xff]
        %v4616 = vld [vmem:[#allocation3 + $0x8] sm:$0xff]
        %v4617 = vld [vmem:[#allocation3 + $0x10] sm:$0xff]
        %v4618 = vld [vmem:[#allocation3 + $0x18] sm:$0xff]
        %v4619 = vld [vmem:[#allocation3 + $0x20] sm:$0xff]
        %v4620 = vld [vmem:[#allocation3 + $0x28] sm:$0xff]
        %v4621 = vld [vmem:[#allocation3 + $0x30] sm:$0xff]
        %v4622 = vld [vmem:[#allocation3 + $0x38] sm:$0xff]
        %v4623 = vld [vmem:[#allocation3 + $0x40] sm:$0xff]
        %v4624 = vld [vmem:[#allocation3 + $0x48] sm:$0xff]
        %v4625 = vld [vmem:[#allocation3 + $0x50] sm:$0xff]
        %v4626 = vld [vmem:[#allocation3 + $0x58] sm:$0xff]
        %v4627 = vld [vmem:[#allocation3 + $0x60] sm:$0xff]
        %v4628 = vld [vmem:[#allocation3 + $0x68] sm:$0xff]
        %v4629 = vld [vmem:[#allocation3 + $0x70] sm:$0xff]
        %v4630 = vld [vmem:[#allocation3 + $0x78] sm:$0xff]
        %v4631 = vld [vmem:[#allocation3 + $0x80] sm:$0xff]
        %v4632 = vld [vmem:[#allocation3 + $0x88] sm:$0xff]
        %v4633 = vld [vmem:[#allocation3 + $0x90] sm:$0xff]
        %v4634 = vld [vmem:[#allocation3 + $0x98] sm:$0xff]
        %v4635 = vld [vmem:[#allocation3 + $0xa0] sm:$0xff]
        %v4636 = vld [vmem:[#allocation3 + $0xa8] sm:$0xff]
        %v4637 = vld [vmem:[#allocation3 + $0xb0] sm:$0xff]
        %v4638 = vld [vmem:[#allocation3 + $0xb8] sm:$0xff]
        %v4639 = vld [vmem:[#allocation3 + $0xc0] sm:$0xff]
        %v4640 = vld [vmem:[#allocation3 + $0xc8] sm:$0xff]
        %v4641 = vld [vmem:[#allocation3 + $0xd0] sm:$0xff]
        %v4642 = vld [vmem:[#allocation3 + $0xd8] sm:$0xff]
        %v4643 = vld [vmem:[#allocation3 + $0xe0] sm:$0xff]
        %v4644 = vld [vmem:[#allocation3 + $0xe8] sm:$0xff]
        %v4645 = vld [vmem:[#allocation3 + $0xf0] sm:$0xff]
        %v4646 = vld [vmem:[#allocation3 + $0xf8] sm:$0xff]
        %v4647 = vld [vmem:[#allocation3 + $0x100] sm:$0xff]
        %v4648 = vld [vmem:[#allocation3 + $0x108] sm:$0xff]
        %v4649 = vld [vmem:[#allocation3 + $0x110] sm:$0xff]
        %v4650 = vld [vmem:[#allocation3 + $0x118] sm:$0xff]
        %v4651 = vld [vmem:[#allocation3 + $0x120] sm:$0xff]
        %v4652 = vld [vmem:[#allocation3 + $0x128] sm:$0xff]
        %v4653 = vld [vmem:[#allocation3 + $0x130] sm:$0xff]
        %v4654 = vld [vmem:[#allocation3 + $0x138] sm:$0xff]
        %v4655 = vld [vmem:[#allocation3 + $0x140] sm:$0xff]
        %v4656 = vld [vmem:[#allocation3 + $0x148] sm:$0xff]
        %v4657 = vld [vmem:[#allocation3 + $0x150] sm:$0xff]
        %v4658 = vld [vmem:[#allocation3 + $0x158] sm:$0xff]
        %v4659 = vld [vmem:[#allocation3 + $0x160] sm:$0xff]
        %v4660 = vld [vmem:[#allocation3 + $0x168] sm:$0xff]
        %v4661 = vld [vmem:[#allocation3 + $0x170] sm:$0xff]
        %v4662 = vld [vmem:[#allocation3 + $0x178] sm:$0xff]
        %v4663 = vld [vmem:[#allocation3 + $0x180] sm:$0xff]
        %v4664 = vld [vmem:[#allocation3 + $0x188] sm:$0xff]
        %v4665 = vld [vmem:[#allocation3 + $0x190] sm:$0xff]
        %v4666 = vld [vmem:[#allocation3 + $0x198] sm:$0xff]
        %v4667 = vld [vmem:[#allocation3 + $0x1a0] sm:$0xff]
        %v4668 = vld [vmem:[#allocation3 + $0x1a8] sm:$0xff]
        %v4669 = vld [vmem:[#allocation3 + $0x1b0] sm:$0xff]
        %v4670 = vld [vmem:[#allocation3 + $0x1b8] sm:$0xff]
        %v4671 = vld [vmem:[#allocation3 + $0x1c0] sm:$0xff]
        %v4672 = vld [vmem:[#allocation3 + $0x1c8] sm:$0xff]
        %v4673 = vld [vmem:[#allocation3 + $0x1d0] sm:$0xff]
        %v4674 = vld [vmem:[#allocation3 + $0x1d8] sm:$0xff]
        %v4675 = vld [vmem:[#allocation3 + $0x1e0] sm:$0xff]
        %v4676 = vld [vmem:[#allocation3 + $0x1e8] sm:$0xff]
        %v4677 = vld [vmem:[#allocation3 + $0x1f0] sm:$0xff]
        %v4678 = vld [vmem:[#allocation3 + $0x1f8] sm:$0xff]
        %v4679 = vld [vmem:[#allocation3 + $0x200] sm:$0xff]
        %v4680 = vld [vmem:[#allocation3 + $0x208] sm:$0xff]
        %v4681 = vld [vmem:[#allocation3 + $0x210] sm:$0xff]
        %v4682 = vld [vmem:[#allocation3 + $0x218] sm:$0xff]
        %v4683 = vld [vmem:[#allocation3 + $0x220] sm:$0xff]
        %v4684 = vld [vmem:[#allocation3 + $0x228] sm:$0xff]
        %v4685 = vld [vmem:[#allocation3 + $0x230] sm:$0xff]
        %v4686 = vld [vmem:[#allocation3 + $0x238] sm:$0xff]
        %v4687 = vld [vmem:[#allocation3 + $0x240] sm:$0xff]
        %v4688 = vld [vmem:[#allocation3 + $0x248] sm:$0xff]
        %v4689 = vld [vmem:[#allocation3 + $0x250] sm:$0xff]
        %v4690 = vld [vmem:[#allocation3 + $0x258] sm:$0xff]
        %v4691 = vld [vmem:[#allocation3 + $0x260] sm:$0xff]
        %v4692 = vld [vmem:[#allocation3 + $0x268] sm:$0xff]
        %v4693 = vld [vmem:[#allocation3 + $0x270] sm:$0xff]
        %v4694 = vld [vmem:[#allocation3 + $0x278] sm:$0xff]
        %v4695 = vld [vmem:[#allocation3 + $0x280] sm:$0xff]
        %v4696 = vld [vmem:[#allocation3 + $0x288] sm:$0xff]
        %v4697 = vld [vmem:[#allocation3 + $0x290] sm:$0xff]
        %v4698 = vld [vmem:[#allocation3 + $0x298] sm:$0xff]
        %v4699 = vld [vmem:[#allocation3 + $0x2a0] sm:$0xff]
        %v4700 = vld [vmem:[#allocation3 + $0x2a8] sm:$0xff]
        %v4701 = vld [vmem:[#allocation3 + $0x2b0] sm:$0xff]
        %v4702 = vld [vmem:[#allocation3 + $0x2b8] sm:$0xff]
        %v4703 = vld [vmem:[#allocation3 + $0x2c0] sm:$0xff]
        %v4704 = vld [vmem:[#allocation3 + $0x2c8] sm:$0xff]
        %v4705 = vld [vmem:[#allocation3 + $0x2d0] sm:$0xff]
        %v4706 = vld [vmem:[#allocation3 + $0x2d8] sm:$0xff]
        %v4707 = vld [vmem:[#allocation3 + $0x2e0] sm:$0xff]
        %v4708 = vld [vmem:[#allocation3 + $0x2e8] sm:$0xff]
        %v4709 = vld [vmem:[#allocation3 + $0x2f0] sm:$0xff]
        %v4710 = vld [vmem:[#allocation3 + $0x2f8] sm:$0xff]
        %v4711 = vld [vmem:[#allocation3 + $0x300] sm:$0xff]
        %v4712 = vld [vmem:[#allocation3 + $0x308] sm:$0xff]
        %v4713 = vld [vmem:[#allocation3 + $0x310] sm:$0xff]
        %v4714 = vld [vmem:[#allocation3 + $0x318] sm:$0xff]
        %v4715 = vld [vmem:[#allocation3 + $0x320] sm:$0xff]
        %v4716 = vld [vmem:[#allocation3 + $0x328] sm:$0xff]
        %v4717 = vld [vmem:[#allocation3 + $0x330] sm:$0xff]
        %v4718 = vld [vmem:[#allocation3 + $0x338] sm:$0xff]
        %v4719 = vld [vmem:[#allocation3 + $0x340] sm:$0xff]
        %v4720 = vld [vmem:[#allocation3 + $0x348] sm:$0xff]
        %v4721 = vld [vmem:[#allocation3 + $0x350] sm:$0xff]
        %v4722 = vld [vmem:[#allocation3 + $0x358] sm:$0xff]
        %v4723 = vld [vmem:[#allocation3 + $0x360] sm:$0xff]
        %v4724 = vld [vmem:[#allocation3 + $0x368] sm:$0xff]
        %v4725 = vld [vmem:[#allocation3 + $0x370] sm:$0xff]
        %v4726 = vld [vmem:[#allocation3 + $0x378] sm:$0xff]
        %v4727 = vld [vmem:[#allocation3 + $0x380] sm:$0xff]
        %v4728 = vld [vmem:[#allocation3 + $0x388] sm:$0xff]
        %v4729 = vld [vmem:[#allocation3 + $0x390] sm:$0xff]
        %v4730 = vld [vmem:[#allocation3 + $0x398] sm:$0xff]
        %v4731 = vld [vmem:[#allocation3 + $0x3a0] sm:$0xff]
        %v4732 = vld [vmem:[#allocation3 + $0x3a8] sm:$0xff]
        %v4733 = vld [vmem:[#allocation3 + $0x3b0] sm:$0xff]
        %v4734 = vld [vmem:[#allocation3 + $0x3b8] sm:$0xff]
        %v4735 = vld [vmem:[#allocation3 + $0x3c0] sm:$0xff]
        %v4736 = vld [vmem:[#allocation3 + $0x3c8] sm:$0xff]
        %v4737 = vld [vmem:[#allocation3 + $0x3d0] sm:$0xff]
        %v4738 = vld [vmem:[#allocation3 + $0x3d8] sm:$0xff]
        %v4739 = vld [vmem:[#allocation3 + $0x3e0] sm:$0xff]
        %v4740 = vld [vmem:[#allocation3 + $0x3e8] sm:$0xff]
        %v4741 = vld [vmem:[#allocation3 + $0x3f0] sm:$0xff]
        %v4742 = vld [vmem:[#allocation3 + $0x3f8] sm:$0xff]
        %v4743 = vld [vmem:[#allocation3 + $0x400] sm:$0xff]
        %v4744 = vld [vmem:[#allocation3 + $0x408] sm:$0xff]
        %v4745 = vld [vmem:[#allocation3 + $0x410] sm:$0xff]
        %v4746 = vld [vmem:[#allocation3 + $0x418] sm:$0xff]
        %v4747 = vld [vmem:[#allocation3 + $0x420] sm:$0xff]
        %v4748 = vld [vmem:[#allocation3 + $0x428] sm:$0xff]
        %v4749 = vld [vmem:[#allocation3 + $0x430] sm:$0xff]
        %v4750 = vld [vmem:[#allocation3 + $0x438] sm:$0xff]
        %v4751 = vld [vmem:[#allocation3 + $0x440] sm:$0xff]
        %v4752 = vld [vmem:[#allocation3 + $0x448] sm:$0xff]
        %v4753 = vld [vmem:[#allocation3 + $0x450] sm:$0xff]
        %v4754 = vld [vmem:[#allocation3 + $0x458] sm:$0xff]
        %v4755 = vld [vmem:[#allocation3 + $0x460] sm:$0xff]
        %v4756 = vld [vmem:[#allocation3 + $0x468] sm:$0xff]
        %v4757 = vld [vmem:[#allocation3 + $0x470] sm:$0xff]
        %v4758 = vld [vmem:[#allocation3 + $0x478] sm:$0xff]
        %v4759 = vld [vmem:[#allocation3 + $0x480] sm:$0xff]
        %v4760 = vld [vmem:[#allocation3 + $0x488] sm:$0xff]
        %v4761 = vld [vmem:[#allocation3 + $0x490] sm:$0xff]
        %v4762 = vld [vmem:[#allocation3 + $0x498] sm:$0xff]
        %v4763 = vld [vmem:[#allocation3 + $0x4a0] sm:$0xff]
        %v4764 = vld [vmem:[#allocation3 + $0x4a8] sm:$0xff]
        %v4765 = vld [vmem:[#allocation3 + $0x4b0] sm:$0xff]
        %v4766 = vld [vmem:[#allocation3 + $0x4b8] sm:$0xff]
        %v4767 = vld [vmem:[#allocation3 + $0x4c0] sm:$0xff]
        %v4768 = vld [vmem:[#allocation3 + $0x4c8] sm:$0xff]
        %v4769 = vld [vmem:[#allocation3 + $0x4d0] sm:$0xff]
        %v4770 = vld [vmem:[#allocation3 + $0x4d8] sm:$0xff]
        %v4771 = vld [vmem:[#allocation3 + $0x4e0] sm:$0xff]
        %v4772 = vld [vmem:[#allocation3 + $0x4e8] sm:$0xff]
        %v4773 = vld [vmem:[#allocation3 + $0x4f0] sm:$0xff]
        %v4774 = vld [vmem:[#allocation3 + $0x4f8] sm:$0xff]
        %v4775 = vld [vmem:[#allocation3 + $0x500] sm:$0xff]
        %v4776 = vld [vmem:[#allocation3 + $0x508] sm:$0xff]
        %v4777 = vld [vmem:[#allocation3 + $0x510] sm:$0xff]
        %v4778 = vld [vmem:[#allocation3 + $0x518] sm:$0xff]
        %v4779 = vld [vmem:[#allocation3 + $0x520] sm:$0xff]
        %v4780 = vld [vmem:[#allocation3 + $0x528] sm:$0xff]
        %v4781 = vld [vmem:[#allocation3 + $0x530] sm:$0xff]
        %v4782 = vld [vmem:[#allocation3 + $0x538] sm:$0xff]
        %v4783 = vld [vmem:[#allocation3 + $0x540] sm:$0xff]
        %v4784 = vld [vmem:[#allocation3 + $0x548] sm:$0xff]
        %v4785 = vld [vmem:[#allocation3 + $0x550] sm:$0xff]
        %v4786 = vld [vmem:[#allocation3 + $0x558] sm:$0xff]
        %v4787 = vld [vmem:[#allocation3 + $0x560] sm:$0xff]
        %v4788 = vld [vmem:[#allocation3 + $0x568] sm:$0xff]
        %v4789 = vld [vmem:[#allocation3 + $0x570] sm:$0xff]
        %v4790 = vld [vmem:[#allocation3 + $0x578] sm:$0xff]
        %v4791 = vld [vmem:[#allocation3 + $0x580] sm:$0xff]
        %v4792 = vld [vmem:[#allocation3 + $0x588] sm:$0xff]
        %v4793 = vld [vmem:[#allocation3 + $0x590] sm:$0xff]
        %v4794 = vld [vmem:[#allocation3 + $0x598] sm:$0xff]
        %v4795 = vld [vmem:[#allocation3 + $0x5a0] sm:$0xff]
        %v4796 = vld [vmem:[#allocation3 + $0x5a8] sm:$0xff]
        %v4797 = vld [vmem:[#allocation3 + $0x5b0] sm:$0xff]
        %v4798 = vld [vmem:[#allocation3 + $0x5b8] sm:$0xff]
        %v4799 = vld [vmem:[#allocation3 + $0x5c0] sm:$0xff]
        %v4800 = vld [vmem:[#allocation3 + $0x5c8] sm:$0xff]
        %v4801 = vld [vmem:[#allocation3 + $0x5d0] sm:$0xff]
        %v4802 = vld [vmem:[#allocation3 + $0x5d8] sm:$0xff]
        %v4803 = vld [vmem:[#allocation3 + $0x5e0] sm:$0xff]
        %v4804 = vld [vmem:[#allocation3 + $0x5e8] sm:$0xff]
        %v4805 = vld [vmem:[#allocation3 + $0x5f0] sm:$0xff]
        %v4806 = vld [vmem:[#allocation3 + $0x5f8] sm:$0xff]
        %v4807 = vld [vmem:[#allocation3 + $0x600] sm:$0xff]
        %v4808 = vld [vmem:[#allocation3 + $0x608] sm:$0xff]
        %v4809 = vld [vmem:[#allocation3 + $0x610] sm:$0xff]
        %v4810 = vld [vmem:[#allocation3 + $0x618] sm:$0xff]
        %v4811 = vld [vmem:[#allocation3 + $0x620] sm:$0xff]
        %v4812 = vld [vmem:[#allocation3 + $0x628] sm:$0xff]
        %v4813 = vld [vmem:[#allocation3 + $0x630] sm:$0xff]
        %v4814 = vld [vmem:[#allocation3 + $0x638] sm:$0xff]
        %v4815 = vld [vmem:[#allocation3 + $0x640] sm:$0xff]
        %v4816 = vld [vmem:[#allocation3 + $0x648] sm:$0xff]
        %v4817 = vld [vmem:[#allocation3 + $0x650] sm:$0xff]
        %v4818 = vld [vmem:[#allocation3 + $0x658] sm:$0xff]
        %v4819 = vld [vmem:[#allocation3 + $0x660] sm:$0xff]
        %v4820 = vld [vmem:[#allocation3 + $0x668] sm:$0xff]
        %v4821 = vld [vmem:[#allocation3 + $0x670] sm:$0xff]
        %v4822 = vld [vmem:[#allocation3 + $0x678] sm:$0xff]
        %v4823 = vld [vmem:[#allocation3 + $0x680] sm:$0xff]
        %v4824 = vld [vmem:[#allocation3 + $0x688] sm:$0xff]
        %v4825 = vld [vmem:[#allocation3 + $0x690] sm:$0xff]
        %v4826 = vld [vmem:[#allocation3 + $0x698] sm:$0xff]
        %v4827 = vld [vmem:[#allocation3 + $0x6a0] sm:$0xff]
        %v4828 = vld [vmem:[#allocation3 + $0x6a8] sm:$0xff]
        %v4829 = vld [vmem:[#allocation3 + $0x6b0] sm:$0xff]
        %v4830 = vld [vmem:[#allocation3 + $0x6b8] sm:$0xff]
        %v4831 = vld [vmem:[#allocation3 + $0x6c0] sm:$0xff]
        %v4832 = vld [vmem:[#allocation3 + $0x6c8] sm:$0xff]
        %v4833 = vld [vmem:[#allocation3 + $0x6d0] sm:$0xff]
        %v4834 = vld [vmem:[#allocation3 + $0x6d8] sm:$0xff]
        %v4835 = vld [vmem:[#allocation3 + $0x6e0] sm:$0xff]
        %v4836 = vld [vmem:[#allocation3 + $0x6e8] sm:$0xff]
        %v4837 = vld [vmem:[#allocation3 + $0x6f0] sm:$0xff]
        %v4838 = vld [vmem:[#allocation3 + $0x6f8] sm:$0xff]
        %v4839 = vld [vmem:[#allocation3 + $0x700] sm:$0xff]
        %v4840 = vld [vmem:[#allocation3 + $0x708] sm:$0xff]
        %v4841 = vld [vmem:[#allocation3 + $0x710] sm:$0xff]
        %v4842 = vld [vmem:[#allocation3 + $0x718] sm:$0xff]
        %v4843 = vld [vmem:[#allocation3 + $0x720] sm:$0xff]
        %v4844 = vld [vmem:[#allocation3 + $0x728] sm:$0xff]
        %v4845 = vld [vmem:[#allocation3 + $0x730] sm:$0xff]
        %v4846 = vld [vmem:[#allocation3 + $0x738] sm:$0xff]
        %v4847 = vld [vmem:[#allocation3 + $0x740] sm:$0xff]
        %v4848 = vld [vmem:[#allocation3 + $0x748] sm:$0xff]
        %v4849 = vld [vmem:[#allocation3 + $0x750] sm:$0xff]
        %v4850 = vld [vmem:[#allocation3 + $0x758] sm:$0xff]
        %v4851 = vld [vmem:[#allocation3 + $0x760] sm:$0xff]
        %v4852 = vld [vmem:[#allocation3 + $0x768] sm:$0xff]
        %v4853 = vld [vmem:[#allocation3 + $0x770] sm:$0xff]
        %v4854 = vld [vmem:[#allocation3 + $0x778] sm:$0xff]
        %v4855 = vld [vmem:[#allocation3 + $0x780] sm:$0xff]
        %v4856 = vld [vmem:[#allocation3 + $0x788] sm:$0xff]
        %v4857 = vld [vmem:[#allocation3 + $0x790] sm:$0xff]
        %v4858 = vld [vmem:[#allocation3 + $0x798] sm:$0xff]
        %v4859 = vld [vmem:[#allocation3 + $0x7a0] sm:$0xff]
        %v4860 = vld [vmem:[#allocation3 + $0x7a8] sm:$0xff]
        %v4861 = vld [vmem:[#allocation3 + $0x7b0] sm:$0xff]
        %v4862 = vld [vmem:[#allocation3 + $0x7b8] sm:$0xff]
        %v4863 = vld [vmem:[#allocation3 + $0x7c0] sm:$0xff]
        %v4864 = vld [vmem:[#allocation3 + $0x7c8] sm:$0xff]
        %v4865 = vld [vmem:[#allocation3 + $0x7d0] sm:$0xff]
        %v4866 = vld [vmem:[#allocation3 + $0x7d8] sm:$0xff]
        %v4867 = vld [vmem:[#allocation3 + $0x7e0] sm:$0xff]
        %v4868 = vld [vmem:[#allocation3 + $0x7e8] sm:$0xff]
        %v4869 = vld [vmem:[#allocation3 + $0x7f0] sm:$0xff]
        %v4870 = vld [vmem:[#allocation3 + $0x7f8] sm:$0xff]
        %v4871 = vld [vmem:[#allocation3 + $0x800] sm:$0xff]
        %v4872 = vld [vmem:[#allocation3 + $0x808] sm:$0xff]
        %v4873 = vld [vmem:[#allocation3 + $0x810] sm:$0xff]
        %v4874 = vld [vmem:[#allocation3 + $0x818] sm:$0xff]
        %v4875 = vld [vmem:[#allocation3 + $0x820] sm:$0xff]
        %v4876 = vld [vmem:[#allocation3 + $0x828] sm:$0xff]
        %v4877 = vld [vmem:[#allocation3 + $0x830] sm:$0xff]
        %v4878 = vld [vmem:[#allocation3 + $0x838] sm:$0xff]
        %v4879 = vld [vmem:[#allocation3 + $0x840] sm:$0xff]
        %v4880 = vld [vmem:[#allocation3 + $0x848] sm:$0xff]
        %v4881 = vld [vmem:[#allocation3 + $0x850] sm:$0xff]
        %v4882 = vld [vmem:[#allocation3 + $0x858] sm:$0xff]
        %v4883 = vld [vmem:[#allocation3 + $0x860] sm:$0xff]
        %v4884 = vld [vmem:[#allocation3 + $0x868] sm:$0xff]
        %v4885 = vld [vmem:[#allocation3 + $0x870] sm:$0xff]
        %v4886 = vld [vmem:[#allocation3 + $0x878] sm:$0xff]
        %v4887 = vld [vmem:[#allocation3 + $0x880] sm:$0xff]
        %v4888 = vld [vmem:[#allocation3 + $0x888] sm:$0xff]
        %v4889 = vld [vmem:[#allocation3 + $0x890] sm:$0xff]
        %v4890 = vld [vmem:[#allocation3 + $0x898] sm:$0xff]
        %v4891 = vld [vmem:[#allocation3 + $0x8a0] sm:$0xff]
        %v4892 = vld [vmem:[#allocation3 + $0x8a8] sm:$0xff]
        %v4893 = vld [vmem:[#allocation3 + $0x8b0] sm:$0xff]
        %v4894 = vld [vmem:[#allocation3 + $0x8b8] sm:$0xff]
        %v4895 = vld [vmem:[#allocation3 + $0x8c0] sm:$0xff]
        %v4896 = vld [vmem:[#allocation3 + $0x8c8] sm:$0xff]
        %v4897 = vld [vmem:[#allocation3 + $0x8d0] sm:$0xff]
        %v4898 = vld [vmem:[#allocation3 + $0x8d8] sm:$0xff]
        %v4899 = vld [vmem:[#allocation3 + $0x8e0] sm:$0xff]
        %v4900 = vld [vmem:[#allocation3 + $0x8e8] sm:$0xff]
        %v4901 = vld [vmem:[#allocation3 + $0x8f0] sm:$0xff]
        %v4902 = vld [vmem:[#allocation3 + $0x8f8] sm:$0xff]
        %v4903 = vld [vmem:[#allocation6] sm:$0xff]
        %v4904 = vld [vmem:[#allocation6 + $0x8] sm:$0xff]
        %v4905 = vld [vmem:[#allocation6 + $0x10] sm:$0xff]
        %v4906 = vld [vmem:[#allocation6 + $0x18] sm:$0xff]
        %v4907 = vld [vmem:[#allocation6 + $0x20] sm:$0xff]
        %v4908 = vld [vmem:[#allocation6 + $0x28] sm:$0xff]
        %v4909 = vld [vmem:[#allocation6 + $0x30] sm:$0xff]
        %v4910 = vld [vmem:[#allocation6 + $0x38] sm:$0xff]
        %v4911 = vld [vmem:[#allocation6 + $0x40] sm:$0xff]
        %v4912 = vld [vmem:[#allocation6 + $0x48] sm:$0xff]
        %v4913 = vld [vmem:[#allocation6 + $0x50] sm:$0xff]
        %v4914 = vld [vmem:[#allocation6 + $0x58] sm:$0xff]
        %v4915 = vld [vmem:[#allocation6 + $0x60] sm:$0xff]
        %v4916 = vld [vmem:[#allocation6 + $0x68] sm:$0xff]
        %v4917 = vld [vmem:[#allocation6 + $0x70] sm:$0xff]
        %v4918 = vld [vmem:[#allocation6 + $0x78] sm:$0xff]
        %v4919 = vld [vmem:[#allocation6 + $0x80] sm:$0xff]
        %v4920 = vld [vmem:[#allocation6 + $0x88] sm:$0xff]
        %v4921 = vld [vmem:[#allocation6 + $0x90] sm:$0xff]
        %v4922 = vld [vmem:[#allocation6 + $0x98] sm:$0xff]
        %v4923 = vld [vmem:[#allocation6 + $0xa0] sm:$0xff]
        %v4924 = vld [vmem:[#allocation6 + $0xa8] sm:$0xff]
        %v4925 = vld [vmem:[#allocation6 + $0xb0] sm:$0xff]
        %v4926 = vld [vmem:[#allocation6 + $0xb8] sm:$0xff]
        %v4927 = vld [vmem:[#allocation6 + $0xc0] sm:$0xff]
        %v4928 = vld [vmem:[#allocation6 + $0xc8] sm:$0xff]
        %v4929 = vld [vmem:[#allocation6 + $0xd0] sm:$0xff]
        %v4930 = vld [vmem:[#allocation6 + $0xd8] sm:$0xff]
        %v4931 = vld [vmem:[#allocation6 + $0xe0] sm:$0xff]
        %v4932 = vld [vmem:[#allocation6 + $0xe8] sm:$0xff]
        %v4933 = vld [vmem:[#allocation6 + $0xf0] sm:$0xff]
        %v4934 = vld [vmem:[#allocation6 + $0xf8] sm:$0xff]
        %v4935 = vld [vmem:[#allocation6 + $0x100] sm:$0xff]
        %v4936 = vld [vmem:[#allocation6 + $0x108] sm:$0xff]
        %v4937 = vld [vmem:[#allocation6 + $0x110] sm:$0xff]
        %v4938 = vld [vmem:[#allocation6 + $0x118] sm:$0xff]
        %v4939 = vld [vmem:[#allocation6 + $0x120] sm:$0xff]
        %v4940 = vld [vmem:[#allocation6 + $0x128] sm:$0xff]
        %v4941 = vld [vmem:[#allocation6 + $0x130] sm:$0xff]
        %v4942 = vld [vmem:[#allocation6 + $0x138] sm:$0xff]
        %v4943 = vld [vmem:[#allocation6 + $0x140] sm:$0xff]
        %v4944 = vld [vmem:[#allocation6 + $0x148] sm:$0xff]
        %v4945 = vld [vmem:[#allocation6 + $0x150] sm:$0xff]
        %v4946 = vld [vmem:[#allocation6 + $0x158] sm:$0xff]
        %v4947 = vld [vmem:[#allocation6 + $0x160] sm:$0xff]
        %v4948 = vld [vmem:[#allocation6 + $0x168] sm:$0xff]
        %v4949 = vld [vmem:[#allocation6 + $0x170] sm:$0xff]
        %v4950 = vld [vmem:[#allocation6 + $0x178] sm:$0xff]
        %v4951 = vld [vmem:[#allocation6 + $0x180] sm:$0xff]
        %v4952 = vld [vmem:[#allocation6 + $0x188] sm:$0xff]
        %v4953 = vld [vmem:[#allocation6 + $0x190] sm:$0xff]
        %v4954 = vld [vmem:[#allocation6 + $0x198] sm:$0xff]
        %v4955 = vld [vmem:[#allocation6 + $0x1a0] sm:$0xff]
        %v4956 = vld [vmem:[#allocation6 + $0x1a8] sm:$0xff]
        %v4957 = vld [vmem:[#allocation6 + $0x1b0] sm:$0xff]
        %v4958 = vld [vmem:[#allocation6 + $0x1b8] sm:$0xff]
        %v4959 = vld [vmem:[#allocation6 + $0x1c0] sm:$0xff]
        %v4960 = vld [vmem:[#allocation6 + $0x1c8] sm:$0xff]
        %v4961 = vld [vmem:[#allocation6 + $0x1d0] sm:$0xff]
        %v4962 = vld [vmem:[#allocation6 + $0x1d8] sm:$0xff]
        %v4963 = vld [vmem:[#allocation6 + $0x1e0] sm:$0xff]
        %v4964 = vld [vmem:[#allocation6 + $0x1e8] sm:$0xff]
        %v4965 = vld [vmem:[#allocation6 + $0x1f0] sm:$0xff]
        %v4966 = vld [vmem:[#allocation6 + $0x1f8] sm:$0xff]
        %v4967 = vld [vmem:[#allocation6 + $0x200] sm:$0xff]
        %v4968 = vld [vmem:[#allocation6 + $0x208] sm:$0xff]
        %v4969 = vld [vmem:[#allocation6 + $0x210] sm:$0xff]
        %v4970 = vld [vmem:[#allocation6 + $0x218] sm:$0xff]
        %v4971 = vld [vmem:[#allocation6 + $0x220] sm:$0xff]
        %v4972 = vld [vmem:[#allocation6 + $0x228] sm:$0xff]
        %v4973 = vld [vmem:[#allocation6 + $0x230] sm:$0xff]
        %v4974 = vld [vmem:[#allocation6 + $0x238] sm:$0xff]
        %v4975 = vld [vmem:[#allocation6 + $0x240] sm:$0xff]
        %v4976 = vld [vmem:[#allocation6 + $0x248] sm:$0xff]
        %v4977 = vld [vmem:[#allocation6 + $0x250] sm:$0xff]
        %v4978 = vld [vmem:[#allocation6 + $0x258] sm:$0xff]
        %v4979 = vld [vmem:[#allocation6 + $0x260] sm:$0xff]
        %v4980 = vld [vmem:[#allocation6 + $0x268] sm:$0xff]
        %v4981 = vld [vmem:[#allocation6 + $0x270] sm:$0xff]
        %v4982 = vld [vmem:[#allocation6 + $0x278] sm:$0xff]
        %v4983 = vld [vmem:[#allocation6 + $0x280] sm:$0xff]
        %v4984 = vld [vmem:[#allocation6 + $0x288] sm:$0xff]
        %v4985 = vld [vmem:[#allocation6 + $0x290] sm:$0xff]
        %v4986 = vld [vmem:[#allocation6 + $0x298] sm:$0xff]
        %v4987 = vld [vmem:[#allocation6 + $0x2a0] sm:$0xff]
        %v4988 = vld [vmem:[#allocation6 + $0x2a8] sm:$0xff]
        %v4989 = vld [vmem:[#allocation6 + $0x2b0] sm:$0xff]
        %v4990 = vld [vmem:[#allocation6 + $0x2b8] sm:$0xff]
        %v4991 = vld [vmem:[#allocation6 + $0x2c0] sm:$0xff]
        %v4992 = vld [vmem:[#allocation6 + $0x2c8] sm:$0xff]
        %v4993 = vld [vmem:[#allocation6 + $0x2d0] sm:$0xff]
        %v4994 = vld [vmem:[#allocation6 + $0x2d8] sm:$0xff]
        %v4995 = vld [vmem:[#allocation6 + $0x2e0] sm:$0xff]
        %v4996 = vld [vmem:[#allocation6 + $0x2e8] sm:$0xff]
        %v4997 = vld [vmem:[#allocation6 + $0x2f0] sm:$0xff]
        %v4998 = vld [vmem:[#allocation6 + $0x2f8] sm:$0xff]
        %v4999 = vld [vmem:[#allocation6 + $0x300] sm:$0xff]
        %v5000 = vld [vmem:[#allocation6 + $0x308] sm:$0xff]
        %v5001 = vld [vmem:[#allocation6 + $0x310] sm:$0xff]
        %v5002 = vld [vmem:[#allocation6 + $0x318] sm:$0xff]
        %v5003 = vld [vmem:[#allocation6 + $0x320] sm:$0xff]
        %v5004 = vld [vmem:[#allocation6 + $0x328] sm:$0xff]
        %v5005 = vld [vmem:[#allocation6 + $0x330] sm:$0xff]
        %v5006 = vld [vmem:[#allocation6 + $0x338] sm:$0xff]
        %v5007 = vld [vmem:[#allocation6 + $0x340] sm:$0xff]
        %v5008 = vld [vmem:[#allocation6 + $0x348] sm:$0xff]
        %v5009 = vld [vmem:[#allocation6 + $0x350] sm:$0xff]
        %v5010 = vld [vmem:[#allocation6 + $0x358] sm:$0xff]
        %v5011 = vld [vmem:[#allocation6 + $0x360] sm:$0xff]
        %v5012 = vld [vmem:[#allocation6 + $0x368] sm:$0xff]
        %v5013 = vld [vmem:[#allocation6 + $0x370] sm:$0xff]
        %v5014 = vld [vmem:[#allocation6 + $0x378] sm:$0xff]
        %v5015 = vld [vmem:[#allocation6 + $0x380] sm:$0xff]
        %v5016 = vld [vmem:[#allocation6 + $0x388] sm:$0xff]
        %v5017 = vld [vmem:[#allocation6 + $0x390] sm:$0xff]
        %v5018 = vld [vmem:[#allocation6 + $0x398] sm:$0xff]
        %v5019 = vld [vmem:[#allocation6 + $0x3a0] sm:$0xff]
        %v5020 = vld [vmem:[#allocation6 + $0x3a8] sm:$0xff]
        %v5021 = vld [vmem:[#allocation6 + $0x3b0] sm:$0xff]
        %v5022 = vld [vmem:[#allocation6 + $0x3b8] sm:$0xff]
        %v5023 = vld [vmem:[#allocation6 + $0x3c0] sm:$0xff]
        %v5024 = vld [vmem:[#allocation6 + $0x3c8] sm:$0xff]
        %v5025 = vld [vmem:[#allocation6 + $0x3d0] sm:$0xff]
        %v5026 = vld [vmem:[#allocation6 + $0x3d8] sm:$0xff]
        %v5027 = vld [vmem:[#allocation6 + $0x3e0] sm:$0xff]
        %v5028 = vld [vmem:[#allocation6 + $0x3e8] sm:$0xff]
        %v5029 = vld [vmem:[#allocation6 + $0x3f0] sm:$0xff]
        %v5030 = vld [vmem:[#allocation6 + $0x3f8] sm:$0xff]
        %v5031 = vld [vmem:[#allocation6 + $0x400] sm:$0xff]
        %v5032 = vld [vmem:[#allocation6 + $0x408] sm:$0xff]
        %v5033 = vld [vmem:[#allocation6 + $0x410] sm:$0xff]
        %v5034 = vld [vmem:[#allocation6 + $0x418] sm:$0xff]
        %v5035 = vld [vmem:[#allocation6 + $0x420] sm:$0xff]
        %v5036 = vld [vmem:[#allocation6 + $0x428] sm:$0xff]
        %v5037 = vld [vmem:[#allocation6 + $0x430] sm:$0xff]
        %v5038 = vld [vmem:[#allocation6 + $0x438] sm:$0xff]
        %v5039 = vld [vmem:[#allocation6 + $0x440] sm:$0xff]
        %v5040 = vld [vmem:[#allocation6 + $0x448] sm:$0xff]
        %v5041 = vld [vmem:[#allocation6 + $0x450] sm:$0xff]
        %v5042 = vld [vmem:[#allocation6 + $0x458] sm:$0xff]
        %v5043 = vld [vmem:[#allocation6 + $0x460] sm:$0xff]
        %v5044 = vld [vmem:[#allocation6 + $0x468] sm:$0xff]
        %v5045 = vld [vmem:[#allocation6 + $0x470] sm:$0xff]
        %v5046 = vld [vmem:[#allocation6 + $0x478] sm:$0xff]
        %5047 = vmatprep.subr.mxu0 0.0
        %5048 = vmatpush1.msra.mxu0 %v4918
        %5049 = vmatprep.subr.mxu0 0.0
        %5050 = vmatpush1.msra.mxu0 %v4917
        %5051 = vmatprep.subr.mxu0 0.0
        %5052 = vmatpush1.msra.mxu0 %v4916
        %5053 = vmatprep.subr.mxu0 0.0
        %5054 = vmatpush1.msra.mxu0 %v4915
        %5055 = vmatprep.subr.mxu0 0.0
        %5056 = vmatpush1.msra.mxu0 %v4914
        %5057 = vmatprep.subr.mxu0 0.0
        %5058 = vmatpush1.msra.mxu0 %v4913
        %5059 = vmatprep.subr.mxu0 0.0
        %5060 = vmatpush1.msra.mxu0 %v4912
        %5061 = vmatprep.subr.mxu0 0.0
        %5062 = vmatpush1.msra.mxu0 %v4911
        %5063 = vmatprep.subr.mxu0 0.0
        %5064 = vmatpush1.msra.mxu0 %v4910
        %5065 = vmatprep.subr.mxu0 0.0
        %5066 = vmatpush1.msra.mxu0 %v4909
        %5067 = vmatprep.subr.mxu0 0.0
        %5068 = vmatpush1.msra.mxu0 %v4908
        %5069 = vmatprep.subr.mxu0 0.0
        %5070 = vmatpush1.msra.mxu0 %v4907
        %5071 = vmatprep.subr.mxu0 0.0
        %5072 = vmatpush1.msra.mxu0 %v4906
        %5073 = vmatprep.subr.mxu0 0.0
        %5074 = vmatpush1.msra.mxu0 %v4905
        %5075 = vmatprep.subr.mxu0 0.0
        %5076 = vmatpush1.msra.mxu0 %v4904
        %5077 = vmatprep.subr.mxu0 0.0
        %5078 = vmatpush1.msra.mxu0 %v4903
        %5079 = vmatprep.subr.mxu0 0.0
        %5080 = vmatpush2.msra.mxu0 %v4934
        %5081 = vmatprep.subr.mxu0 0.0
        %5082 = vmatpush2.msra.mxu0 %v4933
        %5083 = vmatprep.subr.mxu0 0.0
        %5084 = vmatpush2.msra.mxu0 %v4932
        %5085 = vmatprep.subr.mxu0 0.0
        %5086 = vmatpush2.msra.mxu0 %v4931
        %5087 = vmatprep.subr.mxu0 0.0
        %5088 = vmatpush2.msra.mxu0 %v4930
        %5089 = vmatprep.subr.mxu0 0.0
        %5090 = vmatpush2.msra.mxu0 %v4929
        %5091 = vmatprep.subr.mxu0 0.0
        %5092 = vmatpush2.msra.mxu0 %v4928
        %5093 = vmatprep.subr.mxu0 0.0
        %5094 = vmatpush2.msra.mxu0 %v4927
        %5095 = vmatprep.subr.mxu0 0.0
        %5096 = vmatpush2.msra.mxu0 %v4926
        %5097 = vmatprep.subr.mxu0 0.0
        %5098 = vmatpush2.msra.mxu0 %v4925
        %5099 = vmatprep.subr.mxu0 0.0
        %5100 = vmatpush2.msra.mxu0 %v4924
        %5101 = vmatprep.subr.mxu0 0.0
        %5102 = vmatpush2.msra.mxu0 %v4923
        %5103 = vmatprep.subr.mxu0 0.0
        %5104 = vmatpush2.msra.mxu0 %v4922
        %5105 = vmatprep.subr.mxu0 0.0
        %5106 = vmatpush2.msra.mxu0 %v4921
        %5107 = vmatprep.subr.mxu0 0.0
        %5108 = vmatpush2.msra.mxu0 %v4920
        %5109 = vmatprep.subr.mxu0 0.0
        %5110 = vmatpush2.msra.mxu0 %v4919
        %5111 = vmatprep.mubr.f32.mxu0 %v4616
        %5112 = vmatmul.mubr.f32.gmra.mxu0 %v4615
        %v5113 = vpop.f32.mrf.mxu0
        %v5114 = vadd.f32 0.0, %v5113
        %v5115 = vpop.f32.mrf.mxu0
        %5116 = vmatprep.mubr.f32.mxu0 %v4625
        %5117 = vmatmul.mubr.f32.gmra.mxu0 %v4624
        %v5118 = vpop.f32.mrf.mxu0
        %v5119 = vadd.f32 0.0, %v5118
        %v5120 = vpop.f32.mrf.mxu0
        %5121 = vmatprep.mubr.f32.mxu0 %v4634
        %5122 = vmatmul.mubr.f32.gmra.mxu0 %v4633
        %v5123 = vpop.f32.mrf.mxu0
        %v5124 = vadd.f32 0.0, %v5123
        %v5125 = vpop.f32.mrf.mxu0
        %5126 = vmatprep.mubr.f32.mxu0 %v4643
        %5127 = vmatmul.mubr.f32.gmra.mxu0 %v4642
        %v5128 = vpop.f32.mrf.mxu0
        %v5129 = vadd.f32 0.0, %v5128
        %v5130 = vpop.f32.mrf.mxu0
        %5131 = vmatprep.mubr.f32.mxu0 %v4652
        %5132 = vmatmul.mubr.f32.gmra.mxu0 %v4651
        %v5133 = vpop.f32.mrf.mxu0
        %v5134 = vadd.f32 0.0, %v5133
        %v5135 = vpop.f32.mrf.mxu0
        %5136 = vmatprep.mubr.f32.mxu0 %v4661
        %5137 = vmatmul.mubr.f32.gmra.mxu0 %v4660
        %v5138 = vpop.f32.mrf.mxu0
        %v5139 = vadd.f32 0.0, %v5138
        %v5140 = vpop.f32.mrf.mxu0
        %5141 = vmatprep.mubr.f32.mxu0 %v4670
        %5142 = vmatmul.mubr.f32.gmra.mxu0 %v4669
        %v5143 = vpop.f32.mrf.mxu0
        %v5144 = vadd.f32 0.0, %v5143
        %v5145 = vpop.f32.mrf.mxu0
        %5146 = vmatprep.mubr.f32.mxu0 %v4679
        %5147 = vmatmul.mubr.f32.gmra.mxu0 %v4678
        %v5148 = vpop.f32.mrf.mxu0
        %v5149 = vadd.f32 0.0, %v5148
        %v5150 = vpop.f32.mrf.mxu0
        %5151 = vmatprep.mubr.f32.mxu0 %v4688
        %5152 = vmatmul.mubr.f32.gmra.mxu0 %v4687
        %v5153 = vpop.f32.mrf.mxu0
        %v5154 = vadd.f32 0.0, %v5153
        %v5155 = vpop.f32.mrf.mxu0
        %5156 = vmatprep.mubr.f32.mxu0 %v4697
        %5157 = vmatmul.mubr.f32.gmra.mxu0 %v4696
        %v5158 = vpop.f32.mrf.mxu0
        %v5159 = vadd.f32 0.0, %v5158
        %v5160 = vpop.f32.mrf.mxu0
        %5161 = vmatprep.mubr.f32.mxu0 %v4706
        %5162 = vmatmul.mubr.f32.gmra.mxu0 %v4705
        %v5163 = vpop.f32.mrf.mxu0
        %v5164 = vadd.f32 0.0, %v5163
        %v5165 = vpop.f32.mrf.mxu0
        %5166 = vmatprep.mubr.f32.mxu0 %v4715
        %5167 = vmatmul.mubr.f32.gmra.mxu0 %v4714
        %v5168 = vpop.f32.mrf.mxu0
        %v5169 = vadd.f32 0.0, %v5168
        %v5170 = vpop.f32.mrf.mxu0
        %5171 = vmatprep.mubr.f32.mxu0 %v4724
        %5172 = vmatmul.mubr.f32.gmra.mxu0 %v4723
        %v5173 = vpop.f32.mrf.mxu0
        %v5174 = vadd.f32 0.0, %v5173
        %v5175 = vpop.f32.mrf.mxu0
        %5176 = vmatprep.mubr.f32.mxu0 %v4733
        %5177 = vmatmul.mubr.f32.gmra.mxu0 %v4732
        %v5178 = vpop.f32.mrf.mxu0
        %v5179 = vadd.f32 0.0, %v5178
        %v5180 = vpop.f32.mrf.mxu0
        %5181 = vmatprep.mubr.f32.mxu0 %v4742
        %5182 = vmatmul.mubr.f32.gmra.mxu0 %v4741
        %v5183 = vpop.f32.mrf.mxu0
        %v5184 = vadd.f32 0.0, %v5183
        %v5185 = vpop.f32.mrf.mxu0
        %5186 = vmatprep.mubr.f32.mxu0 %v4751
        %5187 = vmatmul.mubr.f32.gmra.mxu0 %v4750
        %v5188 = vpop.f32.mrf.mxu0
        %v5189 = vadd.f32 0.0, %v5188
        %v5190 = vpop.f32.mrf.mxu0
        %5191 = vmatprep.mubr.f32.mxu0 %v4760
        %5192 = vmatmul.mubr.f32.gmra.mxu0 %v4759
        %v5193 = vpop.f32.mrf.mxu0
        %v5194 = vadd.f32 0.0, %v5193
        %v5195 = vpop.f32.mrf.mxu0
        %5196 = vmatprep.mubr.f32.mxu0 %v4769
        %5197 = vmatmul.mubr.f32.gmra.mxu0 %v4768
        %v5198 = vpop.f32.mrf.mxu0
        %v5199 = vadd.f32 0.0, %v5198
        %v5200 = vpop.f32.mrf.mxu0
        %5201 = vmatprep.mubr.f32.mxu0 %v4778
        %5202 = vmatmul.mubr.f32.gmra.mxu0 %v4777
        %v5203 = vpop.f32.mrf.mxu0
        %v5204 = vadd.f32 0.0, %v5203
        %v5205 = vpop.f32.mrf.mxu0
        %5206 = vmatprep.mubr.f32.mxu0 %v4787
        %5207 = vmatmul.mubr.f32.gmra.mxu0 %v4786
        %v5208 = vpop.f32.mrf.mxu0
        %v5209 = vadd.f32 0.0, %v5208
        %v5210 = vpop.f32.mrf.mxu0
        %5211 = vmatprep.mubr.f32.mxu0 %v4796
        %5212 = vmatmul.mubr.f32.gmra.mxu0 %v4795
        %v5213 = vpop.f32.mrf.mxu0
        %v5214 = vadd.f32 0.0, %v5213
        %v5215 = vpop.f32.mrf.mxu0
        %5216 = vmatprep.mubr.f32.mxu0 %v4805
        %5217 = vmatmul.mubr.f32.gmra.mxu0 %v4804
        %v5218 = vpop.f32.mrf.mxu0
        %v5219 = vadd.f32 0.0, %v5218
        %v5220 = vpop.f32.mrf.mxu0
        %5221 = vmatprep.mubr.f32.mxu0 %v4814
        %5222 = vmatmul.mubr.f32.gmra.mxu0 %v4813
        %v5223 = vpop.f32.mrf.mxu0
        %v5224 = vadd.f32 0.0, %v5223
        %v5225 = vpop.f32.mrf.mxu0
        %5226 = vmatprep.mubr.f32.mxu0 %v4823
        %5227 = vmatmul.mubr.f32.gmra.mxu0 %v4822
        %v5228 = vpop.f32.mrf.mxu0
        %v5229 = vadd.f32 0.0, %v5228
        %v5230 = vpop.f32.mrf.mxu0
        %5231 = vmatprep.mubr.f32.mxu0 %v4832
        %5232 = vmatmul.mubr.f32.gmra.mxu0 %v4831
        %v5233 = vpop.f32.mrf.mxu0
        %v5234 = vadd.f32 0.0, %v5233
        %v5235 = vpop.f32.mrf.mxu0
        %5236 = vmatprep.mubr.f32.mxu0 %v4841
        %5237 = vmatmul.mubr.f32.gmra.mxu0 %v4840
        %v5238 = vpop.f32.mrf.mxu0
        %v5239 = vadd.f32 0.0, %v5238
        %v5240 = vpop.f32.mrf.mxu0
        %5241 = vmatprep.mubr.f32.mxu0 %v4850
        %5242 = vmatmul.mubr.f32.gmra.mxu0 %v4849
        %v5243 = vpop.f32.mrf.mxu0
        %v5244 = vadd.f32 0.0, %v5243
        %v5245 = vpop.f32.mrf.mxu0
        %5246 = vmatprep.mubr.f32.mxu0 %v4859
        %5247 = vmatmul.mubr.f32.gmra.mxu0 %v4858
        %v5248 = vpop.f32.mrf.mxu0
        %v5249 = vadd.f32 0.0, %v5248
        %v5250 = vpop.f32.mrf.mxu0
        %5251 = vmatprep.mubr.f32.mxu0 %v4868
        %5252 = vmatmul.mubr.f32.gmra.mxu0 %v4867
        %v5253 = vpop.f32.mrf.mxu0
        %v5254 = vadd.f32 0.0, %v5253
        %v5255 = vpop.f32.mrf.mxu0
        %5256 = vmatprep.mubr.f32.mxu0 %v4877
        %5257 = vmatmul.mubr.f32.gmra.mxu0 %v4876
        %v5258 = vpop.f32.mrf.mxu0
        %v5259 = vadd.f32 0.0, %v5258
        %v5260 = vpop.f32.mrf.mxu0
        %5261 = vmatprep.mubr.f32.mxu0 %v4886
        %5262 = vmatmul.mubr.f32.gmra.mxu0 %v4885
        %v5263 = vpop.f32.mrf.mxu0
        %v5264 = vadd.f32 0.0, %v5263
        %v5265 = vpop.f32.mrf.mxu0
        %5266 = vmatprep.mubr.f32.mxu0 %v4895
        %5267 = vmatmul.mubr.f32.gmra.mxu0 %v4894
        %v5268 = vpop.f32.mrf.mxu0
        %v5269 = vadd.f32 0.0, %v5268
        %v5270 = vpop.f32.mrf.mxu0
        %5271 = vdwg.mxu0
        %5272 = vmatprep.subr.mxu0 0.0
        %5273 = vmatpush1.msra.mxu0 %v4950
        %5274 = vmatprep.subr.mxu0 0.0
        %5275 = vmatpush1.msra.mxu0 %v4949
        %5276 = vmatprep.subr.mxu0 0.0
        %5277 = vmatpush1.msra.mxu0 %v4948
        %5278 = vmatprep.subr.mxu0 0.0
        %5279 = vmatpush1.msra.mxu0 %v4947
        %5280 = vmatprep.subr.mxu0 0.0
        %5281 = vmatpush1.msra.mxu0 %v4946
        %5282 = vmatprep.subr.mxu0 0.0
        %5283 = vmatpush1.msra.mxu0 %v4945
        %5284 = vmatprep.subr.mxu0 0.0
        %5285 = vmatpush1.msra.mxu0 %v4944
        %5286 = vmatprep.subr.mxu0 0.0
        %5287 = vmatpush1.msra.mxu0 %v4943
        %5288 = vmatprep.subr.mxu0 0.0
        %5289 = vmatpush1.msra.mxu0 %v4942
        %5290 = vmatprep.subr.mxu0 0.0
        %5291 = vmatpush1.msra.mxu0 %v4941
        %5292 = vmatprep.subr.mxu0 0.0
        %5293 = vmatpush1.msra.mxu0 %v4940
        %5294 = vmatprep.subr.mxu0 0.0
        %5295 = vmatpush1.msra.mxu0 %v4939
        %5296 = vmatprep.subr.mxu0 0.0
        %5297 = vmatpush1.msra.mxu0 %v4938
        %5298 = vmatprep.subr.mxu0 0.0
        %5299 = vmatpush1.msra.mxu0 %v4937
        %5300 = vmatprep.subr.mxu0 0.0
        %5301 = vmatpush1.msra.mxu0 %v4936
        %5302 = vmatprep.subr.mxu0 0.0
        %5303 = vmatpush1.msra.mxu0 %v4935
        %5304 = vmatprep.subr.mxu0 0.0
        %5305 = vmatpush2.msra.mxu0 %v4966
        %5306 = vmatprep.subr.mxu0 0.0
        %5307 = vmatpush2.msra.mxu0 %v4965
        %5308 = vmatprep.subr.mxu0 0.0
        %5309 = vmatpush2.msra.mxu0 %v4964
        %5310 = vmatprep.subr.mxu0 0.0
        %5311 = vmatpush2.msra.mxu0 %v4963
        %5312 = vmatprep.subr.mxu0 0.0
        %5313 = vmatpush2.msra.mxu0 %v4962
        %5314 = vmatprep.subr.mxu0 0.0
        %5315 = vmatpush2.msra.mxu0 %v4961
        %5316 = vmatprep.subr.mxu0 0.0
        %5317 = vmatpush2.msra.mxu0 %v4960
        %5318 = vmatprep.subr.mxu0 0.0
        %5319 = vmatpush2.msra.mxu0 %v4959
        %5320 = vmatprep.subr.mxu0 0.0
        %5321 = vmatpush2.msra.mxu0 %v4958
        %5322 = vmatprep.subr.mxu0 0.0
        %5323 = vmatpush2.msra.mxu0 %v4957
        %5324 = vmatprep.subr.mxu0 0.0
        %5325 = vmatpush2.msra.mxu0 %v4956
        %5326 = vmatprep.subr.mxu0 0.0
        %5327 = vmatpush2.msra.mxu0 %v4955
        %5328 = vmatprep.subr.mxu0 0.0
        %5329 = vmatpush2.msra.mxu0 %v4954
        %5330 = vmatprep.subr.mxu0 0.0
        %5331 = vmatpush2.msra.mxu0 %v4953
        %5332 = vmatprep.subr.mxu0 0.0
        %5333 = vmatpush2.msra.mxu0 %v4952
        %5334 = vmatprep.subr.mxu0 0.0
        %5335 = vmatpush2.msra.mxu0 %v4951
        %5336 = vmatprep.mubr.f32.mxu0 %v4618
        %5337 = vmatmul.mubr.f32.gmra.mxu0 %v4617
        %v5338 = vpop.f32.mrf.mxu0
        %v5339 = vadd.f32 %v5114, %v5338
        %v5340 = vpop.f32.mrf.mxu0
        %5341 = vmatprep.mubr.f32.mxu0 %v4627
        %5342 = vmatmul.mubr.f32.gmra.mxu0 %v4626
        %v5343 = vpop.f32.mrf.mxu0
        %v5344 = vadd.f32 %v5119, %v5343
        %v5345 = vpop.f32.mrf.mxu0
        %5346 = vmatprep.mubr.f32.mxu0 %v4636
        %5347 = vmatmul.mubr.f32.gmra.mxu0 %v4635
        %v5348 = vpop.f32.mrf.mxu0
        %v5349 = vadd.f32 %v5124, %v5348
        %v5350 = vpop.f32.mrf.mxu0
        %5351 = vmatprep.mubr.f32.mxu0 %v4645
        %5352 = vmatmul.mubr.f32.gmra.mxu0 %v4644
        %v5353 = vpop.f32.mrf.mxu0
        %v5354 = vadd.f32 %v5129, %v5353
        %v5355 = vpop.f32.mrf.mxu0
        %5356 = vmatprep.mubr.f32.mxu0 %v4654
        %5357 = vmatmul.mubr.f32.gmra.mxu0 %v4653
        %v5358 = vpop.f32.mrf.mxu0
        %v5359 = vadd.f32 %v5134, %v5358
        %v5360 = vpop.f32.mrf.mxu0
        %5361 = vmatprep.mubr.f32.mxu0 %v4663
        %5362 = vmatmul.mubr.f32.gmra.mxu0 %v4662
        %v5363 = vpop.f32.mrf.mxu0
        %v5364 = vadd.f32 %v5139, %v5363
        %v5365 = vpop.f32.mrf.mxu0
        %5366 = vmatprep.mubr.f32.mxu0 %v4672
        %5367 = vmatmul.mubr.f32.gmra.mxu0 %v4671
        %v5368 = vpop.f32.mrf.mxu0
        %v5369 = vadd.f32 %v5144, %v5368
        %v5370 = vpop.f32.mrf.mxu0
        %5371 = vmatprep.mubr.f32.mxu0 %v4681
        %5372 = vmatmul.mubr.f32.gmra.mxu0 %v4680
        %v5373 = vpop.f32.mrf.mxu0
        %v5374 = vadd.f32 %v5149, %v5373
        %v5375 = vpop.f32.mrf.mxu0
        %5376 = vmatprep.mubr.f32.mxu0 %v4690
        %5377 = vmatmul.mubr.f32.gmra.mxu0 %v4689
        %v5378 = vpop.f32.mrf.mxu0
        %v5379 = vadd.f32 %v5154, %v5378
        %v5380 = vpop.f32.mrf.mxu0
        %5381 = vmatprep.mubr.f32.mxu0 %v4699
        %5382 = vmatmul.mubr.f32.gmra.mxu0 %v4698
        %v5383 = vpop.f32.mrf.mxu0
        %v5384 = vadd.f32 %v5159, %v5383
        %v5385 = vpop.f32.mrf.mxu0
        %5386 = vmatprep.mubr.f32.mxu0 %v4708
        %5387 = vmatmul.mubr.f32.gmra.mxu0 %v4707
        %v5388 = vpop.f32.mrf.mxu0
        %v5389 = vadd.f32 %v5164, %v5388
        %v5390 = vpop.f32.mrf.mxu0
        %5391 = vmatprep.mubr.f32.mxu0 %v4717
        %5392 = vmatmul.mubr.f32.gmra.mxu0 %v4716
        %v5393 = vpop.f32.mrf.mxu0
        %v5394 = vadd.f32 %v5169, %v5393
        %v5395 = vpop.f32.mrf.mxu0
        %5396 = vmatprep.mubr.f32.mxu0 %v4726
        %5397 = vmatmul.mubr.f32.gmra.mxu0 %v4725
        %v5398 = vpop.f32.mrf.mxu0
        %v5399 = vadd.f32 %v5174, %v5398
        %v5400 = vpop.f32.mrf.mxu0
        %5401 = vmatprep.mubr.f32.mxu0 %v4735
        %5402 = vmatmul.mubr.f32.gmra.mxu0 %v4734
        %v5403 = vpop.f32.mrf.mxu0
        %v5404 = vadd.f32 %v5179, %v5403
        %v5405 = vpop.f32.mrf.mxu0
        %5406 = vmatprep.mubr.f32.mxu0 %v4744
        %5407 = vmatmul.mubr.f32.gmra.mxu0 %v4743
        %v5408 = vpop.f32.mrf.mxu0
        %v5409 = vadd.f32 %v5184, %v5408
        %v5410 = vpop.f32.mrf.mxu0
        %5411 = vmatprep.mubr.f32.mxu0 %v4753
        %5412 = vmatmul.mubr.f32.gmra.mxu0 %v4752
        %v5413 = vpop.f32.mrf.mxu0
        %v5414 = vadd.f32 %v5189, %v5413
        %v5415 = vpop.f32.mrf.mxu0
        %5416 = vmatprep.mubr.f32.mxu0 %v4762
        %5417 = vmatmul.mubr.f32.gmra.mxu0 %v4761
        %v5418 = vpop.f32.mrf.mxu0
        %v5419 = vadd.f32 %v5194, %v5418
        %v5420 = vpop.f32.mrf.mxu0
        %5421 = vmatprep.mubr.f32.mxu0 %v4771
        %5422 = vmatmul.mubr.f32.gmra.mxu0 %v4770
        %v5423 = vpop.f32.mrf.mxu0
        %v5424 = vadd.f32 %v5199, %v5423
        %v5425 = vpop.f32.mrf.mxu0
        %5426 = vmatprep.mubr.f32.mxu0 %v4780
        %5427 = vmatmul.mubr.f32.gmra.mxu0 %v4779
        %v5428 = vpop.f32.mrf.mxu0
        %v5429 = vadd.f32 %v5204, %v5428
        %v5430 = vpop.f32.mrf.mxu0
        %5431 = vmatprep.mubr.f32.mxu0 %v4789
        %5432 = vmatmul.mubr.f32.gmra.mxu0 %v4788
        %v5433 = vpop.f32.mrf.mxu0
        %v5434 = vadd.f32 %v5209, %v5433
        %v5435 = vpop.f32.mrf.mxu0
        %5436 = vmatprep.mubr.f32.mxu0 %v4798
        %5437 = vmatmul.mubr.f32.gmra.mxu0 %v4797
        %v5438 = vpop.f32.mrf.mxu0
        %v5439 = vadd.f32 %v5214, %v5438
        %v5440 = vpop.f32.mrf.mxu0
        %5441 = vmatprep.mubr.f32.mxu0 %v4807
        %5442 = vmatmul.mubr.f32.gmra.mxu0 %v4806
        %v5443 = vpop.f32.mrf.mxu0
        %v5444 = vadd.f32 %v5219, %v5443
        %v5445 = vpop.f32.mrf.mxu0
        %5446 = vmatprep.mubr.f32.mxu0 %v4816
        %5447 = vmatmul.mubr.f32.gmra.mxu0 %v4815
        %v5448 = vpop.f32.mrf.mxu0
        %v5449 = vadd.f32 %v5224, %v5448
        %v5450 = vpop.f32.mrf.mxu0
        %5451 = vmatprep.mubr.f32.mxu0 %v4825
        %5452 = vmatmul.mubr.f32.gmra.mxu0 %v4824
        %v5453 = vpop.f32.mrf.mxu0
        %v5454 = vadd.f32 %v5229, %v5453
        %v5455 = vpop.f32.mrf.mxu0
        %5456 = vmatprep.mubr.f32.mxu0 %v4834
        %5457 = vmatmul.mubr.f32.gmra.mxu0 %v4833
        %v5458 = vpop.f32.mrf.mxu0
        %v5459 = vadd.f32 %v5234, %v5458
        %v5460 = vpop.f32.mrf.mxu0
        %5461 = vmatprep.mubr.f32.mxu0 %v4843
        %5462 = vmatmul.mubr.f32.gmra.mxu0 %v4842
        %v5463 = vpop.f32.mrf.mxu0
        %v5464 = vadd.f32 %v5239, %v5463
        %v5465 = vpop.f32.mrf.mxu0
        %5466 = vmatprep.mubr.f32.mxu0 %v4852
        %5467 = vmatmul.mubr.f32.gmra.mxu0 %v4851
        %v5468 = vpop.f32.mrf.mxu0
        %v5469 = vadd.f32 %v5244, %v5468
        %v5470 = vpop.f32.mrf.mxu0
        %5471 = vmatprep.mubr.f32.mxu0 %v4861
        %5472 = vmatmul.mubr.f32.gmra.mxu0 %v4860
        %v5473 = vpop.f32.mrf.mxu0
        %v5474 = vadd.f32 %v5249, %v5473
        %v5475 = vpop.f32.mrf.mxu0
        %5476 = vmatprep.mubr.f32.mxu0 %v4870
        %5477 = vmatmul.mubr.f32.gmra.mxu0 %v4869
        %v5478 = vpop.f32.mrf.mxu0
        %v5479 = vadd.f32 %v5254, %v5478
        %v5480 = vpop.f32.mrf.mxu0
        %5481 = vmatprep.mubr.f32.mxu0 %v4879
        %5482 = vmatmul.mubr.f32.gmra.mxu0 %v4878
        %v5483 = vpop.f32.mrf.mxu0
        %v5484 = vadd.f32 %v5259, %v5483
        %v5485 = vpop.f32.mrf.mxu0
        %5486 = vmatprep.mubr.f32.mxu0 %v4888
        %5487 = vmatmul.mubr.f32.gmra.mxu0 %v4887
        %v5488 = vpop.f32.mrf.mxu0
        %v5489 = vadd.f32 %v5264, %v5488
        %v5490 = vpop.f32.mrf.mxu0
        %5491 = vmatprep.mubr.f32.mxu0 %v4897
        %5492 = vmatmul.mubr.f32.gmra.mxu0 %v4896
        %v5493 = vpop.f32.mrf.mxu0
        %v5494 = vadd.f32 %v5269, %v5493
        %v5495 = vpop.f32.mrf.mxu0
        %5496 = vdwg.mxu0
        %5497 = vmatprep.subr.mxu0 0.0
        %5498 = vmatpush1.msra.mxu0 %v4982
        %5499 = vmatprep.subr.mxu0 0.0
        %5500 = vmatpush1.msra.mxu0 %v4981
        %5501 = vmatprep.subr.mxu0 0.0
        %5502 = vmatpush1.msra.mxu0 %v4980
        %5503 = vmatprep.subr.mxu0 0.0
        %5504 = vmatpush1.msra.mxu0 %v4979
        %5505 = vmatprep.subr.mxu0 0.0
        %5506 = vmatpush1.msra.mxu0 %v4978
        %5507 = vmatprep.subr.mxu0 0.0
        %5508 = vmatpush1.msra.mxu0 %v4977
        %5509 = vmatprep.subr.mxu0 0.0
        %5510 = vmatpush1.msra.mxu0 %v4976
        %5511 = vmatprep.subr.mxu0 0.0
        %5512 = vmatpush1.msra.mxu0 %v4975
        %5513 = vmatprep.subr.mxu0 0.0
        %5514 = vmatpush1.msra.mxu0 %v4974
        %5515 = vmatprep.subr.mxu0 0.0
        %5516 = vmatpush1.msra.mxu0 %v4973
        %5517 = vmatprep.subr.mxu0 0.0
        %5518 = vmatpush1.msra.mxu0 %v4972
        %5519 = vmatprep.subr.mxu0 0.0
        %5520 = vmatpush1.msra.mxu0 %v4971
        %5521 = vmatprep.subr.mxu0 0.0
        %5522 = vmatpush1.msra.mxu0 %v4970
        %5523 = vmatprep.subr.mxu0 0.0
        %5524 = vmatpush1.msra.mxu0 %v4969
        %5525 = vmatprep.subr.mxu0 0.0
        %5526 = vmatpush1.msra.mxu0 %v4968
        %5527 = vmatprep.subr.mxu0 0.0
        %5528 = vmatpush1.msra.mxu0 %v4967
        %5529 = vmatprep.subr.mxu0 0.0
        %5530 = vmatpush2.msra.mxu0 %v4998
        %5531 = vmatprep.subr.mxu0 0.0
        %5532 = vmatpush2.msra.mxu0 %v4997
        %5533 = vmatprep.subr.mxu0 0.0
        %5534 = vmatpush2.msra.mxu0 %v4996
        %5535 = vmatprep.subr.mxu0 0.0
        %5536 = vmatpush2.msra.mxu0 %v4995
        %5537 = vmatprep.subr.mxu0 0.0
        %5538 = vmatpush2.msra.mxu0 %v4994
        %5539 = vmatprep.subr.mxu0 0.0
        %5540 = vmatpush2.msra.mxu0 %v4993
        %5541 = vmatprep.subr.mxu0 0.0
        %5542 = vmatpush2.msra.mxu0 %v4992
        %5543 = vmatprep.subr.mxu0 0.0
        %5544 = vmatpush2.msra.mxu0 %v4991
        %5545 = vmatprep.subr.mxu0 0.0
        %5546 = vmatpush2.msra.mxu0 %v4990
        %5547 = vmatprep.subr.mxu0 0.0
        %5548 = vmatpush2.msra.mxu0 %v4989
        %5549 = vmatprep.subr.mxu0 0.0
        %5550 = vmatpush2.msra.mxu0 %v4988
        %5551 = vmatprep.subr.mxu0 0.0
        %5552 = vmatpush2.msra.mxu0 %v4987
        %5553 = vmatprep.subr.mxu0 0.0
        %5554 = vmatpush2.msra.mxu0 %v4986
        %5555 = vmatprep.subr.mxu0 0.0
        %5556 = vmatpush2.msra.mxu0 %v4985
        %5557 = vmatprep.subr.mxu0 0.0
        %5558 = vmatpush2.msra.mxu0 %v4984
        %5559 = vmatprep.subr.mxu0 0.0
        %5560 = vmatpush2.msra.mxu0 %v4983
        %5561 = vmatprep.mubr.f32.mxu0 %v4620
        %5562 = vmatmul.mubr.f32.gmra.mxu0 %v4619
        %v5563 = vpop.f32.mrf.mxu0
        %v5564 = vadd.f32 %v5339, %v5563
        %v5565 = vpop.f32.mrf.mxu0
        %5566 = vmatprep.mubr.f32.mxu0 %v4629
        %5567 = vmatmul.mubr.f32.gmra.mxu0 %v4628
        %v5568 = vpop.f32.mrf.mxu0
        %v5569 = vadd.f32 %v5344, %v5568
        %v5570 = vpop.f32.mrf.mxu0
        %5571 = vmatprep.mubr.f32.mxu0 %v4638
        %5572 = vmatmul.mubr.f32.gmra.mxu0 %v4637
        %v5573 = vpop.f32.mrf.mxu0
        %v5574 = vadd.f32 %v5349, %v5573
        %v5575 = vpop.f32.mrf.mxu0
        %5576 = vmatprep.mubr.f32.mxu0 %v4647
        %5577 = vmatmul.mubr.f32.gmra.mxu0 %v4646
        %v5578 = vpop.f32.mrf.mxu0
        %v5579 = vadd.f32 %v5354, %v5578
        %v5580 = vpop.f32.mrf.mxu0
        %5581 = vmatprep.mubr.f32.mxu0 %v4656
        %5582 = vmatmul.mubr.f32.gmra.mxu0 %v4655
        %v5583 = vpop.f32.mrf.mxu0
        %v5584 = vadd.f32 %v5359, %v5583
        %v5585 = vpop.f32.mrf.mxu0
        %5586 = vmatprep.mubr.f32.mxu0 %v4665
        %5587 = vmatmul.mubr.f32.gmra.mxu0 %v4664
        %v5588 = vpop.f32.mrf.mxu0
        %v5589 = vadd.f32 %v5364, %v5588
        %v5590 = vpop.f32.mrf.mxu0
        %5591 = vmatprep.mubr.f32.mxu0 %v4674
        %5592 = vmatmul.mubr.f32.gmra.mxu0 %v4673
        %v5593 = vpop.f32.mrf.mxu0
        %v5594 = vadd.f32 %v5369, %v5593
        %v5595 = vpop.f32.mrf.mxu0
        %5596 = vmatprep.mubr.f32.mxu0 %v4683
        %5597 = vmatmul.mubr.f32.gmra.mxu0 %v4682
        %v5598 = vpop.f32.mrf.mxu0
        %v5599 = vadd.f32 %v5374, %v5598
        %v5600 = vpop.f32.mrf.mxu0
        %5601 = vmatprep.mubr.f32.mxu0 %v4692
        %5602 = vmatmul.mubr.f32.gmra.mxu0 %v4691
        %v5603 = vpop.f32.mrf.mxu0
        %v5604 = vadd.f32 %v5379, %v5603
        %v5605 = vpop.f32.mrf.mxu0
        %5606 = vmatprep.mubr.f32.mxu0 %v4701
        %5607 = vmatmul.mubr.f32.gmra.mxu0 %v4700
        %v5608 = vpop.f32.mrf.mxu0
        %v5609 = vadd.f32 %v5384, %v5608
        %v5610 = vpop.f32.mrf.mxu0
        %5611 = vmatprep.mubr.f32.mxu0 %v4710
        %5612 = vmatmul.mubr.f32.gmra.mxu0 %v4709
        %v5613 = vpop.f32.mrf.mxu0
        %v5614 = vadd.f32 %v5389, %v5613
        %v5615 = vpop.f32.mrf.mxu0
        %5616 = vmatprep.mubr.f32.mxu0 %v4719
        %5617 = vmatmul.mubr.f32.gmra.mxu0 %v4718
        %v5618 = vpop.f32.mrf.mxu0
        %v5619 = vadd.f32 %v5394, %v5618
        %v5620 = vpop.f32.mrf.mxu0
        %5621 = vmatprep.mubr.f32.mxu0 %v4728
        %5622 = vmatmul.mubr.f32.gmra.mxu0 %v4727
        %v5623 = vpop.f32.mrf.mxu0
        %v5624 = vadd.f32 %v5399, %v5623
        %v5625 = vpop.f32.mrf.mxu0
        %5626 = vmatprep.mubr.f32.mxu0 %v4737
        %5627 = vmatmul.mubr.f32.gmra.mxu0 %v4736
        %v5628 = vpop.f32.mrf.mxu0
        %v5629 = vadd.f32 %v5404, %v5628
        %v5630 = vpop.f32.mrf.mxu0
        %5631 = vmatprep.mubr.f32.mxu0 %v4746
        %5632 = vmatmul.mubr.f32.gmra.mxu0 %v4745
        %v5633 = vpop.f32.mrf.mxu0
        %v5634 = vadd.f32 %v5409, %v5633
        %v5635 = vpop.f32.mrf.mxu0
        %5636 = vmatprep.mubr.f32.mxu0 %v4755
        %5637 = vmatmul.mubr.f32.gmra.mxu0 %v4754
        %v5638 = vpop.f32.mrf.mxu0
        %v5639 = vadd.f32 %v5414, %v5638
        %v5640 = vpop.f32.mrf.mxu0
        %5641 = vmatprep.mubr.f32.mxu0 %v4764
        %5642 = vmatmul.mubr.f32.gmra.mxu0 %v4763
        %v5643 = vpop.f32.mrf.mxu0
        %v5644 = vadd.f32 %v5419, %v5643
        %v5645 = vpop.f32.mrf.mxu0
        %5646 = vmatprep.mubr.f32.mxu0 %v4773
        %5647 = vmatmul.mubr.f32.gmra.mxu0 %v4772
        %v5648 = vpop.f32.mrf.mxu0
        %v5649 = vadd.f32 %v5424, %v5648
        %v5650 = vpop.f32.mrf.mxu0
        %5651 = vmatprep.mubr.f32.mxu0 %v4782
        %5652 = vmatmul.mubr.f32.gmra.mxu0 %v4781
        %v5653 = vpop.f32.mrf.mxu0
        %v5654 = vadd.f32 %v5429, %v5653
        %v5655 = vpop.f32.mrf.mxu0
        %5656 = vmatprep.mubr.f32.mxu0 %v4791
        %5657 = vmatmul.mubr.f32.gmra.mxu0 %v4790
        %v5658 = vpop.f32.mrf.mxu0
        %v5659 = vadd.f32 %v5434, %v5658
        %v5660 = vpop.f32.mrf.mxu0
        %5661 = vmatprep.mubr.f32.mxu0 %v4800
        %5662 = vmatmul.mubr.f32.gmra.mxu0 %v4799
        %v5663 = vpop.f32.mrf.mxu0
        %v5664 = vadd.f32 %v5439, %v5663
        %v5665 = vpop.f32.mrf.mxu0
        %5666 = vmatprep.mubr.f32.mxu0 %v4809
        %5667 = vmatmul.mubr.f32.gmra.mxu0 %v4808
        %v5668 = vpop.f32.mrf.mxu0
        %v5669 = vadd.f32 %v5444, %v5668
        %v5670 = vpop.f32.mrf.mxu0
        %5671 = vmatprep.mubr.f32.mxu0 %v4818
        %5672 = vmatmul.mubr.f32.gmra.mxu0 %v4817
        %v5673 = vpop.f32.mrf.mxu0
        %v5674 = vadd.f32 %v5449, %v5673
        %v5675 = vpop.f32.mrf.mxu0
        %5676 = vmatprep.mubr.f32.mxu0 %v4827
        %5677 = vmatmul.mubr.f32.gmra.mxu0 %v4826
        %v5678 = vpop.f32.mrf.mxu0
        %v5679 = vadd.f32 %v5454, %v5678
        %v5680 = vpop.f32.mrf.mxu0
        %5681 = vmatprep.mubr.f32.mxu0 %v4836
        %5682 = vmatmul.mubr.f32.gmra.mxu0 %v4835
        %v5683 = vpop.f32.mrf.mxu0
        %v5684 = vadd.f32 %v5459, %v5683
        %v5685 = vpop.f32.mrf.mxu0
        %5686 = vmatprep.mubr.f32.mxu0 %v4845
        %5687 = vmatmul.mubr.f32.gmra.mxu0 %v4844
        %v5688 = vpop.f32.mrf.mxu0
        %v5689 = vadd.f32 %v5464, %v5688
        %v5690 = vpop.f32.mrf.mxu0
        %5691 = vmatprep.mubr.f32.mxu0 %v4854
        %5692 = vmatmul.mubr.f32.gmra.mxu0 %v4853
        %v5693 = vpop.f32.mrf.mxu0
        %v5694 = vadd.f32 %v5469, %v5693
        %v5695 = vpop.f32.mrf.mxu0
        %5696 = vmatprep.mubr.f32.mxu0 %v4863
        %5697 = vmatmul.mubr.f32.gmra.mxu0 %v4862
        %v5698 = vpop.f32.mrf.mxu0
        %v5699 = vadd.f32 %v5474, %v5698
        %v5700 = vpop.f32.mrf.mxu0
        %5701 = vmatprep.mubr.f32.mxu0 %v4872
        %5702 = vmatmul.mubr.f32.gmra.mxu0 %v4871
        %v5703 = vpop.f32.mrf.mxu0
        %v5704 = vadd.f32 %v5479, %v5703
        %v5705 = vpop.f32.mrf.mxu0
        %5706 = vmatprep.mubr.f32.mxu0 %v4881
        %5707 = vmatmul.mubr.f32.gmra.mxu0 %v4880
        %v5708 = vpop.f32.mrf.mxu0
        %v5709 = vadd.f32 %v5484, %v5708
        %v5710 = vpop.f32.mrf.mxu0
        %5711 = vmatprep.mubr.f32.mxu0 %v4890
        %5712 = vmatmul.mubr.f32.gmra.mxu0 %v4889
        %v5713 = vpop.f32.mrf.mxu0
        %v5714 = vadd.f32 %v5489, %v5713
        %v5715 = vpop.f32.mrf.mxu0
        %5716 = vmatprep.mubr.f32.mxu0 %v4899
        %5717 = vmatmul.mubr.f32.gmra.mxu0 %v4898
        %v5718 = vpop.f32.mrf.mxu0
        %v5719 = vadd.f32 %v5494, %v5718
        %v5720 = vpop.f32.mrf.mxu0
        %5721 = vdwg.mxu0
        %5722 = vmatprep.subr.mxu0 0.0
        %5723 = vmatpush1.msra.mxu0 %v5014
        %5724 = vmatprep.subr.mxu0 0.0
        %5725 = vmatpush1.msra.mxu0 %v5013
        %5726 = vmatprep.subr.mxu0 0.0
        %5727 = vmatpush1.msra.mxu0 %v5012
        %5728 = vmatprep.subr.mxu0 0.0
        %5729 = vmatpush1.msra.mxu0 %v5011
        %5730 = vmatprep.subr.mxu0 0.0
        %5731 = vmatpush1.msra.mxu0 %v5010
        %5732 = vmatprep.subr.mxu0 0.0
        %5733 = vmatpush1.msra.mxu0 %v5009
        %5734 = vmatprep.subr.mxu0 0.0
        %5735 = vmatpush1.msra.mxu0 %v5008
        %5736 = vmatprep.subr.mxu0 0.0
        %5737 = vmatpush1.msra.mxu0 %v5007
        %5738 = vmatprep.subr.mxu0 0.0
        %5739 = vmatpush1.msra.mxu0 %v5006
        %5740 = vmatprep.subr.mxu0 0.0
        %5741 = vmatpush1.msra.mxu0 %v5005
        %5742 = vmatprep.subr.mxu0 0.0
        %5743 = vmatpush1.msra.mxu0 %v5004
        %5744 = vmatprep.subr.mxu0 0.0
        %5745 = vmatpush1.msra.mxu0 %v5003
        %5746 = vmatprep.subr.mxu0 0.0
        %5747 = vmatpush1.msra.mxu0 %v5002
        %5748 = vmatprep.subr.mxu0 0.0
        %5749 = vmatpush1.msra.mxu0 %v5001
        %5750 = vmatprep.subr.mxu0 0.0
        %5751 = vmatpush1.msra.mxu0 %v5000
        %5752 = vmatprep.subr.mxu0 0.0
        %5753 = vmatpush1.msra.mxu0 %v4999
        %5754 = vmatprep.subr.mxu0 0.0
        %5755 = vmatpush2.msra.mxu0 %v5030
        %5756 = vmatprep.subr.mxu0 0.0
        %5757 = vmatpush2.msra.mxu0 %v5029
        %5758 = vmatprep.subr.mxu0 0.0
        %5759 = vmatpush2.msra.mxu0 %v5028
        %5760 = vmatprep.subr.mxu0 0.0
        %5761 = vmatpush2.msra.mxu0 %v5027
        %5762 = vmatprep.subr.mxu0 0.0
        %5763 = vmatpush2.msra.mxu0 %v5026
        %5764 = vmatprep.subr.mxu0 0.0
        %5765 = vmatpush2.msra.mxu0 %v5025
        %5766 = vmatprep.subr.mxu0 0.0
        %5767 = vmatpush2.msra.mxu0 %v5024
        %5768 = vmatprep.subr.mxu0 0.0
        %5769 = vmatpush2.msra.mxu0 %v5023
        %5770 = vmatprep.subr.mxu0 0.0
        %5771 = vmatpush2.msra.mxu0 %v5022
        %5772 = vmatprep.subr.mxu0 0.0
        %5773 = vmatpush2.msra.mxu0 %v5021
        %5774 = vmatprep.subr.mxu0 0.0
        %5775 = vmatpush2.msra.mxu0 %v5020
        %5776 = vmatprep.subr.mxu0 0.0
        %5777 = vmatpush2.msra.mxu0 %v5019
        %5778 = vmatprep.subr.mxu0 0.0
        %5779 = vmatpush2.msra.mxu0 %v5018
        %5780 = vmatprep.subr.mxu0 0.0
        %5781 = vmatpush2.msra.mxu0 %v5017
        %5782 = vmatprep.subr.mxu0 0.0
        %5783 = vmatpush2.msra.mxu0 %v5016
        %5784 = vmatprep.subr.mxu0 0.0
        %5785 = vmatpush2.msra.mxu0 %v5015
        %5786 = vmatprep.mubr.f32.mxu0 %v4622
        %5787 = vmatmul.mubr.f32.gmra.mxu0 %v4621
        %v5788 = vpop.f32.mrf.mxu0
        %v5789 = vadd.f32 %v5564, %v5788
        %v5790 = vpop.f32.mrf.mxu0
        %5791 = vmatprep.mubr.f32.mxu0 %v4631
        %5792 = vmatmul.mubr.f32.gmra.mxu0 %v4630
        %v5793 = vpop.f32.mrf.mxu0
        %v5794 = vadd.f32 %v5569, %v5793
        %v5795 = vpop.f32.mrf.mxu0
        %5796 = vmatprep.mubr.f32.mxu0 %v4640
        %5797 = vmatmul.mubr.f32.gmra.mxu0 %v4639
        %v5798 = vpop.f32.mrf.mxu0
        %v5799 = vadd.f32 %v5574, %v5798
        %v5800 = vpop.f32.mrf.mxu0
        %5801 = vmatprep.mubr.f32.mxu0 %v4649
        %5802 = vmatmul.mubr.f32.gmra.mxu0 %v4648
        %v5803 = vpop.f32.mrf.mxu0
        %v5804 = vadd.f32 %v5579, %v5803
        %v5805 = vpop.f32.mrf.mxu0
        %5806 = vmatprep.mubr.f32.mxu0 %v4658
        %5807 = vmatmul.mubr.f32.gmra.mxu0 %v4657
        %v5808 = vpop.f32.mrf.mxu0
        %v5809 = vadd.f32 %v5584, %v5808
        %v5810 = vpop.f32.mrf.mxu0
        %5811 = vmatprep.mubr.f32.mxu0 %v4667
        %5812 = vmatmul.mubr.f32.gmra.mxu0 %v4666
        %v5813 = vpop.f32.mrf.mxu0
        %v5814 = vadd.f32 %v5589, %v5813
        %v5815 = vpop.f32.mrf.mxu0
        %5816 = vmatprep.mubr.f32.mxu0 %v4676
        %5817 = vmatmul.mubr.f32.gmra.mxu0 %v4675
        %v5818 = vpop.f32.mrf.mxu0
        %v5819 = vadd.f32 %v5594, %v5818
        %v5820 = vpop.f32.mrf.mxu0
        %5821 = vmatprep.mubr.f32.mxu0 %v4685
        %5822 = vmatmul.mubr.f32.gmra.mxu0 %v4684
        %v5823 = vpop.f32.mrf.mxu0
        %v5824 = vadd.f32 %v5599, %v5823
        %v5825 = vpop.f32.mrf.mxu0
        %5826 = vmatprep.mubr.f32.mxu0 %v4694
        %5827 = vmatmul.mubr.f32.gmra.mxu0 %v4693
        %v5828 = vpop.f32.mrf.mxu0
        %v5829 = vadd.f32 %v5604, %v5828
        %v5830 = vpop.f32.mrf.mxu0
        %5831 = vmatprep.mubr.f32.mxu0 %v4703
        %5832 = vmatmul.mubr.f32.gmra.mxu0 %v4702
        %v5833 = vpop.f32.mrf.mxu0
        %v5834 = vadd.f32 %v5609, %v5833
        %v5835 = vpop.f32.mrf.mxu0
        %5836 = vmatprep.mubr.f32.mxu0 %v4712
        %5837 = vmatmul.mubr.f32.gmra.mxu0 %v4711
        %v5838 = vpop.f32.mrf.mxu0
        %v5839 = vadd.f32 %v5614, %v5838
        %v5840 = vpop.f32.mrf.mxu0
        %5841 = vmatprep.mubr.f32.mxu0 %v4721
        %5842 = vmatmul.mubr.f32.gmra.mxu0 %v4720
        %v5843 = vpop.f32.mrf.mxu0
        %v5844 = vadd.f32 %v5619, %v5843
        %v5845 = vpop.f32.mrf.mxu0
        %5846 = vmatprep.mubr.f32.mxu0 %v4730
        %5847 = vmatmul.mubr.f32.gmra.mxu0 %v4729
        %v5848 = vpop.f32.mrf.mxu0
        %v5849 = vadd.f32 %v5624, %v5848
        %v5850 = vpop.f32.mrf.mxu0
        %5851 = vmatprep.mubr.f32.mxu0 %v4739
        %5852 = vmatmul.mubr.f32.gmra.mxu0 %v4738
        %v5853 = vpop.f32.mrf.mxu0
        %v5854 = vadd.f32 %v5629, %v5853
        %v5855 = vpop.f32.mrf.mxu0
        %5856 = vmatprep.mubr.f32.mxu0 %v4748
        %5857 = vmatmul.mubr.f32.gmra.mxu0 %v4747
        %v5858 = vpop.f32.mrf.mxu0
        %v5859 = vadd.f32 %v5634, %v5858
        %v5860 = vpop.f32.mrf.mxu0
        %5861 = vmatprep.mubr.f32.mxu0 %v4757
        %5862 = vmatmul.mubr.f32.gmra.mxu0 %v4756
        %v5863 = vpop.f32.mrf.mxu0
        %v5864 = vadd.f32 %v5639, %v5863
        %v5865 = vpop.f32.mrf.mxu0
        %5866 = vmatprep.mubr.f32.mxu0 %v4766
        %5867 = vmatmul.mubr.f32.gmra.mxu0 %v4765
        %v5868 = vpop.f32.mrf.mxu0
        %v5869 = vadd.f32 %v5644, %v5868
        %v5870 = vpop.f32.mrf.mxu0
        %5871 = vmatprep.mubr.f32.mxu0 %v4775
        %5872 = vmatmul.mubr.f32.gmra.mxu0 %v4774
        %v5873 = vpop.f32.mrf.mxu0
        %v5874 = vadd.f32 %v5649, %v5873
        %v5875 = vpop.f32.mrf.mxu0
        %5876 = vmatprep.mubr.f32.mxu0 %v4784
        %5877 = vmatmul.mubr.f32.gmra.mxu0 %v4783
        %v5878 = vpop.f32.mrf.mxu0
        %v5879 = vadd.f32 %v5654, %v5878
        %v5880 = vpop.f32.mrf.mxu0
        %5881 = vmatprep.mubr.f32.mxu0 %v4793
        %5882 = vmatmul.mubr.f32.gmra.mxu0 %v4792
        %v5883 = vpop.f32.mrf.mxu0
        %v5884 = vadd.f32 %v5659, %v5883
        %v5885 = vpop.f32.mrf.mxu0
        %5886 = vmatprep.mubr.f32.mxu0 %v4802
        %5887 = vmatmul.mubr.f32.gmra.mxu0 %v4801
        %v5888 = vpop.f32.mrf.mxu0
        %v5889 = vadd.f32 %v5664, %v5888
        %v5890 = vpop.f32.mrf.mxu0
        %5891 = vmatprep.mubr.f32.mxu0 %v4811
        %5892 = vmatmul.mubr.f32.gmra.mxu0 %v4810
        %v5893 = vpop.f32.mrf.mxu0
        %v5894 = vadd.f32 %v5669, %v5893
        %v5895 = vpop.f32.mrf.mxu0
        %5896 = vmatprep.mubr.f32.mxu0 %v4820
        %5897 = vmatmul.mubr.f32.gmra.mxu0 %v4819
        %v5898 = vpop.f32.mrf.mxu0
        %v5899 = vadd.f32 %v5674, %v5898
        %v5900 = vpop.f32.mrf.mxu0
        %5901 = vmatprep.mubr.f32.mxu0 %v4829
        %5902 = vmatmul.mubr.f32.gmra.mxu0 %v4828
        %v5903 = vpop.f32.mrf.mxu0
        %v5904 = vadd.f32 %v5679, %v5903
        %v5905 = vpop.f32.mrf.mxu0
        %5906 = vmatprep.mubr.f32.mxu0 %v4838
        %5907 = vmatmul.mubr.f32.gmra.mxu0 %v4837
        %v5908 = vpop.f32.mrf.mxu0
        %v5909 = vadd.f32 %v5684, %v5908
        %v5910 = vpop.f32.mrf.mxu0
        %5911 = vmatprep.mubr.f32.mxu0 %v4847
        %5912 = vmatmul.mubr.f32.gmra.mxu0 %v4846
        %v5913 = vpop.f32.mrf.mxu0
        %v5914 = vadd.f32 %v5689, %v5913
        %v5915 = vpop.f32.mrf.mxu0
        %5916 = vmatprep.mubr.f32.mxu0 %v4856
        %5917 = vmatmul.mubr.f32.gmra.mxu0 %v4855
        %v5918 = vpop.f32.mrf.mxu0
        %v5919 = vadd.f32 %v5694, %v5918
        %v5920 = vpop.f32.mrf.mxu0
        %5921 = vmatprep.mubr.f32.mxu0 %v4865
        %5922 = vmatmul.mubr.f32.gmra.mxu0 %v4864
        %v5923 = vpop.f32.mrf.mxu0
        %v5924 = vadd.f32 %v5699, %v5923
        %v5925 = vpop.f32.mrf.mxu0
        %5926 = vmatprep.mubr.f32.mxu0 %v4874
        %5927 = vmatmul.mubr.f32.gmra.mxu0 %v4873
        %v5928 = vpop.f32.mrf.mxu0
        %v5929 = vadd.f32 %v5704, %v5928
        %v5930 = vpop.f32.mrf.mxu0
        %5931 = vmatprep.mubr.f32.mxu0 %v4883
        %5932 = vmatmul.mubr.f32.gmra.mxu0 %v4882
        %v5933 = vpop.f32.mrf.mxu0
        %v5934 = vadd.f32 %v5709, %v5933
        %v5935 = vpop.f32.mrf.mxu0
        %5936 = vmatprep.mubr.f32.mxu0 %v4892
        %5937 = vmatmul.mubr.f32.gmra.mxu0 %v4891
        %v5938 = vpop.f32.mrf.mxu0
        %v5939 = vadd.f32 %v5714, %v5938
        %v5940 = vpop.f32.mrf.mxu0
        %5941 = vmatprep.mubr.f32.mxu0 %v4901
        %5942 = vmatmul.mubr.f32.gmra.mxu0 %v4900
        %v5943 = vpop.f32.mrf.mxu0
        %v5944 = vadd.f32 %v5719, %v5943
        %v5945 = vpop.f32.mrf.mxu0
        %5946 = vdwg.mxu0
        %5947 = vmatprep.subr.mxu0 0.0
        %5948 = vmatpush1.msra.mxu0 %v5046
        %5949 = vmatprep.subr.mxu0 0.0
        %5950 = vmatpush1.msra.mxu0 %v5045
        %5951 = vmatprep.subr.mxu0 0.0
        %5952 = vmatpush1.msra.mxu0 %v5044
        %5953 = vmatprep.subr.mxu0 0.0
        %5954 = vmatpush1.msra.mxu0 %v5043
        %5955 = vmatprep.subr.mxu0 0.0
        %5956 = vmatpush1.msra.mxu0 %v5042
        %5957 = vmatprep.subr.mxu0 0.0
        %5958 = vmatpush1.msra.mxu0 %v5041
        %5959 = vmatprep.subr.mxu0 0.0
        %5960 = vmatpush1.msra.mxu0 %v5040
        %5961 = vmatprep.subr.mxu0 0.0
        %5962 = vmatpush1.msra.mxu0 %v5039
        %5963 = vmatprep.subr.mxu0 0.0
        %5964 = vmatpush1.msra.mxu0 %v5038
        %5965 = vmatprep.subr.mxu0 0.0
        %5966 = vmatpush1.msra.mxu0 %v5037
        %5967 = vmatprep.subr.mxu0 0.0
        %5968 = vmatpush1.msra.mxu0 %v5036
        %5969 = vmatprep.subr.mxu0 0.0
        %5970 = vmatpush1.msra.mxu0 %v5035
        %5971 = vmatprep.subr.mxu0 0.0
        %5972 = vmatpush1.msra.mxu0 %v5034
        %5973 = vmatprep.subr.mxu0 0.0
        %5974 = vmatpush1.msra.mxu0 %v5033
        %5975 = vmatprep.subr.mxu0 0.0
        %5976 = vmatpush1.msra.mxu0 %v5032
        %5977 = vmatprep.subr.mxu0 0.0
        %5978 = vmatpush1.msra.mxu0 %v5031
        %5979 = vmatprep.subr.mxu0 0.0
        %5980 = vmatpush2.msra.mxu0 0.0
        %5981 = vmatprep.subr.mxu0 0.0
        %5982 = vmatpush2.msra.mxu0 0.0
        %5983 = vmatprep.subr.mxu0 0.0
        %5984 = vmatpush2.msra.mxu0 0.0
        %5985 = vmatprep.subr.mxu0 0.0
        %5986 = vmatpush2.msra.mxu0 0.0
        %5987 = vmatprep.subr.mxu0 0.0
        %5988 = vmatpush2.msra.mxu0 0.0
        %5989 = vmatprep.subr.mxu0 0.0
        %5990 = vmatpush2.msra.mxu0 0.0
        %5991 = vmatprep.subr.mxu0 0.0
        %5992 = vmatpush2.msra.mxu0 0.0
        %5993 = vmatprep.subr.mxu0 0.0
        %5994 = vmatpush2.msra.mxu0 0.0
        %5995 = vmatprep.subr.mxu0 0.0
        %5996 = vmatpush2.msra.mxu0 0.0
        %5997 = vmatprep.subr.mxu0 0.0
        %5998 = vmatpush2.msra.mxu0 0.0
        %5999 = vmatprep.subr.mxu0 0.0
        %6000 = vmatpush2.msra.mxu0 0.0
        %6001 = vmatprep.subr.mxu0 0.0
        %6002 = vmatpush2.msra.mxu0 0.0
        %6003 = vmatprep.subr.mxu0 0.0
        %6004 = vmatpush2.msra.mxu0 0.0
        %6005 = vmatprep.subr.mxu0 0.0
        %6006 = vmatpush2.msra.mxu0 0.0
        %6007 = vmatprep.subr.mxu0 0.0
        %6008 = vmatpush2.msra.mxu0 0.0
        %6009 = vmatprep.subr.mxu0 0.0
        %6010 = vmatpush2.msra.mxu0 0.0
        %6011 = vmatprep.mubr.f32.mxu0 0.0
        %6012 = vmatmul.mubr.f32.gmra.mxu0 %v4623
        %v6013 = vpop.f32.mrf.mxu0
        %v6014 = vadd.f32 %v5789, %v6013
        %v6015 = vpop.f32.mrf.mxu0
        %6016 = vmatprep.mubr.f32.mxu0 0.0
        %6017 = vmatmul.mubr.f32.gmra.mxu0 %v4632
        %v6018 = vpop.f32.mrf.mxu0
        %v6019 = vadd.f32 %v5794, %v6018
        %v6020 = vpop.f32.mrf.mxu0
        %6021 = vmatprep.mubr.f32.mxu0 0.0
        %6022 = vmatmul.mubr.f32.gmra.mxu0 %v4641
        %v6023 = vpop.f32.mrf.mxu0
        %v6024 = vadd.f32 %v5799, %v6023
        %v6025 = vpop.f32.mrf.mxu0
        %6026 = vmatprep.mubr.f32.mxu0 0.0
        %6027 = vmatmul.mubr.f32.gmra.mxu0 %v4650
        %v6028 = vpop.f32.mrf.mxu0
        %v6029 = vadd.f32 %v5804, %v6028
        %v6030 = vpop.f32.mrf.mxu0
        %6031 = vmatprep.mubr.f32.mxu0 0.0
        %6032 = vmatmul.mubr.f32.gmra.mxu0 %v4659
        %v6033 = vpop.f32.mrf.mxu0
        %v6034 = vadd.f32 %v5809, %v6033
        %v6035 = vpop.f32.mrf.mxu0
        %6036 = vmatprep.mubr.f32.mxu0 0.0
        %6037 = vmatmul.mubr.f32.gmra.mxu0 %v4668
        %v6038 = vpop.f32.mrf.mxu0
        %v6039 = vadd.f32 %v5814, %v6038
        %v6040 = vpop.f32.mrf.mxu0
        %6041 = vmatprep.mubr.f32.mxu0 0.0
        %6042 = vmatmul.mubr.f32.gmra.mxu0 %v4677
        %v6043 = vpop.f32.mrf.mxu0
        %v6044 = vadd.f32 %v5819, %v6043
        %v6045 = vpop.f32.mrf.mxu0
        %6046 = vmatprep.mubr.f32.mxu0 0.0
        %6047 = vmatmul.mubr.f32.gmra.mxu0 %v4686
        %v6048 = vpop.f32.mrf.mxu0
        %v6049 = vadd.f32 %v5824, %v6048
        %v6050 = vpop.f32.mrf.mxu0
        %6051 = vmatprep.mubr.f32.mxu0 0.0
        %6052 = vmatmul.mubr.f32.gmra.mxu0 %v4695
        %v6053 = vpop.f32.mrf.mxu0
        %v6054 = vadd.f32 %v5829, %v6053
        %v6055 = vpop.f32.mrf.mxu0
        %6056 = vmatprep.mubr.f32.mxu0 0.0
        %6057 = vmatmul.mubr.f32.gmra.mxu0 %v4704
        %v6058 = vpop.f32.mrf.mxu0
        %v6059 = vadd.f32 %v5834, %v6058
        %v6060 = vpop.f32.mrf.mxu0
        %6061 = vmatprep.mubr.f32.mxu0 0.0
        %6062 = vmatmul.mubr.f32.gmra.mxu0 %v4713
        %v6063 = vpop.f32.mrf.mxu0
        %v6064 = vadd.f32 %v5839, %v6063
        %v6065 = vpop.f32.mrf.mxu0
        %6066 = vmatprep.mubr.f32.mxu0 0.0
        %6067 = vmatmul.mubr.f32.gmra.mxu0 %v4722
        %v6068 = vpop.f32.mrf.mxu0
        %v6069 = vadd.f32 %v5844, %v6068
        %v6070 = vpop.f32.mrf.mxu0
        %6071 = vmatprep.mubr.f32.mxu0 0.0
        %6072 = vmatmul.mubr.f32.gmra.mxu0 %v4731
        %v6073 = vpop.f32.mrf.mxu0
        %v6074 = vadd.f32 %v5849, %v6073
        %v6075 = vpop.f32.mrf.mxu0
        %6076 = vmatprep.mubr.f32.mxu0 0.0
        %6077 = vmatmul.mubr.f32.gmra.mxu0 %v4740
        %v6078 = vpop.f32.mrf.mxu0
        %v6079 = vadd.f32 %v5854, %v6078
        %v6080 = vpop.f32.mrf.mxu0
        %6081 = vmatprep.mubr.f32.mxu0 0.0
        %6082 = vmatmul.mubr.f32.gmra.mxu0 %v4749
        %v6083 = vpop.f32.mrf.mxu0
        %v6084 = vadd.f32 %v5859, %v6083
        %v6085 = vpop.f32.mrf.mxu0
        %6086 = vmatprep.mubr.f32.mxu0 0.0
        %6087 = vmatmul.mubr.f32.gmra.mxu0 %v4758
        %v6088 = vpop.f32.mrf.mxu0
        %v6089 = vadd.f32 %v5864, %v6088
        %v6090 = vpop.f32.mrf.mxu0
        %6091 = vmatprep.mubr.f32.mxu0 0.0
        %6092 = vmatmul.mubr.f32.gmra.mxu0 %v4767
        %v6093 = vpop.f32.mrf.mxu0
        %v6094 = vadd.f32 %v5869, %v6093
        %v6095 = vpop.f32.mrf.mxu0
        %6096 = vmatprep.mubr.f32.mxu0 0.0
        %6097 = vmatmul.mubr.f32.gmra.mxu0 %v4776
        %v6098 = vpop.f32.mrf.mxu0
        %v6099 = vadd.f32 %v5874, %v6098
        %v6100 = vpop.f32.mrf.mxu0
        %6101 = vmatprep.mubr.f32.mxu0 0.0
        %6102 = vmatmul.mubr.f32.gmra.mxu0 %v4785
        %v6103 = vpop.f32.mrf.mxu0
        %v6104 = vadd.f32 %v5879, %v6103
        %v6105 = vpop.f32.mrf.mxu0
        %6106 = vmatprep.mubr.f32.mxu0 0.0
        %6107 = vmatmul.mubr.f32.gmra.mxu0 %v4794
        %v6108 = vpop.f32.mrf.mxu0
        %v6109 = vadd.f32 %v5884, %v6108
        %v6110 = vpop.f32.mrf.mxu0
        %6111 = vmatprep.mubr.f32.mxu0 0.0
        %6112 = vmatmul.mubr.f32.gmra.mxu0 %v4803
        %v6113 = vpop.f32.mrf.mxu0
        %v6114 = vadd.f32 %v5889, %v6113
        %v6115 = vpop.f32.mrf.mxu0
        %6116 = vmatprep.mubr.f32.mxu0 0.0
        %6117 = vmatmul.mubr.f32.gmra.mxu0 %v4812
        %v6118 = vpop.f32.mrf.mxu0
        %v6119 = vadd.f32 %v5894, %v6118
        %v6120 = vpop.f32.mrf.mxu0
        %6121 = vmatprep.mubr.f32.mxu0 0.0
        %6122 = vmatmul.mubr.f32.gmra.mxu0 %v4821
        %v6123 = vpop.f32.mrf.mxu0
        %v6124 = vadd.f32 %v5899, %v6123
        %v6125 = vpop.f32.mrf.mxu0
        %6126 = vmatprep.mubr.f32.mxu0 0.0
        %6127 = vmatmul.mubr.f32.gmra.mxu0 %v4830
        %v6128 = vpop.f32.mrf.mxu0
        %v6129 = vadd.f32 %v5904, %v6128
        %v6130 = vpop.f32.mrf.mxu0
        %6131 = vmatprep.mubr.f32.mxu0 0.0
        %6132 = vmatmul.mubr.f32.gmra.mxu0 %v4839
        %v6133 = vpop.f32.mrf.mxu0
        %v6134 = vadd.f32 %v5909, %v6133
        %v6135 = vpop.f32.mrf.mxu0
        %6136 = vmatprep.mubr.f32.mxu0 0.0
        %6137 = vmatmul.mubr.f32.gmra.mxu0 %v4848
        %v6138 = vpop.f32.mrf.mxu0
        %v6139 = vadd.f32 %v5914, %v6138
        %v6140 = vpop.f32.mrf.mxu0
        %6141 = vmatprep.mubr.f32.mxu0 0.0
        %6142 = vmatmul.mubr.f32.gmra.mxu0 %v4857
        %v6143 = vpop.f32.mrf.mxu0
        %v6144 = vadd.f32 %v5919, %v6143
        %v6145 = vpop.f32.mrf.mxu0
        %6146 = vmatprep.mubr.f32.mxu0 0.0
        %6147 = vmatmul.mubr.f32.gmra.mxu0 %v4866
        %v6148 = vpop.f32.mrf.mxu0
        %v6149 = vadd.f32 %v5924, %v6148
        %v6150 = vpop.f32.mrf.mxu0
        %6151 = vmatprep.mubr.f32.mxu0 0.0
        %6152 = vmatmul.mubr.f32.gmra.mxu0 %v4875
        %v6153 = vpop.f32.mrf.mxu0
        %v6154 = vadd.f32 %v5929, %v6153
        %v6155 = vpop.f32.mrf.mxu0
        %6156 = vmatprep.mubr.f32.mxu0 0.0
        %6157 = vmatmul.mubr.f32.gmra.mxu0 %v4884
        %v6158 = vpop.f32.mrf.mxu0
        %v6159 = vadd.f32 %v5934, %v6158
        %v6160 = vpop.f32.mrf.mxu0
        %6161 = vmatprep.mubr.f32.mxu0 0.0
        %6162 = vmatmul.mubr.f32.gmra.mxu0 %v4893
        %v6163 = vpop.f32.mrf.mxu0
        %v6164 = vadd.f32 %v5939, %v6163
        %v6165 = vpop.f32.mrf.mxu0
        %6166 = vmatprep.mubr.f32.mxu0 0.0
        %6167 = vmatmul.mubr.f32.gmra.mxu0 %v4902
        %v6168 = vpop.f32.mrf.mxu0
        %v6169 = vadd.f32 %v5944, %v6168
        %v6170 = vpop.f32.mrf.mxu0
        %6171 = vdwg.mxu0
        %v6172 = vld [vmem:[%s8] sm:$0x1]
        %v6174 = vlaneseq
        %v6175 = vshrl.u32 %v6174, 7
        %v6176 = vsub.s32 0, %v6175
        %v6177 = vrot.slane %v6172, %v6176
        %v6179 = vmul.f32 %v6014, %v6177
        %v6180 = vmul.f32 %v6019, %v6177
        %v6181 = vmul.f32 %v6024, %v6177
        %v6182 = vmul.f32 %v6029, %v6177
        %v6183 = vmul.f32 %v6034, %v6177
        %v6184 = vmul.f32 %v6039, %v6177
        %v6185 = vmul.f32 %v6044, %v6177
        %v6186 = vmul.f32 %v6049, %v6177
        %v6187 = vmul.f32 %v6054, %v6177
        %v6188 = vmul.f32 %v6059, %v6177
        %v6189 = vmul.f32 %v6064, %v6177
        %v6190 = vmul.f32 %v6069, %v6177
        %v6191 = vmul.f32 %v6074, %v6177
        %v6192 = vmul.f32 %v6079, %v6177
        %v6193 = vmul.f32 %v6084, %v6177
        %v6194 = vmul.f32 %v6089, %v6177
        %v6195 = vmul.f32 %v6094, %v6177
        %v6196 = vmul.f32 %v6099, %v6177
        %v6197 = vmul.f32 %v6104, %v6177
        %v6198 = vmul.f32 %v6109, %v6177
        %v6199 = vmul.f32 %v6114, %v6177
        %v6200 = vmul.f32 %v6119, %v6177
        %v6201 = vmul.f32 %v6124, %v6177
        %v6202 = vmul.f32 %v6129, %v6177
        %v6203 = vmul.f32 %v6134, %v6177
        %v6204 = vmul.f32 %v6139, %v6177
        %v6205 = vmul.f32 %v6144, %v6177
        %v6206 = vmul.f32 %v6149, %v6177
        %v6207 = vmul.f32 %v6154, %v6177
        %v6208 = vmul.f32 %v6159, %v6177
        %v6209 = vmul.f32 %v6164, %v6177
        %v6210 = vmul.f32 %v6169, %v6177
        %v6211 = vld [vmem:[%s9] sm:$0x1]
        %v6213 = vlaneseq
        %v6214 = vshrl.u32 %v6213, 7
        %v6215 = vsub.s32 0, %v6214
        %v6216 = vrot.slane %v6211, %v6215
        %v6218 = vadd.f32 %v6179, %v6216
        %v6219 = vadd.f32 %v6180, %v6216
        %v6220 = vadd.f32 %v6181, %v6216
        %v6221 = vadd.f32 %v6182, %v6216
        %v6222 = vadd.f32 %v6183, %v6216
        %v6223 = vadd.f32 %v6184, %v6216
        %v6224 = vadd.f32 %v6185, %v6216
        %v6225 = vadd.f32 %v6186, %v6216
        %v6226 = vadd.f32 %v6187, %v6216
        %v6227 = vadd.f32 %v6188, %v6216
        %v6228 = vadd.f32 %v6189, %v6216
        %v6229 = vadd.f32 %v6190, %v6216
        %v6230 = vadd.f32 %v6191, %v6216
        %v6231 = vadd.f32 %v6192, %v6216
        %v6232 = vadd.f32 %v6193, %v6216
        %v6233 = vadd.f32 %v6194, %v6216
        %v6234 = vadd.f32 %v6195, %v6216
        %v6235 = vadd.f32 %v6196, %v6216
        %v6236 = vadd.f32 %v6197, %v6216
        %v6237 = vadd.f32 %v6198, %v6216
        %v6238 = vadd.f32 %v6199, %v6216
        %v6239 = vadd.f32 %v6200, %v6216
        %v6240 = vadd.f32 %v6201, %v6216
        %v6241 = vadd.f32 %v6202, %v6216
        %v6242 = vadd.f32 %v6203, %v6216
        %v6243 = vadd.f32 %v6204, %v6216
        %v6244 = vadd.f32 %v6205, %v6216
        %v6245 = vadd.f32 %v6206, %v6216
        %v6246 = vadd.f32 %v6207, %v6216
        %v6247 = vadd.f32 %v6208, %v6216
        %v6248 = vadd.f32 %v6209, %v6216
        %v6249 = vadd.f32 %v6210, %v6216
        %v6250 = vxor.u32 %v6218, 2147483648
        %v6251 = vxor.u32 %v6219, 2147483648
        %v6252 = vxor.u32 %v6220, 2147483648
        %v6253 = vxor.u32 %v6221, 2147483648
        %v6254 = vxor.u32 %v6222, 2147483648
        %v6255 = vxor.u32 %v6223, 2147483648
        %v6256 = vxor.u32 %v6224, 2147483648
        %v6257 = vxor.u32 %v6225, 2147483648
        %v6258 = vxor.u32 %v6226, 2147483648
        %v6259 = vxor.u32 %v6227, 2147483648
        %v6260 = vxor.u32 %v6228, 2147483648
        %v6261 = vxor.u32 %v6229, 2147483648
        %v6262 = vxor.u32 %v6230, 2147483648
        %v6263 = vxor.u32 %v6231, 2147483648
        %v6264 = vxor.u32 %v6232, 2147483648
        %v6265 = vxor.u32 %v6233, 2147483648
        %v6266 = vxor.u32 %v6234, 2147483648
        %v6267 = vxor.u32 %v6235, 2147483648
        %v6268 = vxor.u32 %v6236, 2147483648
        %v6269 = vxor.u32 %v6237, 2147483648
        %v6270 = vxor.u32 %v6238, 2147483648
        %v6271 = vxor.u32 %v6239, 2147483648
        %v6272 = vxor.u32 %v6240, 2147483648
        %v6273 = vxor.u32 %v6241, 2147483648
        %v6274 = vxor.u32 %v6242, 2147483648
        %v6275 = vxor.u32 %v6243, 2147483648
        %v6276 = vxor.u32 %v6244, 2147483648
        %v6277 = vxor.u32 %v6245, 2147483648
        %v6278 = vxor.u32 %v6246, 2147483648
        %v6279 = vxor.u32 %v6247, 2147483648
        %v6280 = vxor.u32 %v6248, 2147483648
        %v6281 = vxor.u32 %v6249, 2147483648
        %v6282 = vmul.f32 %v6250, 1.442695
        %v6283 = vpow.pop %v6282
        %v6284 = vmul.f32 %v6251, 1.442695
        %v6285 = vpow.pop %v6284
        %v6286 = vmul.f32 %v6252, 1.442695
        %v6287 = vpow.pop %v6286
        %v6288 = vmul.f32 %v6253, 1.442695
        %v6289 = vpow.pop %v6288
        %v6290 = vmul.f32 %v6254, 1.442695
        %v6291 = vpow.pop %v6290
        %v6292 = vmul.f32 %v6255, 1.442695
        %v6293 = vpow.pop %v6292
        %v6294 = vmul.f32 %v6256, 1.442695
        %v6295 = vpow.pop %v6294
        %v6296 = vmul.f32 %v6257, 1.442695
        %v6297 = vpow.pop %v6296
        %v6298 = vmul.f32 %v6258, 1.442695
        %v6299 = vpow.pop %v6298
        %v6300 = vmul.f32 %v6259, 1.442695
        %v6301 = vpow.pop %v6300
        %v6302 = vmul.f32 %v6260, 1.442695
        %v6303 = vpow.pop %v6302
        %v6304 = vmul.f32 %v6261, 1.442695
        %v6305 = vpow.pop %v6304
        %v6306 = vmul.f32 %v6262, 1.442695
        %v6307 = vpow.pop %v6306
        %v6308 = vmul.f32 %v6263, 1.442695
        %v6309 = vpow.pop %v6308
        %v6310 = vmul.f32 %v6264, 1.442695
        %v6311 = vpow.pop %v6310
        %v6312 = vmul.f32 %v6265, 1.442695
        %v6313 = vpow.pop %v6312
        %v6314 = vmul.f32 %v6266, 1.442695
        %v6315 = vpow.pop %v6314
        %v6316 = vmul.f32 %v6267, 1.442695
        %v6317 = vpow.pop %v6316
        %v6318 = vmul.f32 %v6268, 1.442695
        %v6319 = vpow.pop %v6318
        %v6320 = vmul.f32 %v6269, 1.442695
        %v6321 = vpow.pop %v6320
        %v6322 = vmul.f32 %v6270, 1.442695
        %v6323 = vpow.pop %v6322
        %v6324 = vmul.f32 %v6271, 1.442695
        %v6325 = vpow.pop %v6324
        %v6326 = vmul.f32 %v6272, 1.442695
        %v6327 = vpow.pop %v6326
        %v6328 = vmul.f32 %v6273, 1.442695
        %v6329 = vpow.pop %v6328
        %v6330 = vmul.f32 %v6274, 1.442695
        %v6331 = vpow.pop %v6330
        %v6332 = vmul.f32 %v6275, 1.442695
        %v6333 = vpow.pop %v6332
        %v6334 = vmul.f32 %v6276, 1.442695
        %v6335 = vpow.pop %v6334
        %v6336 = vmul.f32 %v6277, 1.442695
        %v6337 = vpow.pop %v6336
        %v6338 = vmul.f32 %v6278, 1.442695
        %v6339 = vpow.pop %v6338
        %v6340 = vmul.f32 %v6279, 1.442695
        %v6341 = vpow.pop %v6340
        %v6342 = vmul.f32 %v6280, 1.442695
        %v6343 = vpow.pop %v6342
        %v6344 = vmul.f32 %v6281, 1.442695
        %v6345 = vpow.pop %v6344
        %v6346 = vadd.f32 %v6283, 1.0
        %v6347 = vadd.f32 %v6285, 1.0
        %v6348 = vadd.f32 %v6287, 1.0
        %v6349 = vadd.f32 %v6289, 1.0
        %v6350 = vadd.f32 %v6291, 1.0
        %v6351 = vadd.f32 %v6293, 1.0
        %v6352 = vadd.f32 %v6295, 1.0
        %v6353 = vadd.f32 %v6297, 1.0
        %v6354 = vadd.f32 %v6299, 1.0
        %v6355 = vadd.f32 %v6301, 1.0
        %v6356 = vadd.f32 %v6303, 1.0
        %v6357 = vadd.f32 %v6305, 1.0
        %v6358 = vadd.f32 %v6307, 1.0
        %v6359 = vadd.f32 %v6309, 1.0
        %v6360 = vadd.f32 %v6311, 1.0
        %v6361 = vadd.f32 %v6313, 1.0
        %v6362 = vadd.f32 %v6315, 1.0
        %v6363 = vadd.f32 %v6317, 1.0
        %v6364 = vadd.f32 %v6319, 1.0
        %v6365 = vadd.f32 %v6321, 1.0
        %v6366 = vadd.f32 %v6323, 1.0
        %v6367 = vadd.f32 %v6325, 1.0
        %v6368 = vadd.f32 %v6327, 1.0
        %v6369 = vadd.f32 %v6329, 1.0
        %v6370 = vadd.f32 %v6331, 1.0
        %v6371 = vadd.f32 %v6333, 1.0
        %v6372 = vadd.f32 %v6335, 1.0
        %v6373 = vadd.f32 %v6337, 1.0
        %v6374 = vadd.f32 %v6339, 1.0
        %v6375 = vadd.f32 %v6341, 1.0
        %v6376 = vadd.f32 %v6343, 1.0
        %v6377 = vadd.f32 %v6345, 1.0
        %v6378 = vrcp.pop %v6346
        %v6379 = vmul.f32 1.0, %v6378
        %v6380 = vrcp.pop %v6347
        %v6381 = vmul.f32 1.0, %v6380
        %v6382 = vrcp.pop %v6348
        %v6383 = vmul.f32 1.0, %v6382
        %v6384 = vrcp.pop %v6349
        %v6385 = vmul.f32 1.0, %v6384
        %v6386 = vrcp.pop %v6350
        %v6387 = vmul.f32 1.0, %v6386
        %v6388 = vrcp.pop %v6351
        %v6389 = vmul.f32 1.0, %v6388
        %v6390 = vrcp.pop %v6352
        %v6391 = vmul.f32 1.0, %v6390
        %v6392 = vrcp.pop %v6353
        %v6393 = vmul.f32 1.0, %v6392
        %v6394 = vrcp.pop %v6354
        %v6395 = vmul.f32 1.0, %v6394
        %v6396 = vrcp.pop %v6355
        %v6397 = vmul.f32 1.0, %v6396
        %v6398 = vrcp.pop %v6356
        %v6399 = vmul.f32 1.0, %v6398
        %v6400 = vrcp.pop %v6357
        %v6401 = vmul.f32 1.0, %v6400
        %v6402 = vrcp.pop %v6358
        %v6403 = vmul.f32 1.0, %v6402
        %v6404 = vrcp.pop %v6359
        %v6405 = vmul.f32 1.0, %v6404
        %v6406 = vrcp.pop %v6360
        %v6407 = vmul.f32 1.0, %v6406
        %v6408 = vrcp.pop %v6361
        %v6409 = vmul.f32 1.0, %v6408
        %v6410 = vrcp.pop %v6362
        %v6411 = vmul.f32 1.0, %v6410
        %v6412 = vrcp.pop %v6363
        %v6413 = vmul.f32 1.0, %v6412
        %v6414 = vrcp.pop %v6364
        %v6415 = vmul.f32 1.0, %v6414
        %v6416 = vrcp.pop %v6365
        %v6417 = vmul.f32 1.0, %v6416
        %v6418 = vrcp.pop %v6366
        %v6419 = vmul.f32 1.0, %v6418
        %v6420 = vrcp.pop %v6367
        %v6421 = vmul.f32 1.0, %v6420
        %v6422 = vrcp.pop %v6368
        %v6423 = vmul.f32 1.0, %v6422
        %v6424 = vrcp.pop %v6369
        %v6425 = vmul.f32 1.0, %v6424
        %v6426 = vrcp.pop %v6370
        %v6427 = vmul.f32 1.0, %v6426
        %v6428 = vrcp.pop %v6371
        %v6429 = vmul.f32 1.0, %v6428
        %v6430 = vrcp.pop %v6372
        %v6431 = vmul.f32 1.0, %v6430
        %v6432 = vrcp.pop %v6373
        %v6433 = vmul.f32 1.0, %v6432
        %v6434 = vrcp.pop %v6374
        %v6435 = vmul.f32 1.0, %v6434
        %v6436 = vrcp.pop %v6375
        %v6437 = vmul.f32 1.0, %v6436
        %v6438 = vrcp.pop %v6376
        %v6439 = vmul.f32 1.0, %v6438
        %v6440 = vrcp.pop %v6377
        %v6441 = vmul.f32 1.0, %v6440
        %v6442 = vmul.f32 %v6218, %v6379
        %v6443 = vmul.f32 %v6219, %v6381
        %v6444 = vmul.f32 %v6220, %v6383
        %v6445 = vmul.f32 %v6221, %v6385
        %v6446 = vmul.f32 %v6222, %v6387
        %v6447 = vmul.f32 %v6223, %v6389
        %v6448 = vmul.f32 %v6224, %v6391
        %v6449 = vmul.f32 %v6225, %v6393
        %v6450 = vmul.f32 %v6226, %v6395
        %v6451 = vmul.f32 %v6227, %v6397
        %v6452 = vmul.f32 %v6228, %v6399
        %v6453 = vmul.f32 %v6229, %v6401
        %v6454 = vmul.f32 %v6230, %v6403
        %v6455 = vmul.f32 %v6231, %v6405
        %v6456 = vmul.f32 %v6232, %v6407
        %v6457 = vmul.f32 %v6233, %v6409
        %v6458 = vmul.f32 %v6234, %v6411
        %v6459 = vmul.f32 %v6235, %v6413
        %v6460 = vmul.f32 %v6236, %v6415
        %v6461 = vmul.f32 %v6237, %v6417
        %v6462 = vmul.f32 %v6238, %v6419
        %v6463 = vmul.f32 %v6239, %v6421
        %v6464 = vmul.f32 %v6240, %v6423
        %v6465 = vmul.f32 %v6241, %v6425
        %v6466 = vmul.f32 %v6242, %v6427
        %v6467 = vmul.f32 %v6243, %v6429
        %v6468 = vmul.f32 %v6244, %v6431
        %v6469 = vmul.f32 %v6245, %v6433
        %v6470 = vmul.f32 %v6246, %v6435
        %v6471 = vmul.f32 %v6247, %v6437
        %v6472 = vmul.f32 %v6248, %v6439
        %v6473 = vmul.f32 %v6249, %v6441
        %6474 = vst [vmem:[#allocation2 + $0x10] sm:$0xff] %v6442
        %6475 = vst [vmem:[#allocation2 + $0x28] sm:$0xff] %v6443
        %6476 = vst [vmem:[#allocation2 + $0x40] sm:$0xff] %v6444
        %6477 = vst [vmem:[#allocation2 + $0x58] sm:$0xff] %v6445
        %6478 = vst [vmem:[#allocation2 + $0x70] sm:$0xff] %v6446
        %6479 = vst [vmem:[#allocation2 + $0x88] sm:$0xff] %v6447
        %6480 = vst [vmem:[#allocation2 + $0xa0] sm:$0xff] %v6448
        %6481 = vst [vmem:[#allocation2 + $0xb8] sm:$0xff] %v6449
        %6482 = vst [vmem:[#allocation2 + $0xd0] sm:$0xff] %v6450
        %6483 = vst [vmem:[#allocation2 + $0xe8] sm:$0xff] %v6451
        %6484 = vst [vmem:[#allocation2 + $0x100] sm:$0xff] %v6452
        %6485 = vst [vmem:[#allocation2 + $0x118] sm:$0xff] %v6453
        %6486 = vst [vmem:[#allocation2 + $0x130] sm:$0xff] %v6454
        %6487 = vst [vmem:[#allocation2 + $0x148] sm:$0xff] %v6455
        %6488 = vst [vmem:[#allocation2 + $0x160] sm:$0xff] %v6456
        %6489 = vst [vmem:[#allocation2 + $0x178] sm:$0xff] %v6457
        %6490 = vst [vmem:[#allocation2 + $0x190] sm:$0xff] %v6458
        %6491 = vst [vmem:[#allocation2 + $0x1a8] sm:$0xff] %v6459
        %6492 = vst [vmem:[#allocation2 + $0x1c0] sm:$0xff] %v6460
        %6493 = vst [vmem:[#allocation2 + $0x1d8] sm:$0xff] %v6461
        %6494 = vst [vmem:[#allocation2 + $0x1f0] sm:$0xff] %v6462
        %6495 = vst [vmem:[#allocation2 + $0x208] sm:$0xff] %v6463
        %6496 = vst [vmem:[#allocation2 + $0x220] sm:$0xff] %v6464
        %6497 = vst [vmem:[#allocation2 + $0x238] sm:$0xff] %v6465
        %6498 = vst [vmem:[#allocation2 + $0x250] sm:$0xff] %v6466
        %6499 = vst [vmem:[#allocation2 + $0x268] sm:$0xff] %v6467
        %6500 = vst [vmem:[#allocation2 + $0x280] sm:$0xff] %v6468
        %6501 = vst [vmem:[#allocation2 + $0x298] sm:$0xff] %v6469
        %6502 = vst [vmem:[#allocation2 + $0x2b0] sm:$0xff] %v6470
        %6503 = vst [vmem:[#allocation2 + $0x2c8] sm:$0xff] %v6471
        %6504 = vst [vmem:[#allocation2 + $0x2e0] sm:$0xff] %v6472
        %6505 = vst [vmem:[#allocation2 + $0x2f8] sm:$0xff] %v6473
        %v6506 = vld [vmem:[#allocation2] sm:$0xff]
        %v6507 = vld [vmem:[#allocation2 + $0x8] sm:$0xff]
        %v6508 = vld [vmem:[#allocation2 + $0x10] sm:$0xff]
        %v6509 = vld [vmem:[#allocation2 + $0x18] sm:$0xff]
        %v6510 = vld [vmem:[#allocation2 + $0x20] sm:$0xff]
        %v6511 = vld [vmem:[#allocation2 + $0x28] sm:$0xff]
        %v6512 = vld [vmem:[#allocation2 + $0x30] sm:$0xff]
        %v6513 = vld [vmem:[#allocation2 + $0x38] sm:$0xff]
        %v6514 = vld [vmem:[#allocation2 + $0x40] sm:$0xff]
        %v6515 = vld [vmem:[#allocation2 + $0x48] sm:$0xff]
        %v6516 = vld [vmem:[#allocation2 + $0x50] sm:$0xff]
        %v6517 = vld [vmem:[#allocation2 + $0x58] sm:$0xff]
        %v6518 = vld [vmem:[#allocation2 + $0x60] sm:$0xff]
        %v6519 = vld [vmem:[#allocation2 + $0x68] sm:$0xff]
        %v6520 = vld [vmem:[#allocation2 + $0x70] sm:$0xff]
        %v6521 = vld [vmem:[#allocation2 + $0x78] sm:$0xff]
        %v6522 = vld [vmem:[#allocation2 + $0x80] sm:$0xff]
        %v6523 = vld [vmem:[#allocation2 + $0x88] sm:$0xff]
        %v6524 = vld [vmem:[#allocation2 + $0x90] sm:$0xff]
        %v6525 = vld [vmem:[#allocation2 + $0x98] sm:$0xff]
        %v6526 = vld [vmem:[#allocation2 + $0xa0] sm:$0xff]
        %v6527 = vld [vmem:[#allocation2 + $0xa8] sm:$0xff]
        %v6528 = vld [vmem:[#allocation2 + $0xb0] sm:$0xff]
        %v6529 = vld [vmem:[#allocation2 + $0xb8] sm:$0xff]
        %v6530 = vld [vmem:[#allocation2 + $0xc0] sm:$0xff]
        %v6531 = vld [vmem:[#allocation2 + $0xc8] sm:$0xff]
        %v6532 = vld [vmem:[#allocation2 + $0xd0] sm:$0xff]
        %v6533 = vld [vmem:[#allocation2 + $0xd8] sm:$0xff]
        %v6534 = vld [vmem:[#allocation2 + $0xe0] sm:$0xff]
        %v6535 = vld [vmem:[#allocation2 + $0xe8] sm:$0xff]
        %v6536 = vld [vmem:[#allocation2 + $0xf0] sm:$0xff]
        %v6537 = vld [vmem:[#allocation2 + $0xf8] sm:$0xff]
        %v6538 = vld [vmem:[#allocation2 + $0x100] sm:$0xff]
        %v6539 = vld [vmem:[#allocation2 + $0x108] sm:$0xff]
        %v6540 = vld [vmem:[#allocation2 + $0x110] sm:$0xff]
        %v6541 = vld [vmem:[#allocation2 + $0x118] sm:$0xff]
        %v6542 = vld [vmem:[#allocation2 + $0x120] sm:$0xff]
        %v6543 = vld [vmem:[#allocation2 + $0x128] sm:$0xff]
        %v6544 = vld [vmem:[#allocation2 + $0x130] sm:$0xff]
        %v6545 = vld [vmem:[#allocation2 + $0x138] sm:$0xff]
        %v6546 = vld [vmem:[#allocation2 + $0x140] sm:$0xff]
        %v6547 = vld [vmem:[#allocation2 + $0x148] sm:$0xff]
        %v6548 = vld [vmem:[#allocation2 + $0x150] sm:$0xff]
        %v6549 = vld [vmem:[#allocation2 + $0x158] sm:$0xff]
        %v6550 = vld [vmem:[#allocation2 + $0x160] sm:$0xff]
        %v6551 = vld [vmem:[#allocation2 + $0x168] sm:$0xff]
        %v6552 = vld [vmem:[#allocation2 + $0x170] sm:$0xff]
        %v6553 = vld [vmem:[#allocation2 + $0x178] sm:$0xff]
        %v6554 = vld [vmem:[#allocation2 + $0x180] sm:$0xff]
        %v6555 = vld [vmem:[#allocation2 + $0x188] sm:$0xff]
        %v6556 = vld [vmem:[#allocation2 + $0x190] sm:$0xff]
        %v6557 = vld [vmem:[#allocation2 + $0x198] sm:$0xff]
        %v6558 = vld [vmem:[#allocation2 + $0x1a0] sm:$0xff]
        %v6559 = vld [vmem:[#allocation2 + $0x1a8] sm:$0xff]
        %v6560 = vld [vmem:[#allocation2 + $0x1b0] sm:$0xff]
        %v6561 = vld [vmem:[#allocation2 + $0x1b8] sm:$0xff]
        %v6562 = vld [vmem:[#allocation2 + $0x1c0] sm:$0xff]
        %v6563 = vld [vmem:[#allocation2 + $0x1c8] sm:$0xff]
        %v6564 = vld [vmem:[#allocation2 + $0x1d0] sm:$0xff]
        %v6565 = vld [vmem:[#allocation2 + $0x1d8] sm:$0xff]
        %v6566 = vld [vmem:[#allocation2 + $0x1e0] sm:$0xff]
        %v6567 = vld [vmem:[#allocation2 + $0x1e8] sm:$0xff]
        %v6568 = vld [vmem:[#allocation2 + $0x1f0] sm:$0xff]
        %v6569 = vld [vmem:[#allocation2 + $0x1f8] sm:$0xff]
        %v6570 = vld [vmem:[#allocation2 + $0x200] sm:$0xff]
        %v6571 = vld [vmem:[#allocation2 + $0x208] sm:$0xff]
        %v6572 = vld [vmem:[#allocation2 + $0x210] sm:$0xff]
        %v6573 = vld [vmem:[#allocation2 + $0x218] sm:$0xff]
        %v6574 = vld [vmem:[#allocation2 + $0x220] sm:$0xff]
        %v6575 = vld [vmem:[#allocation2 + $0x228] sm:$0xff]
        %v6576 = vld [vmem:[#allocation2 + $0x230] sm:$0xff]
        %v6577 = vld [vmem:[#allocation2 + $0x238] sm:$0xff]
        %v6578 = vld [vmem:[#allocation2 + $0x240] sm:$0xff]
        %v6579 = vld [vmem:[#allocation2 + $0x248] sm:$0xff]
        %v6580 = vld [vmem:[#allocation2 + $0x250] sm:$0xff]
        %v6581 = vld [vmem:[#allocation2 + $0x258] sm:$0xff]
        %v6582 = vld [vmem:[#allocation2 + $0x260] sm:$0xff]
        %v6583 = vld [vmem:[#allocation2 + $0x268] sm:$0xff]
        %v6584 = vld [vmem:[#allocation2 + $0x270] sm:$0xff]
        %v6585 = vld [vmem:[#allocation2 + $0x278] sm:$0xff]
        %v6586 = vld [vmem:[#allocation2 + $0x280] sm:$0xff]
        %v6587 = vld [vmem:[#allocation2 + $0x288] sm:$0xff]
        %v6588 = vld [vmem:[#allocation2 + $0x290] sm:$0xff]
        %v6589 = vld [vmem:[#allocation2 + $0x298] sm:$0xff]
        %v6590 = vld [vmem:[#allocation2 + $0x2a0] sm:$0xff]
        %v6591 = vld [vmem:[#allocation2 + $0x2a8] sm:$0xff]
        %v6592 = vld [vmem:[#allocation2 + $0x2b0] sm:$0xff]
        %v6593 = vld [vmem:[#allocation2 + $0x2b8] sm:$0xff]
        %v6594 = vld [vmem:[#allocation2 + $0x2c0] sm:$0xff]
        %v6595 = vld [vmem:[#allocation2 + $0x2c8] sm:$0xff]
        %v6596 = vld [vmem:[#allocation2 + $0x2d0] sm:$0xff]
        %v6597 = vld [vmem:[#allocation2 + $0x2d8] sm:$0xff]
        %v6598 = vld [vmem:[#allocation2 + $0x2e0] sm:$0xff]
        %v6599 = vld [vmem:[#allocation2 + $0x2e8] sm:$0xff]
        %v6600 = vld [vmem:[#allocation2 + $0x2f0] sm:$0xff]
        %v6601 = vld [vmem:[#allocation2 + $0x2f8] sm:$0xff]
        %v6602 = vld [vmem:[%s10] sm:$0xff]
        %v6603 = vld [vmem:[%s10 + $0x8] sm:$0xff]
        %v6604 = vld [vmem:[%s10 + $0x10] sm:$0xff]
        %v6605 = vld [vmem:[%s10 + $0x18] sm:$0xff]
        %v6606 = vld [vmem:[%s10 + $0x20] sm:$0xff]
        %v6607 = vld [vmem:[%s10 + $0x28] sm:$0xff]
        %v6608 = vld [vmem:[%s10 + $0x30] sm:$0xff]
        %v6609 = vld [vmem:[%s10 + $0x38] sm:$0xff]
        %v6610 = vld [vmem:[%s10 + $0x40] sm:$0xff]
        %v6611 = vld [vmem:[%s10 + $0x48] sm:$0xff]
        %v6612 = vld [vmem:[%s10 + $0x50] sm:$0xff]
        %v6613 = vld [vmem:[%s10 + $0x58] sm:$0xff]
        %v6614 = vld [vmem:[%s10 + $0x60] sm:$0xff]
        %v6615 = vld [vmem:[%s10 + $0x68] sm:$0xff]
        %v6616 = vld [vmem:[%s10 + $0x70] sm:$0xff]
        %v6617 = vld [vmem:[%s10 + $0x78] sm:$0xff]
        %v6618 = vld [vmem:[%s10 + $0x80] sm:$0xff]
        %v6619 = vld [vmem:[%s10 + $0x88] sm:$0xff]
        %v6620 = vld [vmem:[%s10 + $0x90] sm:$0xff]
        %v6621 = vld [vmem:[%s10 + $0x98] sm:$0xff]
        %v6622 = vld [vmem:[%s10 + $0xa0] sm:$0xff]
        %v6623 = vld [vmem:[%s10 + $0xa8] sm:$0xff]
        %v6624 = vld [vmem:[%s10 + $0xb0] sm:$0xff]
        %v6625 = vld [vmem:[%s10 + $0xb8] sm:$0xff]
        %v6626 = vld [vmem:[%s10 + $0xc0] sm:$0xff]
        %v6627 = vld [vmem:[%s10 + $0xc8] sm:$0xff]
        %v6628 = vld [vmem:[%s10 + $0xd0] sm:$0xff]
        %v6629 = vld [vmem:[%s10 + $0xd8] sm:$0xff]
        %v6630 = vld [vmem:[%s10 + $0xe0] sm:$0xff]
        %v6631 = vld [vmem:[%s10 + $0xe8] sm:$0xff]
        %v6632 = vld [vmem:[%s10 + $0xf0] sm:$0xff]
        %v6633 = vld [vmem:[%s10 + $0xf8] sm:$0xff]
        %v6634 = vld [vmem:[%s10 + $0x100] sm:$0xff]
        %v6635 = vld [vmem:[%s10 + $0x108] sm:$0xff]
        %v6636 = vld [vmem:[%s10 + $0x110] sm:$0xff]
        %v6637 = vld [vmem:[%s10 + $0x118] sm:$0xff]
        %v6638 = vld [vmem:[%s10 + $0x120] sm:$0xff]
        %v6639 = vld [vmem:[%s10 + $0x128] sm:$0xff]
        %v6640 = vld [vmem:[%s10 + $0x130] sm:$0xff]
        %v6641 = vld [vmem:[%s10 + $0x138] sm:$0xff]
        %v6642 = vld [vmem:[%s10 + $0x140] sm:$0xff]
        %v6643 = vld [vmem:[%s10 + $0x148] sm:$0xff]
        %v6644 = vld [vmem:[%s10 + $0x150] sm:$0xff]
        %v6645 = vld [vmem:[%s10 + $0x158] sm:$0xff]
        %v6646 = vld [vmem:[%s10 + $0x160] sm:$0xff]
        %v6647 = vld [vmem:[%s10 + $0x168] sm:$0xff]
        %v6648 = vld [vmem:[%s10 + $0x170] sm:$0xff]
        %v6649 = vld [vmem:[%s10 + $0x178] sm:$0xff]
        %6650 = vmatprep.subr.mxu0 0.0
        %6651 = vmatpush1.msra.mxu0 %v6617
        %6652 = vmatprep.subr.mxu0 0.0
        %6653 = vmatpush1.msra.mxu0 %v6616
        %6654 = vmatprep.subr.mxu0 0.0
        %6655 = vmatpush1.msra.mxu0 %v6615
        %6656 = vmatprep.subr.mxu0 0.0
        %6657 = vmatpush1.msra.mxu0 %v6614
        %6658 = vmatprep.subr.mxu0 0.0
        %6659 = vmatpush1.msra.mxu0 %v6613
        %6660 = vmatprep.subr.mxu0 0.0
        %6661 = vmatpush1.msra.mxu0 %v6612
        %6662 = vmatprep.subr.mxu0 0.0
        %6663 = vmatpush1.msra.mxu0 %v6611
        %6664 = vmatprep.subr.mxu0 0.0
        %6665 = vmatpush1.msra.mxu0 %v6610
        %6666 = vmatprep.subr.mxu0 0.0
        %6667 = vmatpush1.msra.mxu0 %v6609
        %6668 = vmatprep.subr.mxu0 0.0
        %6669 = vmatpush1.msra.mxu0 %v6608
        %6670 = vmatprep.subr.mxu0 0.0
        %6671 = vmatpush1.msra.mxu0 %v6607
        %6672 = vmatprep.subr.mxu0 0.0
        %6673 = vmatpush1.msra.mxu0 %v6606
        %6674 = vmatprep.subr.mxu0 0.0
        %6675 = vmatpush1.msra.mxu0 %v6605
        %6676 = vmatprep.subr.mxu0 0.0
        %6677 = vmatpush1.msra.mxu0 %v6604
        %6678 = vmatprep.subr.mxu0 0.0
        %6679 = vmatpush1.msra.mxu0 %v6603
        %6680 = vmatprep.subr.mxu0 0.0
        %6681 = vmatpush1.msra.mxu0 %v6602
        %6682 = vmatprep.subr.mxu0 0.0
        %6683 = vmatpush2.msra.mxu0 %v6633
        %6684 = vmatprep.subr.mxu0 0.0
        %6685 = vmatpush2.msra.mxu0 %v6632
        %6686 = vmatprep.subr.mxu0 0.0
        %6687 = vmatpush2.msra.mxu0 %v6631
        %6688 = vmatprep.subr.mxu0 0.0
        %6689 = vmatpush2.msra.mxu0 %v6630
        %6690 = vmatprep.subr.mxu0 0.0
        %6691 = vmatpush2.msra.mxu0 %v6629
        %6692 = vmatprep.subr.mxu0 0.0
        %6693 = vmatpush2.msra.mxu0 %v6628
        %6694 = vmatprep.subr.mxu0 0.0
        %6695 = vmatpush2.msra.mxu0 %v6627
        %6696 = vmatprep.subr.mxu0 0.0
        %6697 = vmatpush2.msra.mxu0 %v6626
        %6698 = vmatprep.subr.mxu0 0.0
        %6699 = vmatpush2.msra.mxu0 %v6625
        %6700 = vmatprep.subr.mxu0 0.0
        %6701 = vmatpush2.msra.mxu0 %v6624
        %6702 = vmatprep.subr.mxu0 0.0
        %6703 = vmatpush2.msra.mxu0 %v6623
        %6704 = vmatprep.subr.mxu0 0.0
        %6705 = vmatpush2.msra.mxu0 %v6622
        %6706 = vmatprep.subr.mxu0 0.0
        %6707 = vmatpush2.msra.mxu0 %v6621
        %6708 = vmatprep.subr.mxu0 0.0
        %6709 = vmatpush2.msra.mxu0 %v6620
        %6710 = vmatprep.subr.mxu0 0.0
        %6711 = vmatpush2.msra.mxu0 %v6619
        %6712 = vmatprep.subr.mxu0 0.0
        %6713 = vmatpush2.msra.mxu0 %v6618
        %6714 = vmatprep.mubr.f32.mxu0 %v6507
        %6715 = vmatmul.mubr.f32.gmra.mxu0 %v6506
        %v6716 = vpop.f32.mrf.mxu0
        %v6717 = vadd.f32 0.0, %v6716
        %v6718 = vpop.f32.mrf.mxu0
        %6719 = vmatprep.mubr.f32.mxu0 %v6510
        %6720 = vmatmul.mubr.f32.gmra.mxu0 %v6509
        %v6721 = vpop.f32.mrf.mxu0
        %v6722 = vadd.f32 0.0, %v6721
        %v6723 = vpop.f32.mrf.mxu0
        %6724 = vmatprep.mubr.f32.mxu0 %v6513
        %6725 = vmatmul.mubr.f32.gmra.mxu0 %v6512
        %v6726 = vpop.f32.mrf.mxu0
        %v6727 = vadd.f32 0.0, %v6726
        %v6728 = vpop.f32.mrf.mxu0
        %6729 = vmatprep.mubr.f32.mxu0 %v6516
        %6730 = vmatmul.mubr.f32.gmra.mxu0 %v6515
        %v6731 = vpop.f32.mrf.mxu0
        %v6732 = vadd.f32 0.0, %v6731
        %v6733 = vpop.f32.mrf.mxu0
        %6734 = vmatprep.mubr.f32.mxu0 %v6519
        %6735 = vmatmul.mubr.f32.gmra.mxu0 %v6518
        %v6736 = vpop.f32.mrf.mxu0
        %v6737 = vadd.f32 0.0, %v6736
        %v6738 = vpop.f32.mrf.mxu0
        %6739 = vmatprep.mubr.f32.mxu0 %v6522
        %6740 = vmatmul.mubr.f32.gmra.mxu0 %v6521
        %v6741 = vpop.f32.mrf.mxu0
        %v6742 = vadd.f32 0.0, %v6741
        %v6743 = vpop.f32.mrf.mxu0
        %6744 = vmatprep.mubr.f32.mxu0 %v6525
        %6745 = vmatmul.mubr.f32.gmra.mxu0 %v6524
        %v6746 = vpop.f32.mrf.mxu0
        %v6747 = vadd.f32 0.0, %v6746
        %v6748 = vpop.f32.mrf.mxu0
        %6749 = vmatprep.mubr.f32.mxu0 %v6528
        %6750 = vmatmul.mubr.f32.gmra.mxu0 %v6527
        %v6751 = vpop.f32.mrf.mxu0
        %v6752 = vadd.f32 0.0, %v6751
        %v6753 = vpop.f32.mrf.mxu0
        %6754 = vmatprep.mubr.f32.mxu0 %v6531
        %6755 = vmatmul.mubr.f32.gmra.mxu0 %v6530
        %v6756 = vpop.f32.mrf.mxu0
        %v6757 = vadd.f32 0.0, %v6756
        %v6758 = vpop.f32.mrf.mxu0
        %6759 = vmatprep.mubr.f32.mxu0 %v6534
        %6760 = vmatmul.mubr.f32.gmra.mxu0 %v6533
        %v6761 = vpop.f32.mrf.mxu0
        %v6762 = vadd.f32 0.0, %v6761
        %v6763 = vpop.f32.mrf.mxu0
        %6764 = vmatprep.mubr.f32.mxu0 %v6537
        %6765 = vmatmul.mubr.f32.gmra.mxu0 %v6536
        %v6766 = vpop.f32.mrf.mxu0
        %v6767 = vadd.f32 0.0, %v6766
        %v6768 = vpop.f32.mrf.mxu0
        %6769 = vmatprep.mubr.f32.mxu0 %v6540
        %6770 = vmatmul.mubr.f32.gmra.mxu0 %v6539
        %v6771 = vpop.f32.mrf.mxu0
        %v6772 = vadd.f32 0.0, %v6771
        %v6773 = vpop.f32.mrf.mxu0
        %6774 = vmatprep.mubr.f32.mxu0 %v6543
        %6775 = vmatmul.mubr.f32.gmra.mxu0 %v6542
        %v6776 = vpop.f32.mrf.mxu0
        %v6777 = vadd.f32 0.0, %v6776
        %v6778 = vpop.f32.mrf.mxu0
        %6779 = vmatprep.mubr.f32.mxu0 %v6546
        %6780 = vmatmul.mubr.f32.gmra.mxu0 %v6545
        %v6781 = vpop.f32.mrf.mxu0
        %v6782 = vadd.f32 0.0, %v6781
        %v6783 = vpop.f32.mrf.mxu0
        %6784 = vmatprep.mubr.f32.mxu0 %v6549
        %6785 = vmatmul.mubr.f32.gmra.mxu0 %v6548
        %v6786 = vpop.f32.mrf.mxu0
        %v6787 = vadd.f32 0.0, %v6786
        %v6788 = vpop.f32.mrf.mxu0
        %6789 = vmatprep.mubr.f32.mxu0 %v6552
        %6790 = vmatmul.mubr.f32.gmra.mxu0 %v6551
        %v6791 = vpop.f32.mrf.mxu0
        %v6792 = vadd.f32 0.0, %v6791
        %v6793 = vpop.f32.mrf.mxu0
        %6794 = vmatprep.mubr.f32.mxu0 %v6555
        %6795 = vmatmul.mubr.f32.gmra.mxu0 %v6554
        %v6796 = vpop.f32.mrf.mxu0
        %v6797 = vadd.f32 0.0, %v6796
        %v6798 = vpop.f32.mrf.mxu0
        %6799 = vmatprep.mubr.f32.mxu0 %v6558
        %6800 = vmatmul.mubr.f32.gmra.mxu0 %v6557
        %v6801 = vpop.f32.mrf.mxu0
        %v6802 = vadd.f32 0.0, %v6801
        %v6803 = vpop.f32.mrf.mxu0
        %6804 = vmatprep.mubr.f32.mxu0 %v6561
        %6805 = vmatmul.mubr.f32.gmra.mxu0 %v6560
        %v6806 = vpop.f32.mrf.mxu0
        %v6807 = vadd.f32 0.0, %v6806
        %v6808 = vpop.f32.mrf.mxu0
        %6809 = vmatprep.mubr.f32.mxu0 %v6564
        %6810 = vmatmul.mubr.f32.gmra.mxu0 %v6563
        %v6811 = vpop.f32.mrf.mxu0
        %v6812 = vadd.f32 0.0, %v6811
        %v6813 = vpop.f32.mrf.mxu0
        %6814 = vmatprep.mubr.f32.mxu0 %v6567
        %6815 = vmatmul.mubr.f32.gmra.mxu0 %v6566
        %v6816 = vpop.f32.mrf.mxu0
        %v6817 = vadd.f32 0.0, %v6816
        %v6818 = vpop.f32.mrf.mxu0
        %6819 = vmatprep.mubr.f32.mxu0 %v6570
        %6820 = vmatmul.mubr.f32.gmra.mxu0 %v6569
        %v6821 = vpop.f32.mrf.mxu0
        %v6822 = vadd.f32 0.0, %v6821
        %v6823 = vpop.f32.mrf.mxu0
        %6824 = vmatprep.mubr.f32.mxu0 %v6573
        %6825 = vmatmul.mubr.f32.gmra.mxu0 %v6572
        %v6826 = vpop.f32.mrf.mxu0
        %v6827 = vadd.f32 0.0, %v6826
        %v6828 = vpop.f32.mrf.mxu0
        %6829 = vmatprep.mubr.f32.mxu0 %v6576
        %6830 = vmatmul.mubr.f32.gmra.mxu0 %v6575
        %v6831 = vpop.f32.mrf.mxu0
        %v6832 = vadd.f32 0.0, %v6831
        %v6833 = vpop.f32.mrf.mxu0
        %6834 = vmatprep.mubr.f32.mxu0 %v6579
        %6835 = vmatmul.mubr.f32.gmra.mxu0 %v6578
        %v6836 = vpop.f32.mrf.mxu0
        %v6837 = vadd.f32 0.0, %v6836
        %v6838 = vpop.f32.mrf.mxu0
        %6839 = vmatprep.mubr.f32.mxu0 %v6582
        %6840 = vmatmul.mubr.f32.gmra.mxu0 %v6581
        %v6841 = vpop.f32.mrf.mxu0
        %v6842 = vadd.f32 0.0, %v6841
        %v6843 = vpop.f32.mrf.mxu0
        %6844 = vmatprep.mubr.f32.mxu0 %v6585
        %6845 = vmatmul.mubr.f32.gmra.mxu0 %v6584
        %v6846 = vpop.f32.mrf.mxu0
        %v6847 = vadd.f32 0.0, %v6846
        %v6848 = vpop.f32.mrf.mxu0
        %6849 = vmatprep.mubr.f32.mxu0 %v6588
        %6850 = vmatmul.mubr.f32.gmra.mxu0 %v6587
        %v6851 = vpop.f32.mrf.mxu0
        %v6852 = vadd.f32 0.0, %v6851
        %v6853 = vpop.f32.mrf.mxu0
        %6854 = vmatprep.mubr.f32.mxu0 %v6591
        %6855 = vmatmul.mubr.f32.gmra.mxu0 %v6590
        %v6856 = vpop.f32.mrf.mxu0
        %v6857 = vadd.f32 0.0, %v6856
        %v6858 = vpop.f32.mrf.mxu0
        %6859 = vmatprep.mubr.f32.mxu0 %v6594
        %6860 = vmatmul.mubr.f32.gmra.mxu0 %v6593
        %v6861 = vpop.f32.mrf.mxu0
        %v6862 = vadd.f32 0.0, %v6861
        %v6863 = vpop.f32.mrf.mxu0
        %6864 = vmatprep.mubr.f32.mxu0 %v6597
        %6865 = vmatmul.mubr.f32.gmra.mxu0 %v6596
        %v6866 = vpop.f32.mrf.mxu0
        %v6867 = vadd.f32 0.0, %v6866
        %v6868 = vpop.f32.mrf.mxu0
        %6869 = vmatprep.mubr.f32.mxu0 %v6600
        %6870 = vmatmul.mubr.f32.gmra.mxu0 %v6599
        %v6871 = vpop.f32.mrf.mxu0
        %v6872 = vadd.f32 0.0, %v6871
        %v6873 = vpop.f32.mrf.mxu0
        %6874 = vdwg.mxu0
        %6875 = vmatprep.subr.mxu0 0.0
        %6876 = vmatpush1.msra.mxu0 %v6649
        %6877 = vmatprep.subr.mxu0 0.0
        %6878 = vmatpush1.msra.mxu0 %v6648
        %6879 = vmatprep.subr.mxu0 0.0
        %6880 = vmatpush1.msra.mxu0 %v6647
        %6881 = vmatprep.subr.mxu0 0.0
        %6882 = vmatpush1.msra.mxu0 %v6646
        %6883 = vmatprep.subr.mxu0 0.0
        %6884 = vmatpush1.msra.mxu0 %v6645
        %6885 = vmatprep.subr.mxu0 0.0
        %6886 = vmatpush1.msra.mxu0 %v6644
        %6887 = vmatprep.subr.mxu0 0.0
        %6888 = vmatpush1.msra.mxu0 %v6643
        %6889 = vmatprep.subr.mxu0 0.0
        %6890 = vmatpush1.msra.mxu0 %v6642
        %6891 = vmatprep.subr.mxu0 0.0
        %6892 = vmatpush1.msra.mxu0 %v6641
        %6893 = vmatprep.subr.mxu0 0.0
        %6894 = vmatpush1.msra.mxu0 %v6640
        %6895 = vmatprep.subr.mxu0 0.0
        %6896 = vmatpush1.msra.mxu0 %v6639
        %6897 = vmatprep.subr.mxu0 0.0
        %6898 = vmatpush1.msra.mxu0 %v6638
        %6899 = vmatprep.subr.mxu0 0.0
        %6900 = vmatpush1.msra.mxu0 %v6637
        %6901 = vmatprep.subr.mxu0 0.0
        %6902 = vmatpush1.msra.mxu0 %v6636
        %6903 = vmatprep.subr.mxu0 0.0
        %6904 = vmatpush1.msra.mxu0 %v6635
        %6905 = vmatprep.subr.mxu0 0.0
        %6906 = vmatpush1.msra.mxu0 %v6634
        %6907 = vmatprep.subr.mxu0 0.0
        %6908 = vmatpush2.msra.mxu0 0.0
        %6909 = vmatprep.subr.mxu0 0.0
        %6910 = vmatpush2.msra.mxu0 0.0
        %6911 = vmatprep.subr.mxu0 0.0
        %6912 = vmatpush2.msra.mxu0 0.0
        %6913 = vmatprep.subr.mxu0 0.0
        %6914 = vmatpush2.msra.mxu0 0.0
        %6915 = vmatprep.subr.mxu0 0.0
        %6916 = vmatpush2.msra.mxu0 0.0
        %6917 = vmatprep.subr.mxu0 0.0
        %6918 = vmatpush2.msra.mxu0 0.0
        %6919 = vmatprep.subr.mxu0 0.0
        %6920 = vmatpush2.msra.mxu0 0.0
        %6921 = vmatprep.subr.mxu0 0.0
        %6922 = vmatpush2.msra.mxu0 0.0
        %6923 = vmatprep.subr.mxu0 0.0
        %6924 = vmatpush2.msra.mxu0 0.0
        %6925 = vmatprep.subr.mxu0 0.0
        %6926 = vmatpush2.msra.mxu0 0.0
        %6927 = vmatprep.subr.mxu0 0.0
        %6928 = vmatpush2.msra.mxu0 0.0
        %6929 = vmatprep.subr.mxu0 0.0
        %6930 = vmatpush2.msra.mxu0 0.0
        %6931 = vmatprep.subr.mxu0 0.0
        %6932 = vmatpush2.msra.mxu0 0.0
        %6933 = vmatprep.subr.mxu0 0.0
        %6934 = vmatpush2.msra.mxu0 0.0
        %6935 = vmatprep.subr.mxu0 0.0
        %6936 = vmatpush2.msra.mxu0 0.0
        %6937 = vmatprep.subr.mxu0 0.0
        %6938 = vmatpush2.msra.mxu0 0.0
        %6939 = vmatprep.mubr.f32.mxu0 0.0
        %6940 = vmatmul.mubr.f32.gmra.mxu0 %v6508
        %v6941 = vpop.f32.mrf.mxu0
        %v6942 = vadd.f32 %v6717, %v6941
        %v6943 = vpop.f32.mrf.mxu0
        %6944 = vmatprep.mubr.f32.mxu0 0.0
        %6945 = vmatmul.mubr.f32.gmra.mxu0 %v6511
        %v6946 = vpop.f32.mrf.mxu0
        %v6947 = vadd.f32 %v6722, %v6946
        %v6948 = vpop.f32.mrf.mxu0
        %6949 = vmatprep.mubr.f32.mxu0 0.0
        %6950 = vmatmul.mubr.f32.gmra.mxu0 %v6514
        %v6951 = vpop.f32.mrf.mxu0
        %v6952 = vadd.f32 %v6727, %v6951
        %v6953 = vpop.f32.mrf.mxu0
        %6954 = vmatprep.mubr.f32.mxu0 0.0
        %6955 = vmatmul.mubr.f32.gmra.mxu0 %v6517
        %v6956 = vpop.f32.mrf.mxu0
        %v6957 = vadd.f32 %v6732, %v6956
        %v6958 = vpop.f32.mrf.mxu0
        %6959 = vmatprep.mubr.f32.mxu0 0.0
        %6960 = vmatmul.mubr.f32.gmra.mxu0 %v6520
        %v6961 = vpop.f32.mrf.mxu0
        %v6962 = vadd.f32 %v6737, %v6961
        %v6963 = vpop.f32.mrf.mxu0
        %6964 = vmatprep.mubr.f32.mxu0 0.0
        %6965 = vmatmul.mubr.f32.gmra.mxu0 %v6523
        %v6966 = vpop.f32.mrf.mxu0
        %v6967 = vadd.f32 %v6742, %v6966
        %v6968 = vpop.f32.mrf.mxu0
        %6969 = vmatprep.mubr.f32.mxu0 0.0
        %6970 = vmatmul.mubr.f32.gmra.mxu0 %v6526
        %v6971 = vpop.f32.mrf.mxu0
        %v6972 = vadd.f32 %v6747, %v6971
        %v6973 = vpop.f32.mrf.mxu0
        %6974 = vmatprep.mubr.f32.mxu0 0.0
        %6975 = vmatmul.mubr.f32.gmra.mxu0 %v6529
        %v6976 = vpop.f32.mrf.mxu0
        %v6977 = vadd.f32 %v6752, %v6976
        %v6978 = vpop.f32.mrf.mxu0
        %6979 = vmatprep.mubr.f32.mxu0 0.0
        %6980 = vmatmul.mubr.f32.gmra.mxu0 %v6532
        %v6981 = vpop.f32.mrf.mxu0
        %v6982 = vadd.f32 %v6757, %v6981
        %v6983 = vpop.f32.mrf.mxu0
        %6984 = vmatprep.mubr.f32.mxu0 0.0
        %6985 = vmatmul.mubr.f32.gmra.mxu0 %v6535
        %v6986 = vpop.f32.mrf.mxu0
        %v6987 = vadd.f32 %v6762, %v6986
        %v6988 = vpop.f32.mrf.mxu0
        %6989 = vmatprep.mubr.f32.mxu0 0.0
        %6990 = vmatmul.mubr.f32.gmra.mxu0 %v6538
        %v6991 = vpop.f32.mrf.mxu0
        %v6992 = vadd.f32 %v6767, %v6991
        %v6993 = vpop.f32.mrf.mxu0
        %6994 = vmatprep.mubr.f32.mxu0 0.0
        %6995 = vmatmul.mubr.f32.gmra.mxu0 %v6541
        %v6996 = vpop.f32.mrf.mxu0
        %v6997 = vadd.f32 %v6772, %v6996
        %v6998 = vpop.f32.mrf.mxu0
        %6999 = vmatprep.mubr.f32.mxu0 0.0
        %7000 = vmatmul.mubr.f32.gmra.mxu0 %v6544
        %v7001 = vpop.f32.mrf.mxu0
        %v7002 = vadd.f32 %v6777, %v7001
        %v7003 = vpop.f32.mrf.mxu0
        %7004 = vmatprep.mubr.f32.mxu0 0.0
        %7005 = vmatmul.mubr.f32.gmra.mxu0 %v6547
        %v7006 = vpop.f32.mrf.mxu0
        %v7007 = vadd.f32 %v6782, %v7006
        %v7008 = vpop.f32.mrf.mxu0
        %7009 = vmatprep.mubr.f32.mxu0 0.0
        %7010 = vmatmul.mubr.f32.gmra.mxu0 %v6550
        %v7011 = vpop.f32.mrf.mxu0
        %v7012 = vadd.f32 %v6787, %v7011
        %v7013 = vpop.f32.mrf.mxu0
        %7014 = vmatprep.mubr.f32.mxu0 0.0
        %7015 = vmatmul.mubr.f32.gmra.mxu0 %v6553
        %v7016 = vpop.f32.mrf.mxu0
        %v7017 = vadd.f32 %v6792, %v7016
        %v7018 = vpop.f32.mrf.mxu0
        %7019 = vmatprep.mubr.f32.mxu0 0.0
        %7020 = vmatmul.mubr.f32.gmra.mxu0 %v6556
        %v7021 = vpop.f32.mrf.mxu0
        %v7022 = vadd.f32 %v6797, %v7021
        %v7023 = vpop.f32.mrf.mxu0
        %7024 = vmatprep.mubr.f32.mxu0 0.0
        %7025 = vmatmul.mubr.f32.gmra.mxu0 %v6559
        %v7026 = vpop.f32.mrf.mxu0
        %v7027 = vadd.f32 %v6802, %v7026
        %v7028 = vpop.f32.mrf.mxu0
        %7029 = vmatprep.mubr.f32.mxu0 0.0
        %7030 = vmatmul.mubr.f32.gmra.mxu0 %v6562
        %v7031 = vpop.f32.mrf.mxu0
        %v7032 = vadd.f32 %v6807, %v7031
        %v7033 = vpop.f32.mrf.mxu0
        %7034 = vmatprep.mubr.f32.mxu0 0.0
        %7035 = vmatmul.mubr.f32.gmra.mxu0 %v6565
        %v7036 = vpop.f32.mrf.mxu0
        %v7037 = vadd.f32 %v6812, %v7036
        %v7038 = vpop.f32.mrf.mxu0
        %7039 = vmatprep.mubr.f32.mxu0 0.0
        %7040 = vmatmul.mubr.f32.gmra.mxu0 %v6568
        %v7041 = vpop.f32.mrf.mxu0
        %v7042 = vadd.f32 %v6817, %v7041
        %v7043 = vpop.f32.mrf.mxu0
        %7044 = vmatprep.mubr.f32.mxu0 0.0
        %7045 = vmatmul.mubr.f32.gmra.mxu0 %v6571
        %v7046 = vpop.f32.mrf.mxu0
        %v7047 = vadd.f32 %v6822, %v7046
        %v7048 = vpop.f32.mrf.mxu0
        %7049 = vmatprep.mubr.f32.mxu0 0.0
        %7050 = vmatmul.mubr.f32.gmra.mxu0 %v6574
        %v7051 = vpop.f32.mrf.mxu0
        %v7052 = vadd.f32 %v6827, %v7051
        %v7053 = vpop.f32.mrf.mxu0
        %7054 = vmatprep.mubr.f32.mxu0 0.0
        %7055 = vmatmul.mubr.f32.gmra.mxu0 %v6577
        %v7056 = vpop.f32.mrf.mxu0
        %v7057 = vadd.f32 %v6832, %v7056
        %v7058 = vpop.f32.mrf.mxu0
        %7059 = vmatprep.mubr.f32.mxu0 0.0
        %7060 = vmatmul.mubr.f32.gmra.mxu0 %v6580
        %v7061 = vpop.f32.mrf.mxu0
        %v7062 = vadd.f32 %v6837, %v7061
        %v7063 = vpop.f32.mrf.mxu0
        %7064 = vmatprep.mubr.f32.mxu0 0.0
        %7065 = vmatmul.mubr.f32.gmra.mxu0 %v6583
        %v7066 = vpop.f32.mrf.mxu0
        %v7067 = vadd.f32 %v6842, %v7066
        %v7068 = vpop.f32.mrf.mxu0
        %7069 = vmatprep.mubr.f32.mxu0 0.0
        %7070 = vmatmul.mubr.f32.gmra.mxu0 %v6586
        %v7071 = vpop.f32.mrf.mxu0
        %v7072 = vadd.f32 %v6847, %v7071
        %v7073 = vpop.f32.mrf.mxu0
        %7074 = vmatprep.mubr.f32.mxu0 0.0
        %7075 = vmatmul.mubr.f32.gmra.mxu0 %v6589
        %v7076 = vpop.f32.mrf.mxu0
        %v7077 = vadd.f32 %v6852, %v7076
        %v7078 = vpop.f32.mrf.mxu0
        %7079 = vmatprep.mubr.f32.mxu0 0.0
        %7080 = vmatmul.mubr.f32.gmra.mxu0 %v6592
        %v7081 = vpop.f32.mrf.mxu0
        %v7082 = vadd.f32 %v6857, %v7081
        %v7083 = vpop.f32.mrf.mxu0
        %7084 = vmatprep.mubr.f32.mxu0 0.0
        %7085 = vmatmul.mubr.f32.gmra.mxu0 %v6595
        %v7086 = vpop.f32.mrf.mxu0
        %v7087 = vadd.f32 %v6862, %v7086
        %v7088 = vpop.f32.mrf.mxu0
        %7089 = vmatprep.mubr.f32.mxu0 0.0
        %7090 = vmatmul.mubr.f32.gmra.mxu0 %v6598
        %v7091 = vpop.f32.mrf.mxu0
        %v7092 = vadd.f32 %v6867, %v7091
        %v7093 = vpop.f32.mrf.mxu0
        %7094 = vmatprep.mubr.f32.mxu0 0.0
        %7095 = vmatmul.mubr.f32.gmra.mxu0 %v6601
        %v7096 = vpop.f32.mrf.mxu0
        %v7097 = vadd.f32 %v6872, %v7096
        %v7098 = vpop.f32.mrf.mxu0
        %7099 = vdwg.mxu0
        %v7100 = vld [vmem:[%s11] sm:$0x1]
        %v7102 = vlaneseq
        %v7103 = vshrl.u32 %v7102, 7
        %v7104 = vsub.s32 0, %v7103
        %v7105 = vrot.slane %v7100, %v7104
        %v7107 = vmul.f32 %v6942, %v7105
        %v7108 = vmul.f32 %v6947, %v7105
        %v7109 = vmul.f32 %v6952, %v7105
        %v7110 = vmul.f32 %v6957, %v7105
        %v7111 = vmul.f32 %v6962, %v7105
        %v7112 = vmul.f32 %v6967, %v7105
        %v7113 = vmul.f32 %v6972, %v7105
        %v7114 = vmul.f32 %v6977, %v7105
        %v7115 = vmul.f32 %v6982, %v7105
        %v7116 = vmul.f32 %v6987, %v7105
        %v7117 = vmul.f32 %v6992, %v7105
        %v7118 = vmul.f32 %v6997, %v7105
        %v7119 = vmul.f32 %v7002, %v7105
        %v7120 = vmul.f32 %v7007, %v7105
        %v7121 = vmul.f32 %v7012, %v7105
        %v7122 = vmul.f32 %v7017, %v7105
        %v7123 = vmul.f32 %v7022, %v7105
        %v7124 = vmul.f32 %v7027, %v7105
        %v7125 = vmul.f32 %v7032, %v7105
        %v7126 = vmul.f32 %v7037, %v7105
        %v7127 = vmul.f32 %v7042, %v7105
        %v7128 = vmul.f32 %v7047, %v7105
        %v7129 = vmul.f32 %v7052, %v7105
        %v7130 = vmul.f32 %v7057, %v7105
        %v7131 = vmul.f32 %v7062, %v7105
        %v7132 = vmul.f32 %v7067, %v7105
        %v7133 = vmul.f32 %v7072, %v7105
        %v7134 = vmul.f32 %v7077, %v7105
        %v7135 = vmul.f32 %v7082, %v7105
        %v7136 = vmul.f32 %v7087, %v7105
        %v7137 = vmul.f32 %v7092, %v7105
        %v7138 = vmul.f32 %v7097, %v7105
        %v7139 = vld [vmem:[%s12] sm:$0x1]
        %v7141 = vlaneseq
        %v7142 = vshrl.u32 %v7141, 7
        %v7143 = vsub.s32 0, %v7142
        %v7144 = vrot.slane %v7139, %v7143
        %v7146 = vadd.f32 %v7107, %v7144
        %v7147 = vadd.f32 %v7108, %v7144
        %v7148 = vadd.f32 %v7109, %v7144
        %v7149 = vadd.f32 %v7110, %v7144
        %v7150 = vadd.f32 %v7111, %v7144
        %v7151 = vadd.f32 %v7112, %v7144
        %v7152 = vadd.f32 %v7113, %v7144
        %v7153 = vadd.f32 %v7114, %v7144
        %v7154 = vadd.f32 %v7115, %v7144
        %v7155 = vadd.f32 %v7116, %v7144
        %v7156 = vadd.f32 %v7117, %v7144
        %v7157 = vadd.f32 %v7118, %v7144
        %v7158 = vadd.f32 %v7119, %v7144
        %v7159 = vadd.f32 %v7120, %v7144
        %v7160 = vadd.f32 %v7121, %v7144
        %v7161 = vadd.f32 %v7122, %v7144
        %v7162 = vadd.f32 %v7123, %v7144
        %v7163 = vadd.f32 %v7124, %v7144
        %v7164 = vadd.f32 %v7125, %v7144
        %v7165 = vadd.f32 %v7126, %v7144
        %v7166 = vadd.f32 %v7127, %v7144
        %v7167 = vadd.f32 %v7128, %v7144
        %v7168 = vadd.f32 %v7129, %v7144
        %v7169 = vadd.f32 %v7130, %v7144
        %v7170 = vadd.f32 %v7131, %v7144
        %v7171 = vadd.f32 %v7132, %v7144
        %v7172 = vadd.f32 %v7133, %v7144
        %v7173 = vadd.f32 %v7134, %v7144
        %v7174 = vadd.f32 %v7135, %v7144
        %v7175 = vadd.f32 %v7136, %v7144
        %v7176 = vadd.f32 %v7137, %v7144
        %v7177 = vadd.f32 %v7138, %v7144
        %v7178 = vxor.u32 %v7146, 2147483648
        %v7179 = vxor.u32 %v7147, 2147483648
        %v7180 = vxor.u32 %v7148, 2147483648
        %v7181 = vxor.u32 %v7149, 2147483648
        %v7182 = vxor.u32 %v7150, 2147483648
        %v7183 = vxor.u32 %v7151, 2147483648
        %v7184 = vxor.u32 %v7152, 2147483648
        %v7185 = vxor.u32 %v7153, 2147483648
        %v7186 = vxor.u32 %v7154, 2147483648
        %v7187 = vxor.u32 %v7155, 2147483648
        %v7188 = vxor.u32 %v7156, 2147483648
        %v7189 = vxor.u32 %v7157, 2147483648
        %v7190 = vxor.u32 %v7158, 2147483648
        %v7191 = vxor.u32 %v7159, 2147483648
        %v7192 = vxor.u32 %v7160, 2147483648
        %v7193 = vxor.u32 %v7161, 2147483648
        %v7194 = vxor.u32 %v7162, 2147483648
        %v7195 = vxor.u32 %v7163, 2147483648
        %v7196 = vxor.u32 %v7164, 2147483648
        %v7197 = vxor.u32 %v7165, 2147483648
        %v7198 = vxor.u32 %v7166, 2147483648
        %v7199 = vxor.u32 %v7167, 2147483648
        %v7200 = vxor.u32 %v7168, 2147483648
        %v7201 = vxor.u32 %v7169, 2147483648
        %v7202 = vxor.u32 %v7170, 2147483648
        %v7203 = vxor.u32 %v7171, 2147483648
        %v7204 = vxor.u32 %v7172, 2147483648
        %v7205 = vxor.u32 %v7173, 2147483648
        %v7206 = vxor.u32 %v7174, 2147483648
        %v7207 = vxor.u32 %v7175, 2147483648
        %v7208 = vxor.u32 %v7176, 2147483648
        %v7209 = vxor.u32 %v7177, 2147483648
        %v7210 = vmul.f32 %v7178, 1.442695
        %v7211 = vpow.pop %v7210
        %v7212 = vmul.f32 %v7179, 1.442695
        %v7213 = vpow.pop %v7212
        %v7214 = vmul.f32 %v7180, 1.442695
        %v7215 = vpow.pop %v7214
        %v7216 = vmul.f32 %v7181, 1.442695
        %v7217 = vpow.pop %v7216
        %v7218 = vmul.f32 %v7182, 1.442695
        %v7219 = vpow.pop %v7218
        %v7220 = vmul.f32 %v7183, 1.442695
        %v7221 = vpow.pop %v7220
        %v7222 = vmul.f32 %v7184, 1.442695
        %v7223 = vpow.pop %v7222
        %v7224 = vmul.f32 %v7185, 1.442695
        %v7225 = vpow.pop %v7224
        %v7226 = vmul.f32 %v7186, 1.442695
        %v7227 = vpow.pop %v7226
        %v7228 = vmul.f32 %v7187, 1.442695
        %v7229 = vpow.pop %v7228
        %v7230 = vmul.f32 %v7188, 1.442695
        %v7231 = vpow.pop %v7230
        %v7232 = vmul.f32 %v7189, 1.442695
        %v7233 = vpow.pop %v7232
        %v7234 = vmul.f32 %v7190, 1.442695
        %v7235 = vpow.pop %v7234
        %v7236 = vmul.f32 %v7191, 1.442695
        %v7237 = vpow.pop %v7236
        %v7238 = vmul.f32 %v7192, 1.442695
        %v7239 = vpow.pop %v7238
        %v7240 = vmul.f32 %v7193, 1.442695
        %v7241 = vpow.pop %v7240
        %v7242 = vmul.f32 %v7194, 1.442695
        %v7243 = vpow.pop %v7242
        %v7244 = vmul.f32 %v7195, 1.442695
        %v7245 = vpow.pop %v7244
        %v7246 = vmul.f32 %v7196, 1.442695
        %v7247 = vpow.pop %v7246
        %v7248 = vmul.f32 %v7197, 1.442695
        %v7249 = vpow.pop %v7248
        %v7250 = vmul.f32 %v7198, 1.442695
        %v7251 = vpow.pop %v7250
        %v7252 = vmul.f32 %v7199, 1.442695
        %v7253 = vpow.pop %v7252
        %v7254 = vmul.f32 %v7200, 1.442695
        %v7255 = vpow.pop %v7254
        %v7256 = vmul.f32 %v7201, 1.442695
        %v7257 = vpow.pop %v7256
        %v7258 = vmul.f32 %v7202, 1.442695
        %v7259 = vpow.pop %v7258
        %v7260 = vmul.f32 %v7203, 1.442695
        %v7261 = vpow.pop %v7260
        %v7262 = vmul.f32 %v7204, 1.442695
        %v7263 = vpow.pop %v7262
        %v7264 = vmul.f32 %v7205, 1.442695
        %v7265 = vpow.pop %v7264
        %v7266 = vmul.f32 %v7206, 1.442695
        %v7267 = vpow.pop %v7266
        %v7268 = vmul.f32 %v7207, 1.442695
        %v7269 = vpow.pop %v7268
        %v7270 = vmul.f32 %v7208, 1.442695
        %v7271 = vpow.pop %v7270
        %v7272 = vmul.f32 %v7209, 1.442695
        %v7273 = vpow.pop %v7272
        %v7274 = vadd.f32 %v7211, 1.0
        %v7275 = vadd.f32 %v7213, 1.0
        %v7276 = vadd.f32 %v7215, 1.0
        %v7277 = vadd.f32 %v7217, 1.0
        %v7278 = vadd.f32 %v7219, 1.0
        %v7279 = vadd.f32 %v7221, 1.0
        %v7280 = vadd.f32 %v7223, 1.0
        %v7281 = vadd.f32 %v7225, 1.0
        %v7282 = vadd.f32 %v7227, 1.0
        %v7283 = vadd.f32 %v7229, 1.0
        %v7284 = vadd.f32 %v7231, 1.0
        %v7285 = vadd.f32 %v7233, 1.0
        %v7286 = vadd.f32 %v7235, 1.0
        %v7287 = vadd.f32 %v7237, 1.0
        %v7288 = vadd.f32 %v7239, 1.0
        %v7289 = vadd.f32 %v7241, 1.0
        %v7290 = vadd.f32 %v7243, 1.0
        %v7291 = vadd.f32 %v7245, 1.0
        %v7292 = vadd.f32 %v7247, 1.0
        %v7293 = vadd.f32 %v7249, 1.0
        %v7294 = vadd.f32 %v7251, 1.0
        %v7295 = vadd.f32 %v7253, 1.0
        %v7296 = vadd.f32 %v7255, 1.0
        %v7297 = vadd.f32 %v7257, 1.0
        %v7298 = vadd.f32 %v7259, 1.0
        %v7299 = vadd.f32 %v7261, 1.0
        %v7300 = vadd.f32 %v7263, 1.0
        %v7301 = vadd.f32 %v7265, 1.0
        %v7302 = vadd.f32 %v7267, 1.0
        %v7303 = vadd.f32 %v7269, 1.0
        %v7304 = vadd.f32 %v7271, 1.0
        %v7305 = vadd.f32 %v7273, 1.0
        %v7306 = vrcp.pop %v7274
        %v7307 = vmul.f32 1.0, %v7306
        %v7308 = vrcp.pop %v7275
        %v7309 = vmul.f32 1.0, %v7308
        %v7310 = vrcp.pop %v7276
        %v7311 = vmul.f32 1.0, %v7310
        %v7312 = vrcp.pop %v7277
        %v7313 = vmul.f32 1.0, %v7312
        %v7314 = vrcp.pop %v7278
        %v7315 = vmul.f32 1.0, %v7314
        %v7316 = vrcp.pop %v7279
        %v7317 = vmul.f32 1.0, %v7316
        %v7318 = vrcp.pop %v7280
        %v7319 = vmul.f32 1.0, %v7318
        %v7320 = vrcp.pop %v7281
        %v7321 = vmul.f32 1.0, %v7320
        %v7322 = vrcp.pop %v7282
        %v7323 = vmul.f32 1.0, %v7322
        %v7324 = vrcp.pop %v7283
        %v7325 = vmul.f32 1.0, %v7324
        %v7326 = vrcp.pop %v7284
        %v7327 = vmul.f32 1.0, %v7326
        %v7328 = vrcp.pop %v7285
        %v7329 = vmul.f32 1.0, %v7328
        %v7330 = vrcp.pop %v7286
        %v7331 = vmul.f32 1.0, %v7330
        %v7332 = vrcp.pop %v7287
        %v7333 = vmul.f32 1.0, %v7332
        %v7334 = vrcp.pop %v7288
        %v7335 = vmul.f32 1.0, %v7334
        %v7336 = vrcp.pop %v7289
        %v7337 = vmul.f32 1.0, %v7336
        %v7338 = vrcp.pop %v7290
        %v7339 = vmul.f32 1.0, %v7338
        %v7340 = vrcp.pop %v7291
        %v7341 = vmul.f32 1.0, %v7340
        %v7342 = vrcp.pop %v7292
        %v7343 = vmul.f32 1.0, %v7342
        %v7344 = vrcp.pop %v7293
        %v7345 = vmul.f32 1.0, %v7344
        %v7346 = vrcp.pop %v7294
        %v7347 = vmul.f32 1.0, %v7346
        %v7348 = vrcp.pop %v7295
        %v7349 = vmul.f32 1.0, %v7348
        %v7350 = vrcp.pop %v7296
        %v7351 = vmul.f32 1.0, %v7350
        %v7352 = vrcp.pop %v7297
        %v7353 = vmul.f32 1.0, %v7352
        %v7354 = vrcp.pop %v7298
        %v7355 = vmul.f32 1.0, %v7354
        %v7356 = vrcp.pop %v7299
        %v7357 = vmul.f32 1.0, %v7356
        %v7358 = vrcp.pop %v7300
        %v7359 = vmul.f32 1.0, %v7358
        %v7360 = vrcp.pop %v7301
        %v7361 = vmul.f32 1.0, %v7360
        %v7362 = vrcp.pop %v7302
        %v7363 = vmul.f32 1.0, %v7362
        %v7364 = vrcp.pop %v7303
        %v7365 = vmul.f32 1.0, %v7364
        %v7366 = vrcp.pop %v7304
        %v7367 = vmul.f32 1.0, %v7366
        %v7368 = vrcp.pop %v7305
        %v7369 = vmul.f32 1.0, %v7368
        %v7370 = vmul.f32 %v7146, %v7307
        %v7371 = vmul.f32 %v7147, %v7309
        %v7372 = vmul.f32 %v7148, %v7311
        %v7373 = vmul.f32 %v7149, %v7313
        %v7374 = vmul.f32 %v7150, %v7315
        %v7375 = vmul.f32 %v7151, %v7317
        %v7376 = vmul.f32 %v7152, %v7319
        %v7377 = vmul.f32 %v7153, %v7321
        %v7378 = vmul.f32 %v7154, %v7323
        %v7379 = vmul.f32 %v7155, %v7325
        %v7380 = vmul.f32 %v7156, %v7327
        %v7381 = vmul.f32 %v7157, %v7329
        %v7382 = vmul.f32 %v7158, %v7331
        %v7383 = vmul.f32 %v7159, %v7333
        %v7384 = vmul.f32 %v7160, %v7335
        %v7385 = vmul.f32 %v7161, %v7337
        %v7386 = vmul.f32 %v7162, %v7339
        %v7387 = vmul.f32 %v7163, %v7341
        %v7388 = vmul.f32 %v7164, %v7343
        %v7389 = vmul.f32 %v7165, %v7345
        %v7390 = vmul.f32 %v7166, %v7347
        %v7391 = vmul.f32 %v7167, %v7349
        %v7392 = vmul.f32 %v7168, %v7351
        %v7393 = vmul.f32 %v7169, %v7353
        %v7394 = vmul.f32 %v7170, %v7355
        %v7395 = vmul.f32 %v7171, %v7357
        %v7396 = vmul.f32 %v7172, %v7359
        %v7397 = vmul.f32 %v7173, %v7361
        %v7398 = vmul.f32 %v7174, %v7363
        %v7399 = vmul.f32 %v7175, %v7365
        %v7400 = vmul.f32 %v7176, %v7367
        %v7401 = vmul.f32 %v7177, %v7369
        %7402 = vst [vmem:[%s470] sm:$0xff] %v7370
        %7403 = vst [vmem:[%s470 + $0x8] sm:$0xff] %v7371
        %7404 = vst [vmem:[%s470 + $0x10] sm:$0xff] %v7372
        %7405 = vst [vmem:[%s470 + $0x18] sm:$0xff] %v7373
        %7406 = vst [vmem:[%s470 + $0x20] sm:$0xff] %v7374
        %7407 = vst [vmem:[%s470 + $0x28] sm:$0xff] %v7375
        %7408 = vst [vmem:[%s470 + $0x30] sm:$0xff] %v7376
        %7409 = vst [vmem:[%s470 + $0x38] sm:$0xff] %v7377
        %7410 = vst [vmem:[%s470 + $0x40] sm:$0xff] %v7378
        %7411 = vst [vmem:[%s470 + $0x48] sm:$0xff] %v7379
        %7412 = vst [vmem:[%s470 + $0x50] sm:$0xff] %v7380
        %7413 = vst [vmem:[%s470 + $0x58] sm:$0xff] %v7381
        %7414 = vst [vmem:[%s470 + $0x60] sm:$0xff] %v7382
        %7415 = vst [vmem:[%s470 + $0x68] sm:$0xff] %v7383
        %7416 = vst [vmem:[%s470 + $0x70] sm:$0xff] %v7384
        %7417 = vst [vmem:[%s470 + $0x78] sm:$0xff] %v7385
        %7418 = vst [vmem:[%s470 + $0x80] sm:$0xff] %v7386
        %7419 = vst [vmem:[%s470 + $0x88] sm:$0xff] %v7387
        %7420 = vst [vmem:[%s470 + $0x90] sm:$0xff] %v7388
        %7421 = vst [vmem:[%s470 + $0x98] sm:$0xff] %v7389
        %7422 = vst [vmem:[%s470 + $0xa0] sm:$0xff] %v7390
        %7423 = vst [vmem:[%s470 + $0xa8] sm:$0xff] %v7391
        %7424 = vst [vmem:[%s470 + $0xb0] sm:$0xff] %v7392
        %7425 = vst [vmem:[%s470 + $0xb8] sm:$0xff] %v7393
        %7426 = vst [vmem:[%s470 + $0xc0] sm:$0xff] %v7394
        %7427 = vst [vmem:[%s470 + $0xc8] sm:$0xff] %v7395
        %7428 = vst [vmem:[%s470 + $0xd0] sm:$0xff] %v7396
        %7429 = vst [vmem:[%s470 + $0xd8] sm:$0xff] %v7397
        %7430 = vst [vmem:[%s470 + $0xe0] sm:$0xff] %v7398
        %7431 = vst [vmem:[%s470 + $0xe8] sm:$0xff] %v7399
        %7432 = vst [vmem:[%s470 + $0xf0] sm:$0xff] %v7400
        %7433 = vst [vmem:[%s470 + $0xf8] sm:$0xff] %v7401
        %p7434 = scmp.lt.s32.totalorder %s26, 1
        %s7435 = scalar_select %p7434, %s26, 1
        %s7436 = smul.addr %s7435, 32
        %s7437 = smul.addr %s7436, 8
        %s7438 = scalar_lea.vmem %s13, %s7437
        // Predicated region
        $region81: #{c2f_forward.1} parent=71 // pred_check
          %p7439 = pneg %p322
        $region82: #{c2f_forward.1} parent=71 // pred_check_branch
          %7441 = sbr.rel (%p7439) target = $region84
        $region83: #{c2f_forward.1} parent=71 // pred_region
          _
        $region84: #{c2f_forward.1} parent=71 // pred_fallthru
          _
      $region72: #{c2f_forward.1} parent=5 // pred_fallthru
        _
      %p7442 = scmp.le.s32.totalorder 2, %s21
      // Predicated region
      $region85: #{c2f_forward.1} parent=5 // pred_check
        %p7443 = pneg %p7442
      $region86: #{c2f_forward.1} parent=5 // pred_check_branch
        %7445 = sbr.rel (%p7443) target = $region88
      $region87: #{c2f_forward.1} parent=5 // pred_region
        %s7446 = ssub.s32 %s21, 2
        // Predicated region
        $region89: #{c2f_forward.1} parent=87 // pred_check
          %p7447 = pneg %p328
        $region90: #{c2f_forward.1} parent=87 // pred_check_branch
          %7449 = sbr.rel (%p7447) target = $region92
        $region91: #{c2f_forward.1} parent=87 // pred_region
          %p7450 = scmp.lt.s32.totalorder %s27, 1
          %s7451 = scalar_select %p7450, %s27, 1
          %s7452 = smul.addr %s7451, 32
          %s7453 = smul.addr %s7452, 8
          %s7454 = scalar_lea.vmem %s13, %s7453
        $region92: #{c2f_forward.1} parent=87 // pred_fallthru
          _
      $region88: #{c2f_forward.1} parent=5 // pred_fallthru
        _
    $region6: #{c2f_forward.1} parent=1 // loop_footer
      %s25 = sadd.s32 1, %s21
    $region7: #{c2f_forward.1} parent=1 // loop_footer_branch
      %20 = sbr.rel target = $region3
    $region8: #{c2f_forward.1} parent=1 // loop_exit
      _
    %7455 = vsyncpa [#allocation5], 1
    %s7456 = scalar_lea.sflag [#allocation5], 1
    %7457 = vsyncpa %s7456, 1
    %7458 = vsyncpa [#allocation7], 1

</llo_original>
